<compile_context>
chip_gen: v7x
topology: tpu7x:2x2x1
jax: 0.10.0
libtpu: 0.0.40
codegen_flags: <defaults>
</compile_context>

<pallas_src>
import functools

import numpy as np

import jax
import jax.numpy as jnp
from jax.experimental import pallas as pl
from jax.experimental.pallas import tpu as pltpu


# ----------------------------- Pallas kernels -----------------------------

def _feature_layer_kernel(xp_ref, wmat_ref, b_ref, m_ref, emat_ref, sr_ref, sc_ref, o_ref,
                          *, D, H, W, Cin, Cout):
    """Fused Conv3d(k=3,p=1) + bias + MaskAttention + ReLU + MaxPool3d(2) for one batch element.

    xp_ref:   (1, D+2, H+2, (W+2)*Cin)   zero-padded input, W and Cin merged into lanes
    wmat_ref: (9, (W+2)*Cin, W*Cout)     per-(kd,kh) block-diagonal conv weights (kw folded in)
    b_ref:    (1, W*Cout)                bias tiled over w
    m_ref:    (1, D*H, W)                mask at the conv output resolution
    emat_ref: (W, W*Cout)                MaskAttention 1x1x1 conv weight as a broadcast matrix
    sr_ref:   (4, Do*Ho, D*H)            0/1 row (d,h)->(d2,h2) pooling selectors
    sc_ref:   (2, W*Cout, Wo*Cout)       0/1 lane w->w2 pooling selectors
    o_ref:    (1, Do*Ho, Wo*Cout)        pooled output (lane-dense)
    """
    WpC = (W + 2) * Cin
    DH = D * H

    # --- Conv3d: 9 slab matmuls; result is lane-dense (D*H, W*Cout), accumulated in f32. ---
    acc = None
    for kd in range(3):
        for kh in range(3):
            slab = xp_ref[0, kd:kd + D, kh:kh + H, :]               # (D, H, (W+2)*Cin)
            part = jnp.dot(slab.reshape(DH, WpC), wmat_ref[kd * 3 + kh],
                           preferred_element_type=jnp.float32)
            acc = part if acc is None else acc + part
    y = acc + b_ref[...]                                            # bias

    # --- MaskAttention: sigmoid(Conv3d(1->Cout, k=1, no bias)(mask)), broadcast over (w, co). ---
    att = jax.nn.sigmoid(jnp.dot(m_ref[0], emat_ref[...],
                                 preferred_element_type=jnp.float32))
    z = jnp.maximum(y * att, 0.0)                                   # attention, then ReLU

    # --- MaxPool3d(2): exact 0/1-selection matmuls + elementwise max, all in VMEM. ---
    r = jnp.dot(sr_ref[0], z, preferred_element_type=jnp.float32)   # rows (d,h) -> (d2,h2)
    for p in range(1, 4):
        r = jnp.maximum(r, jnp.dot(sr_ref[p], z, preferred_element_type=jnp.float32))
    o = jnp.dot(r, sc_ref[0], preferred_element_type=jnp.float32)   # lanes w -> w2
    o = jnp.maximum(o, jnp.dot(r, sc_ref[1], preferred_element_type=jnp.float32))
    o_ref[0] = o.astype(o_ref.dtype)


def _classifier_kernel(x_ref, w1_ref, b1_ref, w2_ref, b2_ref, w3_ref, b3_ref, o_ref):
    """Fused fc1+ReLU -> fc2+ReLU -> fc3 (Dropout(0.5) = identity in eval mode)."""
    h = jnp.dot(x_ref[0], w1_ref[...], preferred_element_type=jnp.float32) + b1_ref[...]
    h = jnp.maximum(h, 0.0)
    h = jnp.dot(h, w2_ref[...], preferred_element_type=jnp.float32) + b2_ref[...]
    h = jnp.maximum(h, 0.0)
    o = jnp.dot(h, w3_ref[...], preferred_element_type=jnp.float32) + b3_ref[...]
    o_ref[0] = o.astype(o_ref.dtype)


# ----------------------------- wrappers -----------------------------------

def feature_layer_forward(x, mask, layer):
    """One fused feature layer. x: (B, D, H, W, Cin); mask: (B, D, H, W, 1) at x's spatial size."""
    B, D, H, W, Cin = x.shape
    Cout = layer["btile"].shape[1] // W
    Do, Ho, Wo = D // 2, H // 2, W // 2
    Dp, Hp, Wp = D + 2, H + 2, W + 2

    # Glue (pure data movement): zero pad (padding=1) and merge (W, Cin) into the lane dim.
    xp = jnp.pad(x, ((0, 0), (1, 1), (1, 1), (1, 1), (0, 0))).reshape(B, Dp, Hp, Wp * Cin)
    m2d = mask.reshape(B, D * H, W)

    out = pl.pallas_call(
        functools.partial(_feature_layer_kernel, D=D, H=H, W=W, Cin=Cin, Cout=Cout),
        out_shape=jax.ShapeDtypeStruct((B, Do * Ho, Wo * Cout), jnp.float32),
        grid=(B,),
        in_specs=[
            pl.BlockSpec((1, Dp, Hp, Wp * Cin), lambda i: (i, 0, 0, 0)),
            pl.BlockSpec((9, Wp * Cin, W * Cout), lambda i: (0, 0, 0)),
            pl.BlockSpec((1, W * Cout), lambda i: (0, 0)),
            pl.BlockSpec((1, D * H, W), lambda i: (i, 0, 0)),
            pl.BlockSpec((W, W * Cout), lambda i: (0, 0)),
            pl.BlockSpec((4, Do * Ho, D * H), lambda i: (0, 0, 0)),
            pl.BlockSpec((2, W * Cout, Wo * Cout), lambda i: (0, 0, 0)),
        ],
        out_specs=pl.BlockSpec((1, Do * Ho, Wo * Cout), lambda i: (i, 0, 0)),
        compiler_params=pltpu.CompilerParams(dimension_semantics=("parallel",)),
    )(xp, layer["wmat"], layer["btile"], m2d, layer["emat"], layer["sr"], layer["sc"])
    return out.reshape(B, Do, Ho, Wo, Cout)


def classifier_forward(feat, p):
    """Fused classifier. feat: (B, F) in channels-last flatten order (fc1 rows pre-permuted)."""
    B, F = feat.shape
    ncls = p["fc3_b"].shape[-1]
    x3 = feat.reshape(B, 1, F)
    out = pl.pallas_call(
        _classifier_kernel,
        out_shape=jax.ShapeDtypeStruct((B, 1, ncls), jnp.float32),
        grid=(B,),
        in_specs=[
            pl.BlockSpec((1, 1, F), lambda i: (i, 0, 0)),
            pl.BlockSpec(p["fc1_w"].shape, lambda i: (0, 0)),
            pl.BlockSpec(p["fc1_b"].shape, lambda i: (0, 0)),
            pl.BlockSpec(p["fc2_w"].shape, lambda i: (0, 0)),
            pl.BlockSpec(p["fc2_b"].shape, lambda i: (0, 0)),
            pl.BlockSpec(p["fc3_w"].shape, lambda i: (0, 0)),
            pl.BlockSpec(p["fc3_b"].shape, lambda i: (0, 0)),
        ],
        out_specs=pl.BlockSpec((1, 1, ncls), lambda i: (i, 0, 0)),
        compiler_params=pltpu.CompilerParams(dimension_semantics=("parallel",)),
    )(x3, p["fc1_w"], p["fc1_b"], p["fc2_w"], p["fc2_b"], p["fc3_w"], p["fc3_b"])
    return out.reshape(B, ncls)


# ----------------------------- full forward --------------------------------

def masked_vgg3d_forward(prepped, x_ncdhw, mask_ncdhw):
    """MaskedVgg3DAdapter.forward(x, mask). Inputs are PyTorch NCDHW."""
    x = jnp.transpose(x_ncdhw, (0, 2, 3, 4, 1)).astype(jnp.float32)       # -> (B, D, H, W, C)
    mask = jnp.transpose(mask_ncdhw, (0, 2, 3, 4, 1)).astype(jnp.float32)  # -> (B, D, H, W, 1)
    B = x.shape[0]

    for layer in prepped["features"]:
        if mask.shape[1:4] != x.shape[1:4]:
            # TODO(synk): trilinear interpolation (align_corners=False) done in plain JAX, not Pallas.
            mask = jax.image.resize(mask, (B,) + x.shape[1:4] + (1,),
                                    method="trilinear", antialias=False)
        # Fused Conv3d + MaskAttentionModule + ReLU + MaxPool3d(2) in one pallas_call.
        x = feature_layer_forward(x, mask, layer)

    # features.view(B, -1): channels-last flatten; fc1 rows were pre-permuted from the
    # PyTorch NCDHW flatten order so no transpose is needed here.
    feat = x.reshape(B, -1)
    return classifier_forward(feat, prepped)


# ----------------------------- parameter prep ------------------------------

def _prep_feature_layer(w, b, wa, D, H, W, Cin, Cout):
    """Repack one conv layer's weights for the fused lane-dense kernel."""
    Wp = W + 2
    Do, Ho, Wo = D // 2, H // 2, W // 2

    # kw-shift selector: A[kw, wp, wi] = 1 iff wp == wi + kw
    A = np.zeros((3, Wp, W), np.float32)
    for kw in range(3):
        A[kw, np.arange(W) + kw, np.arange(W)] = 1.0
    # Block-diagonal conv weights: wmat[kd*3+kh, wp*Cin+ci, wi*Cout+co] = w[kd,kh,wp-wi,ci,co]
    wmat = jnp.einsum("kpw,dhkio->dhpiwo", A, w,
                      precision=jax.lax.Precision.HIGHEST).reshape(9, Wp * Cin, W * Cout)
    btile = jnp.tile(b, W).reshape(1, W * Cout)
    # MaskAttention 1x1x1 conv weight as a (W, W*Cout) broadcast matrix
    emat = jnp.einsum("wv,o->wvo", np.eye(W, dtype=np.float32), wa,
                      precision=jax.lax.Precision.HIGHEST).reshape(W, W * Cout)

    # MaxPool3d(2) exact 0/1 selection matrices.
    q = np.arange(Do * Ho)
    d2, h2 = q // Ho, q % Ho
    sr = np.zeros((4, Do * Ho, D * H), np.float32)
    for pd in range(2):
        for ph in range(2):
            sr[2 * pd + ph, q, (2 * d2 + pd) * H + (2 * h2 + ph)] = 1.0
    c = np.arange(Wo * Cout)
    w2, co = c // Cout, c % Cout
    sc = np.zeros((2, W * Cout, Wo * Cout), np.float32)
    for pw in range(2):
        sc[pw, (2 * w2 + pw) * Cout + co, c] = 1.0

    return {"wmat": wmat, "btile": btile, "emat": emat,
            "sr": jnp.asarray(sr), "sc": jnp.asarray(sc)}


def prepare_params(params, spatial=16):
    """One-time repack of raw module parameters into the kernel-friendly layout."""
    feats = []
    D = H = W = spatial
    c_last = 1
    for blk in params["features"]:
        w = blk["w"].astype(jnp.float32)
        b = blk["b"].astype(jnp.float32)
        wa = blk["wa"].astype(jnp.float32)
        Cin, Cout = int(w.shape[3]), int(w.shape[4])
        feats.append(_prep_feature_layer(w, b, wa, D, H, W, Cin, Cout))
        D, H, W = D // 2, H // 2, W // 2
        c_last = Cout

    F = c_last * D * H * W
    w1 = params["fc1_w"].astype(jnp.float32)
    cls = w1.shape[1]
    # Permute fc1 rows from PyTorch NCDHW flatten order (c,d,h,w) to channels-last (d,h,w,c).
    w1 = w1.reshape(c_last, D, H, W, cls).transpose(1, 2, 3, 0, 4).reshape(F, cls)

    return {
        "features": feats,
        "fc1_w": w1,
        "fc1_b": params["fc1_b"].reshape(1, -1).astype(jnp.float32),
        "fc2_w": params["fc2_w"].astype(jnp.float32),
        "fc2_b": params["fc2_b"].reshape(1, -1).astype(jnp.float32),
        "fc3_w": params["fc3_w"].astype(jnp.float32),
        "fc3_b": params["fc3_b"].reshape(1, -1).astype(jnp.float32),
    }


# ----------------------------- parameter init ------------------------------

def init_params(key, num_classes=3, classifier_size=64, spatial=16):
    keys = jax.random.split(key, 16)
    chans = [(1, 8), (8, 16)]   # synthetic base_model conv channels

    def conv_w(k, cin, cout):
        fan_in = cin * 27
        return jax.random.normal(k, (3, 3, 3, cin, cout), jnp.float32) * (1.0 / jnp.sqrt(fan_in))

    feats = []
    for li, (cin, cout) in enumerate(chans):
        feats.append({
            "w": conv_w(keys[3 * li], cin, cout),
            "b": jax.random.normal(keys[3 * li + 1], (cout,), jnp.float32) * 0.01,
            # MaskAttentionModule: Conv3d(1, cout, kernel_size=1, bias=False)
            "wa": jax.random.normal(keys[3 * li + 2], (cout,), jnp.float32),
        })

    final_spatial = spatial // (2 ** len(chans))
    feature_size = chans[-1][1] * final_spatial ** 3

    def lin_w(k, fan_in, fan_out):        # kaiming_normal_: std = sqrt(2 / fan_in)
        return jax.random.normal(k, (fan_in, fan_out), jnp.float32) * ((2.0 / fan_in) ** 0.5)

    return {
        "features": feats,
        "fc1_w": lin_w(keys[8], feature_size, classifier_size),
        "fc1_b": jnp.zeros((classifier_size,), jnp.float32),
        "fc2_w": lin_w(keys[9], classifier_size, classifier_size),
        "fc2_b": jnp.zeros((classifier_size,), jnp.float32),
        "fc3_w": lin_w(keys[10], classifier_size, num_classes),
        "fc3_b": jnp.zeros((num_classes,), jnp.float32),
    }


# ----------------------------- main ----------------------------------------

if __name__ == "__main__":
    key = jax.random.PRNGKey(0)
    kp, kx, km = jax.random.split(key, 3)

    B, Cin, D, H, W = 2, 1, 16, 16, 16
    num_classes = 3
    params = init_params(kp, num_classes=num_classes, classifier_size=64, spatial=D)
    prepped = prepare_params(params, spatial=D)   # one-time weight repack (outside jit)

    x = jax.random.normal(kx, (B, Cin, D, H, W), jnp.float32)
    mask = (jax.random.uniform(km, (B, 1, D, H, W)) > 0.5).astype(jnp.float32)

    fwd = jax.jit(masked_vgg3d_forward)
    out = jax.block_until_ready(fwd(prepped, x, mask))
    assert out.shape == (B, num_classes), out.shape
    assert bool(jnp.all(jnp.isfinite(out)))
    print("KERNEL_OK")
</pallas_src>

<mosaic_0001>
module attributes {stable_mosaic.version = 11 : i64} {
  func.func @_feature_layer_kernel(%arg0: i32, %arg1: memref<1x18x18x18xf32, #tpu.memory_space<vmem>>, %arg2: memref<9x18x128xf32, #tpu.memory_space<vmem>>, %arg3: memref<1x128xf32, #tpu.memory_space<vmem>>, %arg4: memref<1x256x16xf32, #tpu.memory_space<vmem>>, %arg5: memref<16x128xf32, #tpu.memory_space<vmem>>, %arg6: memref<4x64x256xf32, #tpu.memory_space<vmem>>, %arg7: memref<2x128x64xf32, #tpu.memory_space<vmem>>, %arg8: memref<1x64x64xf32, #tpu.memory_space<vmem>>) attributes {dimension_semantics = [#tpu.dimension_semantics<parallel>], iteration_bounds = array<i64: 2>, scalar_prefetch = 0 : i64, scratch_operands = 0 : i64, tpu.core_type = #tpu.core_type<tc>, window_params = [{transform_indices = @transform_0, window_bounds = array<i64: 1, 18, 18, 18>}, {pipeline_mode = #tpu.pipeline_mode<synchronous>, transform_indices = @transform_1, window_bounds = array<i64: 9, 18, 128>}, {pipeline_mode = #tpu.pipeline_mode<synchronous>, transform_indices = @transform_2, window_bounds = array<i64: 1, 128>}, {transform_indices = @transform_3, window_bounds = array<i64: 1, 256, 16>}, {pipeline_mode = #tpu.pipeline_mode<synchronous>, transform_indices = @transform_4, window_bounds = array<i64: 16, 128>}, {pipeline_mode = #tpu.pipeline_mode<synchronous>, transform_indices = @transform_5, window_bounds = array<i64: 4, 64, 256>}, {pipeline_mode = #tpu.pipeline_mode<synchronous>, transform_indices = @transform_6, window_bounds = array<i64: 2, 128, 64>}, {transform_indices = @transform_7, window_bounds = array<i64: 1, 64, 64>}]} {
    %c0 = arith.constant 0 : index
    %c0_0 = arith.constant 0 : index
    %c0_1 = arith.constant 0 : index
    %c0_2 = arith.constant 0 : index
    %0 = vector.load %arg1[%c0, %c0_0, %c0_1, %c0_2] : memref<1x18x18x18xf32, #tpu.memory_space<vmem>>, vector<1x16x16x18xf32>
    %1 = vector.shape_cast %0 : vector<1x16x16x18xf32> to vector<16x16x18xf32>
    %2 = vector.shape_cast %1 : vector<16x16x18xf32> to vector<256x18xf32>
    %c0_3 = arith.constant 0 : index
    %c0_4 = arith.constant 0 : index
    %c0_5 = arith.constant 0 : index
    %3 = vector.load %arg2[%c0_3, %c0_4, %c0_5] : memref<9x18x128xf32, #tpu.memory_space<vmem>>, vector<1x18x128xf32>
    %4 = vector.shape_cast %3 : vector<1x18x128xf32> to vector<18x128xf32>
    %cst = arith.constant dense<0.000000e+00> : vector<256x128xf32>
    %5 = tpu.matmul %2, %4, %cst {dimension_numbers = #tpu.dot_dimension_numbers<[1], [0], [0], [1], [0, 0, 1, 1], [], []>} : vector<256x18xf32>, vector<18x128xf32>, vector<256x128xf32> -> vector<256x128xf32>
    %c0_6 = arith.constant 0 : index
    %c0_7 = arith.constant 0 : index
    %c1 = arith.constant 1 : index
    %c0_8 = arith.constant 0 : index
    %6 = vector.load %arg1[%c0_6, %c0_7, %c1, %c0_8] : memref<1x18x18x18xf32, #tpu.memory_space<vmem>>, vector<1x16x16x18xf32>
    %7 = vector.shape_cast %6 : vector<1x16x16x18xf32> to vector<16x16x18xf32>
    %8 = vector.shape_cast %7 : vector<16x16x18xf32> to vector<256x18xf32>
    %c1_9 = arith.constant 1 : index
    %c0_10 = arith.constant 0 : index
    %c0_11 = arith.constant 0 : index
    %9 = vector.load %arg2[%c1_9, %c0_10, %c0_11] : memref<9x18x128xf32, #tpu.memory_space<vmem>>, vector<1x18x128xf32>
    %10 = vector.shape_cast %9 : vector<1x18x128xf32> to vector<18x128xf32>
    %cst_12 = arith.constant dense<0.000000e+00> : vector<256x128xf32>
    %11 = tpu.matmul %8, %10, %cst_12 {dimension_numbers = #tpu.dot_dimension_numbers<[1], [0], [0], [1], [0, 0, 1, 1], [], []>} : vector<256x18xf32>, vector<18x128xf32>, vector<256x128xf32> -> vector<256x128xf32>
    %12 = arith.addf %5, %11 : vector<256x128xf32>
    %c0_13 = arith.constant 0 : index
    %c0_14 = arith.constant 0 : index
    %c2 = arith.constant 2 : index
    %c0_15 = arith.constant 0 : index
    %13 = vector.load %arg1[%c0_13, %c0_14, %c2, %c0_15] : memref<1x18x18x18xf32, #tpu.memory_space<vmem>>, vector<1x16x16x18xf32>
    %14 = vector.shape_cast %13 : vector<1x16x16x18xf32> to vector<16x16x18xf32>
    %15 = vector.shape_cast %14 : vector<16x16x18xf32> to vector<256x18xf32>
    %c2_16 = arith.constant 2 : index
    %c0_17 = arith.constant 0 : index
    %c0_18 = arith.constant 0 : index
    %16 = vector.load %arg2[%c2_16, %c0_17, %c0_18] : memref<9x18x128xf32, #tpu.memory_space<vmem>>, vector<1x18x128xf32>
    %17 = vector.shape_cast %16 : vector<1x18x128xf32> to vector<18x128xf32>
    %cst_19 = arith.constant dense<0.000000e+00> : vector<256x128xf32>
    %18 = tpu.matmul %15, %17, %cst_19 {dimension_numbers = #tpu.dot_dimension_numbers<[1], [0], [0], [1], [0, 0, 1, 1], [], []>} : vector<256x18xf32>, vector<18x128xf32>, vector<256x128xf32> -> vector<256x128xf32>
    %19 = arith.addf %12, %18 : vector<256x128xf32>
    %c0_20 = arith.constant 0 : index
    %c1_21 = arith.constant 1 : index
    %c0_22 = arith.constant 0 : index
    %c0_23 = arith.constant 0 : index
    %20 = vector.load %arg1[%c0_20, %c1_21, %c0_22, %c0_23] : memref<1x18x18x18xf32, #tpu.memory_space<vmem>>, vector<1x16x16x18xf32>
    %21 = vector.shape_cast %20 : vector<1x16x16x18xf32> to vector<16x16x18xf32>
    %22 = vector.shape_cast %21 : vector<16x16x18xf32> to vector<256x18xf32>
    %c3 = arith.constant 3 : index
    %c0_24 = arith.constant 0 : index
    %c0_25 = arith.constant 0 : index
    %23 = vector.load %arg2[%c3, %c0_24, %c0_25] : memref<9x18x128xf32, #tpu.memory_space<vmem>>, vector<1x18x128xf32>
    %24 = vector.shape_cast %23 : vector<1x18x128xf32> to vector<18x128xf32>
    %cst_26 = arith.constant dense<0.000000e+00> : vector<256x128xf32>
    %25 = tpu.matmul %22, %24, %cst_26 {dimension_numbers = #tpu.dot_dimension_numbers<[1], [0], [0], [1], [0, 0, 1, 1], [], []>} : vector<256x18xf32>, vector<18x128xf32>, vector<256x128xf32> -> vector<256x128xf32>
    %26 = arith.addf %19, %25 : vector<256x128xf32>
    %c0_27 = arith.constant 0 : index
    %c1_28 = arith.constant 1 : index
    %c1_29 = arith.constant 1 : index
    %c0_30 = arith.constant 0 : index
    %27 = vector.load %arg1[%c0_27, %c1_28, %c1_29, %c0_30] : memref<1x18x18x18xf32, #tpu.memory_space<vmem>>, vector<1x16x16x18xf32>
    %28 = vector.shape_cast %27 : vector<1x16x16x18xf32> to vector<16x16x18xf32>
    %29 = vector.shape_cast %28 : vector<16x16x18xf32> to vector<256x18xf32>
    %c4 = arith.constant 4 : index
    %c0_31 = arith.constant 0 : index
    %c0_32 = arith.constant 0 : index
    %30 = vector.load %arg2[%c4, %c0_31, %c0_32] : memref<9x18x128xf32, #tpu.memory_space<vmem>>, vector<1x18x128xf32>
    %31 = vector.shape_cast %30 : vector<1x18x128xf32> to vector<18x128xf32>
    %cst_33 = arith.constant dense<0.000000e+00> : vector<256x128xf32>
    %32 = tpu.matmul %29, %31, %cst_33 {dimension_numbers = #tpu.dot_dimension_numbers<[1], [0], [0], [1], [0, 0, 1, 1], [], []>} : vector<256x18xf32>, vector<18x128xf32>, vector<256x128xf32> -> vector<256x128xf32>
    %33 = arith.addf %26, %32 : vector<256x128xf32>
    %c0_34 = arith.constant 0 : index
    %c1_35 = arith.constant 1 : index
    %c2_36 = arith.constant 2 : index
    %c0_37 = arith.constant 0 : index
    %34 = vector.load %arg1[%c0_34, %c1_35, %c2_36, %c0_37] : memref<1x18x18x18xf32, #tpu.memory_space<vmem>>, vector<1x16x16x18xf32>
    %35 = vector.shape_cast %34 : vector<1x16x16x18xf32> to vector<16x16x18xf32>
    %36 = vector.shape_cast %35 : vector<16x16x18xf32> to vector<256x18xf32>
    %c5 = arith.constant 5 : index
    %c0_38 = arith.constant 0 : index
    %c0_39 = arith.constant 0 : index
    %37 = vector.load %arg2[%c5, %c0_38, %c0_39] : memref<9x18x128xf32, #tpu.memory_space<vmem>>, vector<1x18x128xf32>
    %38 = vector.shape_cast %37 : vector<1x18x128xf32> to vector<18x128xf32>
    %cst_40 = arith.constant dense<0.000000e+00> : vector<256x128xf32>
    %39 = tpu.matmul %36, %38, %cst_40 {dimension_numbers = #tpu.dot_dimension_numbers<[1], [0], [0], [1], [0, 0, 1, 1], [], []>} : vector<256x18xf32>, vector<18x128xf32>, vector<256x128xf32> -> vector<256x128xf32>
    %40 = arith.addf %33, %39 : vector<256x128xf32>
    %c0_41 = arith.constant 0 : index
    %c2_42 = arith.constant 2 : index
    %c0_43 = arith.constant 0 : index
    %c0_44 = arith.constant 0 : index
    %41 = vector.load %arg1[%c0_41, %c2_42, %c0_43, %c0_44] : memref<1x18x18x18xf32, #tpu.memory_space<vmem>>, vector<1x16x16x18xf32>
    %42 = vector.shape_cast %41 : vector<1x16x16x18xf32> to vector<16x16x18xf32>
    %43 = vector.shape_cast %42 : vector<16x16x18xf32> to vector<256x18xf32>
    %c6 = arith.constant 6 : index
    %c0_45 = arith.constant 0 : index
    %c0_46 = arith.constant 0 : index
    %44 = vector.load %arg2[%c6, %c0_45, %c0_46] : memref<9x18x128xf32, #tpu.memory_space<vmem>>, vector<1x18x128xf32>
    %45 = vector.shape_cast %44 : vector<1x18x128xf32> to vector<18x128xf32>
    %cst_47 = arith.constant dense<0.000000e+00> : vector<256x128xf32>
    %46 = tpu.matmul %43, %45, %cst_47 {dimension_numbers = #tpu.dot_dimension_numbers<[1], [0], [0], [1], [0, 0, 1, 1], [], []>} : vector<256x18xf32>, vector<18x128xf32>, vector<256x128xf32> -> vector<256x128xf32>
    %47 = arith.addf %40, %46 : vector<256x128xf32>
    %c0_48 = arith.constant 0 : index
    %c2_49 = arith.constant 2 : index
    %c1_50 = arith.constant 1 : index
    %c0_51 = arith.constant 0 : index
    %48 = vector.load %arg1[%c0_48, %c2_49, %c1_50, %c0_51] : memref<1x18x18x18xf32, #tpu.memory_space<vmem>>, vector<1x16x16x18xf32>
    %49 = vector.shape_cast %48 : vector<1x16x16x18xf32> to vector<16x16x18xf32>
    %50 = vector.shape_cast %49 : vector<16x16x18xf32> to vector<256x18xf32>
    %c7 = arith.constant 7 : index
    %c0_52 = arith.constant 0 : index
    %c0_53 = arith.constant 0 : index
    %51 = vector.load %arg2[%c7, %c0_52, %c0_53] : memref<9x18x128xf32, #tpu.memory_space<vmem>>, vector<1x18x128xf32>
    %52 = vector.shape_cast %51 : vector<1x18x128xf32> to vector<18x128xf32>
    %cst_54 = arith.constant dense<0.000000e+00> : vector<256x128xf32>
    %53 = tpu.matmul %50, %52, %cst_54 {dimension_numbers = #tpu.dot_dimension_numbers<[1], [0], [0], [1], [0, 0, 1, 1], [], []>} : vector<256x18xf32>, vector<18x128xf32>, vector<256x128xf32> -> vector<256x128xf32>
    %54 = arith.addf %47, %53 : vector<256x128xf32>
    %c0_55 = arith.constant 0 : index
    %c2_56 = arith.constant 2 : index
    %c2_57 = arith.constant 2 : index
    %c0_58 = arith.constant 0 : index
    %55 = vector.load %arg1[%c0_55, %c2_56, %c2_57, %c0_58] : memref<1x18x18x18xf32, #tpu.memory_space<vmem>>, vector<1x16x16x18xf32>
    %56 = vector.shape_cast %55 : vector<1x16x16x18xf32> to vector<16x16x18xf32>
    %57 = vector.shape_cast %56 : vector<16x16x18xf32> to vector<256x18xf32>
    %c8 = arith.constant 8 : index
    %c0_59 = arith.constant 0 : index
    %c0_60 = arith.constant 0 : index
    %58 = vector.load %arg2[%c8, %c0_59, %c0_60] : memref<9x18x128xf32, #tpu.memory_space<vmem>>, vector<1x18x128xf32>
    %59 = vector.shape_cast %58 : vector<1x18x128xf32> to vector<18x128xf32>
    %cst_61 = arith.constant dense<0.000000e+00> : vector<256x128xf32>
    %60 = tpu.matmul %57, %59, %cst_61 {dimension_numbers = #tpu.dot_dimension_numbers<[1], [0], [0], [1], [0, 0, 1, 1], [], []>} : vector<256x18xf32>, vector<18x128xf32>, vector<256x128xf32> -> vector<256x128xf32>
    %61 = arith.addf %54, %60 : vector<256x128xf32>
    %c0_62 = arith.constant 0 : index
    %c0_63 = arith.constant 0 : index
    %62 = vector.load %arg3[%c0_62, %c0_63] : memref<1x128xf32, #tpu.memory_space<vmem>>, vector<1x128xf32>
    %63 = vector.broadcast %62 : vector<1x128xf32> to vector<256x128xf32>
    %64 = arith.addf %61, %63 : vector<256x128xf32>
    %c0_64 = arith.constant 0 : index
    %c0_65 = arith.constant 0 : index
    %c0_66 = arith.constant 0 : index
    %65 = vector.load %arg4[%c0_64, %c0_65, %c0_66] : memref<1x256x16xf32, #tpu.memory_space<vmem>>, vector<1x256x16xf32>
    %66 = vector.shape_cast %65 : vector<1x256x16xf32> to vector<256x16xf32>
    %c0_67 = arith.constant 0 : index
    %c0_68 = arith.constant 0 : index
    %67 = vector.load %arg5[%c0_67, %c0_68] : memref<16x128xf32, #tpu.memory_space<vmem>>, vector<16x128xf32>
    %cst_69 = arith.constant dense<0.000000e+00> : vector<256x128xf32>
    %68 = tpu.matmul %66, %67, %cst_69 {dimension_numbers = #tpu.dot_dimension_numbers<[1], [0], [0], [1], [0, 0, 1, 1], [], []>} : vector<256x16xf32>, vector<16x128xf32>, vector<256x128xf32> -> vector<256x128xf32>
    %69 = arith.negf %68 : vector<256x128xf32>
    %70 = math.exp %69 : vector<256x128xf32>
    %cst_70 = arith.constant 1.000000e+00 : f32
    %71 = vector.broadcast %cst_70 : f32 to vector<256x128xf32>
    %72 = arith.addf %71, %70 : vector<256x128xf32>
    %73 = arith.divf %71, %72 : vector<256x128xf32>
    %74 = arith.mulf %64, %73 : vector<256x128xf32>
    %cst_71 = arith.constant 0.000000e+00 : f32
    %75 = vector.broadcast %cst_71 : f32 to vector<256x128xf32>
    %76 = arith.maximumf %74, %75 : vector<256x128xf32>
    %c0_72 = arith.constant 0 : index
    %c0_73 = arith.constant 0 : index
    %c0_74 = arith.constant 0 : index
    %77 = vector.load %arg6[%c0_72, %c0_73, %c0_74] : memref<4x64x256xf32, #tpu.memory_space<vmem>>, vector<1x64x256xf32>
    %78 = vector.shape_cast %77 : vector<1x64x256xf32> to vector<64x256xf32>
    %cst_75 = arith.constant dense<0.000000e+00> : vector<64x128xf32>
    %79 = tpu.matmul %78, %76, %cst_75 {dimension_numbers = #tpu.dot_dimension_numbers<[1], [0], [0], [1], [0, 0, 1, 1], [], []>} : vector<64x256xf32>, vector<256x128xf32>, vector<64x128xf32> -> vector<64x128xf32>
    %c1_76 = arith.constant 1 : index
    %c0_77 = arith.constant 0 : index
    %c0_78 = arith.constant 0 : index
    %80 = vector.load %arg6[%c1_76, %c0_77, %c0_78] : memref<4x64x256xf32, #tpu.memory_space<vmem>>, vector<1x64x256xf32>
    %81 = vector.shape_cast %80 : vector<1x64x256xf32> to vector<64x256xf32>
    %cst_79 = arith.constant dense<0.000000e+00> : vector<64x128xf32>
    %82 = tpu.matmul %81, %76, %cst_79 {dimension_numbers = #tpu.dot_dimension_numbers<[1], [0], [0], [1], [0, 0, 1, 1], [], []>} : vector<64x256xf32>, vector<256x128xf32>, vector<64x128xf32> -> vector<64x128xf32>
    %83 = arith.maximumf %79, %82 : vector<64x128xf32>
    %c2_80 = arith.constant 2 : index
    %c0_81 = arith.constant 0 : index
    %c0_82 = arith.constant 0 : index
    %84 = vector.load %arg6[%c2_80, %c0_81, %c0_82] : memref<4x64x256xf32, #tpu.memory_space<vmem>>, vector<1x64x256xf32>
    %85 = vector.shape_cast %84 : vector<1x64x256xf32> to vector<64x256xf32>
    %cst_83 = arith.constant dense<0.000000e+00> : vector<64x128xf32>
    %86 = tpu.matmul %85, %76, %cst_83 {dimension_numbers = #tpu.dot_dimension_numbers<[1], [0], [0], [1], [0, 0, 1, 1], [], []>} : vector<64x256xf32>, vector<256x128xf32>, vector<64x128xf32> -> vector<64x128xf32>
    %87 = arith.maximumf %83, %86 : vector<64x128xf32>
    %c3_84 = arith.constant 3 : index
    %c0_85 = arith.constant 0 : index
    %c0_86 = arith.constant 0 : index
    %88 = vector.load %arg6[%c3_84, %c0_85, %c0_86] : memref<4x64x256xf32, #tpu.memory_space<vmem>>, vector<1x64x256xf32>
    %89 = vector.shape_cast %88 : vector<1x64x256xf32> to vector<64x256xf32>
    %cst_87 = arith.constant dense<0.000000e+00> : vector<64x128xf32>
    %90 = tpu.matmul %89, %76, %cst_87 {dimension_numbers = #tpu.dot_dimension_numbers<[1], [0], [0], [1], [0, 0, 1, 1], [], []>} : vector<64x256xf32>, vector<256x128xf32>, vector<64x128xf32> -> vector<64x128xf32>
    %91 = arith.maximumf %87, %90 : vector<64x128xf32>
    %c0_88 = arith.constant 0 : index
    %c0_89 = arith.constant 0 : index
    %c0_90 = arith.constant 0 : index
    %92 = vector.load %arg7[%c0_88, %c0_89, %c0_90] : memref<2x128x64xf32, #tpu.memory_space<vmem>>, vector<1x128x64xf32>
    %93 = vector.shape_cast %92 : vector<1x128x64xf32> to vector<128x64xf32>
    %cst_91 = arith.constant dense<0.000000e+00> : vector<64x64xf32>
    %94 = tpu.matmul %91, %93, %cst_91 {dimension_numbers = #tpu.dot_dimension_numbers<[1], [0], [0], [1], [0, 0, 1, 1], [], []>} : vector<64x128xf32>, vector<128x64xf32>, vector<64x64xf32> -> vector<64x64xf32>
    %c1_92 = arith.constant 1 : index
    %c0_93 = arith.constant 0 : index
    %c0_94 = arith.constant 0 : index
    %95 = vector.load %arg7[%c1_92, %c0_93, %c0_94] : memref<2x128x64xf32, #tpu.memory_space<vmem>>, vector<1x128x64xf32>
    %96 = vector.shape_cast %95 : vector<1x128x64xf32> to vector<128x64xf32>
    %cst_95 = arith.constant dense<0.000000e+00> : vector<64x64xf32>
    %97 = tpu.matmul %91, %96, %cst_95 {dimension_numbers = #tpu.dot_dimension_numbers<[1], [0], [0], [1], [0, 0, 1, 1], [], []>} : vector<64x128xf32>, vector<128x64xf32>, vector<64x64xf32> -> vector<64x64xf32>
    %98 = arith.maximumf %94, %97 : vector<64x64xf32>
    %c0_96 = arith.constant 0 : index
    %c0_97 = arith.constant 0 : index
    %c0_98 = arith.constant 0 : index
    %99 = vector.load %arg8[%c0_96, %c0_97, %c0_98] : memref<1x64x64xf32, #tpu.memory_space<vmem>>, vector<1x64x64xf32>
    %100 = vector.shape_cast %99 : vector<1x64x64xf32> to vector<64x64xf32>
    %101 = vector.shape_cast %98 : vector<64x64xf32> to vector<1x64x64xf32>
    tpu.vector_store %arg8[%c0_96, %c0_97, %c0_98], %101 {strides = array<i32>} : memref<1x64x64xf32, #tpu.memory_space<vmem>>, vector<1x64x64xf32>,
    return
  }
  func.func @transform_0(%arg0: i32) -> (i32, i32, i32, i32) {
    %c0_i32 = arith.constant 0 : i32
    %c0_i32_0 = arith.constant 0 : i32
    %c0_i32_1 = arith.constant 0 : i32
    %c0_i32_2 = arith.constant 0 : i32
    return %arg0, %c0_i32, %c0_i32_0, %c0_i32_1 : i32, i32, i32, i32
  }
  func.func @transform_1(%arg0: i32) -> (i32, i32, i32) {
    %c0_i32 = arith.constant 0 : i32
    %c0_i32_0 = arith.constant 0 : i32
    %c0_i32_1 = arith.constant 0 : i32
    %c0_i32_2 = arith.constant 0 : i32
    return %c0_i32, %c0_i32_0, %c0_i32_1 : i32, i32, i32
  }
  func.func @transform_2(%arg0: i32) -> (i32, i32) {
    %c0_i32 = arith.constant 0 : i32
    %c0_i32_0 = arith.constant 0 : i32
    %c0_i32_1 = arith.constant 0 : i32
    return %c0_i32, %c0_i32_0 : i32, i32
  }
  func.func @transform_3(%arg0: i32) -> (i32, i32, i32) {
    %c0_i32 = arith.constant 0 : i32
    %c0_i32_0 = arith.constant 0 : i32
    %c0_i32_1 = arith.constant 0 : i32
    return %arg0, %c0_i32, %c0_i32_0 : i32, i32, i32
  }
  func.func @transform_4(%arg0: i32) -> (i32, i32) {
    %c0_i32 = arith.constant 0 : i32
    %c0_i32_0 = arith.constant 0 : i32
    %c0_i32_1 = arith.constant 0 : i32
    return %c0_i32, %c0_i32_0 : i32, i32
  }
  func.func @transform_5(%arg0: i32) -> (i32, i32, i32) {
    %c0_i32 = arith.constant 0 : i32
    %c0_i32_0 = arith.constant 0 : i32
    %c0_i32_1 = arith.constant 0 : i32
    %c0_i32_2 = arith.constant 0 : i32
    return %c0_i32, %c0_i32_0, %c0_i32_1 : i32, i32, i32
  }
  func.func @transform_6(%arg0: i32) -> (i32, i32, i32) {
    %c0_i32 = arith.constant 0 : i32
    %c0_i32_0 = arith.constant 0 : i32
    %c0_i32_1 = arith.constant 0 : i32
    %c0_i32_2 = arith.constant 0 : i32
    return %c0_i32, %c0_i32_0, %c0_i32_1 : i32, i32, i32
  }
  func.func @transform_7(%arg0: i32) -> (i32, i32, i32) {
    %c0_i32 = arith.constant 0 : i32
    %c0_i32_0 = arith.constant 0 : i32
    %c0_i32_1 = arith.constant 0 : i32
    return %arg0, %c0_i32, %c0_i32_0 : i32, i32, i32
  }
}

module attributes {stable_mosaic.version = 11 : i64} {
  func.func @_feature_layer_kernel(%arg0: i32, %arg1: memref<1x10x10x80xf32, #tpu.memory_space<vmem>>, %arg2: memref<9x80x128xf32, #tpu.memory_space<vmem>>, %arg3: memref<1x128xf32, #tpu.memory_space<vmem>>, %arg4: memref<1x64x8xf32, #tpu.memory_space<vmem>>, %arg5: memref<8x128xf32, #tpu.memory_space<vmem>>, %arg6: memref<4x16x64xf32, #tpu.memory_space<vmem>>, %arg7: memref<2x128x64xf32, #tpu.memory_space<vmem>>, %arg8: memref<1x16x64xf32, #tpu.memory_space<vmem>>) attributes {dimension_semantics = [#tpu.dimension_semantics<parallel>], iteration_bounds = array<i64: 2>, scalar_prefetch = 0 : i64, scratch_operands = 0 : i64, tpu.core_type = #tpu.core_type<tc>, window_params = [{transform_indices = @transform_0, window_bounds = array<i64: 1, 10, 10, 80>}, {pipeline_mode = #tpu.pipeline_mode<synchronous>, transform_indices = @transform_1, window_bounds = array<i64: 9, 80, 128>}, {pipeline_mode = #tpu.pipeline_mode<synchronous>, transform_indices = @transform_2, window_bounds = array<i64: 1, 128>}, {transform_indices = @transform_3, window_bounds = array<i64: 1, 64, 8>}, {pipeline_mode = #tpu.pipeline_mode<synchronous>, transform_indices = @transform_4, window_bounds = array<i64: 8, 128>}, {pipeline_mode = #tpu.pipeline_mode<synchronous>, transform_indices = @transform_5, window_bounds = array<i64: 4, 16, 64>}, {pipeline_mode = #tpu.pipeline_mode<synchronous>, transform_indices = @transform_6, window_bounds = array<i64: 2, 128, 64>}, {transform_indices = @transform_7, window_bounds = array<i64: 1, 16, 64>}]} {
    %c0 = arith.constant 0 : index
    %c0_0 = arith.constant 0 : index
    %c0_1 = arith.constant 0 : index
    %c0_2 = arith.constant 0 : index
    %0 = vector.load %arg1[%c0, %c0_0, %c0_1, %c0_2] : memref<1x10x10x80xf32, #tpu.memory_space<vmem>>, vector<1x8x8x80xf32>
    %1 = vector.shape_cast %0 : vector<1x8x8x80xf32> to vector<8x8x80xf32>
    %2 = vector.shape_cast %1 : vector<8x8x80xf32> to vector<64x80xf32>
    %c0_3 = arith.constant 0 : index
    %c0_4 = arith.constant 0 : index
    %c0_5 = arith.constant 0 : index
    %3 = vector.load %arg2[%c0_3, %c0_4, %c0_5] : memref<9x80x128xf32, #tpu.memory_space<vmem>>, vector<1x80x128xf32>
    %4 = vector.shape_cast %3 : vector<1x80x128xf32> to vector<80x128xf32>
    %cst = arith.constant dense<0.000000e+00> : vector<64x128xf32>
    %5 = tpu.matmul %2, %4, %cst {dimension_numbers = #tpu.dot_dimension_numbers<[1], [0], [0], [1], [0, 0, 1, 1], [], []>} : vector<64x80xf32>, vector<80x128xf32>, vector<64x128xf32> -> vector<64x128xf32>
    %c0_6 = arith.constant 0 : index
    %c0_7 = arith.constant 0 : index
    %c1 = arith.constant 1 : index
    %c0_8 = arith.constant 0 : index
    %6 = vector.load %arg1[%c0_6, %c0_7, %c1, %c0_8] : memref<1x10x10x80xf32, #tpu.memory_space<vmem>>, vector<1x8x8x80xf32>
    %7 = vector.shape_cast %6 : vector<1x8x8x80xf32> to vector<8x8x80xf32>
    %8 = vector.shape_cast %7 : vector<8x8x80xf32> to vector<64x80xf32>
    %c1_9 = arith.constant 1 : index
    %c0_10 = arith.constant 0 : index
    %c0_11 = arith.constant 0 : index
    %9 = vector.load %arg2[%c1_9, %c0_10, %c0_11] : memref<9x80x128xf32, #tpu.memory_space<vmem>>, vector<1x80x128xf32>
    %10 = vector.shape_cast %9 : vector<1x80x128xf32> to vector<80x128xf32>
    %cst_12 = arith.constant dense<0.000000e+00> : vector<64x128xf32>
    %11 = tpu.matmul %8, %10, %cst_12 {dimension_numbers = #tpu.dot_dimension_numbers<[1], [0], [0], [1], [0, 0, 1, 1], [], []>} : vector<64x80xf32>, vector<80x128xf32>, vector<64x128xf32> -> vector<64x128xf32>
    %12 = arith.addf %5, %11 : vector<64x128xf32>
    %c0_13 = arith.constant 0 : index
    %c0_14 = arith.constant 0 : index
    %c2 = arith.constant 2 : index
    %c0_15 = arith.constant 0 : index
    %13 = vector.load %arg1[%c0_13, %c0_14, %c2, %c0_15] : memref<1x10x10x80xf32, #tpu.memory_space<vmem>>, vector<1x8x8x80xf32>
    %14 = vector.shape_cast %13 : vector<1x8x8x80xf32> to vector<8x8x80xf32>
    %15 = vector.shape_cast %14 : vector<8x8x80xf32> to vector<64x80xf32>
    %c2_16 = arith.constant 2 : index
    %c0_17 = arith.constant 0 : index
    %c0_18 = arith.constant 0 : index
    %16 = vector.load %arg2[%c2_16, %c0_17, %c0_18] : memref<9x80x128xf32, #tpu.memory_space<vmem>>, vector<1x80x128xf32>
    %17 = vector.shape_cast %16 : vector<1x80x128xf32> to vector<80x128xf32>
    %cst_19 = arith.constant dense<0.000000e+00> : vector<64x128xf32>
    %18 = tpu.matmul %15, %17, %cst_19 {dimension_numbers = #tpu.dot_dimension_numbers<[1], [0], [0], [1], [0, 0, 1, 1], [], []>} : vector<64x80xf32>, vector<80x128xf32>, vector<64x128xf32> -> vector<64x128xf32>
    %19 = arith.addf %12, %18 : vector<64x128xf32>
    %c0_20 = arith.constant 0 : index
    %c1_21 = arith.constant 1 : index
    %c0_22 = arith.constant 0 : index
    %c0_23 = arith.constant 0 : index
    %20 = vector.load %arg1[%c0_20, %c1_21, %c0_22, %c0_23] : memref<1x10x10x80xf32, #tpu.memory_space<vmem>>, vector<1x8x8x80xf32>
    %21 = vector.shape_cast %20 : vector<1x8x8x80xf32> to vector<8x8x80xf32>
    %22 = vector.shape_cast %21 : vector<8x8x80xf32> to vector<64x80xf32>
    %c3 = arith.constant 3 : index
    %c0_24 = arith.constant 0 : index
    %c0_25 = arith.constant 0 : index
    %23 = vector.load %arg2[%c3, %c0_24, %c0_25] : memref<9x80x128xf32, #tpu.memory_space<vmem>>, vector<1x80x128xf32>
    %24 = vector.shape_cast %23 : vector<1x80x128xf32> to vector<80x128xf32>
    %cst_26 = arith.constant dense<0.000000e+00> : vector<64x128xf32>
    %25 = tpu.matmul %22, %24, %cst_26 {dimension_numbers = #tpu.dot_dimension_numbers<[1], [0], [0], [1], [0, 0, 1, 1], [], []>} : vector<64x80xf32>, vector<80x128xf32>, vector<64x128xf32> -> vector<64x128xf32>
    %26 = arith.addf %19, %25 : vector<64x128xf32>
    %c0_27 = arith.constant 0 : index
    %c1_28 = arith.constant 1 : index
    %c1_29 = arith.constant 1 : index
    %c0_30 = arith.constant 0 : index
    %27 = vector.load %arg1[%c0_27, %c1_28, %c1_29, %c0_30] : memref<1x10x10x80xf32, #tpu.memory_space<vmem>>, vector<1x8x8x80xf32>
    %28 = vector.shape_cast %27 : vector<1x8x8x80xf32> to vector<8x8x80xf32>
    %29 = vector.shape_cast %28 : vector<8x8x80xf32> to vector<64x80xf32>
    %c4 = arith.constant 4 : index
    %c0_31 = arith.constant 0 : index
    %c0_32 = arith.constant 0 : index
    %30 = vector.load %arg2[%c4, %c0_31, %c0_32] : memref<9x80x128xf32, #tpu.memory_space<vmem>>, vector<1x80x128xf32>
    %31 = vector.shape_cast %30 : vector<1x80x128xf32> to vector<80x128xf32>
    %cst_33 = arith.constant dense<0.000000e+00> : vector<64x128xf32>
    %32 = tpu.matmul %29, %31, %cst_33 {dimension_numbers = #tpu.dot_dimension_numbers<[1], [0], [0], [1], [0, 0, 1, 1], [], []>} : vector<64x80xf32>, vector<80x128xf32>, vector<64x128xf32> -> vector<64x128xf32>
    %33 = arith.addf %26, %32 : vector<64x128xf32>
    %c0_34 = arith.constant 0 : index
    %c1_35 = arith.constant 1 : index
    %c2_36 = arith.constant 2 : index
    %c0_37 = arith.constant 0 : index
    %34 = vector.load %arg1[%c0_34, %c1_35, %c2_36, %c0_37] : memref<1x10x10x80xf32, #tpu.memory_space<vmem>>, vector<1x8x8x80xf32>
    %35 = vector.shape_cast %34 : vector<1x8x8x80xf32> to vector<8x8x80xf32>
    %36 = vector.shape_cast %35 : vector<8x8x80xf32> to vector<64x80xf32>
    %c5 = arith.constant 5 : index
    %c0_38 = arith.constant 0 : index
    %c0_39 = arith.constant 0 : index
    %37 = vector.load %arg2[%c5, %c0_38, %c0_39] : memref<9x80x128xf32, #tpu.memory_space<vmem>>, vector<1x80x128xf32>
    %38 = vector.shape_cast %37 : vector<1x80x128xf32> to vector<80x128xf32>
    %cst_40 = arith.constant dense<0.000000e+00> : vector<64x128xf32>
    %39 = tpu.matmul %36, %38, %cst_40 {dimension_numbers = #tpu.dot_dimension_numbers<[1], [0], [0], [1], [0, 0, 1, 1], [], []>} : vector<64x80xf32>, vector<80x128xf32>, vector<64x128xf32> -> vector<64x128xf32>
    %40 = arith.addf %33, %39 : vector<64x128xf32>
    %c0_41 = arith.constant 0 : index
    %c2_42 = arith.constant 2 : index
    %c0_43 = arith.constant 0 : index
    %c0_44 = arith.constant 0 : index
    %41 = vector.load %arg1[%c0_41, %c2_42, %c0_43, %c0_44] : memref<1x10x10x80xf32, #tpu.memory_space<vmem>>, vector<1x8x8x80xf32>
    %42 = vector.shape_cast %41 : vector<1x8x8x80xf32> to vector<8x8x80xf32>
    %43 = vector.shape_cast %42 : vector<8x8x80xf32> to vector<64x80xf32>
    %c6 = arith.constant 6 : index
    %c0_45 = arith.constant 0 : index
    %c0_46 = arith.constant 0 : index
    %44 = vector.load %arg2[%c6, %c0_45, %c0_46] : memref<9x80x128xf32, #tpu.memory_space<vmem>>, vector<1x80x128xf32>
    %45 = vector.shape_cast %44 : vector<1x80x128xf32> to vector<80x128xf32>
    %cst_47 = arith.constant dense<0.000000e+00> : vector<64x128xf32>
    %46 = tpu.matmul %43, %45, %cst_47 {dimension_numbers = #tpu.dot_dimension_numbers<[1], [0], [0], [1], [0, 0, 1, 1], [], []>} : vector<64x80xf32>, vector<80x128xf32>, vector<64x128xf32> -> vector<64x128xf32>
    %47 = arith.addf %40, %46 : vector<64x128xf32>
    %c0_48 = arith.constant 0 : index
    %c2_49 = arith.constant 2 : index
    %c1_50 = arith.constant 1 : index
    %c0_51 = arith.constant 0 : index
    %48 = vector.load %arg1[%c0_48, %c2_49, %c1_50, %c0_51] : memref<1x10x10x80xf32, #tpu.memory_space<vmem>>, vector<1x8x8x80xf32>
    %49 = vector.shape_cast %48 : vector<1x8x8x80xf32> to vector<8x8x80xf32>
    %50 = vector.shape_cast %49 : vector<8x8x80xf32> to vector<64x80xf32>
    %c7 = arith.constant 7 : index
    %c0_52 = arith.constant 0 : index
    %c0_53 = arith.constant 0 : index
    %51 = vector.load %arg2[%c7, %c0_52, %c0_53] : memref<9x80x128xf32, #tpu.memory_space<vmem>>, vector<1x80x128xf32>
    %52 = vector.shape_cast %51 : vector<1x80x128xf32> to vector<80x128xf32>
    %cst_54 = arith.constant dense<0.000000e+00> : vector<64x128xf32>
    %53 = tpu.matmul %50, %52, %cst_54 {dimension_numbers = #tpu.dot_dimension_numbers<[1], [0], [0], [1], [0, 0, 1, 1], [], []>} : vector<64x80xf32>, vector<80x128xf32>, vector<64x128xf32> -> vector<64x128xf32>
    %54 = arith.addf %47, %53 : vector<64x128xf32>
    %c0_55 = arith.constant 0 : index
    %c2_56 = arith.constant 2 : index
    %c2_57 = arith.constant 2 : index
    %c0_58 = arith.constant 0 : index
    %55 = vector.load %arg1[%c0_55, %c2_56, %c2_57, %c0_58] : memref<1x10x10x80xf32, #tpu.memory_space<vmem>>, vector<1x8x8x80xf32>
    %56 = vector.shape_cast %55 : vector<1x8x8x80xf32> to vector<8x8x80xf32>
    %57 = vector.shape_cast %56 : vector<8x8x80xf32> to vector<64x80xf32>
    %c8 = arith.constant 8 : index
    %c0_59 = arith.constant 0 : index
    %c0_60 = arith.constant 0 : index
    %58 = vector.load %arg2[%c8, %c0_59, %c0_60] : memref<9x80x128xf32, #tpu.memory_space<vmem>>, vector<1x80x128xf32>
    %59 = vector.shape_cast %58 : vector<1x80x128xf32> to vector<80x128xf32>
    %cst_61 = arith.constant dense<0.000000e+00> : vector<64x128xf32>
    %60 = tpu.matmul %57, %59, %cst_61 {dimension_numbers = #tpu.dot_dimension_numbers<[1], [0], [0], [1], [0, 0, 1, 1], [], []>} : vector<64x80xf32>, vector<80x128xf32>, vector<64x128xf32> -> vector<64x128xf32>
    %61 = arith.addf %54, %60 : vector<64x128xf32>
    %c0_62 = arith.constant 0 : index
    %c0_63 = arith.constant 0 : index
    %62 = vector.load %arg3[%c0_62, %c0_63] : memref<1x128xf32, #tpu.memory_space<vmem>>, vector<1x128xf32>
    %63 = vector.broadcast %62 : vector<1x128xf32> to vector<64x128xf32>
    %64 = arith.addf %61, %63 : vector<64x128xf32>
    %c0_64 = arith.constant 0 : index
    %c0_65 = arith.constant 0 : index
    %c0_66 = arith.constant 0 : index
    %65 = vector.load %arg4[%c0_64, %c0_65, %c0_66] : memref<1x64x8xf32, #tpu.memory_space<vmem>>, vector<1x64x8xf32>
    %66 = vector.shape_cast %65 : vector<1x64x8xf32> to vector<64x8xf32>
    %c0_67 = arith.constant 0 : index
    %c0_68 = arith.constant 0 : index
    %67 = vector.load %arg5[%c0_67, %c0_68] : memref<8x128xf32, #tpu.memory_space<vmem>>, vector<8x128xf32>
    %cst_69 = arith.constant dense<0.000000e+00> : vector<64x128xf32>
    %68 = tpu.matmul %66, %67, %cst_69 {dimension_numbers = #tpu.dot_dimension_numbers<[1], [0], [0], [1], [0, 0, 1, 1], [], []>} : vector<64x8xf32>, vector<8x128xf32>, vector<64x128xf32> -> vector<64x128xf32>
    %69 = arith.negf %68 : vector<64x128xf32>
    %70 = math.exp %69 : vector<64x128xf32>
    %cst_70 = arith.constant 1.000000e+00 : f32
    %71 = vector.broadcast %cst_70 : f32 to vector<64x128xf32>
    %72 = arith.addf %71, %70 : vector<64x128xf32>
    %73 = arith.divf %71, %72 : vector<64x128xf32>
    %74 = arith.mulf %64, %73 : vector<64x128xf32>
    %cst_71 = arith.constant 0.000000e+00 : f32
    %75 = vector.broadcast %cst_71 : f32 to vector<64x128xf32>
    %76 = arith.maximumf %74, %75 : vector<64x128xf32>
    %c0_72 = arith.constant 0 : index
    %c0_73 = arith.constant 0 : index
    %c0_74 = arith.constant 0 : index
    %77 = vector.load %arg6[%c0_72, %c0_73, %c0_74] : memref<4x16x64xf32, #tpu.memory_space<vmem>>, vector<1x16x64xf32>
    %78 = vector.shape_cast %77 : vector<1x16x64xf32> to vector<16x64xf32>
    %cst_75 = arith.constant dense<0.000000e+00> : vector<16x128xf32>
    %79 = tpu.matmul %78, %76, %cst_75 {dimension_numbers = #tpu.dot_dimension_numbers<[1], [0], [0], [1], [0, 0, 1, 1], [], []>} : vector<16x64xf32>, vector<64x128xf32>, vector<16x128xf32> -> vector<16x128xf32>
    %c1_76 = arith.constant 1 : index
    %c0_77 = arith.constant 0 : index
    %c0_78 = arith.constant 0 : index
    %80 = vector.load %arg6[%c1_76, %c0_77, %c0_78] : memref<4x16x64xf32, #tpu.memory_space<vmem>>, vector<1x16x64xf32>
    %81 = vector.shape_cast %80 : vector<1x16x64xf32> to vector<16x64xf32>
    %cst_79 = arith.constant dense<0.000000e+00> : vector<16x128xf32>
    %82 = tpu.matmul %81, %76, %cst_79 {dimension_numbers = #tpu.dot_dimension_numbers<[1], [0], [0], [1], [0, 0, 1, 1], [], []>} : vector<16x64xf32>, vector<64x128xf32>, vector<16x128xf32> -> vector<16x128xf32>
    %83 = arith.maximumf %79, %82 : vector<16x128xf32>
    %c2_80 = arith.constant 2 : index
    %c0_81 = arith.constant 0 : index
    %c0_82 = arith.constant 0 : index
    %84 = vector.load %arg6[%c2_80, %c0_81, %c0_82] : memref<4x16x64xf32, #tpu.memory_space<vmem>>, vector<1x16x64xf32>
    %85 = vector.shape_cast %84 : vector<1x16x64xf32> to vector<16x64xf32>
    %cst_83 = arith.constant dense<0.000000e+00> : vector<16x128xf32>
    %86 = tpu.matmul %85, %76, %cst_83 {dimension_numbers = #tpu.dot_dimension_numbers<[1], [0], [0], [1], [0, 0, 1, 1], [], []>} : vector<16x64xf32>, vector<64x128xf32>, vector<16x128xf32> -> vector<16x128xf32>
    %87 = arith.maximumf %83, %86 : vector<16x128xf32>
    %c3_84 = arith.constant 3 : index
    %c0_85 = arith.constant 0 : index
    %c0_86 = arith.constant 0 : index
    %88 = vector.load %arg6[%c3_84, %c0_85, %c0_86] : memref<4x16x64xf32, #tpu.memory_space<vmem>>, vector<1x16x64xf32>
    %89 = vector.shape_cast %88 : vector<1x16x64xf32> to vector<16x64xf32>
    %cst_87 = arith.constant dense<0.000000e+00> : vector<16x128xf32>
    %90 = tpu.matmul %89, %76, %cst_87 {dimension_numbers = #tpu.dot_dimension_numbers<[1], [0], [0], [1], [0, 0, 1, 1], [], []>} : vector<16x64xf32>, vector<64x128xf32>, vector<16x128xf32> -> vector<16x128xf32>
    %91 = arith.maximumf %87, %90 : vector<16x128xf32>
    %c0_88 = arith.constant 0 : index
    %c0_89 = arith.constant 0 : index
    %c0_90 = arith.constant 0 : index
    %92 = vector.load %arg7[%c0_88, %c0_89, %c0_90] : memref<2x128x64xf32, #tpu.memory_space<vmem>>, vector<1x128x64xf32>
    %93 = vector.shape_cast %92 : vector<1x128x64xf32> to vector<128x64xf32>
    %cst_91 = arith.constant dense<0.000000e+00> : vector<16x64xf32>
    %94 = tpu.matmul %91, %93, %cst_91 {dimension_numbers = #tpu.dot_dimension_numbers<[1], [0], [0], [1], [0, 0, 1, 1], [], []>} : vector<16x128xf32>, vector<128x64xf32>, vector<16x64xf32> -> vector<16x64xf32>
    %c1_92 = arith.constant 1 : index
    %c0_93 = arith.constant 0 : index
    %c0_94 = arith.constant 0 : index
    %95 = vector.load %arg7[%c1_92, %c0_93, %c0_94] : memref<2x128x64xf32, #tpu.memory_space<vmem>>, vector<1x128x64xf32>
    %96 = vector.shape_cast %95 : vector<1x128x64xf32> to vector<128x64xf32>
    %cst_95 = arith.constant dense<0.000000e+00> : vector<16x64xf32>
    %97 = tpu.matmul %91, %96, %cst_95 {dimension_numbers = #tpu.dot_dimension_numbers<[1], [0], [0], [1], [0, 0, 1, 1], [], []>} : vector<16x128xf32>, vector<128x64xf32>, vector<16x64xf32> -> vector<16x64xf32>
    %98 = arith.maximumf %94, %97 : vector<16x64xf32>
    %c0_96 = arith.constant 0 : index
    %c0_97 = arith.constant 0 : index
    %c0_98 = arith.constant 0 : index
    %99 = vector.load %arg8[%c0_96, %c0_97, %c0_98] : memref<1x16x64xf32, #tpu.memory_space<vmem>>, vector<1x16x64xf32>
    %100 = vector.shape_cast %99 : vector<1x16x64xf32> to vector<16x64xf32>
    %101 = vector.shape_cast %98 : vector<16x64xf32> to vector<1x16x64xf32>
    tpu.vector_store %arg8[%c0_96, %c0_97, %c0_98], %101 {strides = array<i32>} : memref<1x16x64xf32, #tpu.memory_space<vmem>>, vector<1x16x64xf32>,
    return
  }
  func.func @transform_0(%arg0: i32) -> (i32, i32, i32, i32) {
    %c0_i32 = arith.constant 0 : i32
    %c0_i32_0 = arith.constant 0 : i32
    %c0_i32_1 = arith.constant 0 : i32
    %c0_i32_2 = arith.constant 0 : i32
    return %arg0, %c0_i32, %c0_i32_0, %c0_i32_1 : i32, i32, i32, i32
  }
  func.func @transform_1(%arg0: i32) -> (i32, i32, i32) {
    %c0_i32 = arith.constant 0 : i32
    %c0_i32_0 = arith.constant 0 : i32
    %c0_i32_1 = arith.constant 0 : i32
    %c0_i32_2 = arith.constant 0 : i32
    return %c0_i32, %c0_i32_0, %c0_i32_1 : i32, i32, i32
  }
  func.func @transform_2(%arg0: i32) -> (i32, i32) {
    %c0_i32 = arith.constant 0 : i32
    %c0_i32_0 = arith.constant 0 : i32
    %c0_i32_1 = arith.constant 0 : i32
    return %c0_i32, %c0_i32_0 : i32, i32
  }
  func.func @transform_3(%arg0: i32) -> (i32, i32, i32) {
    %c0_i32 = arith.constant 0 : i32
    %c0_i32_0 = arith.constant 0 : i32
    %c0_i32_1 = arith.constant 0 : i32
    return %arg0, %c0_i32, %c0_i32_0 : i32, i32, i32
  }
  func.func @transform_4(%arg0: i32) -> (i32, i32) {
    %c0_i32 = arith.constant 0 : i32
    %c0_i32_0 = arith.constant 0 : i32
    %c0_i32_1 = arith.constant 0 : i32
    return %c0_i32, %c0_i32_0 : i32, i32
  }
  func.func @transform_5(%arg0: i32) -> (i32, i32, i32) {
    %c0_i32 = arith.constant 0 : i32
    %c0_i32_0 = arith.constant 0 : i32
    %c0_i32_1 = arith.constant 0 : i32
    %c0_i32_2 = arith.constant 0 : i32
    return %c0_i32, %c0_i32_0, %c0_i32_1 : i32, i32, i32
  }
  func.func @transform_6(%arg0: i32) -> (i32, i32, i32) {
    %c0_i32 = arith.constant 0 : i32
    %c0_i32_0 = arith.constant 0 : i32
    %c0_i32_1 = arith.constant 0 : i32
    %c0_i32_2 = arith.constant 0 : i32
    return %c0_i32, %c0_i32_0, %c0_i32_1 : i32, i32, i32
  }
  func.func @transform_7(%arg0: i32) -> (i32, i32, i32) {
    %c0_i32 = arith.constant 0 : i32
    %c0_i32_0 = arith.constant 0 : i32
    %c0_i32_1 = arith.constant 0 : i32
    return %arg0, %c0_i32, %c0_i32_0 : i32, i32, i32
  }
}

module attributes {stable_mosaic.version = 11 : i64} {
  func.func @_classifier_kernel(%arg0: i32, %arg1: memref<1x1x1024xf32, #tpu.memory_space<vmem>>, %arg2: memref<1024x64xf32, #tpu.memory_space<vmem>>, %arg3: memref<1x64xf32, #tpu.memory_space<vmem>>, %arg4: memref<64x64xf32, #tpu.memory_space<vmem>>, %arg5: memref<1x64xf32, #tpu.memory_space<vmem>>, %arg6: memref<64x3xf32, #tpu.memory_space<vmem>>, %arg7: memref<1x3xf32, #tpu.memory_space<vmem>>, %arg8: memref<1x1x3xf32, #tpu.memory_space<vmem>>) attributes {dimension_semantics = [#tpu.dimension_semantics<parallel>], iteration_bounds = array<i64: 2>, scalar_prefetch = 0 : i64, scratch_operands = 0 : i64, tpu.core_type = #tpu.core_type<tc>, window_params = [{transform_indices = @transform_0, window_bounds = array<i64: 1, 1, 1024>}, {pipeline_mode = #tpu.pipeline_mode<synchronous>, transform_indices = @transform_1, window_bounds = array<i64: 1024, 64>}, {pipeline_mode = #tpu.pipeline_mode<synchronous>, transform_indices = @transform_2, window_bounds = array<i64: 1, 64>}, {pipeline_mode = #tpu.pipeline_mode<synchronous>, transform_indices = @transform_3, window_bounds = array<i64: 64, 64>}, {pipeline_mode = #tpu.pipeline_mode<synchronous>, transform_indices = @transform_4, window_bounds = array<i64: 1, 64>}, {pipeline_mode = #tpu.pipeline_mode<synchronous>, transform_indices = @transform_5, window_bounds = array<i64: 64, 3>}, {pipeline_mode = #tpu.pipeline_mode<synchronous>, transform_indices = @transform_6, window_bounds = array<i64: 1, 3>}, {transform_indices = @transform_7, window_bounds = array<i64: 1, 1, 3>}]} {
    %c0 = arith.constant 0 : index
    %c0_0 = arith.constant 0 : index
    %c0_1 = arith.constant 0 : index
    %0 = vector.load %arg1[%c0, %c0_0, %c0_1] : memref<1x1x1024xf32, #tpu.memory_space<vmem>>, vector<1x1x1024xf32>
    %1 = vector.shape_cast %0 : vector<1x1x1024xf32> to vector<1x1024xf32>
    %c0_2 = arith.constant 0 : index
    %c0_3 = arith.constant 0 : index
    %2 = vector.load %arg2[%c0_2, %c0_3] : memref<1024x64xf32, #tpu.memory_space<vmem>>, vector<1024x64xf32>
    %cst = arith.constant dense<0.000000e+00> : vector<1x64xf32>
    %3 = tpu.matmul %1, %2, %cst {dimension_numbers = #tpu.dot_dimension_numbers<[1], [0], [0], [1], [0, 0, 1, 1], [], []>} : vector<1x1024xf32>, vector<1024x64xf32>, vector<1x64xf32> -> vector<1x64xf32>
    %c0_4 = arith.constant 0 : index
    %c0_5 = arith.constant 0 : index
    %4 = vector.load %arg3[%c0_4, %c0_5] : memref<1x64xf32, #tpu.memory_space<vmem>>, vector<1x64xf32>
    %5 = arith.addf %3, %4 : vector<1x64xf32>
    %cst_6 = arith.constant 0.000000e+00 : f32
    %6 = vector.broadcast %cst_6 : f32 to vector<1x64xf32>
    %7 = arith.maximumf %5, %6 : vector<1x64xf32>
    %c0_7 = arith.constant 0 : index
    %c0_8 = arith.constant 0 : index
    %8 = vector.load %arg4[%c0_7, %c0_8] : memref<64x64xf32, #tpu.memory_space<vmem>>, vector<64x64xf32>
    %cst_9 = arith.constant dense<0.000000e+00> : vector<1x64xf32>
    %9 = tpu.matmul %7, %8, %cst_9 {dimension_numbers = #tpu.dot_dimension_numbers<[1], [0], [0], [1], [0, 0, 1, 1], [], []>} : vector<1x64xf32>, vector<64x64xf32>, vector<1x64xf32> -> vector<1x64xf32>
    %c0_10 = arith.constant 0 : index
    %c0_11 = arith.constant 0 : index
    %10 = vector.load %arg5[%c0_10, %c0_11] : memref<1x64xf32, #tpu.memory_space<vmem>>, vector<1x64xf32>
    %11 = arith.addf %9, %10 : vector<1x64xf32>
    %cst_12 = arith.constant 0.000000e+00 : f32
    %12 = vector.broadcast %cst_12 : f32 to vector<1x64xf32>
    %13 = arith.maximumf %11, %12 : vector<1x64xf32>
    %c0_13 = arith.constant 0 : index
    %c0_14 = arith.constant 0 : index
    %14 = vector.load %arg6[%c0_13, %c0_14] : memref<64x3xf32, #tpu.memory_space<vmem>>, vector<64x3xf32>
    %cst_15 = arith.constant dense<0.000000e+00> : vector<1x3xf32>
    %15 = tpu.matmul %13, %14, %cst_15 {dimension_numbers = #tpu.dot_dimension_numbers<[1], [0], [0], [1], [0, 0, 1, 1], [], []>} : vector<1x64xf32>, vector<64x3xf32>, vector<1x3xf32> -> vector<1x3xf32>
    %c0_16 = arith.constant 0 : index
    %c0_17 = arith.constant 0 : index
    %16 = vector.load %arg7[%c0_16, %c0_17] : memref<1x3xf32, #tpu.memory_space<vmem>>, vector<1x3xf32>
    %17 = arith.addf %15, %16 : vector<1x3xf32>
    %c0_18 = arith.constant 0 : index
    %c0_19 = arith.constant 0 : index
    %c0_20 = arith.constant 0 : index
    %18 = vector.load %arg8[%c0_18, %c0_19, %c0_20] : memref<1x1x3xf32, #tpu.memory_space<vmem>>, vector<1x1x3xf32>
    %19 = vector.shape_cast %18 : vector<1x1x3xf32> to vector<1x3xf32>
    %20 = vector.shape_cast %17 : vector<1x3xf32> to vector<1x1x3xf32>
    tpu.vector_store %arg8[%c0_18, %c0_19, %c0_20], %20 {strides = array<i32>} : memref<1x1x3xf32, #tpu.memory_space<vmem>>, vector<1x1x3xf32>,
    return
  }
  func.func @transform_0(%arg0: i32) -> (i32, i32, i32) {
    %c0_i32 = arith.constant 0 : i32
    %c0_i32_0 = arith.constant 0 : i32
    %c0_i32_1 = arith.constant 0 : i32
    return %arg0, %c0_i32, %c0_i32_0 : i32, i32, i32
  }
  func.func @transform_1(%arg0: i32) -> (i32, i32) {
    %c0_i32 = arith.constant 0 : i32
    %c0_i32_0 = arith.constant 0 : i32
    %c0_i32_1 = arith.constant 0 : i32
    return %c0_i32, %c0_i32_0 : i32, i32
  }
  func.func @transform_2(%arg0: i32) -> (i32, i32) {
    %c0_i32 = arith.constant 0 : i32
    %c0_i32_0 = arith.constant 0 : i32
    %c0_i32_1 = arith.constant 0 : i32
    return %c0_i32, %c0_i32_0 : i32, i32
  }
  func.func @transform_3(%arg0: i32) -> (i32, i32) {
    %c0_i32 = arith.constant 0 : i32
    %c0_i32_0 = arith.constant 0 : i32
    %c0_i32_1 = arith.constant 0 : i32
    return %c0_i32, %c0_i32_0 : i32, i32
  }
  func.func @transform_4(%arg0: i32) -> (i32, i32) {
    %c0_i32 = arith.constant 0 : i32
    %c0_i32_0 = arith.constant 0 : i32
    %c0_i32_1 = arith.constant 0 : i32
    return %c0_i32, %c0_i32_0 : i32, i32
  }
  func.func @transform_5(%arg0: i32) -> (i32, i32) {
    %c0_i32 = arith.constant 0 : i32
    %c0_i32_0 = arith.constant 0 : i32
    %c0_i32_1 = arith.constant 0 : i32
    return %c0_i32, %c0_i32_0 : i32, i32
  }
  func.func @transform_6(%arg0: i32) -> (i32, i32) {
    %c0_i32 = arith.constant 0 : i32
    %c0_i32_0 = arith.constant 0 : i32
    %c0_i32_1 = arith.constant 0 : i32
    return %c0_i32, %c0_i32_0 : i32, i32
  }
  func.func @transform_7(%arg0: i32) -> (i32, i32, i32) {
    %c0_i32 = arith.constant 0 : i32
    %c0_i32_0 = arith.constant 0 : i32
    %c0_i32_1 = arith.constant 0 : i32
    return %arg0, %c0_i32, %c0_i32_0 : i32, i32, i32
  }
}

</mosaic_0001>

<llo_original>
// kernel: masked_vgg3d_forward.3
$region0: #{masked_vgg3d_forward.3}
  #allocation0 [shape = 'u32[]', space=smem, size = 0x4, offset = 0x4, fixed_abs, tag = 'smem constant byte address 0x4 - core index']
  #allocation1 [shape = 'u32[144,128]{1,0:T(1,128)}', space=vmem, size = 0x12000, scoped, tag = 'internal scratch']
  %s0 = inlined_call_operand.vmem [shape: f32[2,18,18,18], index: 0, kind: input, shape index: {}]
  %s1 = inlined_call_operand.vmem [shape: f32[9,18,128], index: 1, kind: input, shape index: {}]
  %s2 = inlined_call_operand.vmem [shape: f32[1,128], index: 2, kind: input, shape index: {}]
  %s3 = inlined_call_operand.vmem [shape: f32[2,256,16], index: 3, kind: input, shape index: {}]
  %s4 = inlined_call_operand.vmem [shape: f32[16,128], index: 4, kind: input, shape index: {}]
  %s5 = inlined_call_operand.vmem [shape: f32[4,64,256], index: 5, kind: input, shape index: {}]
  %s6 = inlined_call_operand.vmem [shape: f32[2,128,64], index: 6, kind: input, shape index: {}]
  %s7 = inlined_call_operand.vmem [shape: f32[2,64,64], index: 7, kind: output, shape index: {}]
  %s8 = sld [smem:[#allocation0]]
  $region61: #{masked_vgg3d_forward.3} parent=0
    _
  %s10 = ssub.s32 1, %s8
  %s11 = scalar_select 0, %s10, %s8
  loop: start=0, step=1, limit=4
  $region2: #{masked_vgg3d_forward.3} parent=0 // loop_pre_header
    _
  $region3: #{masked_vgg3d_forward.3} parent=0 // loop_header
    %s13 = sphi 0, %s17
    %p14 = scmp.ge.s32.totalorder %s13, 4
    %s23 = sphi 0, %s25
    %s26 = sphi 0, %s23
    %s27 = sphi 0, %s26
    %s43 = sphi 0, %s27
    %s47 = sphi 0, %s47
    %s49 = sphi 0, %s47
    %s50 = sphi 0, %s49
    %s64 = sphi 0, %s50
    %s68 = sphi 0, %s68
    %s70 = sphi 0, %s68
    %s71 = sphi 0, %s70
    %s85 = sphi 0, %s71
    %s91 = sphi 0, %s93
    %s94 = sphi 0, %s91
    %s95 = sphi 0, %s94
    %s111 = sphi 0, %s95
    %s115 = sphi 0, %s115
    %s117 = sphi 0, %s115
    %s118 = sphi 0, %s117
    %s132 = sphi 0, %s118
    %s136 = sphi 0, %s136
    %s138 = sphi 0, %s136
    %s139 = sphi 0, %s138
    %s153 = sphi 0, %s139
    %s157 = sphi 0, %s157
    %s159 = sphi 0, %s157
    %s160 = sphi 0, %s159
    %s174 = sphi 0, %s160
    %s180 = sphi 0, %s182
    %s183 = sphi 0, %s180
    %s184 = sphi 0, %s183
    %s200 = sphi 0, %s184
  $region4: #{masked_vgg3d_forward.3} parent=0 // loop_header_branch
    %16 = sbr.rel (%p14) target = $region8
  $region5: #{masked_vgg3d_forward.3} parent=0 // loop_body
    %s18 = ssub.s32 %s13, 1
    %s19 = ssub.s32 %s13, 2
    %s20 = sadd.s32 %s13, 1
    %s21 = ssub.s32 %s13, %s20
    %p22 = scmp.eq.s32.totalorder %s21, 0
    %s24 = sadd.s32 %s23, 1
    %s25 = scalar_select %p22, %s23, %s24
    %p28 = pneg %p22
    %p29 = scmp.eq.s32.totalorder %s13, 1
    %p30 = por %p28, %p29
    %p31 = scmp.ne.s32.totalorder %s23, %s26
    %p32 = scmp.eq.s32.totalorder %s13, 0
    %p33 = por %p31, %p32
    %p34 = scmp.ne.s32.totalorder %s23, %s26
    %p35 = scmp.eq.s32.totalorder %s18, 1
    %p36 = por %p34, %p35
    %p37 = scmp.ne.s32.totalorder %s26, %s27
    %p38 = scmp.eq.s32.totalorder %s18, 0
    %p39 = por %p37, %p38
    %p40 = scmp.ne.s32.totalorder %s26, %s27
    %p41 = scmp.eq.s32.totalorder %s19, 1
    %p42 = por %p40, %p41
    %p44 = scmp.ne.s32.totalorder %s27, %s43
    %p45 = scmp.eq.s32.totalorder %s19, 0
    %p46 = por %p44, %p45
    %s48 = sadd.s32 %s47, 1
    %p51 = scmp.eq.s32.totalorder %s13, 1
    %p52 = scmp.ne.s32.totalorder %s47, %s49
    %p53 = scmp.eq.s32.totalorder %s13, 0
    %p54 = por %p52, %p53
    %p55 = scmp.ne.s32.totalorder %s47, %s49
    %p56 = scmp.eq.s32.totalorder %s18, 1
    %p57 = por %p55, %p56
    %p58 = scmp.ne.s32.totalorder %s49, %s50
    %p59 = scmp.eq.s32.totalorder %s18, 0
    %p60 = por %p58, %p59
    %p61 = scmp.ne.s32.totalorder %s49, %s50
    %p62 = scmp.eq.s32.totalorder %s19, 1
    %p63 = por %p61, %p62
    %p65 = scmp.ne.s32.totalorder %s50, %s64
    %p66 = scmp.eq.s32.totalorder %s19, 0
    %p67 = por %p65, %p66
    %s69 = sadd.s32 %s68, 1
    %p72 = scmp.eq.s32.totalorder %s13, 1
    %p73 = scmp.ne.s32.totalorder %s68, %s70
    %p74 = scmp.eq.s32.totalorder %s13, 0
    %p75 = por %p73, %p74
    %p76 = scmp.ne.s32.totalorder %s68, %s70
    %p77 = scmp.eq.s32.totalorder %s18, 1
    %p78 = por %p76, %p77
    %p79 = scmp.ne.s32.totalorder %s70, %s71
    %p80 = scmp.eq.s32.totalorder %s18, 0
    %p81 = por %p79, %p80
    %p82 = scmp.ne.s32.totalorder %s70, %s71
    %p83 = scmp.eq.s32.totalorder %s19, 1
    %p84 = por %p82, %p83
    %p86 = scmp.ne.s32.totalorder %s71, %s85
    %p87 = scmp.eq.s32.totalorder %s19, 0
    %p88 = por %p86, %p87
    %s89 = ssub.s32 %s13, %s20
    %p90 = scmp.eq.s32.totalorder %s89, 0
    %s92 = sadd.s32 %s91, 1
    %s93 = scalar_select %p90, %s91, %s92
    %p96 = pneg %p90
    %p97 = scmp.eq.s32.totalorder %s13, 1
    %p98 = por %p96, %p97
    %p99 = scmp.ne.s32.totalorder %s91, %s94
    %p100 = scmp.eq.s32.totalorder %s13, 0
    %p101 = por %p99, %p100
    %p102 = scmp.ne.s32.totalorder %s91, %s94
    %p103 = scmp.eq.s32.totalorder %s18, 1
    %p104 = por %p102, %p103
    %p105 = scmp.ne.s32.totalorder %s94, %s95
    %p106 = scmp.eq.s32.totalorder %s18, 0
    %p107 = por %p105, %p106
    %p108 = scmp.ne.s32.totalorder %s94, %s95
    %p109 = scmp.eq.s32.totalorder %s19, 1
    %p110 = por %p108, %p109
    %p112 = scmp.ne.s32.totalorder %s95, %s111
    %p113 = scmp.eq.s32.totalorder %s19, 0
    %p114 = por %p112, %p113
    %s116 = sadd.s32 %s115, 1
    %p119 = scmp.eq.s32.totalorder %s13, 1
    %p120 = scmp.ne.s32.totalorder %s115, %s117
    %p121 = scmp.eq.s32.totalorder %s13, 0
    %p122 = por %p120, %p121
    %p123 = scmp.ne.s32.totalorder %s115, %s117
    %p124 = scmp.eq.s32.totalorder %s18, 1
    %p125 = por %p123, %p124
    %p126 = scmp.ne.s32.totalorder %s117, %s118
    %p127 = scmp.eq.s32.totalorder %s18, 0
    %p128 = por %p126, %p127
    %p129 = scmp.ne.s32.totalorder %s117, %s118
    %p130 = scmp.eq.s32.totalorder %s19, 1
    %p131 = por %p129, %p130
    %p133 = scmp.ne.s32.totalorder %s118, %s132
    %p134 = scmp.eq.s32.totalorder %s19, 0
    %p135 = por %p133, %p134
    %s137 = sadd.s32 %s136, 1
    %p140 = scmp.eq.s32.totalorder %s13, 1
    %p141 = scmp.ne.s32.totalorder %s136, %s138
    %p142 = scmp.eq.s32.totalorder %s13, 0
    %p143 = por %p141, %p142
    %p144 = scmp.ne.s32.totalorder %s136, %s138
    %p145 = scmp.eq.s32.totalorder %s18, 1
    %p146 = por %p144, %p145
    %p147 = scmp.ne.s32.totalorder %s138, %s139
    %p148 = scmp.eq.s32.totalorder %s18, 0
    %p149 = por %p147, %p148
    %p150 = scmp.ne.s32.totalorder %s138, %s139
    %p151 = scmp.eq.s32.totalorder %s19, 1
    %p152 = por %p150, %p151
    %p154 = scmp.ne.s32.totalorder %s139, %s153
    %p155 = scmp.eq.s32.totalorder %s19, 0
    %p156 = por %p154, %p155
    %s158 = sadd.s32 %s157, 1
    %p161 = scmp.eq.s32.totalorder %s13, 1
    %p162 = scmp.ne.s32.totalorder %s157, %s159
    %p163 = scmp.eq.s32.totalorder %s13, 0
    %p164 = por %p162, %p163
    %p165 = scmp.ne.s32.totalorder %s157, %s159
    %p166 = scmp.eq.s32.totalorder %s18, 1
    %p167 = por %p165, %p166
    %p168 = scmp.ne.s32.totalorder %s159, %s160
    %p169 = scmp.eq.s32.totalorder %s18, 0
    %p170 = por %p168, %p169
    %p171 = scmp.ne.s32.totalorder %s159, %s160
    %p172 = scmp.eq.s32.totalorder %s19, 1
    %p173 = por %p171, %p172
    %p175 = scmp.ne.s32.totalorder %s160, %s174
    %p176 = scmp.eq.s32.totalorder %s19, 0
    %p177 = por %p175, %p176
    %s178 = ssub.s32 %s13, %s20
    %p179 = scmp.eq.s32.totalorder %s178, 0
    %s181 = sadd.s32 %s180, 1
    %s182 = scalar_select %p179, %s180, %s181
    %p185 = pneg %p179
    %p186 = scmp.eq.s32.totalorder %s13, 1
    %p187 = por %p185, %p186
    %p188 = scmp.ne.s32.totalorder %s180, %s183
    %p189 = scmp.eq.s32.totalorder %s13, 0
    %p190 = por %p188, %p189
    %p191 = scmp.ne.s32.totalorder %s180, %s183
    %p192 = scmp.eq.s32.totalorder %s18, 1
    %p193 = por %p191, %p192
    %p194 = scmp.ne.s32.totalorder %s183, %s184
    %p195 = scmp.eq.s32.totalorder %s18, 0
    %p196 = por %p194, %p195
    %p197 = scmp.ne.s32.totalorder %s183, %s184
    %p198 = scmp.eq.s32.totalorder %s19, 1
    %p199 = por %p197, %p198
    %p201 = scmp.ne.s32.totalorder %s184, %s200
    %p202 = scmp.eq.s32.totalorder %s19, 0
    %p203 = por %p201, %p202
    %p204 = scmp.le.s32.totalorder 1, %s13
    %p205 = scmp.lt.s32.totalorder %s13, 3
    %p206 = pnand %p204, %p205
    %p207 = pneg %p206
    // Predicated region
    $region9: #{masked_vgg3d_forward.3} parent=5 // pred_check
      _
    $region10: #{masked_vgg3d_forward.3} parent=5 // pred_check_branch
      %209 = sbr.rel (%p206) target = $region12
    $region11: #{masked_vgg3d_forward.3} parent=5 // pred_region
      %s210 = ssub.s32 %s13, 1
      // Predicated region
      $region13: #{masked_vgg3d_forward.3} parent=11 // pred_check
        %p211 = pneg %p60
      $region14: #{masked_vgg3d_forward.3} parent=11 // pred_check_branch
        %213 = sbr.rel (%p211) target = $region16
      $region15: #{masked_vgg3d_forward.3} parent=11 // pred_region
        _
      $region16: #{masked_vgg3d_forward.3} parent=11 // pred_fallthru
        _
      // Predicated region
      $region17: #{masked_vgg3d_forward.3} parent=11 // pred_check
        %p214 = pneg %p81
      $region18: #{masked_vgg3d_forward.3} parent=11 // pred_check_branch
        %216 = sbr.rel (%p214) target = $region20
      $region19: #{masked_vgg3d_forward.3} parent=11 // pred_region
        _
      $region20: #{masked_vgg3d_forward.3} parent=11 // pred_fallthru
        _
      // Predicated region
      $region21: #{masked_vgg3d_forward.3} parent=11 // pred_check
        %p217 = pneg %p128
      $region22: #{masked_vgg3d_forward.3} parent=11 // pred_check_branch
        %219 = sbr.rel (%p217) target = $region24
      $region23: #{masked_vgg3d_forward.3} parent=11 // pred_region
        _
      $region24: #{masked_vgg3d_forward.3} parent=11 // pred_fallthru
        _
      // Predicated region
      $region25: #{masked_vgg3d_forward.3} parent=11 // pred_check
        %p220 = pneg %p149
      $region26: #{masked_vgg3d_forward.3} parent=11 // pred_check_branch
        %222 = sbr.rel (%p220) target = $region28
      $region27: #{masked_vgg3d_forward.3} parent=11 // pred_region
        _
      $region28: #{masked_vgg3d_forward.3} parent=11 // pred_fallthru
        _
      // Predicated region
      $region29: #{masked_vgg3d_forward.3} parent=11 // pred_check
        %p223 = pneg %p170
      $region30: #{masked_vgg3d_forward.3} parent=11 // pred_check_branch
        %225 = sbr.rel (%p223) target = $region32
      $region31: #{masked_vgg3d_forward.3} parent=11 // pred_region
        _
      $region32: #{masked_vgg3d_forward.3} parent=11 // pred_fallthru
        _
    $region12: #{masked_vgg3d_forward.3} parent=5 // pred_fallthru
      _
    %p226 = scmp.lt.s32.totalorder %s13, 2
    // Predicated region
    $region33: #{masked_vgg3d_forward.3} parent=5 // pred_check
      %p227 = pneg %p226
    $region34: #{masked_vgg3d_forward.3} parent=5 // pred_check_branch
      %229 = sbr.rel (%p227) target = $region36
    $region35: #{masked_vgg3d_forward.3} parent=5 // pred_region
      // Predicated region
      $region37: #{masked_vgg3d_forward.3} parent=35 // pred_check
        %p230 = pneg %p33
      $region38: #{masked_vgg3d_forward.3} parent=35 // pred_check_branch
        %232 = sbr.rel (%p230) target = $region40
      $region39: #{masked_vgg3d_forward.3} parent=35 // pred_region
        %p233 = scmp.lt.s32.totalorder %s13, 1
        %s234 = scalar_select %p233, %s13, 1
        %s235 = smul.addr %s234, 54
        %s236 = smul.addr %s235, 8
        %s237 = scalar_lea.vmem %s0, %s236
      $region40: #{masked_vgg3d_forward.3} parent=35 // pred_fallthru
        _
      // Predicated region
      $region41: #{masked_vgg3d_forward.3} parent=35 // pred_check
        %p238 = pneg %p101
      $region42: #{masked_vgg3d_forward.3} parent=35 // pred_check_branch
        %240 = sbr.rel (%p238) target = $region44
      $region43: #{masked_vgg3d_forward.3} parent=35 // pred_region
        %p241 = scmp.lt.s32.totalorder %s13, 1
        %s242 = scalar_select %p241, %s13, 1
        %s243 = smul.addr %s242, 32
        %s244 = smul.addr %s243, 8
        %s245 = scalar_lea.vmem %s3, %s244
      $region44: #{masked_vgg3d_forward.3} parent=35 // pred_fallthru
        _
    $region36: #{masked_vgg3d_forward.3} parent=5 // pred_fallthru
      _
    %p246 = scmp.le.s32.totalorder 1, %s13
    %p247 = scmp.lt.s32.totalorder %s13, 3
    %p248 = pnand %p246, %p247
    %p249 = pneg %p248
    // Predicated region
    $region45: #{masked_vgg3d_forward.3} parent=5 // pred_check
      _
    $region46: #{masked_vgg3d_forward.3} parent=5 // pred_check_branch
      %251 = sbr.rel (%p248) target = $region48
    $region47: #{masked_vgg3d_forward.3} parent=5 // pred_region
      %s252 = ssub.s32 %s13, 1
      %p253 = scmp.lt.s32.totalorder %s18, 1
      %s254 = scalar_select %p253, %s18, 1
      %s255 = smul.addr %s254, 54
      %s256 = smul.addr %s255, 8
      %s257 = scalar_lea.vmem %s0, %s256
      %p258 = pneg %p39
      %p259 = pneg %p36
      %p260 = pneg %p60
      %p261 = pneg %p57
      %p262 = pneg %p81
      %p263 = pneg %p78
      %p264 = scmp.lt.s32.totalorder %s18, 1
      %s265 = scalar_select %p264, %s18, 1
      %s266 = smul.addr %s265, 32
      %s267 = smul.addr %s266, 8
      %s268 = scalar_lea.vmem %s3, %s267
      %p269 = pneg %p107
      %p270 = pneg %p104
      %p271 = pneg %p128
      %p272 = pneg %p125
      %p273 = pneg %p149
      %p274 = pneg %p146
      %p275 = pneg %p170
      %p276 = pneg %p167
      %p277 = pneg %p196
      %p278 = pneg %p193
      %p279 = scmp.lt.s32.totalorder %s18, 1
      %s280 = scalar_select %p279, %s18, 1
      %s281 = smul.addr %s280, 8
      %s282 = smul.addr %s281, 8
      %s283 = scalar_lea.vmem %s7, %s282
      %p284 = scmp.lt.s32.totalorder %s18, 1
      %s285 = scalar_select %p284, %s18, 1
      %s286 = smul.addr %s285, 54
      %s287 = smul.addr %s286, 8
      %s288 = scalar_lea.vmem %s0, %s287
      %p289 = scmp.lt.s32.totalorder %s18, 1
      %s290 = scalar_select %p289, %s18, 1
      %s291 = smul.addr %s290, 32
      %s292 = smul.addr %s291, 8
      %s293 = scalar_lea.vmem %s3, %s292
      %p294 = scmp.lt.s32.totalorder %s18, 1
      %s295 = scalar_select %p294, %s18, 1
      %s296 = smul.addr %s295, 8
      %s297 = smul.addr %s296, 8
      %s298 = scalar_lea.vmem %s7, %s297
      %v299 = vld [vmem:[%s288] sm:$0xff]
      %v300 = vld [vmem:[%s288 + $0x8] sm:$0xff]
      %v301 = vld [vmem:[%s288 + $0x18] sm:$0xff]
      %v302 = vld [vmem:[%s288 + $0x20] sm:$0xff]
      %v303 = vld [vmem:[%s288 + $0x30] sm:$0xff]
      %v304 = vld [vmem:[%s288 + $0x38] sm:$0xff]
      %v305 = vld [vmem:[%s288 + $0x48] sm:$0xff]
      %v306 = vld [vmem:[%s288 + $0x50] sm:$0xff]
      %v307 = vld [vmem:[%s288 + $0x60] sm:$0xff]
      %v308 = vld [vmem:[%s288 + $0x68] sm:$0xff]
      %v309 = vld [vmem:[%s288 + $0x78] sm:$0xff]
      %v310 = vld [vmem:[%s288 + $0x80] sm:$0xff]
      %v311 = vld [vmem:[%s288 + $0x90] sm:$0xff]
      %v312 = vld [vmem:[%s288 + $0x98] sm:$0xff]
      %v313 = vld [vmem:[%s288 + $0xa8] sm:$0xff]
      %v314 = vld [vmem:[%s288 + $0xb0] sm:$0xff]
      %v315 = vld [vmem:[%s288 + $0xc0] sm:$0xff]
      %v316 = vld [vmem:[%s288 + $0xc8] sm:$0xff]
      %v317 = vld [vmem:[%s288 + $0xd8] sm:$0xff]
      %v318 = vld [vmem:[%s288 + $0xe0] sm:$0xff]
      %v319 = vld [vmem:[%s288 + $0xf0] sm:$0xff]
      %v320 = vld [vmem:[%s288 + $0xf8] sm:$0xff]
      %v321 = vld [vmem:[%s288 + $0x108] sm:$0xff]
      %v322 = vld [vmem:[%s288 + $0x110] sm:$0xff]
      %v323 = vld [vmem:[%s288 + $0x120] sm:$0xff]
      %v324 = vld [vmem:[%s288 + $0x128] sm:$0xff]
      %v325 = vld [vmem:[%s288 + $0x138] sm:$0xff]
      %v326 = vld [vmem:[%s288 + $0x140] sm:$0xff]
      %v327 = vld [vmem:[%s288 + $0x150] sm:$0xff]
      %v328 = vld [vmem:[%s288 + $0x158] sm:$0xff]
      %v329 = vld [vmem:[%s288 + $0x168] sm:$0xff]
      %v330 = vld [vmem:[%s288 + $0x170] sm:$0xff]
      %v331 = vld [vmem:[%s1] sm:$0xff]
      %v332 = vld [vmem:[%s1 + $0x8] sm:$0xff]
      %v333 = vld [vmem:[%s1 + $0x10] sm:$0x3]
      %v334 = vld [vmem:[%s288 + $0x1] sm:$0xff]
      %v335 = vld [vmem:[%s288 + $0x9] sm:$0xff]
      %v336 = vld [vmem:[%s288 + $0x19] sm:$0xff]
      %v337 = vld [vmem:[%s288 + $0x21] sm:$0xff]
      %v338 = vld [vmem:[%s288 + $0x31] sm:$0xff]
      %v339 = vld [vmem:[%s288 + $0x39] sm:$0xff]
      %v340 = vld [vmem:[%s288 + $0x49] sm:$0xff]
      %v341 = vld [vmem:[%s288 + $0x51] sm:$0xff]
      %v342 = vld [vmem:[%s288 + $0x61] sm:$0xff]
      %v343 = vld [vmem:[%s288 + $0x69] sm:$0xff]
      %v344 = vld [vmem:[%s288 + $0x79] sm:$0xff]
      %v345 = vld [vmem:[%s288 + $0x81] sm:$0xff]
      %v346 = vld [vmem:[%s288 + $0x91] sm:$0xff]
      %v347 = vld [vmem:[%s288 + $0x99] sm:$0xff]
      %v348 = vld [vmem:[%s288 + $0xa9] sm:$0xff]
      %v349 = vld [vmem:[%s288 + $0xb1] sm:$0xff]
      %v350 = vld [vmem:[%s288 + $0xc1] sm:$0xff]
      %v351 = vld [vmem:[%s288 + $0xc9] sm:$0xff]
      %v352 = vld [vmem:[%s288 + $0xd9] sm:$0xff]
      %v353 = vld [vmem:[%s288 + $0xe1] sm:$0xff]
      %v354 = vld [vmem:[%s288 + $0xf1] sm:$0xff]
      %v355 = vld [vmem:[%s288 + $0xf9] sm:$0xff]
      %v356 = vld [vmem:[%s288 + $0x109] sm:$0xff]
      %v357 = vld [vmem:[%s288 + $0x111] sm:$0xff]
      %v358 = vld [vmem:[%s288 + $0x121] sm:$0xff]
      %v359 = vld [vmem:[%s288 + $0x129] sm:$0xff]
      %v360 = vld [vmem:[%s288 + $0x139] sm:$0xff]
      %v361 = vld [vmem:[%s288 + $0x141] sm:$0xff]
      %v362 = vld [vmem:[%s288 + $0x151] sm:$0xff]
      %v363 = vld [vmem:[%s288 + $0x159] sm:$0xff]
      %v364 = vld [vmem:[%s288 + $0x169] sm:$0xff]
      %v365 = vld [vmem:[%s288 + $0x171] sm:$0xff]
      %s366 = scalar_lea.vmem %s1, 24
      %v367 = vld [vmem:[%s366] sm:$0xff]
      %v368 = vld [vmem:[%s366 + $0x8] sm:$0xff]
      %v369 = vld [vmem:[%s366 + $0x10] sm:$0x3]
      %vm370 = vcmask 146432
      %v372 = vsel %vm370, %v334, 0
      %v375 = vsel %vm370, %v335, 0
      %v378 = vsel %vm370, %v336, 0
      %v381 = vsel %vm370, %v337, 0
      %v384 = vsel %vm370, %v338, 0
      %v387 = vsel %vm370, %v339, 0
      %v390 = vsel %vm370, %v340, 0
      %v393 = vsel %vm370, %v341, 0
      %v396 = vsel %vm370, %v342, 0
      %v399 = vsel %vm370, %v343, 0
      %v402 = vsel %vm370, %v344, 0
      %v405 = vsel %vm370, %v345, 0
      %v408 = vsel %vm370, %v346, 0
      %v411 = vsel %vm370, %v347, 0
      %v414 = vsel %vm370, %v348, 0
      %v417 = vsel %vm370, %v349, 0
      %v420 = vsel %vm370, %v350, 0
      %v423 = vsel %vm370, %v351, 0
      %v426 = vsel %vm370, %v352, 0
      %v429 = vsel %vm370, %v353, 0
      %v432 = vsel %vm370, %v354, 0
      %v435 = vsel %vm370, %v355, 0
      %v438 = vsel %vm370, %v356, 0
      %v441 = vsel %vm370, %v357, 0
      %v444 = vsel %vm370, %v358, 0
      %v447 = vsel %vm370, %v359, 0
      %v450 = vsel %vm370, %v360, 0
      %v453 = vsel %vm370, %v361, 0
      %v456 = vsel %vm370, %v362, 0
      %v459 = vsel %vm370, %v363, 0
      %v462 = vsel %vm370, %v364, 0
      %v465 = vsel %vm370, %v365, 0
      %vm467 = vcmask 1041408
      %v469 = vsel %vm467, %v369, 0
      %471 = vmatprep.subr.mxu0 0.0
      %472 = vmatpush1.msra.mxu0 %v367
      %473 = vmatprep.subr.mxu0 0.0
      %474 = vmatpush1.msra.mxu0 %v368
      %475 = vmatprep.subr.mxu0 0.0
      %476 = vmatpush1.msra.mxu0 %v469
      %477 = vmatprep.subr.mxu0 0.0
      %478 = vmatpush1.msra.mxu0 0.0
      %479 = vmatprep.subr.mxu0 0.0
      %480 = vmatpush1.msra.mxu0 0.0
      %481 = vmatprep.subr.mxu0 0.0
      %482 = vmatpush1.msra.mxu0 0.0
      %483 = vmatprep.subr.mxu0 0.0
      %484 = vmatpush1.msra.mxu0 0.0
      %485 = vmatprep.subr.mxu0 0.0
      %486 = vmatpush1.msra.mxu0 0.0
      %487 = vmatprep.subr.mxu0 0.0
      %488 = vmatpush1.msra.mxu0 0.0
      %489 = vmatprep.subr.mxu0 0.0
      %490 = vmatpush1.msra.mxu0 0.0
      %491 = vmatprep.subr.mxu0 0.0
      %492 = vmatpush1.msra.mxu0 0.0
      %493 = vmatprep.subr.mxu0 0.0
      %494 = vmatpush1.msra.mxu0 0.0
      %495 = vmatprep.subr.mxu0 0.0
      %496 = vmatpush1.msra.mxu0 0.0
      %497 = vmatprep.subr.mxu0 0.0
      %498 = vmatpush1.msra.mxu0 0.0
      %499 = vmatprep.subr.mxu0 0.0
      %500 = vmatpush1.msra.mxu0 0.0
      %501 = vmatprep.subr.mxu0 0.0
      %502 = vmatpush1.msra.mxu0 0.0
      %503 = vmatprep.subr.mxu0 0.0
      %504 = vmatpush1.msra.mxu0 0.0
      %505 = vmatprep.subr.mxu0 0.0
      %506 = vmatpush1.msra.mxu0 0.0
      %507 = vmatprep.subr.mxu0 0.0
      %508 = vmatpush1.msra.mxu0 0.0
      %509 = vmatprep.subr.mxu0 0.0
      %510 = vmatpush1.msra.mxu0 0.0
      %511 = vmatprep.subr.mxu0 0.0
      %512 = vmatpush1.msra.mxu0 0.0
      %513 = vmatprep.subr.mxu0 0.0
      %514 = vmatpush1.msra.mxu0 0.0
      %515 = vmatprep.subr.mxu0 0.0
      %516 = vmatpush1.msra.mxu0 0.0
      %517 = vmatprep.subr.mxu0 0.0
      %518 = vmatpush1.msra.mxu0 0.0
      %519 = vmatprep.subr.mxu0 0.0
      %520 = vmatpush1.msra.mxu0 0.0
      %521 = vmatprep.subr.mxu0 0.0
      %522 = vmatpush1.msra.mxu0 0.0
      %523 = vmatprep.subr.mxu0 0.0
      %524 = vmatpush1.msra.mxu0 0.0
      %525 = vmatprep.subr.mxu0 0.0
      %526 = vmatpush1.msra.mxu0 0.0
      %527 = vmatprep.subr.mxu0 0.0
      %528 = vmatpush1.msra.mxu0 0.0
      %529 = vmatprep.subr.mxu0 0.0
      %530 = vmatpush1.msra.mxu0 0.0
      %531 = vmatprep.subr.mxu0 0.0
      %532 = vmatpush1.msra.mxu0 0.0
      %533 = vmatprep.subr.mxu0 0.0
      %534 = vmatpush1.msra.mxu0 0.0
      %535 = vmatprep.mubr.f32.mxu0 0.0
      %536 = vmatmul.mubr.f32.gmra.mrb[0].mxu0 %v372
      %v537 = vpop.f32.mrb[0].mxu0
      %v538 = vadd.f32 0.0, %v537
      %v539 = vpop.f32.mrb[0].mxu0
      %540 = vmatprep.mubr.f32.mxu0 0.0
      %541 = vmatmul.mubr.f32.gmra.mrb[0].mxu0 %v375
      %v542 = vpop.f32.mrb[0].mxu0
      %v543 = vadd.f32 0.0, %v542
      %v544 = vpop.f32.mrb[0].mxu0
      %545 = vmatprep.mubr.f32.mxu0 0.0
      %546 = vmatmul.mubr.f32.gmra.mrb[0].mxu0 %v378
      %v547 = vpop.f32.mrb[0].mxu0
      %v548 = vadd.f32 0.0, %v547
      %v549 = vpop.f32.mrb[0].mxu0
      %550 = vmatprep.mubr.f32.mxu0 0.0
      %551 = vmatmul.mubr.f32.gmra.mrb[0].mxu0 %v381
      %v552 = vpop.f32.mrb[0].mxu0
      %v553 = vadd.f32 0.0, %v552
      %v554 = vpop.f32.mrb[0].mxu0
      %555 = vmatprep.mubr.f32.mxu0 0.0
      %556 = vmatmul.mubr.f32.gmra.mrb[0].mxu0 %v384
      %v557 = vpop.f32.mrb[0].mxu0
      %v558 = vadd.f32 0.0, %v557
      %v559 = vpop.f32.mrb[0].mxu0
      %560 = vmatprep.mubr.f32.mxu0 0.0
      %561 = vmatmul.mubr.f32.gmra.mrb[0].mxu0 %v387
      %v562 = vpop.f32.mrb[0].mxu0
      %v563 = vadd.f32 0.0, %v562
      %v564 = vpop.f32.mrb[0].mxu0
      %565 = vmatprep.mubr.f32.mxu0 0.0
      %566 = vmatmul.mubr.f32.gmra.mrb[0].mxu0 %v390
      %v567 = vpop.f32.mrb[0].mxu0
      %v568 = vadd.f32 0.0, %v567
      %v569 = vpop.f32.mrb[0].mxu0
      %570 = vmatprep.mubr.f32.mxu0 0.0
      %571 = vmatmul.mubr.f32.gmra.mrb[0].mxu0 %v393
      %v572 = vpop.f32.mrb[0].mxu0
      %v573 = vadd.f32 0.0, %v572
      %v574 = vpop.f32.mrb[0].mxu0
      %575 = vmatprep.mubr.f32.mxu0 0.0
      %576 = vmatmul.mubr.f32.gmra.mrb[0].mxu0 %v396
      %v577 = vpop.f32.mrb[0].mxu0
      %v578 = vadd.f32 0.0, %v577
      %v579 = vpop.f32.mrb[0].mxu0
      %580 = vmatprep.mubr.f32.mxu0 0.0
      %581 = vmatmul.mubr.f32.gmra.mrb[0].mxu0 %v399
      %v582 = vpop.f32.mrb[0].mxu0
      %v583 = vadd.f32 0.0, %v582
      %v584 = vpop.f32.mrb[0].mxu0
      %585 = vmatprep.mubr.f32.mxu0 0.0
      %586 = vmatmul.mubr.f32.gmra.mrb[0].mxu0 %v402
      %v587 = vpop.f32.mrb[0].mxu0
      %v588 = vadd.f32 0.0, %v587
      %v589 = vpop.f32.mrb[0].mxu0
      %590 = vmatprep.mubr.f32.mxu0 0.0
      %591 = vmatmul.mubr.f32.gmra.mrb[0].mxu0 %v405
      %v592 = vpop.f32.mrb[0].mxu0
      %v593 = vadd.f32 0.0, %v592
      %v594 = vpop.f32.mrb[0].mxu0
      %595 = vmatprep.mubr.f32.mxu0 0.0
      %596 = vmatmul.mubr.f32.gmra.mrb[0].mxu0 %v408
      %v597 = vpop.f32.mrb[0].mxu0
      %v598 = vadd.f32 0.0, %v597
      %v599 = vpop.f32.mrb[0].mxu0
      %600 = vmatprep.mubr.f32.mxu0 0.0
      %601 = vmatmul.mubr.f32.gmra.mrb[0].mxu0 %v411
      %v602 = vpop.f32.mrb[0].mxu0
      %v603 = vadd.f32 0.0, %v602
      %v604 = vpop.f32.mrb[0].mxu0
      %605 = vmatprep.mubr.f32.mxu0 0.0
      %606 = vmatmul.mubr.f32.gmra.mrb[0].mxu0 %v414
      %v607 = vpop.f32.mrb[0].mxu0
      %v608 = vadd.f32 0.0, %v607
      %v609 = vpop.f32.mrb[0].mxu0
      %610 = vmatprep.mubr.f32.mxu0 0.0
      %611 = vmatmul.mubr.f32.gmra.mrb[0].mxu0 %v417
      %v612 = vpop.f32.mrb[0].mxu0
      %v613 = vadd.f32 0.0, %v612
      %v614 = vpop.f32.mrb[0].mxu0
      %615 = vmatprep.mubr.f32.mxu0 0.0
      %616 = vmatmul.mubr.f32.gmra.mrb[0].mxu0 %v420
      %v617 = vpop.f32.mrb[0].mxu0
      %v618 = vadd.f32 0.0, %v617
      %v619 = vpop.f32.mrb[0].mxu0
      %620 = vmatprep.mubr.f32.mxu0 0.0
      %621 = vmatmul.mubr.f32.gmra.mrb[0].mxu0 %v423
      %v622 = vpop.f32.mrb[0].mxu0
      %v623 = vadd.f32 0.0, %v622
      %v624 = vpop.f32.mrb[0].mxu0
      %625 = vmatprep.mubr.f32.mxu0 0.0
      %626 = vmatmul.mubr.f32.gmra.mrb[0].mxu0 %v426
      %v627 = vpop.f32.mrb[0].mxu0
      %v628 = vadd.f32 0.0, %v627
      %v629 = vpop.f32.mrb[0].mxu0
      %630 = vmatprep.mubr.f32.mxu0 0.0
      %631 = vmatmul.mubr.f32.gmra.mrb[0].mxu0 %v429
      %v632 = vpop.f32.mrb[0].mxu0
      %v633 = vadd.f32 0.0, %v632
      %v634 = vpop.f32.mrb[0].mxu0
      %635 = vmatprep.mubr.f32.mxu0 0.0
      %636 = vmatmul.mubr.f32.gmra.mrb[0].mxu0 %v432
      %v637 = vpop.f32.mrb[0].mxu0
      %v638 = vadd.f32 0.0, %v637
      %v639 = vpop.f32.mrb[0].mxu0
      %640 = vmatprep.mubr.f32.mxu0 0.0
      %641 = vmatmul.mubr.f32.gmra.mrb[0].mxu0 %v435
      %v642 = vpop.f32.mrb[0].mxu0
      %v643 = vadd.f32 0.0, %v642
      %v644 = vpop.f32.mrb[0].mxu0
      %645 = vmatprep.mubr.f32.mxu0 0.0
      %646 = vmatmul.mubr.f32.gmra.mrb[0].mxu0 %v438
      %v647 = vpop.f32.mrb[0].mxu0
      %v648 = vadd.f32 0.0, %v647
      %v649 = vpop.f32.mrb[0].mxu0
      %650 = vmatprep.mubr.f32.mxu0 0.0
      %651 = vmatmul.mubr.f32.gmra.mrb[0].mxu0 %v441
      %v652 = vpop.f32.mrb[0].mxu0
      %v653 = vadd.f32 0.0, %v652
      %v654 = vpop.f32.mrb[0].mxu0
      %655 = vmatprep.mubr.f32.mxu0 0.0
      %656 = vmatmul.mubr.f32.gmra.mrb[0].mxu0 %v444
      %v657 = vpop.f32.mrb[0].mxu0
      %v658 = vadd.f32 0.0, %v657
      %v659 = vpop.f32.mrb[0].mxu0
      %660 = vmatprep.mubr.f32.mxu0 0.0
      %661 = vmatmul.mubr.f32.gmra.mrb[0].mxu0 %v447
      %v662 = vpop.f32.mrb[0].mxu0
      %v663 = vadd.f32 0.0, %v662
      %v664 = vpop.f32.mrb[0].mxu0
      %665 = vmatprep.mubr.f32.mxu0 0.0
      %666 = vmatmul.mubr.f32.gmra.mrb[0].mxu0 %v450
      %v667 = vpop.f32.mrb[0].mxu0
      %v668 = vadd.f32 0.0, %v667
      %v669 = vpop.f32.mrb[0].mxu0
      %670 = vmatprep.mubr.f32.mxu0 0.0
      %671 = vmatmul.mubr.f32.gmra.mrb[0].mxu0 %v453
      %v672 = vpop.f32.mrb[0].mxu0
      %v673 = vadd.f32 0.0, %v672
      %v674 = vpop.f32.mrb[0].mxu0
      %675 = vmatprep.mubr.f32.mxu0 0.0
      %676 = vmatmul.mubr.f32.gmra.mrb[0].mxu0 %v456
      %v677 = vpop.f32.mrb[0].mxu0
      %v678 = vadd.f32 0.0, %v677
      %v679 = vpop.f32.mrb[0].mxu0
      %680 = vmatprep.mubr.f32.mxu0 0.0
      %681 = vmatmul.mubr.f32.gmra.mrb[0].mxu0 %v459
      %v682 = vpop.f32.mrb[0].mxu0
      %v683 = vadd.f32 0.0, %v682
      %v684 = vpop.f32.mrb[0].mxu0
      %685 = vmatprep.mubr.f32.mxu0 0.0
      %686 = vmatmul.mubr.f32.gmra.mrb[0].mxu0 %v462
      %v687 = vpop.f32.mrb[0].mxu0
      %v688 = vadd.f32 0.0, %v687
      %v689 = vpop.f32.mrb[0].mxu0
      %690 = vmatprep.mubr.f32.mxu0 0.0
      %691 = vmatmul.mubr.f32.gmra.mrb[0].mxu0 %v465
      %v692 = vpop.f32.mrb[0].mxu0
      %v693 = vadd.f32 0.0, %v692
      %v694 = vpop.f32.mrb[0].mxu0
      %695 = vdwg.mxu0
      %v697 = vsel %vm370, %v299, 0
      %v700 = vsel %vm370, %v300, 0
      %v703 = vsel %vm370, %v301, 0
      %v706 = vsel %vm370, %v302, 0
      %v709 = vsel %vm370, %v303, 0
      %v712 = vsel %vm370, %v304, 0
      %v715 = vsel %vm370, %v305, 0
      %v718 = vsel %vm370, %v306, 0
      %v721 = vsel %vm370, %v307, 0
      %v724 = vsel %vm370, %v308, 0
      %v727 = vsel %vm370, %v309, 0
      %v730 = vsel %vm370, %v310, 0
      %v733 = vsel %vm370, %v311, 0
      %v736 = vsel %vm370, %v312, 0
      %v739 = vsel %vm370, %v313, 0
      %v742 = vsel %vm370, %v314, 0
      %v745 = vsel %vm370, %v315, 0
      %v748 = vsel %vm370, %v316, 0
      %v751 = vsel %vm370, %v317, 0
      %v754 = vsel %vm370, %v318, 0
      %v757 = vsel %vm370, %v319, 0
      %v760 = vsel %vm370, %v320, 0
      %v763 = vsel %vm370, %v321, 0
      %v766 = vsel %vm370, %v322, 0
      %v769 = vsel %vm370, %v323, 0
      %v772 = vsel %vm370, %v324, 0
      %v775 = vsel %vm370, %v325, 0
      %v778 = vsel %vm370, %v326, 0
      %v781 = vsel %vm370, %v327, 0
      %v784 = vsel %vm370, %v328, 0
      %v787 = vsel %vm370, %v329, 0
      %v790 = vsel %vm370, %v330, 0
      %v793 = vsel %vm467, %v333, 0
      %795 = vmatprep.subr.mxu0 0.0
      %796 = vmatpush1.msra.mxu0 %v331
      %797 = vmatprep.subr.mxu0 0.0
      %798 = vmatpush1.msra.mxu0 %v332
      %799 = vmatprep.subr.mxu0 0.0
      %800 = vmatpush1.msra.mxu0 %v793
      %801 = vmatprep.subr.mxu0 0.0
      %802 = vmatpush1.msra.mxu0 0.0
      %803 = vmatprep.subr.mxu0 0.0
      %804 = vmatpush1.msra.mxu0 0.0
      %805 = vmatprep.subr.mxu0 0.0
      %806 = vmatpush1.msra.mxu0 0.0
      %807 = vmatprep.subr.mxu0 0.0
      %808 = vmatpush1.msra.mxu0 0.0
      %809 = vmatprep.subr.mxu0 0.0
      %810 = vmatpush1.msra.mxu0 0.0
      %811 = vmatprep.subr.mxu0 0.0
      %812 = vmatpush1.msra.mxu0 0.0
      %813 = vmatprep.subr.mxu0 0.0
      %814 = vmatpush1.msra.mxu0 0.0
      %815 = vmatprep.subr.mxu0 0.0
      %816 = vmatpush1.msra.mxu0 0.0
      %817 = vmatprep.subr.mxu0 0.0
      %818 = vmatpush1.msra.mxu0 0.0
      %819 = vmatprep.subr.mxu0 0.0
      %820 = vmatpush1.msra.mxu0 0.0
      %821 = vmatprep.subr.mxu0 0.0
      %822 = vmatpush1.msra.mxu0 0.0
      %823 = vmatprep.subr.mxu0 0.0
      %824 = vmatpush1.msra.mxu0 0.0
      %825 = vmatprep.subr.mxu0 0.0
      %826 = vmatpush1.msra.mxu0 0.0
      %827 = vmatprep.subr.mxu0 0.0
      %828 = vmatpush1.msra.mxu0 0.0
      %829 = vmatprep.subr.mxu0 0.0
      %830 = vmatpush1.msra.mxu0 0.0
      %831 = vmatprep.subr.mxu0 0.0
      %832 = vmatpush1.msra.mxu0 0.0
      %833 = vmatprep.subr.mxu0 0.0
      %834 = vmatpush1.msra.mxu0 0.0
      %835 = vmatprep.subr.mxu0 0.0
      %836 = vmatpush1.msra.mxu0 0.0
      %837 = vmatprep.subr.mxu0 0.0
      %838 = vmatpush1.msra.mxu0 0.0
      %839 = vmatprep.subr.mxu0 0.0
      %840 = vmatpush1.msra.mxu0 0.0
      %841 = vmatprep.subr.mxu0 0.0
      %842 = vmatpush1.msra.mxu0 0.0
      %843 = vmatprep.subr.mxu0 0.0
      %844 = vmatpush1.msra.mxu0 0.0
      %845 = vmatprep.subr.mxu0 0.0
      %846 = vmatpush1.msra.mxu0 0.0
      %847 = vmatprep.subr.mxu0 0.0
      %848 = vmatpush1.msra.mxu0 0.0
      %849 = vmatprep.subr.mxu0 0.0
      %850 = vmatpush1.msra.mxu0 0.0
      %851 = vmatprep.subr.mxu0 0.0
      %852 = vmatpush1.msra.mxu0 0.0
      %853 = vmatprep.subr.mxu0 0.0
      %854 = vmatpush1.msra.mxu0 0.0
      %855 = vmatprep.subr.mxu0 0.0
      %856 = vmatpush1.msra.mxu0 0.0
      %857 = vmatprep.subr.mxu0 0.0
      %858 = vmatpush1.msra.mxu0 0.0
      %859 = vmatprep.mubr.f32.mxu0 0.0
      %860 = vmatmul.mubr.f32.gmra.mrb[0].mxu0 %v697
      %v861 = vpop.f32.mrb[0].mxu0
      %v862 = vadd.f32 %v538, %v861
      %v863 = vpop.f32.mrb[0].mxu0
      %864 = vmatprep.mubr.f32.mxu0 0.0
      %865 = vmatmul.mubr.f32.gmra.mrb[0].mxu0 %v700
      %v866 = vpop.f32.mrb[0].mxu0
      %v867 = vadd.f32 %v543, %v866
      %v868 = vpop.f32.mrb[0].mxu0
      %869 = vmatprep.mubr.f32.mxu0 0.0
      %870 = vmatmul.mubr.f32.gmra.mrb[0].mxu0 %v703
      %v871 = vpop.f32.mrb[0].mxu0
      %v872 = vadd.f32 %v548, %v871
      %v873 = vpop.f32.mrb[0].mxu0
      %874 = vmatprep.mubr.f32.mxu0 0.0
      %875 = vmatmul.mubr.f32.gmra.mrb[0].mxu0 %v706
      %v876 = vpop.f32.mrb[0].mxu0
      %v877 = vadd.f32 %v553, %v876
      %v878 = vpop.f32.mrb[0].mxu0
      %879 = vmatprep.mubr.f32.mxu0 0.0
      %880 = vmatmul.mubr.f32.gmra.mrb[0].mxu0 %v709
      %v881 = vpop.f32.mrb[0].mxu0
      %v882 = vadd.f32 %v558, %v881
      %v883 = vpop.f32.mrb[0].mxu0
      %884 = vmatprep.mubr.f32.mxu0 0.0
      %885 = vmatmul.mubr.f32.gmra.mrb[0].mxu0 %v712
      %v886 = vpop.f32.mrb[0].mxu0
      %v887 = vadd.f32 %v563, %v886
      %v888 = vpop.f32.mrb[0].mxu0
      %889 = vmatprep.mubr.f32.mxu0 0.0
      %890 = vmatmul.mubr.f32.gmra.mrb[0].mxu0 %v715
      %v891 = vpop.f32.mrb[0].mxu0
      %v892 = vadd.f32 %v568, %v891
      %v893 = vpop.f32.mrb[0].mxu0
      %894 = vmatprep.mubr.f32.mxu0 0.0
      %895 = vmatmul.mubr.f32.gmra.mrb[0].mxu0 %v718
      %v896 = vpop.f32.mrb[0].mxu0
      %v897 = vadd.f32 %v573, %v896
      %v898 = vpop.f32.mrb[0].mxu0
      %899 = vmatprep.mubr.f32.mxu0 0.0
      %900 = vmatmul.mubr.f32.gmra.mrb[0].mxu0 %v721
      %v901 = vpop.f32.mrb[0].mxu0
      %v902 = vadd.f32 %v578, %v901
      %v903 = vpop.f32.mrb[0].mxu0
      %904 = vmatprep.mubr.f32.mxu0 0.0
      %905 = vmatmul.mubr.f32.gmra.mrb[0].mxu0 %v724
      %v906 = vpop.f32.mrb[0].mxu0
      %v907 = vadd.f32 %v583, %v906
      %v908 = vpop.f32.mrb[0].mxu0
      %909 = vmatprep.mubr.f32.mxu0 0.0
      %910 = vmatmul.mubr.f32.gmra.mrb[0].mxu0 %v727
      %v911 = vpop.f32.mrb[0].mxu0
      %v912 = vadd.f32 %v588, %v911
      %v913 = vpop.f32.mrb[0].mxu0
      %914 = vmatprep.mubr.f32.mxu0 0.0
      %915 = vmatmul.mubr.f32.gmra.mrb[0].mxu0 %v730
      %v916 = vpop.f32.mrb[0].mxu0
      %v917 = vadd.f32 %v593, %v916
      %v918 = vpop.f32.mrb[0].mxu0
      %919 = vmatprep.mubr.f32.mxu0 0.0
      %920 = vmatmul.mubr.f32.gmra.mrb[0].mxu0 %v733
      %v921 = vpop.f32.mrb[0].mxu0
      %v922 = vadd.f32 %v598, %v921
      %v923 = vpop.f32.mrb[0].mxu0
      %924 = vmatprep.mubr.f32.mxu0 0.0
      %925 = vmatmul.mubr.f32.gmra.mrb[0].mxu0 %v736
      %v926 = vpop.f32.mrb[0].mxu0
      %v927 = vadd.f32 %v603, %v926
      %v928 = vpop.f32.mrb[0].mxu0
      %929 = vmatprep.mubr.f32.mxu0 0.0
      %930 = vmatmul.mubr.f32.gmra.mrb[0].mxu0 %v739
      %v931 = vpop.f32.mrb[0].mxu0
      %v932 = vadd.f32 %v608, %v931
      %v933 = vpop.f32.mrb[0].mxu0
      %934 = vmatprep.mubr.f32.mxu0 0.0
      %935 = vmatmul.mubr.f32.gmra.mrb[0].mxu0 %v742
      %v936 = vpop.f32.mrb[0].mxu0
      %v937 = vadd.f32 %v613, %v936
      %v938 = vpop.f32.mrb[0].mxu0
      %939 = vmatprep.mubr.f32.mxu0 0.0
      %940 = vmatmul.mubr.f32.gmra.mrb[0].mxu0 %v745
      %v941 = vpop.f32.mrb[0].mxu0
      %v942 = vadd.f32 %v618, %v941
      %v943 = vpop.f32.mrb[0].mxu0
      %944 = vmatprep.mubr.f32.mxu0 0.0
      %945 = vmatmul.mubr.f32.gmra.mrb[0].mxu0 %v748
      %v946 = vpop.f32.mrb[0].mxu0
      %v947 = vadd.f32 %v623, %v946
      %v948 = vpop.f32.mrb[0].mxu0
      %949 = vmatprep.mubr.f32.mxu0 0.0
      %950 = vmatmul.mubr.f32.gmra.mrb[0].mxu0 %v751
      %v951 = vpop.f32.mrb[0].mxu0
      %v952 = vadd.f32 %v628, %v951
      %v953 = vpop.f32.mrb[0].mxu0
      %954 = vmatprep.mubr.f32.mxu0 0.0
      %955 = vmatmul.mubr.f32.gmra.mrb[0].mxu0 %v754
      %v956 = vpop.f32.mrb[0].mxu0
      %v957 = vadd.f32 %v633, %v956
      %v958 = vpop.f32.mrb[0].mxu0
      %959 = vmatprep.mubr.f32.mxu0 0.0
      %960 = vmatmul.mubr.f32.gmra.mrb[0].mxu0 %v757
      %v961 = vpop.f32.mrb[0].mxu0
      %v962 = vadd.f32 %v638, %v961
      %v963 = vpop.f32.mrb[0].mxu0
      %964 = vmatprep.mubr.f32.mxu0 0.0
      %965 = vmatmul.mubr.f32.gmra.mrb[0].mxu0 %v760
      %v966 = vpop.f32.mrb[0].mxu0
      %v967 = vadd.f32 %v643, %v966
      %v968 = vpop.f32.mrb[0].mxu0
      %969 = vmatprep.mubr.f32.mxu0 0.0
      %970 = vmatmul.mubr.f32.gmra.mrb[0].mxu0 %v763
      %v971 = vpop.f32.mrb[0].mxu0
      %v972 = vadd.f32 %v648, %v971
      %v973 = vpop.f32.mrb[0].mxu0
      %974 = vmatprep.mubr.f32.mxu0 0.0
      %975 = vmatmul.mubr.f32.gmra.mrb[0].mxu0 %v766
      %v976 = vpop.f32.mrb[0].mxu0
      %v977 = vadd.f32 %v653, %v976
      %v978 = vpop.f32.mrb[0].mxu0
      %979 = vmatprep.mubr.f32.mxu0 0.0
      %980 = vmatmul.mubr.f32.gmra.mrb[0].mxu0 %v769
      %v981 = vpop.f32.mrb[0].mxu0
      %v982 = vadd.f32 %v658, %v981
      %v983 = vpop.f32.mrb[0].mxu0
      %984 = vmatprep.mubr.f32.mxu0 0.0
      %985 = vmatmul.mubr.f32.gmra.mrb[0].mxu0 %v772
      %v986 = vpop.f32.mrb[0].mxu0
      %v987 = vadd.f32 %v663, %v986
      %v988 = vpop.f32.mrb[0].mxu0
      %989 = vmatprep.mubr.f32.mxu0 0.0
      %990 = vmatmul.mubr.f32.gmra.mrb[0].mxu0 %v775
      %v991 = vpop.f32.mrb[0].mxu0
      %v992 = vadd.f32 %v668, %v991
      %v993 = vpop.f32.mrb[0].mxu0
      %994 = vmatprep.mubr.f32.mxu0 0.0
      %995 = vmatmul.mubr.f32.gmra.mrb[0].mxu0 %v778
      %v996 = vpop.f32.mrb[0].mxu0
      %v997 = vadd.f32 %v673, %v996
      %v998 = vpop.f32.mrb[0].mxu0
      %999 = vmatprep.mubr.f32.mxu0 0.0
      %1000 = vmatmul.mubr.f32.gmra.mrb[0].mxu0 %v781
      %v1001 = vpop.f32.mrb[0].mxu0
      %v1002 = vadd.f32 %v678, %v1001
      %v1003 = vpop.f32.mrb[0].mxu0
      %1004 = vmatprep.mubr.f32.mxu0 0.0
      %1005 = vmatmul.mubr.f32.gmra.mrb[0].mxu0 %v784
      %v1006 = vpop.f32.mrb[0].mxu0
      %v1007 = vadd.f32 %v683, %v1006
      %v1008 = vpop.f32.mrb[0].mxu0
      %1009 = vmatprep.mubr.f32.mxu0 0.0
      %1010 = vmatmul.mubr.f32.gmra.mrb[0].mxu0 %v787
      %v1011 = vpop.f32.mrb[0].mxu0
      %v1012 = vadd.f32 %v688, %v1011
      %v1013 = vpop.f32.mrb[0].mxu0
      %1014 = vmatprep.mubr.f32.mxu0 0.0
      %1015 = vmatmul.mubr.f32.gmra.mrb[0].mxu0 %v790
      %v1016 = vpop.f32.mrb[0].mxu0
      %v1017 = vadd.f32 %v693, %v1016
      %v1018 = vpop.f32.mrb[0].mxu0
      %1019 = vdwg.mxu0
      %v1020 = vld [vmem:[%s288 + $0x2] sm:$0xff]
      %v1021 = vld [vmem:[%s288 + $0xa] sm:$0xff]
      %v1022 = vld [vmem:[%s288 + $0x1a] sm:$0xff]
      %v1023 = vld [vmem:[%s288 + $0x22] sm:$0xff]
      %v1024 = vld [vmem:[%s288 + $0x32] sm:$0xff]
      %v1025 = vld [vmem:[%s288 + $0x3a] sm:$0xff]
      %v1026 = vld [vmem:[%s288 + $0x4a] sm:$0xff]
      %v1027 = vld [vmem:[%s288 + $0x52] sm:$0xff]
      %v1028 = vld [vmem:[%s288 + $0x62] sm:$0xff]
      %v1029 = vld [vmem:[%s288 + $0x6a] sm:$0xff]
      %v1030 = vld [vmem:[%s288 + $0x7a] sm:$0xff]
      %v1031 = vld [vmem:[%s288 + $0x82] sm:$0xff]
      %v1032 = vld [vmem:[%s288 + $0x92] sm:$0xff]
      %v1033 = vld [vmem:[%s288 + $0x9a] sm:$0xff]
      %v1034 = vld [vmem:[%s288 + $0xaa] sm:$0xff]
      %v1035 = vld [vmem:[%s288 + $0xb2] sm:$0xff]
      %v1036 = vld [vmem:[%s288 + $0xc2] sm:$0xff]
      %v1037 = vld [vmem:[%s288 + $0xca] sm:$0xff]
      %v1038 = vld [vmem:[%s288 + $0xda] sm:$0xff]
      %v1039 = vld [vmem:[%s288 + $0xe2] sm:$0xff]
      %v1040 = vld [vmem:[%s288 + $0xf2] sm:$0xff]
      %v1041 = vld [vmem:[%s288 + $0xfa] sm:$0xff]
      %v1042 = vld [vmem:[%s288 + $0x10a] sm:$0xff]
      %v1043 = vld [vmem:[%s288 + $0x112] sm:$0xff]
      %v1044 = vld [vmem:[%s288 + $0x122] sm:$0xff]
      %v1045 = vld [vmem:[%s288 + $0x12a] sm:$0xff]
      %v1046 = vld [vmem:[%s288 + $0x13a] sm:$0xff]
      %v1047 = vld [vmem:[%s288 + $0x142] sm:$0xff]
      %v1048 = vld [vmem:[%s288 + $0x152] sm:$0xff]
      %v1049 = vld [vmem:[%s288 + $0x15a] sm:$0xff]
      %v1050 = vld [vmem:[%s288 + $0x16a] sm:$0xff]
      %v1051 = vld [vmem:[%s288 + $0x172] sm:$0xff]
      %s1052 = scalar_lea.vmem %s1, 48
      %v1053 = vld [vmem:[%s1052] sm:$0xff]
      %v1054 = vld [vmem:[%s1052 + $0x8] sm:$0xff]
      %v1055 = vld [vmem:[%s1052 + $0x10] sm:$0x3]
      %v1057 = vsel %vm370, %v1020, 0
      %v1060 = vsel %vm370, %v1021, 0
      %v1063 = vsel %vm370, %v1022, 0
      %v1066 = vsel %vm370, %v1023, 0
      %v1069 = vsel %vm370, %v1024, 0
      %v1072 = vsel %vm370, %v1025, 0
      %v1075 = vsel %vm370, %v1026, 0
      %v1078 = vsel %vm370, %v1027, 0
      %v1081 = vsel %vm370, %v1028, 0
      %v1084 = vsel %vm370, %v1029, 0
      %v1087 = vsel %vm370, %v1030, 0
      %v1090 = vsel %vm370, %v1031, 0
      %v1093 = vsel %vm370, %v1032, 0
      %v1096 = vsel %vm370, %v1033, 0
      %v1099 = vsel %vm370, %v1034, 0
      %v1102 = vsel %vm370, %v1035, 0
      %v1105 = vsel %vm370, %v1036, 0
      %v1108 = vsel %vm370, %v1037, 0
      %v1111 = vsel %vm370, %v1038, 0
      %v1114 = vsel %vm370, %v1039, 0
      %v1117 = vsel %vm370, %v1040, 0
      %v1120 = vsel %vm370, %v1041, 0
      %v1123 = vsel %vm370, %v1042, 0
      %v1126 = vsel %vm370, %v1043, 0
      %v1129 = vsel %vm370, %v1044, 0
      %v1132 = vsel %vm370, %v1045, 0
      %v1135 = vsel %vm370, %v1046, 0
      %v1138 = vsel %vm370, %v1047, 0
      %v1141 = vsel %vm370, %v1048, 0
      %v1144 = vsel %vm370, %v1049, 0
      %v1147 = vsel %vm370, %v1050, 0
      %v1150 = vsel %vm370, %v1051, 0
      %v1153 = vsel %vm467, %v1055, 0
      %1155 = vmatprep.subr.mxu0 0.0
      %1156 = vmatpush1.msra.mxu0 %v1053
      %1157 = vmatprep.subr.mxu0 0.0
      %1158 = vmatpush1.msra.mxu0 %v1054
      %1159 = vmatprep.subr.mxu0 0.0
      %1160 = vmatpush1.msra.mxu0 %v1153
      %1161 = vmatprep.subr.mxu0 0.0
      %1162 = vmatpush1.msra.mxu0 0.0
      %1163 = vmatprep.subr.mxu0 0.0
      %1164 = vmatpush1.msra.mxu0 0.0
      %1165 = vmatprep.subr.mxu0 0.0
      %1166 = vmatpush1.msra.mxu0 0.0
      %1167 = vmatprep.subr.mxu0 0.0
      %1168 = vmatpush1.msra.mxu0 0.0
      %1169 = vmatprep.subr.mxu0 0.0
      %1170 = vmatpush1.msra.mxu0 0.0
      %1171 = vmatprep.subr.mxu0 0.0
      %1172 = vmatpush1.msra.mxu0 0.0
      %1173 = vmatprep.subr.mxu0 0.0
      %1174 = vmatpush1.msra.mxu0 0.0
      %1175 = vmatprep.subr.mxu0 0.0
      %1176 = vmatpush1.msra.mxu0 0.0
      %1177 = vmatprep.subr.mxu0 0.0
      %1178 = vmatpush1.msra.mxu0 0.0
      %1179 = vmatprep.subr.mxu0 0.0
      %1180 = vmatpush1.msra.mxu0 0.0
      %1181 = vmatprep.subr.mxu0 0.0
      %1182 = vmatpush1.msra.mxu0 0.0
      %1183 = vmatprep.subr.mxu0 0.0
      %1184 = vmatpush1.msra.mxu0 0.0
      %1185 = vmatprep.subr.mxu0 0.0
      %1186 = vmatpush1.msra.mxu0 0.0
      %1187 = vmatprep.subr.mxu0 0.0
      %1188 = vmatpush1.msra.mxu0 0.0
      %1189 = vmatprep.subr.mxu0 0.0
      %1190 = vmatpush1.msra.mxu0 0.0
      %1191 = vmatprep.subr.mxu0 0.0
      %1192 = vmatpush1.msra.mxu0 0.0
      %1193 = vmatprep.subr.mxu0 0.0
      %1194 = vmatpush1.msra.mxu0 0.0
      %1195 = vmatprep.subr.mxu0 0.0
      %1196 = vmatpush1.msra.mxu0 0.0
      %1197 = vmatprep.subr.mxu0 0.0
      %1198 = vmatpush1.msra.mxu0 0.0
      %1199 = vmatprep.subr.mxu0 0.0
      %1200 = vmatpush1.msra.mxu0 0.0
      %1201 = vmatprep.subr.mxu0 0.0
      %1202 = vmatpush1.msra.mxu0 0.0
      %1203 = vmatprep.subr.mxu0 0.0
      %1204 = vmatpush1.msra.mxu0 0.0
      %1205 = vmatprep.subr.mxu0 0.0
      %1206 = vmatpush1.msra.mxu0 0.0
      %1207 = vmatprep.subr.mxu0 0.0
      %1208 = vmatpush1.msra.mxu0 0.0
      %1209 = vmatprep.subr.mxu0 0.0
      %1210 = vmatpush1.msra.mxu0 0.0
      %1211 = vmatprep.subr.mxu0 0.0
      %1212 = vmatpush1.msra.mxu0 0.0
      %1213 = vmatprep.subr.mxu0 0.0
      %1214 = vmatpush1.msra.mxu0 0.0
      %1215 = vmatprep.subr.mxu0 0.0
      %1216 = vmatpush1.msra.mxu0 0.0
      %1217 = vmatprep.subr.mxu0 0.0
      %1218 = vmatpush1.msra.mxu0 0.0
      %1219 = vmatprep.mubr.f32.mxu0 0.0
      %1220 = vmatmul.mubr.f32.gmra.mrb[0].mxu0 %v1057
      %v1221 = vpop.f32.mrb[0].mxu0
      %v1222 = vadd.f32 0.0, %v1221
      %v1223 = vpop.f32.mrb[0].mxu0
      %1224 = vmatprep.mubr.f32.mxu0 0.0
      %1225 = vmatmul.mubr.f32.gmra.mrb[0].mxu0 %v1060
      %v1226 = vpop.f32.mrb[0].mxu0
      %v1227 = vadd.f32 0.0, %v1226
      %v1228 = vpop.f32.mrb[0].mxu0
      %1229 = vmatprep.mubr.f32.mxu0 0.0
      %1230 = vmatmul.mubr.f32.gmra.mrb[0].mxu0 %v1063
      %v1231 = vpop.f32.mrb[0].mxu0
      %v1232 = vadd.f32 0.0, %v1231
      %v1233 = vpop.f32.mrb[0].mxu0
      %1234 = vmatprep.mubr.f32.mxu0 0.0
      %1235 = vmatmul.mubr.f32.gmra.mrb[0].mxu0 %v1066
      %v1236 = vpop.f32.mrb[0].mxu0
      %v1237 = vadd.f32 0.0, %v1236
      %v1238 = vpop.f32.mrb[0].mxu0
      %1239 = vmatprep.mubr.f32.mxu0 0.0
      %1240 = vmatmul.mubr.f32.gmra.mrb[0].mxu0 %v1069
      %v1241 = vpop.f32.mrb[0].mxu0
      %v1242 = vadd.f32 0.0, %v1241
      %v1243 = vpop.f32.mrb[0].mxu0
      %1244 = vmatprep.mubr.f32.mxu0 0.0
      %1245 = vmatmul.mubr.f32.gmra.mrb[0].mxu0 %v1072
      %v1246 = vpop.f32.mrb[0].mxu0
      %v1247 = vadd.f32 0.0, %v1246
      %v1248 = vpop.f32.mrb[0].mxu0
      %1249 = vmatprep.mubr.f32.mxu0 0.0
      %1250 = vmatmul.mubr.f32.gmra.mrb[0].mxu0 %v1075
      %v1251 = vpop.f32.mrb[0].mxu0
      %v1252 = vadd.f32 0.0, %v1251
      %v1253 = vpop.f32.mrb[0].mxu0
      %1254 = vmatprep.mubr.f32.mxu0 0.0
      %1255 = vmatmul.mubr.f32.gmra.mrb[0].mxu0 %v1078
      %v1256 = vpop.f32.mrb[0].mxu0
      %v1257 = vadd.f32 0.0, %v1256
      %v1258 = vpop.f32.mrb[0].mxu0
      %1259 = vmatprep.mubr.f32.mxu0 0.0
      %1260 = vmatmul.mubr.f32.gmra.mrb[0].mxu0 %v1081
      %v1261 = vpop.f32.mrb[0].mxu0
      %v1262 = vadd.f32 0.0, %v1261
      %v1263 = vpop.f32.mrb[0].mxu0
      %1264 = vmatprep.mubr.f32.mxu0 0.0
      %1265 = vmatmul.mubr.f32.gmra.mrb[0].mxu0 %v1084
      %v1266 = vpop.f32.mrb[0].mxu0
      %v1267 = vadd.f32 0.0, %v1266
      %v1268 = vpop.f32.mrb[0].mxu0
      %1269 = vmatprep.mubr.f32.mxu0 0.0
      %1270 = vmatmul.mubr.f32.gmra.mrb[0].mxu0 %v1087
      %v1271 = vpop.f32.mrb[0].mxu0
      %v1272 = vadd.f32 0.0, %v1271
      %v1273 = vpop.f32.mrb[0].mxu0
      %1274 = vmatprep.mubr.f32.mxu0 0.0
      %1275 = vmatmul.mubr.f32.gmra.mrb[0].mxu0 %v1090
      %v1276 = vpop.f32.mrb[0].mxu0
      %v1277 = vadd.f32 0.0, %v1276
      %v1278 = vpop.f32.mrb[0].mxu0
      %1279 = vmatprep.mubr.f32.mxu0 0.0
      %1280 = vmatmul.mubr.f32.gmra.mrb[0].mxu0 %v1093
      %v1281 = vpop.f32.mrb[0].mxu0
      %v1282 = vadd.f32 0.0, %v1281
      %v1283 = vpop.f32.mrb[0].mxu0
      %1284 = vmatprep.mubr.f32.mxu0 0.0
      %1285 = vmatmul.mubr.f32.gmra.mrb[0].mxu0 %v1096
      %v1286 = vpop.f32.mrb[0].mxu0
      %v1287 = vadd.f32 0.0, %v1286
      %v1288 = vpop.f32.mrb[0].mxu0
      %1289 = vmatprep.mubr.f32.mxu0 0.0
      %1290 = vmatmul.mubr.f32.gmra.mrb[0].mxu0 %v1099
      %v1291 = vpop.f32.mrb[0].mxu0
      %v1292 = vadd.f32 0.0, %v1291
      %v1293 = vpop.f32.mrb[0].mxu0
      %1294 = vmatprep.mubr.f32.mxu0 0.0
      %1295 = vmatmul.mubr.f32.gmra.mrb[0].mxu0 %v1102
      %v1296 = vpop.f32.mrb[0].mxu0
      %v1297 = vadd.f32 0.0, %v1296
      %v1298 = vpop.f32.mrb[0].mxu0
      %1299 = vmatprep.mubr.f32.mxu0 0.0
      %1300 = vmatmul.mubr.f32.gmra.mrb[0].mxu0 %v1105
      %v1301 = vpop.f32.mrb[0].mxu0
      %v1302 = vadd.f32 0.0, %v1301
      %v1303 = vpop.f32.mrb[0].mxu0
      %1304 = vmatprep.mubr.f32.mxu0 0.0
      %1305 = vmatmul.mubr.f32.gmra.mrb[0].mxu0 %v1108
      %v1306 = vpop.f32.mrb[0].mxu0
      %v1307 = vadd.f32 0.0, %v1306
      %v1308 = vpop.f32.mrb[0].mxu0
      %1309 = vmatprep.mubr.f32.mxu0 0.0
      %1310 = vmatmul.mubr.f32.gmra.mrb[0].mxu0 %v1111
      %v1311 = vpop.f32.mrb[0].mxu0
      %v1312 = vadd.f32 0.0, %v1311
      %v1313 = vpop.f32.mrb[0].mxu0
      %1314 = vmatprep.mubr.f32.mxu0 0.0
      %1315 = vmatmul.mubr.f32.gmra.mrb[0].mxu0 %v1114
      %v1316 = vpop.f32.mrb[0].mxu0
      %v1317 = vadd.f32 0.0, %v1316
      %v1318 = vpop.f32.mrb[0].mxu0
      %1319 = vmatprep.mubr.f32.mxu0 0.0
      %1320 = vmatmul.mubr.f32.gmra.mrb[0].mxu0 %v1117
      %v1321 = vpop.f32.mrb[0].mxu0
      %v1322 = vadd.f32 0.0, %v1321
      %v1323 = vpop.f32.mrb[0].mxu0
      %1324 = vmatprep.mubr.f32.mxu0 0.0
      %1325 = vmatmul.mubr.f32.gmra.mrb[0].mxu0 %v1120
      %v1326 = vpop.f32.mrb[0].mxu0
      %v1327 = vadd.f32 0.0, %v1326
      %v1328 = vpop.f32.mrb[0].mxu0
      %1329 = vmatprep.mubr.f32.mxu0 0.0
      %1330 = vmatmul.mubr.f32.gmra.mrb[0].mxu0 %v1123
      %v1331 = vpop.f32.mrb[0].mxu0
      %v1332 = vadd.f32 0.0, %v1331
      %v1333 = vpop.f32.mrb[0].mxu0
      %1334 = vmatprep.mubr.f32.mxu0 0.0
      %1335 = vmatmul.mubr.f32.gmra.mrb[0].mxu0 %v1126
      %v1336 = vpop.f32.mrb[0].mxu0
      %v1337 = vadd.f32 0.0, %v1336
      %v1338 = vpop.f32.mrb[0].mxu0
      %1339 = vmatprep.mubr.f32.mxu0 0.0
      %1340 = vmatmul.mubr.f32.gmra.mrb[0].mxu0 %v1129
      %v1341 = vpop.f32.mrb[0].mxu0
      %v1342 = vadd.f32 0.0, %v1341
      %v1343 = vpop.f32.mrb[0].mxu0
      %1344 = vmatprep.mubr.f32.mxu0 0.0
      %1345 = vmatmul.mubr.f32.gmra.mrb[0].mxu0 %v1132
      %v1346 = vpop.f32.mrb[0].mxu0
      %v1347 = vadd.f32 0.0, %v1346
      %v1348 = vpop.f32.mrb[0].mxu0
      %1349 = vmatprep.mubr.f32.mxu0 0.0
      %1350 = vmatmul.mubr.f32.gmra.mrb[0].mxu0 %v1135
      %v1351 = vpop.f32.mrb[0].mxu0
      %v1352 = vadd.f32 0.0, %v1351
      %v1353 = vpop.f32.mrb[0].mxu0
      %1354 = vmatprep.mubr.f32.mxu0 0.0
      %1355 = vmatmul.mubr.f32.gmra.mrb[0].mxu0 %v1138
      %v1356 = vpop.f32.mrb[0].mxu0
      %v1357 = vadd.f32 0.0, %v1356
      %v1358 = vpop.f32.mrb[0].mxu0
      %1359 = vmatprep.mubr.f32.mxu0 0.0
      %1360 = vmatmul.mubr.f32.gmra.mrb[0].mxu0 %v1141
      %v1361 = vpop.f32.mrb[0].mxu0
      %v1362 = vadd.f32 0.0, %v1361
      %v1363 = vpop.f32.mrb[0].mxu0
      %1364 = vmatprep.mubr.f32.mxu0 0.0
      %1365 = vmatmul.mubr.f32.gmra.mrb[0].mxu0 %v1144
      %v1366 = vpop.f32.mrb[0].mxu0
      %v1367 = vadd.f32 0.0, %v1366
      %v1368 = vpop.f32.mrb[0].mxu0
      %1369 = vmatprep.mubr.f32.mxu0 0.0
      %1370 = vmatmul.mubr.f32.gmra.mrb[0].mxu0 %v1147
      %v1371 = vpop.f32.mrb[0].mxu0
      %v1372 = vadd.f32 0.0, %v1371
      %v1373 = vpop.f32.mrb[0].mxu0
      %1374 = vmatprep.mubr.f32.mxu0 0.0
      %1375 = vmatmul.mubr.f32.gmra.mrb[0].mxu0 %v1150
      %v1376 = vpop.f32.mrb[0].mxu0
      %v1377 = vadd.f32 0.0, %v1376
      %v1378 = vpop.f32.mrb[0].mxu0
      %1379 = vdwg.mxu0
      %v1380 = vadd.f32 %v862, %v1222
      %v1381 = vadd.f32 %v867, %v1227
      %v1382 = vadd.f32 %v872, %v1232
      %v1383 = vadd.f32 %v877, %v1237
      %v1384 = vadd.f32 %v882, %v1242
      %v1385 = vadd.f32 %v887, %v1247
      %v1386 = vadd.f32 %v892, %v1252
      %v1387 = vadd.f32 %v897, %v1257
      %v1388 = vadd.f32 %v902, %v1262
      %v1389 = vadd.f32 %v907, %v1267
      %v1390 = vadd.f32 %v912, %v1272
      %v1391 = vadd.f32 %v917, %v1277
      %v1392 = vadd.f32 %v922, %v1282
      %v1393 = vadd.f32 %v927, %v1287
      %v1394 = vadd.f32 %v932, %v1292
      %v1395 = vadd.f32 %v937, %v1297
      %v1396 = vadd.f32 %v942, %v1302
      %v1397 = vadd.f32 %v947, %v1307
      %v1398 = vadd.f32 %v952, %v1312
      %v1399 = vadd.f32 %v957, %v1317
      %v1400 = vadd.f32 %v962, %v1322
      %v1401 = vadd.f32 %v967, %v1327
      %v1402 = vadd.f32 %v972, %v1332
      %v1403 = vadd.f32 %v977, %v1337
      %v1404 = vadd.f32 %v982, %v1342
      %v1405 = vadd.f32 %v987, %v1347
      %v1406 = vadd.f32 %v992, %v1352
      %v1407 = vadd.f32 %v997, %v1357
      %v1408 = vadd.f32 %v1002, %v1362
      %v1409 = vadd.f32 %v1007, %v1367
      %v1410 = vadd.f32 %v1012, %v1372
      %v1411 = vadd.f32 %v1017, %v1377
      %s1412 = scalar_lea.vmem %s288, 24
      %v1413 = vld [vmem:[%s1412] sm:$0xff]
      %v1414 = vld [vmem:[%s1412 + $0x8] sm:$0xff]
      %v1415 = vld [vmem:[%s1412 + $0x18] sm:$0xff]
      %v1416 = vld [vmem:[%s1412 + $0x20] sm:$0xff]
      %v1417 = vld [vmem:[%s1412 + $0x30] sm:$0xff]
      %v1418 = vld [vmem:[%s1412 + $0x38] sm:$0xff]
      %v1419 = vld [vmem:[%s1412 + $0x48] sm:$0xff]
      %v1420 = vld [vmem:[%s1412 + $0x50] sm:$0xff]
      %v1421 = vld [vmem:[%s1412 + $0x60] sm:$0xff]
      %v1422 = vld [vmem:[%s1412 + $0x68] sm:$0xff]
      %v1423 = vld [vmem:[%s1412 + $0x78] sm:$0xff]
      %v1424 = vld [vmem:[%s1412 + $0x80] sm:$0xff]
      %v1425 = vld [vmem:[%s1412 + $0x90] sm:$0xff]
      %v1426 = vld [vmem:[%s1412 + $0x98] sm:$0xff]
      %v1427 = vld [vmem:[%s1412 + $0xa8] sm:$0xff]
      %v1428 = vld [vmem:[%s1412 + $0xb0] sm:$0xff]
      %v1429 = vld [vmem:[%s1412 + $0xc0] sm:$0xff]
      %v1430 = vld [vmem:[%s1412 + $0xc8] sm:$0xff]
      %v1431 = vld [vmem:[%s1412 + $0xd8] sm:$0xff]
      %v1432 = vld [vmem:[%s1412 + $0xe0] sm:$0xff]
      %v1433 = vld [vmem:[%s1412 + $0xf0] sm:$0xff]
      %v1434 = vld [vmem:[%s1412 + $0xf8] sm:$0xff]
      %v1435 = vld [vmem:[%s1412 + $0x108] sm:$0xff]
      %v1436 = vld [vmem:[%s1412 + $0x110] sm:$0xff]
      %v1437 = vld [vmem:[%s1412 + $0x120] sm:$0xff]
      %v1438 = vld [vmem:[%s1412 + $0x128] sm:$0xff]
      %v1439 = vld [vmem:[%s1412 + $0x138] sm:$0xff]
      %v1440 = vld [vmem:[%s1412 + $0x140] sm:$0xff]
      %v1441 = vld [vmem:[%s1412 + $0x150] sm:$0xff]
      %v1442 = vld [vmem:[%s1412 + $0x158] sm:$0xff]
      %v1443 = vld [vmem:[%s1412 + $0x168] sm:$0xff]
      %v1444 = vld [vmem:[%s1412 + $0x170] sm:$0xff]
      %s1445 = scalar_lea.vmem %s1, 72
      %v1446 = vld [vmem:[%s1445] sm:$0xff]
      %v1447 = vld [vmem:[%s1445 + $0x8] sm:$0xff]
      %v1448 = vld [vmem:[%s1445 + $0x10] sm:$0x3]
      %v1450 = vsel %vm370, %v1413, 0
      %v1453 = vsel %vm370, %v1414, 0
      %v1456 = vsel %vm370, %v1415, 0
      %v1459 = vsel %vm370, %v1416, 0
      %v1462 = vsel %vm370, %v1417, 0
      %v1465 = vsel %vm370, %v1418, 0
      %v1468 = vsel %vm370, %v1419, 0
      %v1471 = vsel %vm370, %v1420, 0
      %v1474 = vsel %vm370, %v1421, 0
      %v1477 = vsel %vm370, %v1422, 0
      %v1480 = vsel %vm370, %v1423, 0
      %v1483 = vsel %vm370, %v1424, 0
      %v1486 = vsel %vm370, %v1425, 0
      %v1489 = vsel %vm370, %v1426, 0
      %v1492 = vsel %vm370, %v1427, 0
      %v1495 = vsel %vm370, %v1428, 0
      %v1498 = vsel %vm370, %v1429, 0
      %v1501 = vsel %vm370, %v1430, 0
      %v1504 = vsel %vm370, %v1431, 0
      %v1507 = vsel %vm370, %v1432, 0
      %v1510 = vsel %vm370, %v1433, 0
      %v1513 = vsel %vm370, %v1434, 0
      %v1516 = vsel %vm370, %v1435, 0
      %v1519 = vsel %vm370, %v1436, 0
      %v1522 = vsel %vm370, %v1437, 0
      %v1525 = vsel %vm370, %v1438, 0
      %v1528 = vsel %vm370, %v1439, 0
      %v1531 = vsel %vm370, %v1440, 0
      %v1534 = vsel %vm370, %v1441, 0
      %v1537 = vsel %vm370, %v1442, 0
      %v1540 = vsel %vm370, %v1443, 0
      %v1543 = vsel %vm370, %v1444, 0
      %v1546 = vsel %vm467, %v1448, 0
      %1548 = vmatprep.subr.mxu0 0.0
      %1549 = vmatpush1.msra.mxu0 %v1446
      %1550 = vmatprep.subr.mxu0 0.0
      %1551 = vmatpush1.msra.mxu0 %v1447
      %1552 = vmatprep.subr.mxu0 0.0
      %1553 = vmatpush1.msra.mxu0 %v1546
      %1554 = vmatprep.subr.mxu0 0.0
      %1555 = vmatpush1.msra.mxu0 0.0
      %1556 = vmatprep.subr.mxu0 0.0
      %1557 = vmatpush1.msra.mxu0 0.0
      %1558 = vmatprep.subr.mxu0 0.0
      %1559 = vmatpush1.msra.mxu0 0.0
      %1560 = vmatprep.subr.mxu0 0.0
      %1561 = vmatpush1.msra.mxu0 0.0
      %1562 = vmatprep.subr.mxu0 0.0
      %1563 = vmatpush1.msra.mxu0 0.0
      %1564 = vmatprep.subr.mxu0 0.0
      %1565 = vmatpush1.msra.mxu0 0.0
      %1566 = vmatprep.subr.mxu0 0.0
      %1567 = vmatpush1.msra.mxu0 0.0
      %1568 = vmatprep.subr.mxu0 0.0
      %1569 = vmatpush1.msra.mxu0 0.0
      %1570 = vmatprep.subr.mxu0 0.0
      %1571 = vmatpush1.msra.mxu0 0.0
      %1572 = vmatprep.subr.mxu0 0.0
      %1573 = vmatpush1.msra.mxu0 0.0
      %1574 = vmatprep.subr.mxu0 0.0
      %1575 = vmatpush1.msra.mxu0 0.0
      %1576 = vmatprep.subr.mxu0 0.0
      %1577 = vmatpush1.msra.mxu0 0.0
      %1578 = vmatprep.subr.mxu0 0.0
      %1579 = vmatpush1.msra.mxu0 0.0
      %1580 = vmatprep.subr.mxu0 0.0
      %1581 = vmatpush1.msra.mxu0 0.0
      %1582 = vmatprep.subr.mxu0 0.0
      %1583 = vmatpush1.msra.mxu0 0.0
      %1584 = vmatprep.subr.mxu0 0.0
      %1585 = vmatpush1.msra.mxu0 0.0
      %1586 = vmatprep.subr.mxu0 0.0
      %1587 = vmatpush1.msra.mxu0 0.0
      %1588 = vmatprep.subr.mxu0 0.0
      %1589 = vmatpush1.msra.mxu0 0.0
      %1590 = vmatprep.subr.mxu0 0.0
      %1591 = vmatpush1.msra.mxu0 0.0
      %1592 = vmatprep.subr.mxu0 0.0
      %1593 = vmatpush1.msra.mxu0 0.0
      %1594 = vmatprep.subr.mxu0 0.0
      %1595 = vmatpush1.msra.mxu0 0.0
      %1596 = vmatprep.subr.mxu0 0.0
      %1597 = vmatpush1.msra.mxu0 0.0
      %1598 = vmatprep.subr.mxu0 0.0
      %1599 = vmatpush1.msra.mxu0 0.0
      %1600 = vmatprep.subr.mxu0 0.0
      %1601 = vmatpush1.msra.mxu0 0.0
      %1602 = vmatprep.subr.mxu0 0.0
      %1603 = vmatpush1.msra.mxu0 0.0
      %1604 = vmatprep.subr.mxu0 0.0
      %1605 = vmatpush1.msra.mxu0 0.0
      %1606 = vmatprep.subr.mxu0 0.0
      %1607 = vmatpush1.msra.mxu0 0.0
      %1608 = vmatprep.subr.mxu0 0.0
      %1609 = vmatpush1.msra.mxu0 0.0
      %1610 = vmatprep.subr.mxu0 0.0
      %1611 = vmatpush1.msra.mxu0 0.0
      %1612 = vmatprep.mubr.f32.mxu0 0.0
      %1613 = vmatmul.mubr.f32.gmra.mrb[0].mxu0 %v1450
      %v1614 = vpop.f32.mrb[0].mxu0
      %v1615 = vadd.f32 0.0, %v1614
      %v1616 = vpop.f32.mrb[0].mxu0
      %1617 = vmatprep.mubr.f32.mxu0 0.0
      %1618 = vmatmul.mubr.f32.gmra.mrb[0].mxu0 %v1453
      %v1619 = vpop.f32.mrb[0].mxu0
      %v1620 = vadd.f32 0.0, %v1619
      %v1621 = vpop.f32.mrb[0].mxu0
      %1622 = vmatprep.mubr.f32.mxu0 0.0
      %1623 = vmatmul.mubr.f32.gmra.mrb[0].mxu0 %v1456
      %v1624 = vpop.f32.mrb[0].mxu0
      %v1625 = vadd.f32 0.0, %v1624
      %v1626 = vpop.f32.mrb[0].mxu0
      %1627 = vmatprep.mubr.f32.mxu0 0.0
      %1628 = vmatmul.mubr.f32.gmra.mrb[0].mxu0 %v1459
      %v1629 = vpop.f32.mrb[0].mxu0
      %v1630 = vadd.f32 0.0, %v1629
      %v1631 = vpop.f32.mrb[0].mxu0
      %1632 = vmatprep.mubr.f32.mxu0 0.0
      %1633 = vmatmul.mubr.f32.gmra.mrb[0].mxu0 %v1462
      %v1634 = vpop.f32.mrb[0].mxu0
      %v1635 = vadd.f32 0.0, %v1634
      %v1636 = vpop.f32.mrb[0].mxu0
      %1637 = vmatprep.mubr.f32.mxu0 0.0
      %1638 = vmatmul.mubr.f32.gmra.mrb[0].mxu0 %v1465
      %v1639 = vpop.f32.mrb[0].mxu0
      %v1640 = vadd.f32 0.0, %v1639
      %v1641 = vpop.f32.mrb[0].mxu0
      %1642 = vmatprep.mubr.f32.mxu0 0.0
      %1643 = vmatmul.mubr.f32.gmra.mrb[0].mxu0 %v1468
      %v1644 = vpop.f32.mrb[0].mxu0
      %v1645 = vadd.f32 0.0, %v1644
      %v1646 = vpop.f32.mrb[0].mxu0
      %1647 = vmatprep.mubr.f32.mxu0 0.0
      %1648 = vmatmul.mubr.f32.gmra.mrb[0].mxu0 %v1471
      %v1649 = vpop.f32.mrb[0].mxu0
      %v1650 = vadd.f32 0.0, %v1649
      %v1651 = vpop.f32.mrb[0].mxu0
      %1652 = vmatprep.mubr.f32.mxu0 0.0
      %1653 = vmatmul.mubr.f32.gmra.mrb[0].mxu0 %v1474
      %v1654 = vpop.f32.mrb[0].mxu0
      %v1655 = vadd.f32 0.0, %v1654
      %v1656 = vpop.f32.mrb[0].mxu0
      %1657 = vmatprep.mubr.f32.mxu0 0.0
      %1658 = vmatmul.mubr.f32.gmra.mrb[0].mxu0 %v1477
      %v1659 = vpop.f32.mrb[0].mxu0
      %v1660 = vadd.f32 0.0, %v1659
      %v1661 = vpop.f32.mrb[0].mxu0
      %1662 = vmatprep.mubr.f32.mxu0 0.0
      %1663 = vmatmul.mubr.f32.gmra.mrb[0].mxu0 %v1480
      %v1664 = vpop.f32.mrb[0].mxu0
      %v1665 = vadd.f32 0.0, %v1664
      %v1666 = vpop.f32.mrb[0].mxu0
      %1667 = vmatprep.mubr.f32.mxu0 0.0
      %1668 = vmatmul.mubr.f32.gmra.mrb[0].mxu0 %v1483
      %v1669 = vpop.f32.mrb[0].mxu0
      %v1670 = vadd.f32 0.0, %v1669
      %v1671 = vpop.f32.mrb[0].mxu0
      %1672 = vmatprep.mubr.f32.mxu0 0.0
      %1673 = vmatmul.mubr.f32.gmra.mrb[0].mxu0 %v1486
      %v1674 = vpop.f32.mrb[0].mxu0
      %v1675 = vadd.f32 0.0, %v1674
      %v1676 = vpop.f32.mrb[0].mxu0
      %1677 = vmatprep.mubr.f32.mxu0 0.0
      %1678 = vmatmul.mubr.f32.gmra.mrb[0].mxu0 %v1489
      %v1679 = vpop.f32.mrb[0].mxu0
      %v1680 = vadd.f32 0.0, %v1679
      %v1681 = vpop.f32.mrb[0].mxu0
      %1682 = vmatprep.mubr.f32.mxu0 0.0
      %1683 = vmatmul.mubr.f32.gmra.mrb[0].mxu0 %v1492
      %v1684 = vpop.f32.mrb[0].mxu0
      %v1685 = vadd.f32 0.0, %v1684
      %v1686 = vpop.f32.mrb[0].mxu0
      %1687 = vmatprep.mubr.f32.mxu0 0.0
      %1688 = vmatmul.mubr.f32.gmra.mrb[0].mxu0 %v1495
      %v1689 = vpop.f32.mrb[0].mxu0
      %v1690 = vadd.f32 0.0, %v1689
      %v1691 = vpop.f32.mrb[0].mxu0
      %1692 = vmatprep.mubr.f32.mxu0 0.0
      %1693 = vmatmul.mubr.f32.gmra.mrb[0].mxu0 %v1498
      %v1694 = vpop.f32.mrb[0].mxu0
      %v1695 = vadd.f32 0.0, %v1694
      %v1696 = vpop.f32.mrb[0].mxu0
      %1697 = vmatprep.mubr.f32.mxu0 0.0
      %1698 = vmatmul.mubr.f32.gmra.mrb[0].mxu0 %v1501
      %v1699 = vpop.f32.mrb[0].mxu0
      %v1700 = vadd.f32 0.0, %v1699
      %v1701 = vpop.f32.mrb[0].mxu0
      %1702 = vmatprep.mubr.f32.mxu0 0.0
      %1703 = vmatmul.mubr.f32.gmra.mrb[0].mxu0 %v1504
      %v1704 = vpop.f32.mrb[0].mxu0
      %v1705 = vadd.f32 0.0, %v1704
      %v1706 = vpop.f32.mrb[0].mxu0
      %1707 = vmatprep.mubr.f32.mxu0 0.0
      %1708 = vmatmul.mubr.f32.gmra.mrb[0].mxu0 %v1507
      %v1709 = vpop.f32.mrb[0].mxu0
      %v1710 = vadd.f32 0.0, %v1709
      %v1711 = vpop.f32.mrb[0].mxu0
      %1712 = vmatprep.mubr.f32.mxu0 0.0
      %1713 = vmatmul.mubr.f32.gmra.mrb[0].mxu0 %v1510
      %v1714 = vpop.f32.mrb[0].mxu0
      %v1715 = vadd.f32 0.0, %v1714
      %v1716 = vpop.f32.mrb[0].mxu0
      %1717 = vmatprep.mubr.f32.mxu0 0.0
      %1718 = vmatmul.mubr.f32.gmra.mrb[0].mxu0 %v1513
      %v1719 = vpop.f32.mrb[0].mxu0
      %v1720 = vadd.f32 0.0, %v1719
      %v1721 = vpop.f32.mrb[0].mxu0
      %1722 = vmatprep.mubr.f32.mxu0 0.0
      %1723 = vmatmul.mubr.f32.gmra.mrb[0].mxu0 %v1516
      %v1724 = vpop.f32.mrb[0].mxu0
      %v1725 = vadd.f32 0.0, %v1724
      %v1726 = vpop.f32.mrb[0].mxu0
      %1727 = vmatprep.mubr.f32.mxu0 0.0
      %1728 = vmatmul.mubr.f32.gmra.mrb[0].mxu0 %v1519
      %v1729 = vpop.f32.mrb[0].mxu0
      %v1730 = vadd.f32 0.0, %v1729
      %v1731 = vpop.f32.mrb[0].mxu0
      %1732 = vmatprep.mubr.f32.mxu0 0.0
      %1733 = vmatmul.mubr.f32.gmra.mrb[0].mxu0 %v1522
      %v1734 = vpop.f32.mrb[0].mxu0
      %v1735 = vadd.f32 0.0, %v1734
      %v1736 = vpop.f32.mrb[0].mxu0
      %1737 = vmatprep.mubr.f32.mxu0 0.0
      %1738 = vmatmul.mubr.f32.gmra.mrb[0].mxu0 %v1525
      %v1739 = vpop.f32.mrb[0].mxu0
      %v1740 = vadd.f32 0.0, %v1739
      %v1741 = vpop.f32.mrb[0].mxu0
      %1742 = vmatprep.mubr.f32.mxu0 0.0
      %1743 = vmatmul.mubr.f32.gmra.mrb[0].mxu0 %v1528
      %v1744 = vpop.f32.mrb[0].mxu0
      %v1745 = vadd.f32 0.0, %v1744
      %v1746 = vpop.f32.mrb[0].mxu0
      %1747 = vmatprep.mubr.f32.mxu0 0.0
      %1748 = vmatmul.mubr.f32.gmra.mrb[0].mxu0 %v1531
      %v1749 = vpop.f32.mrb[0].mxu0
      %v1750 = vadd.f32 0.0, %v1749
      %v1751 = vpop.f32.mrb[0].mxu0
      %1752 = vmatprep.mubr.f32.mxu0 0.0
      %1753 = vmatmul.mubr.f32.gmra.mrb[0].mxu0 %v1534
      %v1754 = vpop.f32.mrb[0].mxu0
      %v1755 = vadd.f32 0.0, %v1754
      %v1756 = vpop.f32.mrb[0].mxu0
      %1757 = vmatprep.mubr.f32.mxu0 0.0
      %1758 = vmatmul.mubr.f32.gmra.mrb[0].mxu0 %v1537
      %v1759 = vpop.f32.mrb[0].mxu0
      %v1760 = vadd.f32 0.0, %v1759
      %v1761 = vpop.f32.mrb[0].mxu0
      %1762 = vmatprep.mubr.f32.mxu0 0.0
      %1763 = vmatmul.mubr.f32.gmra.mrb[0].mxu0 %v1540
      %v1764 = vpop.f32.mrb[0].mxu0
      %v1765 = vadd.f32 0.0, %v1764
      %v1766 = vpop.f32.mrb[0].mxu0
      %1767 = vmatprep.mubr.f32.mxu0 0.0
      %1768 = vmatmul.mubr.f32.gmra.mrb[0].mxu0 %v1543
      %v1769 = vpop.f32.mrb[0].mxu0
      %v1770 = vadd.f32 0.0, %v1769
      %v1771 = vpop.f32.mrb[0].mxu0
      %1772 = vdwg.mxu0
      %v1773 = vadd.f32 %v1380, %v1615
      %v1774 = vadd.f32 %v1381, %v1620
      %v1775 = vadd.f32 %v1382, %v1625
      %v1776 = vadd.f32 %v1383, %v1630
      %v1777 = vadd.f32 %v1384, %v1635
      %v1778 = vadd.f32 %v1385, %v1640
      %v1779 = vadd.f32 %v1386, %v1645
      %v1780 = vadd.f32 %v1387, %v1650
      %v1781 = vadd.f32 %v1388, %v1655
      %v1782 = vadd.f32 %v1389, %v1660
      %v1783 = vadd.f32 %v1390, %v1665
      %v1784 = vadd.f32 %v1391, %v1670
      %v1785 = vadd.f32 %v1392, %v1675
      %v1786 = vadd.f32 %v1393, %v1680
      %v1787 = vadd.f32 %v1394, %v1685
      %v1788 = vadd.f32 %v1395, %v1690
      %v1789 = vadd.f32 %v1396, %v1695
      %v1790 = vadd.f32 %v1397, %v1700
      %v1791 = vadd.f32 %v1398, %v1705
      %v1792 = vadd.f32 %v1399, %v1710
      %v1793 = vadd.f32 %v1400, %v1715
      %v1794 = vadd.f32 %v1401, %v1720
      %v1795 = vadd.f32 %v1402, %v1725
      %v1796 = vadd.f32 %v1403, %v1730
      %v1797 = vadd.f32 %v1404, %v1735
      %v1798 = vadd.f32 %v1405, %v1740
      %v1799 = vadd.f32 %v1406, %v1745
      %v1800 = vadd.f32 %v1407, %v1750
      %v1801 = vadd.f32 %v1408, %v1755
      %v1802 = vadd.f32 %v1409, %v1760
      %v1803 = vadd.f32 %v1410, %v1765
      %v1804 = vadd.f32 %v1411, %v1770
      %v1805 = vld [vmem:[%s1412 + $0x1] sm:$0xff]
      %v1806 = vld [vmem:[%s1412 + $0x9] sm:$0xff]
      %v1807 = vld [vmem:[%s1412 + $0x19] sm:$0xff]
      %v1808 = vld [vmem:[%s1412 + $0x21] sm:$0xff]
      %v1809 = vld [vmem:[%s1412 + $0x31] sm:$0xff]
      %v1810 = vld [vmem:[%s1412 + $0x39] sm:$0xff]
      %v1811 = vld [vmem:[%s1412 + $0x49] sm:$0xff]
      %v1812 = vld [vmem:[%s1412 + $0x51] sm:$0xff]
      %v1813 = vld [vmem:[%s1412 + $0x61] sm:$0xff]
      %v1814 = vld [vmem:[%s1412 + $0x69] sm:$0xff]
      %v1815 = vld [vmem:[%s1412 + $0x79] sm:$0xff]
      %v1816 = vld [vmem:[%s1412 + $0x81] sm:$0xff]
      %v1817 = vld [vmem:[%s1412 + $0x91] sm:$0xff]
      %v1818 = vld [vmem:[%s1412 + $0x99] sm:$0xff]
      %v1819 = vld [vmem:[%s1412 + $0xa9] sm:$0xff]
      %v1820 = vld [vmem:[%s1412 + $0xb1] sm:$0xff]
      %v1821 = vld [vmem:[%s1412 + $0xc1] sm:$0xff]
      %v1822 = vld [vmem:[%s1412 + $0xc9] sm:$0xff]
      %v1823 = vld [vmem:[%s1412 + $0xd9] sm:$0xff]
      %v1824 = vld [vmem:[%s1412 + $0xe1] sm:$0xff]
      %v1825 = vld [vmem:[%s1412 + $0xf1] sm:$0xff]
      %v1826 = vld [vmem:[%s1412 + $0xf9] sm:$0xff]
      %v1827 = vld [vmem:[%s1412 + $0x109] sm:$0xff]
      %v1828 = vld [vmem:[%s1412 + $0x111] sm:$0xff]
      %v1829 = vld [vmem:[%s1412 + $0x121] sm:$0xff]
      %v1830 = vld [vmem:[%s1412 + $0x129] sm:$0xff]
      %v1831 = vld [vmem:[%s1412 + $0x139] sm:$0xff]
      %v1832 = vld [vmem:[%s1412 + $0x141] sm:$0xff]
      %v1833 = vld [vmem:[%s1412 + $0x151] sm:$0xff]
      %v1834 = vld [vmem:[%s1412 + $0x159] sm:$0xff]
      %v1835 = vld [vmem:[%s1412 + $0x169] sm:$0xff]
      %v1836 = vld [vmem:[%s1412 + $0x171] sm:$0xff]
      %s1837 = scalar_lea.vmem %s1, 96
      %v1838 = vld [vmem:[%s1837] sm:$0xff]
      %v1839 = vld [vmem:[%s1837 + $0x8] sm:$0xff]
      %v1840 = vld [vmem:[%s1837 + $0x10] sm:$0x3]
      %v1842 = vsel %vm370, %v1805, 0
      %v1845 = vsel %vm370, %v1806, 0
      %v1848 = vsel %vm370, %v1807, 0
      %v1851 = vsel %vm370, %v1808, 0
      %v1854 = vsel %vm370, %v1809, 0
      %v1857 = vsel %vm370, %v1810, 0
      %v1860 = vsel %vm370, %v1811, 0
      %v1863 = vsel %vm370, %v1812, 0
      %v1866 = vsel %vm370, %v1813, 0
      %v1869 = vsel %vm370, %v1814, 0
      %v1872 = vsel %vm370, %v1815, 0
      %v1875 = vsel %vm370, %v1816, 0
      %v1878 = vsel %vm370, %v1817, 0
      %v1881 = vsel %vm370, %v1818, 0
      %v1884 = vsel %vm370, %v1819, 0
      %v1887 = vsel %vm370, %v1820, 0
      %v1890 = vsel %vm370, %v1821, 0
      %v1893 = vsel %vm370, %v1822, 0
      %v1896 = vsel %vm370, %v1823, 0
      %v1899 = vsel %vm370, %v1824, 0
      %v1902 = vsel %vm370, %v1825, 0
      %v1905 = vsel %vm370, %v1826, 0
      %v1908 = vsel %vm370, %v1827, 0
      %v1911 = vsel %vm370, %v1828, 0
      %v1914 = vsel %vm370, %v1829, 0
      %v1917 = vsel %vm370, %v1830, 0
      %v1920 = vsel %vm370, %v1831, 0
      %v1923 = vsel %vm370, %v1832, 0
      %v1926 = vsel %vm370, %v1833, 0
      %v1929 = vsel %vm370, %v1834, 0
      %v1932 = vsel %vm370, %v1835, 0
      %v1935 = vsel %vm370, %v1836, 0
      %v1938 = vsel %vm467, %v1840, 0
      %1940 = vmatprep.subr.mxu0 0.0
      %1941 = vmatpush1.msra.mxu0 %v1838
      %1942 = vmatprep.subr.mxu0 0.0
      %1943 = vmatpush1.msra.mxu0 %v1839
      %1944 = vmatprep.subr.mxu0 0.0
      %1945 = vmatpush1.msra.mxu0 %v1938
      %1946 = vmatprep.subr.mxu0 0.0
      %1947 = vmatpush1.msra.mxu0 0.0
      %1948 = vmatprep.subr.mxu0 0.0
      %1949 = vmatpush1.msra.mxu0 0.0
      %1950 = vmatprep.subr.mxu0 0.0
      %1951 = vmatpush1.msra.mxu0 0.0
      %1952 = vmatprep.subr.mxu0 0.0
      %1953 = vmatpush1.msra.mxu0 0.0
      %1954 = vmatprep.subr.mxu0 0.0
      %1955 = vmatpush1.msra.mxu0 0.0
      %1956 = vmatprep.subr.mxu0 0.0
      %1957 = vmatpush1.msra.mxu0 0.0
      %1958 = vmatprep.subr.mxu0 0.0
      %1959 = vmatpush1.msra.mxu0 0.0
      %1960 = vmatprep.subr.mxu0 0.0
      %1961 = vmatpush1.msra.mxu0 0.0
      %1962 = vmatprep.subr.mxu0 0.0
      %1963 = vmatpush1.msra.mxu0 0.0
      %1964 = vmatprep.subr.mxu0 0.0
      %1965 = vmatpush1.msra.mxu0 0.0
      %1966 = vmatprep.subr.mxu0 0.0
      %1967 = vmatpush1.msra.mxu0 0.0
      %1968 = vmatprep.subr.mxu0 0.0
      %1969 = vmatpush1.msra.mxu0 0.0
      %1970 = vmatprep.subr.mxu0 0.0
      %1971 = vmatpush1.msra.mxu0 0.0
      %1972 = vmatprep.subr.mxu0 0.0
      %1973 = vmatpush1.msra.mxu0 0.0
      %1974 = vmatprep.subr.mxu0 0.0
      %1975 = vmatpush1.msra.mxu0 0.0
      %1976 = vmatprep.subr.mxu0 0.0
      %1977 = vmatpush1.msra.mxu0 0.0
      %1978 = vmatprep.subr.mxu0 0.0
      %1979 = vmatpush1.msra.mxu0 0.0
      %1980 = vmatprep.subr.mxu0 0.0
      %1981 = vmatpush1.msra.mxu0 0.0
      %1982 = vmatprep.subr.mxu0 0.0
      %1983 = vmatpush1.msra.mxu0 0.0
      %1984 = vmatprep.subr.mxu0 0.0
      %1985 = vmatpush1.msra.mxu0 0.0
      %1986 = vmatprep.subr.mxu0 0.0
      %1987 = vmatpush1.msra.mxu0 0.0
      %1988 = vmatprep.subr.mxu0 0.0
      %1989 = vmatpush1.msra.mxu0 0.0
      %1990 = vmatprep.subr.mxu0 0.0
      %1991 = vmatpush1.msra.mxu0 0.0
      %1992 = vmatprep.subr.mxu0 0.0
      %1993 = vmatpush1.msra.mxu0 0.0
      %1994 = vmatprep.subr.mxu0 0.0
      %1995 = vmatpush1.msra.mxu0 0.0
      %1996 = vmatprep.subr.mxu0 0.0
      %1997 = vmatpush1.msra.mxu0 0.0
      %1998 = vmatprep.subr.mxu0 0.0
      %1999 = vmatpush1.msra.mxu0 0.0
      %2000 = vmatprep.subr.mxu0 0.0
      %2001 = vmatpush1.msra.mxu0 0.0
      %2002 = vmatprep.subr.mxu0 0.0
      %2003 = vmatpush1.msra.mxu0 0.0
      %2004 = vmatprep.mubr.f32.mxu0 0.0
      %2005 = vmatmul.mubr.f32.gmra.mrb[0].mxu0 %v1842
      %v2006 = vpop.f32.mrb[0].mxu0
      %v2007 = vadd.f32 0.0, %v2006
      %v2008 = vpop.f32.mrb[0].mxu0
      %2009 = vmatprep.mubr.f32.mxu0 0.0
      %2010 = vmatmul.mubr.f32.gmra.mrb[0].mxu0 %v1845
      %v2011 = vpop.f32.mrb[0].mxu0
      %v2012 = vadd.f32 0.0, %v2011
      %v2013 = vpop.f32.mrb[0].mxu0
      %2014 = vmatprep.mubr.f32.mxu0 0.0
      %2015 = vmatmul.mubr.f32.gmra.mrb[0].mxu0 %v1848
      %v2016 = vpop.f32.mrb[0].mxu0
      %v2017 = vadd.f32 0.0, %v2016
      %v2018 = vpop.f32.mrb[0].mxu0
      %2019 = vmatprep.mubr.f32.mxu0 0.0
      %2020 = vmatmul.mubr.f32.gmra.mrb[0].mxu0 %v1851
      %v2021 = vpop.f32.mrb[0].mxu0
      %v2022 = vadd.f32 0.0, %v2021
      %v2023 = vpop.f32.mrb[0].mxu0
      %2024 = vmatprep.mubr.f32.mxu0 0.0
      %2025 = vmatmul.mubr.f32.gmra.mrb[0].mxu0 %v1854
      %v2026 = vpop.f32.mrb[0].mxu0
      %v2027 = vadd.f32 0.0, %v2026
      %v2028 = vpop.f32.mrb[0].mxu0
      %2029 = vmatprep.mubr.f32.mxu0 0.0
      %2030 = vmatmul.mubr.f32.gmra.mrb[0].mxu0 %v1857
      %v2031 = vpop.f32.mrb[0].mxu0
      %v2032 = vadd.f32 0.0, %v2031
      %v2033 = vpop.f32.mrb[0].mxu0
      %2034 = vmatprep.mubr.f32.mxu0 0.0
      %2035 = vmatmul.mubr.f32.gmra.mrb[0].mxu0 %v1860
      %v2036 = vpop.f32.mrb[0].mxu0
      %v2037 = vadd.f32 0.0, %v2036
      %v2038 = vpop.f32.mrb[0].mxu0
      %2039 = vmatprep.mubr.f32.mxu0 0.0
      %2040 = vmatmul.mubr.f32.gmra.mrb[0].mxu0 %v1863
      %v2041 = vpop.f32.mrb[0].mxu0
      %v2042 = vadd.f32 0.0, %v2041
      %v2043 = vpop.f32.mrb[0].mxu0
      %2044 = vmatprep.mubr.f32.mxu0 0.0
      %2045 = vmatmul.mubr.f32.gmra.mrb[0].mxu0 %v1866
      %v2046 = vpop.f32.mrb[0].mxu0
      %v2047 = vadd.f32 0.0, %v2046
      %v2048 = vpop.f32.mrb[0].mxu0
      %2049 = vmatprep.mubr.f32.mxu0 0.0
      %2050 = vmatmul.mubr.f32.gmra.mrb[0].mxu0 %v1869
      %v2051 = vpop.f32.mrb[0].mxu0
      %v2052 = vadd.f32 0.0, %v2051
      %v2053 = vpop.f32.mrb[0].mxu0
      %2054 = vmatprep.mubr.f32.mxu0 0.0
      %2055 = vmatmul.mubr.f32.gmra.mrb[0].mxu0 %v1872
      %v2056 = vpop.f32.mrb[0].mxu0
      %v2057 = vadd.f32 0.0, %v2056
      %v2058 = vpop.f32.mrb[0].mxu0
      %2059 = vmatprep.mubr.f32.mxu0 0.0
      %2060 = vmatmul.mubr.f32.gmra.mrb[0].mxu0 %v1875
      %v2061 = vpop.f32.mrb[0].mxu0
      %v2062 = vadd.f32 0.0, %v2061
      %v2063 = vpop.f32.mrb[0].mxu0
      %2064 = vmatprep.mubr.f32.mxu0 0.0
      %2065 = vmatmul.mubr.f32.gmra.mrb[0].mxu0 %v1878
      %v2066 = vpop.f32.mrb[0].mxu0
      %v2067 = vadd.f32 0.0, %v2066
      %v2068 = vpop.f32.mrb[0].mxu0
      %2069 = vmatprep.mubr.f32.mxu0 0.0
      %2070 = vmatmul.mubr.f32.gmra.mrb[0].mxu0 %v1881
      %v2071 = vpop.f32.mrb[0].mxu0
      %v2072 = vadd.f32 0.0, %v2071
      %v2073 = vpop.f32.mrb[0].mxu0
      %2074 = vmatprep.mubr.f32.mxu0 0.0
      %2075 = vmatmul.mubr.f32.gmra.mrb[0].mxu0 %v1884
      %v2076 = vpop.f32.mrb[0].mxu0
      %v2077 = vadd.f32 0.0, %v2076
      %v2078 = vpop.f32.mrb[0].mxu0
      %2079 = vmatprep.mubr.f32.mxu0 0.0
      %2080 = vmatmul.mubr.f32.gmra.mrb[0].mxu0 %v1887
      %v2081 = vpop.f32.mrb[0].mxu0
      %v2082 = vadd.f32 0.0, %v2081
      %v2083 = vpop.f32.mrb[0].mxu0
      %2084 = vmatprep.mubr.f32.mxu0 0.0
      %2085 = vmatmul.mubr.f32.gmra.mrb[0].mxu0 %v1890
      %v2086 = vpop.f32.mrb[0].mxu0
      %v2087 = vadd.f32 0.0, %v2086
      %v2088 = vpop.f32.mrb[0].mxu0
      %2089 = vmatprep.mubr.f32.mxu0 0.0
      %2090 = vmatmul.mubr.f32.gmra.mrb[0].mxu0 %v1893
      %v2091 = vpop.f32.mrb[0].mxu0
      %v2092 = vadd.f32 0.0, %v2091
      %v2093 = vpop.f32.mrb[0].mxu0
      %2094 = vmatprep.mubr.f32.mxu0 0.0
      %2095 = vmatmul.mubr.f32.gmra.mrb[0].mxu0 %v1896
      %v2096 = vpop.f32.mrb[0].mxu0
      %v2097 = vadd.f32 0.0, %v2096
      %v2098 = vpop.f32.mrb[0].mxu0
      %2099 = vmatprep.mubr.f32.mxu0 0.0
      %2100 = vmatmul.mubr.f32.gmra.mrb[0].mxu0 %v1899
      %v2101 = vpop.f32.mrb[0].mxu0
      %v2102 = vadd.f32 0.0, %v2101
      %v2103 = vpop.f32.mrb[0].mxu0
      %2104 = vmatprep.mubr.f32.mxu0 0.0
      %2105 = vmatmul.mubr.f32.gmra.mrb[0].mxu0 %v1902
      %v2106 = vpop.f32.mrb[0].mxu0
      %v2107 = vadd.f32 0.0, %v2106
      %v2108 = vpop.f32.mrb[0].mxu0
      %2109 = vmatprep.mubr.f32.mxu0 0.0
      %2110 = vmatmul.mubr.f32.gmra.mrb[0].mxu0 %v1905
      %v2111 = vpop.f32.mrb[0].mxu0
      %v2112 = vadd.f32 0.0, %v2111
      %v2113 = vpop.f32.mrb[0].mxu0
      %2114 = vmatprep.mubr.f32.mxu0 0.0
      %2115 = vmatmul.mubr.f32.gmra.mrb[0].mxu0 %v1908
      %v2116 = vpop.f32.mrb[0].mxu0
      %v2117 = vadd.f32 0.0, %v2116
      %v2118 = vpop.f32.mrb[0].mxu0
      %2119 = vmatprep.mubr.f32.mxu0 0.0
      %2120 = vmatmul.mubr.f32.gmra.mrb[0].mxu0 %v1911
      %v2121 = vpop.f32.mrb[0].mxu0
      %v2122 = vadd.f32 0.0, %v2121
      %v2123 = vpop.f32.mrb[0].mxu0
      %2124 = vmatprep.mubr.f32.mxu0 0.0
      %2125 = vmatmul.mubr.f32.gmra.mrb[0].mxu0 %v1914
      %v2126 = vpop.f32.mrb[0].mxu0
      %v2127 = vadd.f32 0.0, %v2126
      %v2128 = vpop.f32.mrb[0].mxu0
      %2129 = vmatprep.mubr.f32.mxu0 0.0
      %2130 = vmatmul.mubr.f32.gmra.mrb[0].mxu0 %v1917
      %v2131 = vpop.f32.mrb[0].mxu0
      %v2132 = vadd.f32 0.0, %v2131
      %v2133 = vpop.f32.mrb[0].mxu0
      %2134 = vmatprep.mubr.f32.mxu0 0.0
      %2135 = vmatmul.mubr.f32.gmra.mrb[0].mxu0 %v1920
      %v2136 = vpop.f32.mrb[0].mxu0
      %v2137 = vadd.f32 0.0, %v2136
      %v2138 = vpop.f32.mrb[0].mxu0
      %2139 = vmatprep.mubr.f32.mxu0 0.0
      %2140 = vmatmul.mubr.f32.gmra.mrb[0].mxu0 %v1923
      %v2141 = vpop.f32.mrb[0].mxu0
      %v2142 = vadd.f32 0.0, %v2141
      %v2143 = vpop.f32.mrb[0].mxu0
      %2144 = vmatprep.mubr.f32.mxu0 0.0
      %2145 = vmatmul.mubr.f32.gmra.mrb[0].mxu0 %v1926
      %v2146 = vpop.f32.mrb[0].mxu0
      %v2147 = vadd.f32 0.0, %v2146
      %v2148 = vpop.f32.mrb[0].mxu0
      %2149 = vmatprep.mubr.f32.mxu0 0.0
      %2150 = vmatmul.mubr.f32.gmra.mrb[0].mxu0 %v1929
      %v2151 = vpop.f32.mrb[0].mxu0
      %v2152 = vadd.f32 0.0, %v2151
      %v2153 = vpop.f32.mrb[0].mxu0
      %2154 = vmatprep.mubr.f32.mxu0 0.0
      %2155 = vmatmul.mubr.f32.gmra.mrb[0].mxu0 %v1932
      %v2156 = vpop.f32.mrb[0].mxu0
      %v2157 = vadd.f32 0.0, %v2156
      %v2158 = vpop.f32.mrb[0].mxu0
      %2159 = vmatprep.mubr.f32.mxu0 0.0
      %2160 = vmatmul.mubr.f32.gmra.mrb[0].mxu0 %v1935
      %v2161 = vpop.f32.mrb[0].mxu0
      %v2162 = vadd.f32 0.0, %v2161
      %v2163 = vpop.f32.mrb[0].mxu0
      %2164 = vdwg.mxu0
      %v2165 = vadd.f32 %v1773, %v2007
      %v2166 = vadd.f32 %v1774, %v2012
      %v2167 = vadd.f32 %v1775, %v2017
      %v2168 = vadd.f32 %v1776, %v2022
      %v2169 = vadd.f32 %v1777, %v2027
      %v2170 = vadd.f32 %v1778, %v2032
      %v2171 = vadd.f32 %v1779, %v2037
      %v2172 = vadd.f32 %v1780, %v2042
      %v2173 = vadd.f32 %v1781, %v2047
      %v2174 = vadd.f32 %v1782, %v2052
      %v2175 = vadd.f32 %v1783, %v2057
      %v2176 = vadd.f32 %v1784, %v2062
      %v2177 = vadd.f32 %v1785, %v2067
      %v2178 = vadd.f32 %v1786, %v2072
      %v2179 = vadd.f32 %v1787, %v2077
      %v2180 = vadd.f32 %v1788, %v2082
      %v2181 = vadd.f32 %v1789, %v2087
      %v2182 = vadd.f32 %v1790, %v2092
      %v2183 = vadd.f32 %v1791, %v2097
      %v2184 = vadd.f32 %v1792, %v2102
      %v2185 = vadd.f32 %v1793, %v2107
      %v2186 = vadd.f32 %v1794, %v2112
      %v2187 = vadd.f32 %v1795, %v2117
      %v2188 = vadd.f32 %v1796, %v2122
      %v2189 = vadd.f32 %v1797, %v2127
      %v2190 = vadd.f32 %v1798, %v2132
      %v2191 = vadd.f32 %v1799, %v2137
      %v2192 = vadd.f32 %v1800, %v2142
      %v2193 = vadd.f32 %v1801, %v2147
      %v2194 = vadd.f32 %v1802, %v2152
      %v2195 = vadd.f32 %v1803, %v2157
      %v2196 = vadd.f32 %v1804, %v2162
      %v2197 = vld [vmem:[%s1412 + $0x2] sm:$0xff]
      %v2198 = vld [vmem:[%s1412 + $0xa] sm:$0xff]
      %v2199 = vld [vmem:[%s1412 + $0x1a] sm:$0xff]
      %v2200 = vld [vmem:[%s1412 + $0x22] sm:$0xff]
      %v2201 = vld [vmem:[%s1412 + $0x32] sm:$0xff]
      %v2202 = vld [vmem:[%s1412 + $0x3a] sm:$0xff]
      %v2203 = vld [vmem:[%s1412 + $0x4a] sm:$0xff]
      %v2204 = vld [vmem:[%s1412 + $0x52] sm:$0xff]
      %v2205 = vld [vmem:[%s1412 + $0x62] sm:$0xff]
      %v2206 = vld [vmem:[%s1412 + $0x6a] sm:$0xff]
      %v2207 = vld [vmem:[%s1412 + $0x7a] sm:$0xff]
      %v2208 = vld [vmem:[%s1412 + $0x82] sm:$0xff]
      %v2209 = vld [vmem:[%s1412 + $0x92] sm:$0xff]
      %v2210 = vld [vmem:[%s1412 + $0x9a] sm:$0xff]
      %v2211 = vld [vmem:[%s1412 + $0xaa] sm:$0xff]
      %v2212 = vld [vmem:[%s1412 + $0xb2] sm:$0xff]
      %v2213 = vld [vmem:[%s1412 + $0xc2] sm:$0xff]
      %v2214 = vld [vmem:[%s1412 + $0xca] sm:$0xff]
      %v2215 = vld [vmem:[%s1412 + $0xda] sm:$0xff]
      %v2216 = vld [vmem:[%s1412 + $0xe2] sm:$0xff]
      %v2217 = vld [vmem:[%s1412 + $0xf2] sm:$0xff]
      %v2218 = vld [vmem:[%s1412 + $0xfa] sm:$0xff]
      %v2219 = vld [vmem:[%s1412 + $0x10a] sm:$0xff]
      %v2220 = vld [vmem:[%s1412 + $0x112] sm:$0xff]
      %v2221 = vld [vmem:[%s1412 + $0x122] sm:$0xff]
      %v2222 = vld [vmem:[%s1412 + $0x12a] sm:$0xff]
      %v2223 = vld [vmem:[%s1412 + $0x13a] sm:$0xff]
      %v2224 = vld [vmem:[%s1412 + $0x142] sm:$0xff]
      %v2225 = vld [vmem:[%s1412 + $0x152] sm:$0xff]
      %v2226 = vld [vmem:[%s1412 + $0x15a] sm:$0xff]
      %v2227 = vld [vmem:[%s1412 + $0x16a] sm:$0xff]
      %v2228 = vld [vmem:[%s1412 + $0x172] sm:$0xff]
      %s2229 = scalar_lea.vmem %s1, 120
      %v2230 = vld [vmem:[%s2229] sm:$0xff]
      %v2231 = vld [vmem:[%s2229 + $0x8] sm:$0xff]
      %v2232 = vld [vmem:[%s2229 + $0x10] sm:$0x3]
      %v2234 = vsel %vm370, %v2197, 0
      %v2237 = vsel %vm370, %v2198, 0
      %v2240 = vsel %vm370, %v2199, 0
      %v2243 = vsel %vm370, %v2200, 0
      %v2246 = vsel %vm370, %v2201, 0
      %v2249 = vsel %vm370, %v2202, 0
      %v2252 = vsel %vm370, %v2203, 0
      %v2255 = vsel %vm370, %v2204, 0
      %v2258 = vsel %vm370, %v2205, 0
      %v2261 = vsel %vm370, %v2206, 0
      %v2264 = vsel %vm370, %v2207, 0
      %v2267 = vsel %vm370, %v2208, 0
      %v2270 = vsel %vm370, %v2209, 0
      %v2273 = vsel %vm370, %v2210, 0
      %v2276 = vsel %vm370, %v2211, 0
      %v2279 = vsel %vm370, %v2212, 0
      %v2282 = vsel %vm370, %v2213, 0
      %v2285 = vsel %vm370, %v2214, 0
      %v2288 = vsel %vm370, %v2215, 0
      %v2291 = vsel %vm370, %v2216, 0
      %v2294 = vsel %vm370, %v2217, 0
      %v2297 = vsel %vm370, %v2218, 0
      %v2300 = vsel %vm370, %v2219, 0
      %v2303 = vsel %vm370, %v2220, 0
      %v2306 = vsel %vm370, %v2221, 0
      %v2309 = vsel %vm370, %v2222, 0
      %v2312 = vsel %vm370, %v2223, 0
      %v2315 = vsel %vm370, %v2224, 0
      %v2318 = vsel %vm370, %v2225, 0
      %v2321 = vsel %vm370, %v2226, 0
      %v2324 = vsel %vm370, %v2227, 0
      %v2327 = vsel %vm370, %v2228, 0
      %v2330 = vsel %vm467, %v2232, 0
      %2332 = vmatprep.subr.mxu0 0.0
      %2333 = vmatpush1.msra.mxu0 %v2230
      %2334 = vmatprep.subr.mxu0 0.0
      %2335 = vmatpush1.msra.mxu0 %v2231
      %2336 = vmatprep.subr.mxu0 0.0
      %2337 = vmatpush1.msra.mxu0 %v2330
      %2338 = vmatprep.subr.mxu0 0.0
      %2339 = vmatpush1.msra.mxu0 0.0
      %2340 = vmatprep.subr.mxu0 0.0
      %2341 = vmatpush1.msra.mxu0 0.0
      %2342 = vmatprep.subr.mxu0 0.0
      %2343 = vmatpush1.msra.mxu0 0.0
      %2344 = vmatprep.subr.mxu0 0.0
      %2345 = vmatpush1.msra.mxu0 0.0
      %2346 = vmatprep.subr.mxu0 0.0
      %2347 = vmatpush1.msra.mxu0 0.0
      %2348 = vmatprep.subr.mxu0 0.0
      %2349 = vmatpush1.msra.mxu0 0.0
      %2350 = vmatprep.subr.mxu0 0.0
      %2351 = vmatpush1.msra.mxu0 0.0
      %2352 = vmatprep.subr.mxu0 0.0
      %2353 = vmatpush1.msra.mxu0 0.0
      %2354 = vmatprep.subr.mxu0 0.0
      %2355 = vmatpush1.msra.mxu0 0.0
      %2356 = vmatprep.subr.mxu0 0.0
      %2357 = vmatpush1.msra.mxu0 0.0
      %2358 = vmatprep.subr.mxu0 0.0
      %2359 = vmatpush1.msra.mxu0 0.0
      %2360 = vmatprep.subr.mxu0 0.0
      %2361 = vmatpush1.msra.mxu0 0.0
      %2362 = vmatprep.subr.mxu0 0.0
      %2363 = vmatpush1.msra.mxu0 0.0
      %2364 = vmatprep.subr.mxu0 0.0
      %2365 = vmatpush1.msra.mxu0 0.0
      %2366 = vmatprep.subr.mxu0 0.0
      %2367 = vmatpush1.msra.mxu0 0.0
      %2368 = vmatprep.subr.mxu0 0.0
      %2369 = vmatpush1.msra.mxu0 0.0
      %2370 = vmatprep.subr.mxu0 0.0
      %2371 = vmatpush1.msra.mxu0 0.0
      %2372 = vmatprep.subr.mxu0 0.0
      %2373 = vmatpush1.msra.mxu0 0.0
      %2374 = vmatprep.subr.mxu0 0.0
      %2375 = vmatpush1.msra.mxu0 0.0
      %2376 = vmatprep.subr.mxu0 0.0
      %2377 = vmatpush1.msra.mxu0 0.0
      %2378 = vmatprep.subr.mxu0 0.0
      %2379 = vmatpush1.msra.mxu0 0.0
      %2380 = vmatprep.subr.mxu0 0.0
      %2381 = vmatpush1.msra.mxu0 0.0
      %2382 = vmatprep.subr.mxu0 0.0
      %2383 = vmatpush1.msra.mxu0 0.0
      %2384 = vmatprep.subr.mxu0 0.0
      %2385 = vmatpush1.msra.mxu0 0.0
      %2386 = vmatprep.subr.mxu0 0.0
      %2387 = vmatpush1.msra.mxu0 0.0
      %2388 = vmatprep.subr.mxu0 0.0
      %2389 = vmatpush1.msra.mxu0 0.0
      %2390 = vmatprep.subr.mxu0 0.0
      %2391 = vmatpush1.msra.mxu0 0.0
      %2392 = vmatprep.subr.mxu0 0.0
      %2393 = vmatpush1.msra.mxu0 0.0
      %2394 = vmatprep.subr.mxu0 0.0
      %2395 = vmatpush1.msra.mxu0 0.0
      %2396 = vmatprep.mubr.f32.mxu0 0.0
      %2397 = vmatmul.mubr.f32.gmra.mrb[0].mxu0 %v2234
      %v2398 = vpop.f32.mrb[0].mxu0
      %v2399 = vadd.f32 0.0, %v2398
      %v2400 = vpop.f32.mrb[0].mxu0
      %2401 = vmatprep.mubr.f32.mxu0 0.0
      %2402 = vmatmul.mubr.f32.gmra.mrb[0].mxu0 %v2237
      %v2403 = vpop.f32.mrb[0].mxu0
      %v2404 = vadd.f32 0.0, %v2403
      %v2405 = vpop.f32.mrb[0].mxu0
      %2406 = vmatprep.mubr.f32.mxu0 0.0
      %2407 = vmatmul.mubr.f32.gmra.mrb[0].mxu0 %v2240
      %v2408 = vpop.f32.mrb[0].mxu0
      %v2409 = vadd.f32 0.0, %v2408
      %v2410 = vpop.f32.mrb[0].mxu0
      %2411 = vmatprep.mubr.f32.mxu0 0.0
      %2412 = vmatmul.mubr.f32.gmra.mrb[0].mxu0 %v2243
      %v2413 = vpop.f32.mrb[0].mxu0
      %v2414 = vadd.f32 0.0, %v2413
      %v2415 = vpop.f32.mrb[0].mxu0
      %2416 = vmatprep.mubr.f32.mxu0 0.0
      %2417 = vmatmul.mubr.f32.gmra.mrb[0].mxu0 %v2246
      %v2418 = vpop.f32.mrb[0].mxu0
      %v2419 = vadd.f32 0.0, %v2418
      %v2420 = vpop.f32.mrb[0].mxu0
      %2421 = vmatprep.mubr.f32.mxu0 0.0
      %2422 = vmatmul.mubr.f32.gmra.mrb[0].mxu0 %v2249
      %v2423 = vpop.f32.mrb[0].mxu0
      %v2424 = vadd.f32 0.0, %v2423
      %v2425 = vpop.f32.mrb[0].mxu0
      %2426 = vmatprep.mubr.f32.mxu0 0.0
      %2427 = vmatmul.mubr.f32.gmra.mrb[0].mxu0 %v2252
      %v2428 = vpop.f32.mrb[0].mxu0
      %v2429 = vadd.f32 0.0, %v2428
      %v2430 = vpop.f32.mrb[0].mxu0
      %2431 = vmatprep.mubr.f32.mxu0 0.0
      %2432 = vmatmul.mubr.f32.gmra.mrb[0].mxu0 %v2255
      %v2433 = vpop.f32.mrb[0].mxu0
      %v2434 = vadd.f32 0.0, %v2433
      %v2435 = vpop.f32.mrb[0].mxu0
      %2436 = vmatprep.mubr.f32.mxu0 0.0
      %2437 = vmatmul.mubr.f32.gmra.mrb[0].mxu0 %v2258
      %v2438 = vpop.f32.mrb[0].mxu0
      %v2439 = vadd.f32 0.0, %v2438
      %v2440 = vpop.f32.mrb[0].mxu0
      %2441 = vmatprep.mubr.f32.mxu0 0.0
      %2442 = vmatmul.mubr.f32.gmra.mrb[0].mxu0 %v2261
      %v2443 = vpop.f32.mrb[0].mxu0
      %v2444 = vadd.f32 0.0, %v2443
      %v2445 = vpop.f32.mrb[0].mxu0
      %2446 = vmatprep.mubr.f32.mxu0 0.0
      %2447 = vmatmul.mubr.f32.gmra.mrb[0].mxu0 %v2264
      %v2448 = vpop.f32.mrb[0].mxu0
      %v2449 = vadd.f32 0.0, %v2448
      %v2450 = vpop.f32.mrb[0].mxu0
      %2451 = vmatprep.mubr.f32.mxu0 0.0
      %2452 = vmatmul.mubr.f32.gmra.mrb[0].mxu0 %v2267
      %v2453 = vpop.f32.mrb[0].mxu0
      %v2454 = vadd.f32 0.0, %v2453
      %v2455 = vpop.f32.mrb[0].mxu0
      %2456 = vmatprep.mubr.f32.mxu0 0.0
      %2457 = vmatmul.mubr.f32.gmra.mrb[0].mxu0 %v2270
      %v2458 = vpop.f32.mrb[0].mxu0
      %v2459 = vadd.f32 0.0, %v2458
      %v2460 = vpop.f32.mrb[0].mxu0
      %2461 = vmatprep.mubr.f32.mxu0 0.0
      %2462 = vmatmul.mubr.f32.gmra.mrb[0].mxu0 %v2273
      %v2463 = vpop.f32.mrb[0].mxu0
      %v2464 = vadd.f32 0.0, %v2463
      %v2465 = vpop.f32.mrb[0].mxu0
      %2466 = vmatprep.mubr.f32.mxu0 0.0
      %2467 = vmatmul.mubr.f32.gmra.mrb[0].mxu0 %v2276
      %v2468 = vpop.f32.mrb[0].mxu0
      %v2469 = vadd.f32 0.0, %v2468
      %v2470 = vpop.f32.mrb[0].mxu0
      %2471 = vmatprep.mubr.f32.mxu0 0.0
      %2472 = vmatmul.mubr.f32.gmra.mrb[0].mxu0 %v2279
      %v2473 = vpop.f32.mrb[0].mxu0
      %v2474 = vadd.f32 0.0, %v2473
      %v2475 = vpop.f32.mrb[0].mxu0
      %2476 = vmatprep.mubr.f32.mxu0 0.0
      %2477 = vmatmul.mubr.f32.gmra.mrb[0].mxu0 %v2282
      %v2478 = vpop.f32.mrb[0].mxu0
      %v2479 = vadd.f32 0.0, %v2478
      %v2480 = vpop.f32.mrb[0].mxu0
      %2481 = vmatprep.mubr.f32.mxu0 0.0
      %2482 = vmatmul.mubr.f32.gmra.mrb[0].mxu0 %v2285
      %v2483 = vpop.f32.mrb[0].mxu0
      %v2484 = vadd.f32 0.0, %v2483
      %v2485 = vpop.f32.mrb[0].mxu0
      %2486 = vmatprep.mubr.f32.mxu0 0.0
      %2487 = vmatmul.mubr.f32.gmra.mrb[0].mxu0 %v2288
      %v2488 = vpop.f32.mrb[0].mxu0
      %v2489 = vadd.f32 0.0, %v2488
      %v2490 = vpop.f32.mrb[0].mxu0
      %2491 = vmatprep.mubr.f32.mxu0 0.0
      %2492 = vmatmul.mubr.f32.gmra.mrb[0].mxu0 %v2291
      %v2493 = vpop.f32.mrb[0].mxu0
      %v2494 = vadd.f32 0.0, %v2493
      %v2495 = vpop.f32.mrb[0].mxu0
      %2496 = vmatprep.mubr.f32.mxu0 0.0
      %2497 = vmatmul.mubr.f32.gmra.mrb[0].mxu0 %v2294
      %v2498 = vpop.f32.mrb[0].mxu0
      %v2499 = vadd.f32 0.0, %v2498
      %v2500 = vpop.f32.mrb[0].mxu0
      %2501 = vmatprep.mubr.f32.mxu0 0.0
      %2502 = vmatmul.mubr.f32.gmra.mrb[0].mxu0 %v2297
      %v2503 = vpop.f32.mrb[0].mxu0
      %v2504 = vadd.f32 0.0, %v2503
      %v2505 = vpop.f32.mrb[0].mxu0
      %2506 = vmatprep.mubr.f32.mxu0 0.0
      %2507 = vmatmul.mubr.f32.gmra.mrb[0].mxu0 %v2300
      %v2508 = vpop.f32.mrb[0].mxu0
      %v2509 = vadd.f32 0.0, %v2508
      %v2510 = vpop.f32.mrb[0].mxu0
      %2511 = vmatprep.mubr.f32.mxu0 0.0
      %2512 = vmatmul.mubr.f32.gmra.mrb[0].mxu0 %v2303
      %v2513 = vpop.f32.mrb[0].mxu0
      %v2514 = vadd.f32 0.0, %v2513
      %v2515 = vpop.f32.mrb[0].mxu0
      %2516 = vmatprep.mubr.f32.mxu0 0.0
      %2517 = vmatmul.mubr.f32.gmra.mrb[0].mxu0 %v2306
      %v2518 = vpop.f32.mrb[0].mxu0
      %v2519 = vadd.f32 0.0, %v2518
      %v2520 = vpop.f32.mrb[0].mxu0
      %2521 = vmatprep.mubr.f32.mxu0 0.0
      %2522 = vmatmul.mubr.f32.gmra.mrb[0].mxu0 %v2309
      %v2523 = vpop.f32.mrb[0].mxu0
      %v2524 = vadd.f32 0.0, %v2523
      %v2525 = vpop.f32.mrb[0].mxu0
      %2526 = vmatprep.mubr.f32.mxu0 0.0
      %2527 = vmatmul.mubr.f32.gmra.mrb[0].mxu0 %v2312
      %v2528 = vpop.f32.mrb[0].mxu0
      %v2529 = vadd.f32 0.0, %v2528
      %v2530 = vpop.f32.mrb[0].mxu0
      %2531 = vmatprep.mubr.f32.mxu0 0.0
      %2532 = vmatmul.mubr.f32.gmra.mrb[0].mxu0 %v2315
      %v2533 = vpop.f32.mrb[0].mxu0
      %v2534 = vadd.f32 0.0, %v2533
      %v2535 = vpop.f32.mrb[0].mxu0
      %2536 = vmatprep.mubr.f32.mxu0 0.0
      %2537 = vmatmul.mubr.f32.gmra.mrb[0].mxu0 %v2318
      %v2538 = vpop.f32.mrb[0].mxu0
      %v2539 = vadd.f32 0.0, %v2538
      %v2540 = vpop.f32.mrb[0].mxu0
      %2541 = vmatprep.mubr.f32.mxu0 0.0
      %2542 = vmatmul.mubr.f32.gmra.mrb[0].mxu0 %v2321
      %v2543 = vpop.f32.mrb[0].mxu0
      %v2544 = vadd.f32 0.0, %v2543
      %v2545 = vpop.f32.mrb[0].mxu0
      %2546 = vmatprep.mubr.f32.mxu0 0.0
      %2547 = vmatmul.mubr.f32.gmra.mrb[0].mxu0 %v2324
      %v2548 = vpop.f32.mrb[0].mxu0
      %v2549 = vadd.f32 0.0, %v2548
      %v2550 = vpop.f32.mrb[0].mxu0
      %2551 = vmatprep.mubr.f32.mxu0 0.0
      %2552 = vmatmul.mubr.f32.gmra.mrb[0].mxu0 %v2327
      %v2553 = vpop.f32.mrb[0].mxu0
      %v2554 = vadd.f32 0.0, %v2553
      %v2555 = vpop.f32.mrb[0].mxu0
      %2556 = vdwg.mxu0
      %v2557 = vadd.f32 %v2165, %v2399
      %v2558 = vadd.f32 %v2166, %v2404
      %v2559 = vadd.f32 %v2167, %v2409
      %v2560 = vadd.f32 %v2168, %v2414
      %v2561 = vadd.f32 %v2169, %v2419
      %v2562 = vadd.f32 %v2170, %v2424
      %v2563 = vadd.f32 %v2171, %v2429
      %v2564 = vadd.f32 %v2172, %v2434
      %v2565 = vadd.f32 %v2173, %v2439
      %v2566 = vadd.f32 %v2174, %v2444
      %v2567 = vadd.f32 %v2175, %v2449
      %v2568 = vadd.f32 %v2176, %v2454
      %v2569 = vadd.f32 %v2177, %v2459
      %v2570 = vadd.f32 %v2178, %v2464
      %v2571 = vadd.f32 %v2179, %v2469
      %v2572 = vadd.f32 %v2180, %v2474
      %v2573 = vadd.f32 %v2181, %v2479
      %v2574 = vadd.f32 %v2182, %v2484
      %v2575 = vadd.f32 %v2183, %v2489
      %v2576 = vadd.f32 %v2184, %v2494
      %v2577 = vadd.f32 %v2185, %v2499
      %v2578 = vadd.f32 %v2186, %v2504
      %v2579 = vadd.f32 %v2187, %v2509
      %v2580 = vadd.f32 %v2188, %v2514
      %v2581 = vadd.f32 %v2189, %v2519
      %v2582 = vadd.f32 %v2190, %v2524
      %v2583 = vadd.f32 %v2191, %v2529
      %v2584 = vadd.f32 %v2192, %v2534
      %v2585 = vadd.f32 %v2193, %v2539
      %v2586 = vadd.f32 %v2194, %v2544
      %v2587 = vadd.f32 %v2195, %v2549
      %v2588 = vadd.f32 %v2196, %v2554
      %s2589 = scalar_lea.vmem %s288, 48
      %v2590 = vld [vmem:[%s2589] sm:$0xff]
      %v2591 = vld [vmem:[%s2589 + $0x8] sm:$0xff]
      %v2592 = vld [vmem:[%s2589 + $0x18] sm:$0xff]
      %v2593 = vld [vmem:[%s2589 + $0x20] sm:$0xff]
      %v2594 = vld [vmem:[%s2589 + $0x30] sm:$0xff]
      %v2595 = vld [vmem:[%s2589 + $0x38] sm:$0xff]
      %v2596 = vld [vmem:[%s2589 + $0x48] sm:$0xff]
      %v2597 = vld [vmem:[%s2589 + $0x50] sm:$0xff]
      %v2598 = vld [vmem:[%s2589 + $0x60] sm:$0xff]
      %v2599 = vld [vmem:[%s2589 + $0x68] sm:$0xff]
      %v2600 = vld [vmem:[%s2589 + $0x78] sm:$0xff]
      %v2601 = vld [vmem:[%s2589 + $0x80] sm:$0xff]
      %v2602 = vld [vmem:[%s2589 + $0x90] sm:$0xff]
      %v2603 = vld [vmem:[%s2589 + $0x98] sm:$0xff]
      %v2604 = vld [vmem:[%s2589 + $0xa8] sm:$0xff]
      %v2605 = vld [vmem:[%s2589 + $0xb0] sm:$0xff]
      %v2606 = vld [vmem:[%s2589 + $0xc0] sm:$0xff]
      %v2607 = vld [vmem:[%s2589 + $0xc8] sm:$0xff]
      %v2608 = vld [vmem:[%s2589 + $0xd8] sm:$0xff]
      %v2609 = vld [vmem:[%s2589 + $0xe0] sm:$0xff]
      %v2610 = vld [vmem:[%s2589 + $0xf0] sm:$0xff]
      %v2611 = vld [vmem:[%s2589 + $0xf8] sm:$0xff]
      %v2612 = vld [vmem:[%s2589 + $0x108] sm:$0xff]
      %v2613 = vld [vmem:[%s2589 + $0x110] sm:$0xff]
      %v2614 = vld [vmem:[%s2589 + $0x120] sm:$0xff]
      %v2615 = vld [vmem:[%s2589 + $0x128] sm:$0xff]
      %v2616 = vld [vmem:[%s2589 + $0x138] sm:$0xff]
      %v2617 = vld [vmem:[%s2589 + $0x140] sm:$0xff]
      %v2618 = vld [vmem:[%s2589 + $0x150] sm:$0xff]
      %v2619 = vld [vmem:[%s2589 + $0x158] sm:$0xff]
      %v2620 = vld [vmem:[%s2589 + $0x168] sm:$0xff]
      %v2621 = vld [vmem:[%s2589 + $0x170] sm:$0xff]
      %s2622 = scalar_lea.vmem %s1, 144
      %v2623 = vld [vmem:[%s2622] sm:$0xff]
      %v2624 = vld [vmem:[%s2622 + $0x8] sm:$0xff]
      %v2625 = vld [vmem:[%s2622 + $0x10] sm:$0x3]
      %v2627 = vsel %vm370, %v2590, 0
      %v2630 = vsel %vm370, %v2591, 0
      %v2633 = vsel %vm370, %v2592, 0
      %v2636 = vsel %vm370, %v2593, 0
      %v2639 = vsel %vm370, %v2594, 0
      %v2642 = vsel %vm370, %v2595, 0
      %v2645 = vsel %vm370, %v2596, 0
      %v2648 = vsel %vm370, %v2597, 0
      %v2651 = vsel %vm370, %v2598, 0
      %v2654 = vsel %vm370, %v2599, 0
      %v2657 = vsel %vm370, %v2600, 0
      %v2660 = vsel %vm370, %v2601, 0
      %v2663 = vsel %vm370, %v2602, 0
      %v2666 = vsel %vm370, %v2603, 0
      %v2669 = vsel %vm370, %v2604, 0
      %v2672 = vsel %vm370, %v2605, 0
      %v2675 = vsel %vm370, %v2606, 0
      %v2678 = vsel %vm370, %v2607, 0
      %v2681 = vsel %vm370, %v2608, 0
      %v2684 = vsel %vm370, %v2609, 0
      %v2687 = vsel %vm370, %v2610, 0
      %v2690 = vsel %vm370, %v2611, 0
      %v2693 = vsel %vm370, %v2612, 0
      %v2696 = vsel %vm370, %v2613, 0
      %v2699 = vsel %vm370, %v2614, 0
      %v2702 = vsel %vm370, %v2615, 0
      %v2705 = vsel %vm370, %v2616, 0
      %v2708 = vsel %vm370, %v2617, 0
      %v2711 = vsel %vm370, %v2618, 0
      %v2714 = vsel %vm370, %v2619, 0
      %v2717 = vsel %vm370, %v2620, 0
      %v2720 = vsel %vm370, %v2621, 0
      %v2723 = vsel %vm467, %v2625, 0
      %2725 = vmatprep.subr.mxu0 0.0
      %2726 = vmatpush1.msra.mxu0 %v2623
      %2727 = vmatprep.subr.mxu0 0.0
      %2728 = vmatpush1.msra.mxu0 %v2624
      %2729 = vmatprep.subr.mxu0 0.0
      %2730 = vmatpush1.msra.mxu0 %v2723
      %2731 = vmatprep.subr.mxu0 0.0
      %2732 = vmatpush1.msra.mxu0 0.0
      %2733 = vmatprep.subr.mxu0 0.0
      %2734 = vmatpush1.msra.mxu0 0.0
      %2735 = vmatprep.subr.mxu0 0.0
      %2736 = vmatpush1.msra.mxu0 0.0
      %2737 = vmatprep.subr.mxu0 0.0
      %2738 = vmatpush1.msra.mxu0 0.0
      %2739 = vmatprep.subr.mxu0 0.0
      %2740 = vmatpush1.msra.mxu0 0.0
      %2741 = vmatprep.subr.mxu0 0.0
      %2742 = vmatpush1.msra.mxu0 0.0
      %2743 = vmatprep.subr.mxu0 0.0
      %2744 = vmatpush1.msra.mxu0 0.0
      %2745 = vmatprep.subr.mxu0 0.0
      %2746 = vmatpush1.msra.mxu0 0.0
      %2747 = vmatprep.subr.mxu0 0.0
      %2748 = vmatpush1.msra.mxu0 0.0
      %2749 = vmatprep.subr.mxu0 0.0
      %2750 = vmatpush1.msra.mxu0 0.0
      %2751 = vmatprep.subr.mxu0 0.0
      %2752 = vmatpush1.msra.mxu0 0.0
      %2753 = vmatprep.subr.mxu0 0.0
      %2754 = vmatpush1.msra.mxu0 0.0
      %2755 = vmatprep.subr.mxu0 0.0
      %2756 = vmatpush1.msra.mxu0 0.0
      %2757 = vmatprep.subr.mxu0 0.0
      %2758 = vmatpush1.msra.mxu0 0.0
      %2759 = vmatprep.subr.mxu0 0.0
      %2760 = vmatpush1.msra.mxu0 0.0
      %2761 = vmatprep.subr.mxu0 0.0
      %2762 = vmatpush1.msra.mxu0 0.0
      %2763 = vmatprep.subr.mxu0 0.0
      %2764 = vmatpush1.msra.mxu0 0.0
      %2765 = vmatprep.subr.mxu0 0.0
      %2766 = vmatpush1.msra.mxu0 0.0
      %2767 = vmatprep.subr.mxu0 0.0
      %2768 = vmatpush1.msra.mxu0 0.0
      %2769 = vmatprep.subr.mxu0 0.0
      %2770 = vmatpush1.msra.mxu0 0.0
      %2771 = vmatprep.subr.mxu0 0.0
      %2772 = vmatpush1.msra.mxu0 0.0
      %2773 = vmatprep.subr.mxu0 0.0
      %2774 = vmatpush1.msra.mxu0 0.0
      %2775 = vmatprep.subr.mxu0 0.0
      %2776 = vmatpush1.msra.mxu0 0.0
      %2777 = vmatprep.subr.mxu0 0.0
      %2778 = vmatpush1.msra.mxu0 0.0
      %2779 = vmatprep.subr.mxu0 0.0
      %2780 = vmatpush1.msra.mxu0 0.0
      %2781 = vmatprep.subr.mxu0 0.0
      %2782 = vmatpush1.msra.mxu0 0.0
      %2783 = vmatprep.subr.mxu0 0.0
      %2784 = vmatpush1.msra.mxu0 0.0
      %2785 = vmatprep.subr.mxu0 0.0
      %2786 = vmatpush1.msra.mxu0 0.0
      %2787 = vmatprep.subr.mxu0 0.0
      %2788 = vmatpush1.msra.mxu0 0.0
      %2789 = vmatprep.mubr.f32.mxu0 0.0
      %2790 = vmatmul.mubr.f32.gmra.mrb[0].mxu0 %v2627
      %v2791 = vpop.f32.mrb[0].mxu0
      %v2792 = vadd.f32 0.0, %v2791
      %v2793 = vpop.f32.mrb[0].mxu0
      %2794 = vmatprep.mubr.f32.mxu0 0.0
      %2795 = vmatmul.mubr.f32.gmra.mrb[0].mxu0 %v2630
      %v2796 = vpop.f32.mrb[0].mxu0
      %v2797 = vadd.f32 0.0, %v2796
      %v2798 = vpop.f32.mrb[0].mxu0
      %2799 = vmatprep.mubr.f32.mxu0 0.0
      %2800 = vmatmul.mubr.f32.gmra.mrb[0].mxu0 %v2633
      %v2801 = vpop.f32.mrb[0].mxu0
      %v2802 = vadd.f32 0.0, %v2801
      %v2803 = vpop.f32.mrb[0].mxu0
      %2804 = vmatprep.mubr.f32.mxu0 0.0
      %2805 = vmatmul.mubr.f32.gmra.mrb[0].mxu0 %v2636
      %v2806 = vpop.f32.mrb[0].mxu0
      %v2807 = vadd.f32 0.0, %v2806
      %v2808 = vpop.f32.mrb[0].mxu0
      %2809 = vmatprep.mubr.f32.mxu0 0.0
      %2810 = vmatmul.mubr.f32.gmra.mrb[0].mxu0 %v2639
      %v2811 = vpop.f32.mrb[0].mxu0
      %v2812 = vadd.f32 0.0, %v2811
      %v2813 = vpop.f32.mrb[0].mxu0
      %2814 = vmatprep.mubr.f32.mxu0 0.0
      %2815 = vmatmul.mubr.f32.gmra.mrb[0].mxu0 %v2642
      %v2816 = vpop.f32.mrb[0].mxu0
      %v2817 = vadd.f32 0.0, %v2816
      %v2818 = vpop.f32.mrb[0].mxu0
      %2819 = vmatprep.mubr.f32.mxu0 0.0
      %2820 = vmatmul.mubr.f32.gmra.mrb[0].mxu0 %v2645
      %v2821 = vpop.f32.mrb[0].mxu0
      %v2822 = vadd.f32 0.0, %v2821
      %v2823 = vpop.f32.mrb[0].mxu0
      %2824 = vmatprep.mubr.f32.mxu0 0.0
      %2825 = vmatmul.mubr.f32.gmra.mrb[0].mxu0 %v2648
      %v2826 = vpop.f32.mrb[0].mxu0
      %v2827 = vadd.f32 0.0, %v2826
      %v2828 = vpop.f32.mrb[0].mxu0
      %2829 = vmatprep.mubr.f32.mxu0 0.0
      %2830 = vmatmul.mubr.f32.gmra.mrb[0].mxu0 %v2651
      %v2831 = vpop.f32.mrb[0].mxu0
      %v2832 = vadd.f32 0.0, %v2831
      %v2833 = vpop.f32.mrb[0].mxu0
      %2834 = vmatprep.mubr.f32.mxu0 0.0
      %2835 = vmatmul.mubr.f32.gmra.mrb[0].mxu0 %v2654
      %v2836 = vpop.f32.mrb[0].mxu0
      %v2837 = vadd.f32 0.0, %v2836
      %v2838 = vpop.f32.mrb[0].mxu0
      %2839 = vmatprep.mubr.f32.mxu0 0.0
      %2840 = vmatmul.mubr.f32.gmra.mrb[0].mxu0 %v2657
      %v2841 = vpop.f32.mrb[0].mxu0
      %v2842 = vadd.f32 0.0, %v2841
      %v2843 = vpop.f32.mrb[0].mxu0
      %2844 = vmatprep.mubr.f32.mxu0 0.0
      %2845 = vmatmul.mubr.f32.gmra.mrb[0].mxu0 %v2660
      %v2846 = vpop.f32.mrb[0].mxu0
      %v2847 = vadd.f32 0.0, %v2846
      %v2848 = vpop.f32.mrb[0].mxu0
      %2849 = vmatprep.mubr.f32.mxu0 0.0
      %2850 = vmatmul.mubr.f32.gmra.mrb[0].mxu0 %v2663
      %v2851 = vpop.f32.mrb[0].mxu0
      %v2852 = vadd.f32 0.0, %v2851
      %v2853 = vpop.f32.mrb[0].mxu0
      %2854 = vmatprep.mubr.f32.mxu0 0.0
      %2855 = vmatmul.mubr.f32.gmra.mrb[0].mxu0 %v2666
      %v2856 = vpop.f32.mrb[0].mxu0
      %v2857 = vadd.f32 0.0, %v2856
      %v2858 = vpop.f32.mrb[0].mxu0
      %2859 = vmatprep.mubr.f32.mxu0 0.0
      %2860 = vmatmul.mubr.f32.gmra.mrb[0].mxu0 %v2669
      %v2861 = vpop.f32.mrb[0].mxu0
      %v2862 = vadd.f32 0.0, %v2861
      %v2863 = vpop.f32.mrb[0].mxu0
      %2864 = vmatprep.mubr.f32.mxu0 0.0
      %2865 = vmatmul.mubr.f32.gmra.mrb[0].mxu0 %v2672
      %v2866 = vpop.f32.mrb[0].mxu0
      %v2867 = vadd.f32 0.0, %v2866
      %v2868 = vpop.f32.mrb[0].mxu0
      %2869 = vmatprep.mubr.f32.mxu0 0.0
      %2870 = vmatmul.mubr.f32.gmra.mrb[0].mxu0 %v2675
      %v2871 = vpop.f32.mrb[0].mxu0
      %v2872 = vadd.f32 0.0, %v2871
      %v2873 = vpop.f32.mrb[0].mxu0
      %2874 = vmatprep.mubr.f32.mxu0 0.0
      %2875 = vmatmul.mubr.f32.gmra.mrb[0].mxu0 %v2678
      %v2876 = vpop.f32.mrb[0].mxu0
      %v2877 = vadd.f32 0.0, %v2876
      %v2878 = vpop.f32.mrb[0].mxu0
      %2879 = vmatprep.mubr.f32.mxu0 0.0
      %2880 = vmatmul.mubr.f32.gmra.mrb[0].mxu0 %v2681
      %v2881 = vpop.f32.mrb[0].mxu0
      %v2882 = vadd.f32 0.0, %v2881
      %v2883 = vpop.f32.mrb[0].mxu0
      %2884 = vmatprep.mubr.f32.mxu0 0.0
      %2885 = vmatmul.mubr.f32.gmra.mrb[0].mxu0 %v2684
      %v2886 = vpop.f32.mrb[0].mxu0
      %v2887 = vadd.f32 0.0, %v2886
      %v2888 = vpop.f32.mrb[0].mxu0
      %2889 = vmatprep.mubr.f32.mxu0 0.0
      %2890 = vmatmul.mubr.f32.gmra.mrb[0].mxu0 %v2687
      %v2891 = vpop.f32.mrb[0].mxu0
      %v2892 = vadd.f32 0.0, %v2891
      %v2893 = vpop.f32.mrb[0].mxu0
      %2894 = vmatprep.mubr.f32.mxu0 0.0
      %2895 = vmatmul.mubr.f32.gmra.mrb[0].mxu0 %v2690
      %v2896 = vpop.f32.mrb[0].mxu0
      %v2897 = vadd.f32 0.0, %v2896
      %v2898 = vpop.f32.mrb[0].mxu0
      %2899 = vmatprep.mubr.f32.mxu0 0.0
      %2900 = vmatmul.mubr.f32.gmra.mrb[0].mxu0 %v2693
      %v2901 = vpop.f32.mrb[0].mxu0
      %v2902 = vadd.f32 0.0, %v2901
      %v2903 = vpop.f32.mrb[0].mxu0
      %2904 = vmatprep.mubr.f32.mxu0 0.0
      %2905 = vmatmul.mubr.f32.gmra.mrb[0].mxu0 %v2696
      %v2906 = vpop.f32.mrb[0].mxu0
      %v2907 = vadd.f32 0.0, %v2906
      %v2908 = vpop.f32.mrb[0].mxu0
      %2909 = vmatprep.mubr.f32.mxu0 0.0
      %2910 = vmatmul.mubr.f32.gmra.mrb[0].mxu0 %v2699
      %v2911 = vpop.f32.mrb[0].mxu0
      %v2912 = vadd.f32 0.0, %v2911
      %v2913 = vpop.f32.mrb[0].mxu0
      %2914 = vmatprep.mubr.f32.mxu0 0.0
      %2915 = vmatmul.mubr.f32.gmra.mrb[0].mxu0 %v2702
      %v2916 = vpop.f32.mrb[0].mxu0
      %v2917 = vadd.f32 0.0, %v2916
      %v2918 = vpop.f32.mrb[0].mxu0
      %2919 = vmatprep.mubr.f32.mxu0 0.0
      %2920 = vmatmul.mubr.f32.gmra.mrb[0].mxu0 %v2705
      %v2921 = vpop.f32.mrb[0].mxu0
      %v2922 = vadd.f32 0.0, %v2921
      %v2923 = vpop.f32.mrb[0].mxu0
      %2924 = vmatprep.mubr.f32.mxu0 0.0
      %2925 = vmatmul.mubr.f32.gmra.mrb[0].mxu0 %v2708
      %v2926 = vpop.f32.mrb[0].mxu0
      %v2927 = vadd.f32 0.0, %v2926
      %v2928 = vpop.f32.mrb[0].mxu0
      %2929 = vmatprep.mubr.f32.mxu0 0.0
      %2930 = vmatmul.mubr.f32.gmra.mrb[0].mxu0 %v2711
      %v2931 = vpop.f32.mrb[0].mxu0
      %v2932 = vadd.f32 0.0, %v2931
      %v2933 = vpop.f32.mrb[0].mxu0
      %2934 = vmatprep.mubr.f32.mxu0 0.0
      %2935 = vmatmul.mubr.f32.gmra.mrb[0].mxu0 %v2714
      %v2936 = vpop.f32.mrb[0].mxu0
      %v2937 = vadd.f32 0.0, %v2936
      %v2938 = vpop.f32.mrb[0].mxu0
      %2939 = vmatprep.mubr.f32.mxu0 0.0
      %2940 = vmatmul.mubr.f32.gmra.mrb[0].mxu0 %v2717
      %v2941 = vpop.f32.mrb[0].mxu0
      %v2942 = vadd.f32 0.0, %v2941
      %v2943 = vpop.f32.mrb[0].mxu0
      %2944 = vmatprep.mubr.f32.mxu0 0.0
      %2945 = vmatmul.mubr.f32.gmra.mrb[0].mxu0 %v2720
      %v2946 = vpop.f32.mrb[0].mxu0
      %v2947 = vadd.f32 0.0, %v2946
      %v2948 = vpop.f32.mrb[0].mxu0
      %2949 = vdwg.mxu0
      %v2950 = vadd.f32 %v2557, %v2792
      %v2951 = vadd.f32 %v2558, %v2797
      %v2952 = vadd.f32 %v2559, %v2802
      %v2953 = vadd.f32 %v2560, %v2807
      %v2954 = vadd.f32 %v2561, %v2812
      %v2955 = vadd.f32 %v2562, %v2817
      %v2956 = vadd.f32 %v2563, %v2822
      %v2957 = vadd.f32 %v2564, %v2827
      %v2958 = vadd.f32 %v2565, %v2832
      %v2959 = vadd.f32 %v2566, %v2837
      %v2960 = vadd.f32 %v2567, %v2842
      %v2961 = vadd.f32 %v2568, %v2847
      %v2962 = vadd.f32 %v2569, %v2852
      %v2963 = vadd.f32 %v2570, %v2857
      %v2964 = vadd.f32 %v2571, %v2862
      %v2965 = vadd.f32 %v2572, %v2867
      %v2966 = vadd.f32 %v2573, %v2872
      %v2967 = vadd.f32 %v2574, %v2877
      %v2968 = vadd.f32 %v2575, %v2882
      %v2969 = vadd.f32 %v2576, %v2887
      %v2970 = vadd.f32 %v2577, %v2892
      %v2971 = vadd.f32 %v2578, %v2897
      %v2972 = vadd.f32 %v2579, %v2902
      %v2973 = vadd.f32 %v2580, %v2907
      %v2974 = vadd.f32 %v2581, %v2912
      %v2975 = vadd.f32 %v2582, %v2917
      %v2976 = vadd.f32 %v2583, %v2922
      %v2977 = vadd.f32 %v2584, %v2927
      %v2978 = vadd.f32 %v2585, %v2932
      %v2979 = vadd.f32 %v2586, %v2937
      %v2980 = vadd.f32 %v2587, %v2942
      %v2981 = vadd.f32 %v2588, %v2947
      %v2982 = vld [vmem:[%s2589 + $0x1] sm:$0xff]
      %v2983 = vld [vmem:[%s2589 + $0x9] sm:$0xff]
      %v2984 = vld [vmem:[%s2589 + $0x19] sm:$0xff]
      %v2985 = vld [vmem:[%s2589 + $0x21] sm:$0xff]
      %v2986 = vld [vmem:[%s2589 + $0x31] sm:$0xff]
      %v2987 = vld [vmem:[%s2589 + $0x39] sm:$0xff]
      %v2988 = vld [vmem:[%s2589 + $0x49] sm:$0xff]
      %v2989 = vld [vmem:[%s2589 + $0x51] sm:$0xff]
      %v2990 = vld [vmem:[%s2589 + $0x61] sm:$0xff]
      %v2991 = vld [vmem:[%s2589 + $0x69] sm:$0xff]
      %v2992 = vld [vmem:[%s2589 + $0x79] sm:$0xff]
      %v2993 = vld [vmem:[%s2589 + $0x81] sm:$0xff]
      %v2994 = vld [vmem:[%s2589 + $0x91] sm:$0xff]
      %v2995 = vld [vmem:[%s2589 + $0x99] sm:$0xff]
      %v2996 = vld [vmem:[%s2589 + $0xa9] sm:$0xff]
      %v2997 = vld [vmem:[%s2589 + $0xb1] sm:$0xff]
      %v2998 = vld [vmem:[%s2589 + $0xc1] sm:$0xff]
      %v2999 = vld [vmem:[%s2589 + $0xc9] sm:$0xff]
      %v3000 = vld [vmem:[%s2589 + $0xd9] sm:$0xff]
      %v3001 = vld [vmem:[%s2589 + $0xe1] sm:$0xff]
      %v3002 = vld [vmem:[%s2589 + $0xf1] sm:$0xff]
      %v3003 = vld [vmem:[%s2589 + $0xf9] sm:$0xff]
      %v3004 = vld [vmem:[%s2589 + $0x109] sm:$0xff]
      %v3005 = vld [vmem:[%s2589 + $0x111] sm:$0xff]
      %v3006 = vld [vmem:[%s2589 + $0x121] sm:$0xff]
      %v3007 = vld [vmem:[%s2589 + $0x129] sm:$0xff]
      %v3008 = vld [vmem:[%s2589 + $0x139] sm:$0xff]
      %v3009 = vld [vmem:[%s2589 + $0x141] sm:$0xff]
      %v3010 = vld [vmem:[%s2589 + $0x151] sm:$0xff]
      %v3011 = vld [vmem:[%s2589 + $0x159] sm:$0xff]
      %v3012 = vld [vmem:[%s2589 + $0x169] sm:$0xff]
      %v3013 = vld [vmem:[%s2589 + $0x171] sm:$0xff]
      %s3014 = scalar_lea.vmem %s1, 168
      %v3015 = vld [vmem:[%s3014] sm:$0xff]
      %v3016 = vld [vmem:[%s3014 + $0x8] sm:$0xff]
      %v3017 = vld [vmem:[%s3014 + $0x10] sm:$0x3]
      %v3019 = vsel %vm370, %v2982, 0
      %v3022 = vsel %vm370, %v2983, 0
      %v3025 = vsel %vm370, %v2984, 0
      %v3028 = vsel %vm370, %v2985, 0
      %v3031 = vsel %vm370, %v2986, 0
      %v3034 = vsel %vm370, %v2987, 0
      %v3037 = vsel %vm370, %v2988, 0
      %v3040 = vsel %vm370, %v2989, 0
      %v3043 = vsel %vm370, %v2990, 0
      %v3046 = vsel %vm370, %v2991, 0
      %v3049 = vsel %vm370, %v2992, 0
      %v3052 = vsel %vm370, %v2993, 0
      %v3055 = vsel %vm370, %v2994, 0
      %v3058 = vsel %vm370, %v2995, 0
      %v3061 = vsel %vm370, %v2996, 0
      %v3064 = vsel %vm370, %v2997, 0
      %v3067 = vsel %vm370, %v2998, 0
      %v3070 = vsel %vm370, %v2999, 0
      %v3073 = vsel %vm370, %v3000, 0
      %v3076 = vsel %vm370, %v3001, 0
      %v3079 = vsel %vm370, %v3002, 0
      %v3082 = vsel %vm370, %v3003, 0
      %v3085 = vsel %vm370, %v3004, 0
      %v3088 = vsel %vm370, %v3005, 0
      %v3091 = vsel %vm370, %v3006, 0
      %v3094 = vsel %vm370, %v3007, 0
      %v3097 = vsel %vm370, %v3008, 0
      %v3100 = vsel %vm370, %v3009, 0
      %v3103 = vsel %vm370, %v3010, 0
      %v3106 = vsel %vm370, %v3011, 0
      %v3109 = vsel %vm370, %v3012, 0
      %v3112 = vsel %vm370, %v3013, 0
      %v3115 = vsel %vm467, %v3017, 0
      %3117 = vmatprep.subr.mxu0 0.0
      %3118 = vmatpush1.msra.mxu0 %v3015
      %3119 = vmatprep.subr.mxu0 0.0
      %3120 = vmatpush1.msra.mxu0 %v3016
      %3121 = vmatprep.subr.mxu0 0.0
      %3122 = vmatpush1.msra.mxu0 %v3115
      %3123 = vmatprep.subr.mxu0 0.0
      %3124 = vmatpush1.msra.mxu0 0.0
      %3125 = vmatprep.subr.mxu0 0.0
      %3126 = vmatpush1.msra.mxu0 0.0
      %3127 = vmatprep.subr.mxu0 0.0
      %3128 = vmatpush1.msra.mxu0 0.0
      %3129 = vmatprep.subr.mxu0 0.0
      %3130 = vmatpush1.msra.mxu0 0.0
      %3131 = vmatprep.subr.mxu0 0.0
      %3132 = vmatpush1.msra.mxu0 0.0
      %3133 = vmatprep.subr.mxu0 0.0
      %3134 = vmatpush1.msra.mxu0 0.0
      %3135 = vmatprep.subr.mxu0 0.0
      %3136 = vmatpush1.msra.mxu0 0.0
      %3137 = vmatprep.subr.mxu0 0.0
      %3138 = vmatpush1.msra.mxu0 0.0
      %3139 = vmatprep.subr.mxu0 0.0
      %3140 = vmatpush1.msra.mxu0 0.0
      %3141 = vmatprep.subr.mxu0 0.0
      %3142 = vmatpush1.msra.mxu0 0.0
      %3143 = vmatprep.subr.mxu0 0.0
      %3144 = vmatpush1.msra.mxu0 0.0
      %3145 = vmatprep.subr.mxu0 0.0
      %3146 = vmatpush1.msra.mxu0 0.0
      %3147 = vmatprep.subr.mxu0 0.0
      %3148 = vmatpush1.msra.mxu0 0.0
      %3149 = vmatprep.subr.mxu0 0.0
      %3150 = vmatpush1.msra.mxu0 0.0
      %3151 = vmatprep.subr.mxu0 0.0
      %3152 = vmatpush1.msra.mxu0 0.0
      %3153 = vmatprep.subr.mxu0 0.0
      %3154 = vmatpush1.msra.mxu0 0.0
      %3155 = vmatprep.subr.mxu0 0.0
      %3156 = vmatpush1.msra.mxu0 0.0
      %3157 = vmatprep.subr.mxu0 0.0
      %3158 = vmatpush1.msra.mxu0 0.0
      %3159 = vmatprep.subr.mxu0 0.0
      %3160 = vmatpush1.msra.mxu0 0.0
      %3161 = vmatprep.subr.mxu0 0.0
      %3162 = vmatpush1.msra.mxu0 0.0
      %3163 = vmatprep.subr.mxu0 0.0
      %3164 = vmatpush1.msra.mxu0 0.0
      %3165 = vmatprep.subr.mxu0 0.0
      %3166 = vmatpush1.msra.mxu0 0.0
      %3167 = vmatprep.subr.mxu0 0.0
      %3168 = vmatpush1.msra.mxu0 0.0
      %3169 = vmatprep.subr.mxu0 0.0
      %3170 = vmatpush1.msra.mxu0 0.0
      %3171 = vmatprep.subr.mxu0 0.0
      %3172 = vmatpush1.msra.mxu0 0.0
      %3173 = vmatprep.subr.mxu0 0.0
      %3174 = vmatpush1.msra.mxu0 0.0
      %3175 = vmatprep.subr.mxu0 0.0
      %3176 = vmatpush1.msra.mxu0 0.0
      %3177 = vmatprep.subr.mxu0 0.0
      %3178 = vmatpush1.msra.mxu0 0.0
      %3179 = vmatprep.subr.mxu0 0.0
      %3180 = vmatpush1.msra.mxu0 0.0
      %3181 = vmatprep.mubr.f32.mxu0 0.0
      %3182 = vmatmul.mubr.f32.gmra.mrb[0].mxu0 %v3019
      %v3183 = vpop.f32.mrb[0].mxu0
      %v3184 = vadd.f32 0.0, %v3183
      %v3185 = vpop.f32.mrb[0].mxu0
      %3186 = vmatprep.mubr.f32.mxu0 0.0
      %3187 = vmatmul.mubr.f32.gmra.mrb[0].mxu0 %v3022
      %v3188 = vpop.f32.mrb[0].mxu0
      %v3189 = vadd.f32 0.0, %v3188
      %v3190 = vpop.f32.mrb[0].mxu0
      %3191 = vmatprep.mubr.f32.mxu0 0.0
      %3192 = vmatmul.mubr.f32.gmra.mrb[0].mxu0 %v3025
      %v3193 = vpop.f32.mrb[0].mxu0
      %v3194 = vadd.f32 0.0, %v3193
      %v3195 = vpop.f32.mrb[0].mxu0
      %3196 = vmatprep.mubr.f32.mxu0 0.0
      %3197 = vmatmul.mubr.f32.gmra.mrb[0].mxu0 %v3028
      %v3198 = vpop.f32.mrb[0].mxu0
      %v3199 = vadd.f32 0.0, %v3198
      %v3200 = vpop.f32.mrb[0].mxu0
      %3201 = vmatprep.mubr.f32.mxu0 0.0
      %3202 = vmatmul.mubr.f32.gmra.mrb[0].mxu0 %v3031
      %v3203 = vpop.f32.mrb[0].mxu0
      %v3204 = vadd.f32 0.0, %v3203
      %v3205 = vpop.f32.mrb[0].mxu0
      %3206 = vmatprep.mubr.f32.mxu0 0.0
      %3207 = vmatmul.mubr.f32.gmra.mrb[0].mxu0 %v3034
      %v3208 = vpop.f32.mrb[0].mxu0
      %v3209 = vadd.f32 0.0, %v3208
      %v3210 = vpop.f32.mrb[0].mxu0
      %3211 = vmatprep.mubr.f32.mxu0 0.0
      %3212 = vmatmul.mubr.f32.gmra.mrb[0].mxu0 %v3037
      %v3213 = vpop.f32.mrb[0].mxu0
      %v3214 = vadd.f32 0.0, %v3213
      %v3215 = vpop.f32.mrb[0].mxu0
      %3216 = vmatprep.mubr.f32.mxu0 0.0
      %3217 = vmatmul.mubr.f32.gmra.mrb[0].mxu0 %v3040
      %v3218 = vpop.f32.mrb[0].mxu0
      %v3219 = vadd.f32 0.0, %v3218
      %v3220 = vpop.f32.mrb[0].mxu0
      %3221 = vmatprep.mubr.f32.mxu0 0.0
      %3222 = vmatmul.mubr.f32.gmra.mrb[0].mxu0 %v3043
      %v3223 = vpop.f32.mrb[0].mxu0
      %v3224 = vadd.f32 0.0, %v3223
      %v3225 = vpop.f32.mrb[0].mxu0
      %3226 = vmatprep.mubr.f32.mxu0 0.0
      %3227 = vmatmul.mubr.f32.gmra.mrb[0].mxu0 %v3046
      %v3228 = vpop.f32.mrb[0].mxu0
      %v3229 = vadd.f32 0.0, %v3228
      %v3230 = vpop.f32.mrb[0].mxu0
      %3231 = vmatprep.mubr.f32.mxu0 0.0
      %3232 = vmatmul.mubr.f32.gmra.mrb[0].mxu0 %v3049
      %v3233 = vpop.f32.mrb[0].mxu0
      %v3234 = vadd.f32 0.0, %v3233
      %v3235 = vpop.f32.mrb[0].mxu0
      %3236 = vmatprep.mubr.f32.mxu0 0.0
      %3237 = vmatmul.mubr.f32.gmra.mrb[0].mxu0 %v3052
      %v3238 = vpop.f32.mrb[0].mxu0
      %v3239 = vadd.f32 0.0, %v3238
      %v3240 = vpop.f32.mrb[0].mxu0
      %3241 = vmatprep.mubr.f32.mxu0 0.0
      %3242 = vmatmul.mubr.f32.gmra.mrb[0].mxu0 %v3055
      %v3243 = vpop.f32.mrb[0].mxu0
      %v3244 = vadd.f32 0.0, %v3243
      %v3245 = vpop.f32.mrb[0].mxu0
      %3246 = vmatprep.mubr.f32.mxu0 0.0
      %3247 = vmatmul.mubr.f32.gmra.mrb[0].mxu0 %v3058
      %v3248 = vpop.f32.mrb[0].mxu0
      %v3249 = vadd.f32 0.0, %v3248
      %v3250 = vpop.f32.mrb[0].mxu0
      %3251 = vmatprep.mubr.f32.mxu0 0.0
      %3252 = vmatmul.mubr.f32.gmra.mrb[0].mxu0 %v3061
      %v3253 = vpop.f32.mrb[0].mxu0
      %v3254 = vadd.f32 0.0, %v3253
      %v3255 = vpop.f32.mrb[0].mxu0
      %3256 = vmatprep.mubr.f32.mxu0 0.0
      %3257 = vmatmul.mubr.f32.gmra.mrb[0].mxu0 %v3064
      %v3258 = vpop.f32.mrb[0].mxu0
      %v3259 = vadd.f32 0.0, %v3258
      %v3260 = vpop.f32.mrb[0].mxu0
      %3261 = vmatprep.mubr.f32.mxu0 0.0
      %3262 = vmatmul.mubr.f32.gmra.mrb[0].mxu0 %v3067
      %v3263 = vpop.f32.mrb[0].mxu0
      %v3264 = vadd.f32 0.0, %v3263
      %v3265 = vpop.f32.mrb[0].mxu0
      %3266 = vmatprep.mubr.f32.mxu0 0.0
      %3267 = vmatmul.mubr.f32.gmra.mrb[0].mxu0 %v3070
      %v3268 = vpop.f32.mrb[0].mxu0
      %v3269 = vadd.f32 0.0, %v3268
      %v3270 = vpop.f32.mrb[0].mxu0
      %3271 = vmatprep.mubr.f32.mxu0 0.0
      %3272 = vmatmul.mubr.f32.gmra.mrb[0].mxu0 %v3073
      %v3273 = vpop.f32.mrb[0].mxu0
      %v3274 = vadd.f32 0.0, %v3273
      %v3275 = vpop.f32.mrb[0].mxu0
      %3276 = vmatprep.mubr.f32.mxu0 0.0
      %3277 = vmatmul.mubr.f32.gmra.mrb[0].mxu0 %v3076
      %v3278 = vpop.f32.mrb[0].mxu0
      %v3279 = vadd.f32 0.0, %v3278
      %v3280 = vpop.f32.mrb[0].mxu0
      %3281 = vmatprep.mubr.f32.mxu0 0.0
      %3282 = vmatmul.mubr.f32.gmra.mrb[0].mxu0 %v3079
      %v3283 = vpop.f32.mrb[0].mxu0
      %v3284 = vadd.f32 0.0, %v3283
      %v3285 = vpop.f32.mrb[0].mxu0
      %3286 = vmatprep.mubr.f32.mxu0 0.0
      %3287 = vmatmul.mubr.f32.gmra.mrb[0].mxu0 %v3082
      %v3288 = vpop.f32.mrb[0].mxu0
      %v3289 = vadd.f32 0.0, %v3288
      %v3290 = vpop.f32.mrb[0].mxu0
      %3291 = vmatprep.mubr.f32.mxu0 0.0
      %3292 = vmatmul.mubr.f32.gmra.mrb[0].mxu0 %v3085
      %v3293 = vpop.f32.mrb[0].mxu0
      %v3294 = vadd.f32 0.0, %v3293
      %v3295 = vpop.f32.mrb[0].mxu0
      %3296 = vmatprep.mubr.f32.mxu0 0.0
      %3297 = vmatmul.mubr.f32.gmra.mrb[0].mxu0 %v3088
      %v3298 = vpop.f32.mrb[0].mxu0
      %v3299 = vadd.f32 0.0, %v3298
      %v3300 = vpop.f32.mrb[0].mxu0
      %3301 = vmatprep.mubr.f32.mxu0 0.0
      %3302 = vmatmul.mubr.f32.gmra.mrb[0].mxu0 %v3091
      %v3303 = vpop.f32.mrb[0].mxu0
      %v3304 = vadd.f32 0.0, %v3303
      %v3305 = vpop.f32.mrb[0].mxu0
      %3306 = vmatprep.mubr.f32.mxu0 0.0
      %3307 = vmatmul.mubr.f32.gmra.mrb[0].mxu0 %v3094
      %v3308 = vpop.f32.mrb[0].mxu0
      %v3309 = vadd.f32 0.0, %v3308
      %v3310 = vpop.f32.mrb[0].mxu0
      %3311 = vmatprep.mubr.f32.mxu0 0.0
      %3312 = vmatmul.mubr.f32.gmra.mrb[0].mxu0 %v3097
      %v3313 = vpop.f32.mrb[0].mxu0
      %v3314 = vadd.f32 0.0, %v3313
      %v3315 = vpop.f32.mrb[0].mxu0
      %3316 = vmatprep.mubr.f32.mxu0 0.0
      %3317 = vmatmul.mubr.f32.gmra.mrb[0].mxu0 %v3100
      %v3318 = vpop.f32.mrb[0].mxu0
      %v3319 = vadd.f32 0.0, %v3318
      %v3320 = vpop.f32.mrb[0].mxu0
      %3321 = vmatprep.mubr.f32.mxu0 0.0
      %3322 = vmatmul.mubr.f32.gmra.mrb[0].mxu0 %v3103
      %v3323 = vpop.f32.mrb[0].mxu0
      %v3324 = vadd.f32 0.0, %v3323
      %v3325 = vpop.f32.mrb[0].mxu0
      %3326 = vmatprep.mubr.f32.mxu0 0.0
      %3327 = vmatmul.mubr.f32.gmra.mrb[0].mxu0 %v3106
      %v3328 = vpop.f32.mrb[0].mxu0
      %v3329 = vadd.f32 0.0, %v3328
      %v3330 = vpop.f32.mrb[0].mxu0
      %3331 = vmatprep.mubr.f32.mxu0 0.0
      %3332 = vmatmul.mubr.f32.gmra.mrb[0].mxu0 %v3109
      %v3333 = vpop.f32.mrb[0].mxu0
      %v3334 = vadd.f32 0.0, %v3333
      %v3335 = vpop.f32.mrb[0].mxu0
      %3336 = vmatprep.mubr.f32.mxu0 0.0
      %3337 = vmatmul.mubr.f32.gmra.mrb[0].mxu0 %v3112
      %v3338 = vpop.f32.mrb[0].mxu0
      %v3339 = vadd.f32 0.0, %v3338
      %v3340 = vpop.f32.mrb[0].mxu0
      %3341 = vdwg.mxu0
      %v3342 = vadd.f32 %v2950, %v3184
      %v3343 = vadd.f32 %v2951, %v3189
      %v3344 = vadd.f32 %v2952, %v3194
      %v3345 = vadd.f32 %v2953, %v3199
      %v3346 = vadd.f32 %v2954, %v3204
      %v3347 = vadd.f32 %v2955, %v3209
      %v3348 = vadd.f32 %v2956, %v3214
      %v3349 = vadd.f32 %v2957, %v3219
      %v3350 = vadd.f32 %v2958, %v3224
      %v3351 = vadd.f32 %v2959, %v3229
      %v3352 = vadd.f32 %v2960, %v3234
      %v3353 = vadd.f32 %v2961, %v3239
      %v3354 = vadd.f32 %v2962, %v3244
      %v3355 = vadd.f32 %v2963, %v3249
      %v3356 = vadd.f32 %v2964, %v3254
      %v3357 = vadd.f32 %v2965, %v3259
      %v3358 = vadd.f32 %v2966, %v3264
      %v3359 = vadd.f32 %v2967, %v3269
      %v3360 = vadd.f32 %v2968, %v3274
      %v3361 = vadd.f32 %v2969, %v3279
      %v3362 = vadd.f32 %v2970, %v3284
      %v3363 = vadd.f32 %v2971, %v3289
      %v3364 = vadd.f32 %v2972, %v3294
      %v3365 = vadd.f32 %v2973, %v3299
      %v3366 = vadd.f32 %v2974, %v3304
      %v3367 = vadd.f32 %v2975, %v3309
      %v3368 = vadd.f32 %v2976, %v3314
      %v3369 = vadd.f32 %v2977, %v3319
      %v3370 = vadd.f32 %v2978, %v3324
      %v3371 = vadd.f32 %v2979, %v3329
      %v3372 = vadd.f32 %v2980, %v3334
      %v3373 = vadd.f32 %v2981, %v3339
      %v3374 = vld [vmem:[%s2589 + $0x2] sm:$0xff]
      %v3375 = vld [vmem:[%s2589 + $0xa] sm:$0xff]
      %v3376 = vld [vmem:[%s2589 + $0x1a] sm:$0xff]
      %v3377 = vld [vmem:[%s2589 + $0x22] sm:$0xff]
      %v3378 = vld [vmem:[%s2589 + $0x32] sm:$0xff]
      %v3379 = vld [vmem:[%s2589 + $0x3a] sm:$0xff]
      %v3380 = vld [vmem:[%s2589 + $0x4a] sm:$0xff]
      %v3381 = vld [vmem:[%s2589 + $0x52] sm:$0xff]
      %v3382 = vld [vmem:[%s2589 + $0x62] sm:$0xff]
      %v3383 = vld [vmem:[%s2589 + $0x6a] sm:$0xff]
      %v3384 = vld [vmem:[%s2589 + $0x7a] sm:$0xff]
      %v3385 = vld [vmem:[%s2589 + $0x82] sm:$0xff]
      %v3386 = vld [vmem:[%s2589 + $0x92] sm:$0xff]
      %v3387 = vld [vmem:[%s2589 + $0x9a] sm:$0xff]
      %v3388 = vld [vmem:[%s2589 + $0xaa] sm:$0xff]
      %v3389 = vld [vmem:[%s2589 + $0xb2] sm:$0xff]
      %v3390 = vld [vmem:[%s2589 + $0xc2] sm:$0xff]
      %v3391 = vld [vmem:[%s2589 + $0xca] sm:$0xff]
      %v3392 = vld [vmem:[%s2589 + $0xda] sm:$0xff]
      %v3393 = vld [vmem:[%s2589 + $0xe2] sm:$0xff]
      %v3394 = vld [vmem:[%s2589 + $0xf2] sm:$0xff]
      %v3395 = vld [vmem:[%s2589 + $0xfa] sm:$0xff]
      %v3396 = vld [vmem:[%s2589 + $0x10a] sm:$0xff]
      %v3397 = vld [vmem:[%s2589 + $0x112] sm:$0xff]
      %v3398 = vld [vmem:[%s2589 + $0x122] sm:$0xff]
      %v3399 = vld [vmem:[%s2589 + $0x12a] sm:$0xff]
      %v3400 = vld [vmem:[%s2589 + $0x13a] sm:$0xff]
      %v3401 = vld [vmem:[%s2589 + $0x142] sm:$0xff]
      %v3402 = vld [vmem:[%s2589 + $0x152] sm:$0xff]
      %v3403 = vld [vmem:[%s2589 + $0x15a] sm:$0xff]
      %v3404 = vld [vmem:[%s2589 + $0x16a] sm:$0xff]
      %v3405 = vld [vmem:[%s2589 + $0x172] sm:$0xff]
      %s3406 = scalar_lea.vmem %s1, 192
      %v3407 = vld [vmem:[%s3406] sm:$0xff]
      %v3408 = vld [vmem:[%s3406 + $0x8] sm:$0xff]
      %v3409 = vld [vmem:[%s3406 + $0x10] sm:$0x3]
      %v3411 = vsel %vm370, %v3374, 0
      %v3414 = vsel %vm370, %v3375, 0
      %v3417 = vsel %vm370, %v3376, 0
      %v3420 = vsel %vm370, %v3377, 0
      %v3423 = vsel %vm370, %v3378, 0
      %v3426 = vsel %vm370, %v3379, 0
      %v3429 = vsel %vm370, %v3380, 0
      %v3432 = vsel %vm370, %v3381, 0
      %v3435 = vsel %vm370, %v3382, 0
      %v3438 = vsel %vm370, %v3383, 0
      %v3441 = vsel %vm370, %v3384, 0
      %v3444 = vsel %vm370, %v3385, 0
      %v3447 = vsel %vm370, %v3386, 0
      %v3450 = vsel %vm370, %v3387, 0
      %v3453 = vsel %vm370, %v3388, 0
      %v3456 = vsel %vm370, %v3389, 0
      %v3459 = vsel %vm370, %v3390, 0
      %v3462 = vsel %vm370, %v3391, 0
      %v3465 = vsel %vm370, %v3392, 0
      %v3468 = vsel %vm370, %v3393, 0
      %v3471 = vsel %vm370, %v3394, 0
      %v3474 = vsel %vm370, %v3395, 0
      %v3477 = vsel %vm370, %v3396, 0
      %v3480 = vsel %vm370, %v3397, 0
      %v3483 = vsel %vm370, %v3398, 0
      %v3486 = vsel %vm370, %v3399, 0
      %v3489 = vsel %vm370, %v3400, 0
      %v3492 = vsel %vm370, %v3401, 0
      %v3495 = vsel %vm370, %v3402, 0
      %v3498 = vsel %vm370, %v3403, 0
      %v3501 = vsel %vm370, %v3404, 0
      %v3504 = vsel %vm370, %v3405, 0
      %v3507 = vsel %vm467, %v3409, 0
      %3509 = vmatprep.subr.mxu0 0.0
      %3510 = vmatpush1.msra.mxu0 %v3407
      %3511 = vmatprep.subr.mxu0 0.0
      %3512 = vmatpush1.msra.mxu0 %v3408
      %3513 = vmatprep.subr.mxu0 0.0
      %3514 = vmatpush1.msra.mxu0 %v3507
      %3515 = vmatprep.subr.mxu0 0.0
      %3516 = vmatpush1.msra.mxu0 0.0
      %3517 = vmatprep.subr.mxu0 0.0
      %3518 = vmatpush1.msra.mxu0 0.0
      %3519 = vmatprep.subr.mxu0 0.0
      %3520 = vmatpush1.msra.mxu0 0.0
      %3521 = vmatprep.subr.mxu0 0.0
      %3522 = vmatpush1.msra.mxu0 0.0
      %3523 = vmatprep.subr.mxu0 0.0
      %3524 = vmatpush1.msra.mxu0 0.0
      %3525 = vmatprep.subr.mxu0 0.0
      %3526 = vmatpush1.msra.mxu0 0.0
      %3527 = vmatprep.subr.mxu0 0.0
      %3528 = vmatpush1.msra.mxu0 0.0
      %3529 = vmatprep.subr.mxu0 0.0
      %3530 = vmatpush1.msra.mxu0 0.0
      %3531 = vmatprep.subr.mxu0 0.0
      %3532 = vmatpush1.msra.mxu0 0.0
      %3533 = vmatprep.subr.mxu0 0.0
      %3534 = vmatpush1.msra.mxu0 0.0
      %3535 = vmatprep.subr.mxu0 0.0
      %3536 = vmatpush1.msra.mxu0 0.0
      %3537 = vmatprep.subr.mxu0 0.0
      %3538 = vmatpush1.msra.mxu0 0.0
      %3539 = vmatprep.subr.mxu0 0.0
      %3540 = vmatpush1.msra.mxu0 0.0
      %3541 = vmatprep.subr.mxu0 0.0
      %3542 = vmatpush1.msra.mxu0 0.0
      %3543 = vmatprep.subr.mxu0 0.0
      %3544 = vmatpush1.msra.mxu0 0.0
      %3545 = vmatprep.subr.mxu0 0.0
      %3546 = vmatpush1.msra.mxu0 0.0
      %3547 = vmatprep.subr.mxu0 0.0
      %3548 = vmatpush1.msra.mxu0 0.0
      %3549 = vmatprep.subr.mxu0 0.0
      %3550 = vmatpush1.msra.mxu0 0.0
      %3551 = vmatprep.subr.mxu0 0.0
      %3552 = vmatpush1.msra.mxu0 0.0
      %3553 = vmatprep.subr.mxu0 0.0
      %3554 = vmatpush1.msra.mxu0 0.0
      %3555 = vmatprep.subr.mxu0 0.0
      %3556 = vmatpush1.msra.mxu0 0.0
      %3557 = vmatprep.subr.mxu0 0.0
      %3558 = vmatpush1.msra.mxu0 0.0
      %3559 = vmatprep.subr.mxu0 0.0
      %3560 = vmatpush1.msra.mxu0 0.0
      %3561 = vmatprep.subr.mxu0 0.0
      %3562 = vmatpush1.msra.mxu0 0.0
      %3563 = vmatprep.subr.mxu0 0.0
      %3564 = vmatpush1.msra.mxu0 0.0
      %3565 = vmatprep.subr.mxu0 0.0
      %3566 = vmatpush1.msra.mxu0 0.0
      %3567 = vmatprep.subr.mxu0 0.0
      %3568 = vmatpush1.msra.mxu0 0.0
      %3569 = vmatprep.subr.mxu0 0.0
      %3570 = vmatpush1.msra.mxu0 0.0
      %3571 = vmatprep.subr.mxu0 0.0
      %3572 = vmatpush1.msra.mxu0 0.0
      %3573 = vmatprep.mubr.f32.mxu0 0.0
      %3574 = vmatmul.mubr.f32.gmra.mrb[0].mxu0 %v3411
      %v3575 = vpop.f32.mrb[0].mxu0
      %v3576 = vadd.f32 0.0, %v3575
      %v3577 = vpop.f32.mrb[0].mxu0
      %3578 = vmatprep.mubr.f32.mxu0 0.0
      %3579 = vmatmul.mubr.f32.gmra.mrb[0].mxu0 %v3414
      %v3580 = vpop.f32.mrb[0].mxu0
      %v3581 = vadd.f32 0.0, %v3580
      %v3582 = vpop.f32.mrb[0].mxu0
      %3583 = vmatprep.mubr.f32.mxu0 0.0
      %3584 = vmatmul.mubr.f32.gmra.mrb[0].mxu0 %v3417
      %v3585 = vpop.f32.mrb[0].mxu0
      %v3586 = vadd.f32 0.0, %v3585
      %v3587 = vpop.f32.mrb[0].mxu0
      %3588 = vmatprep.mubr.f32.mxu0 0.0
      %3589 = vmatmul.mubr.f32.gmra.mrb[0].mxu0 %v3420
      %v3590 = vpop.f32.mrb[0].mxu0
      %v3591 = vadd.f32 0.0, %v3590
      %v3592 = vpop.f32.mrb[0].mxu0
      %3593 = vmatprep.mubr.f32.mxu0 0.0
      %3594 = vmatmul.mubr.f32.gmra.mrb[0].mxu0 %v3423
      %v3595 = vpop.f32.mrb[0].mxu0
      %v3596 = vadd.f32 0.0, %v3595
      %v3597 = vpop.f32.mrb[0].mxu0
      %3598 = vmatprep.mubr.f32.mxu0 0.0
      %3599 = vmatmul.mubr.f32.gmra.mrb[0].mxu0 %v3426
      %v3600 = vpop.f32.mrb[0].mxu0
      %v3601 = vadd.f32 0.0, %v3600
      %v3602 = vpop.f32.mrb[0].mxu0
      %3603 = vmatprep.mubr.f32.mxu0 0.0
      %3604 = vmatmul.mubr.f32.gmra.mrb[0].mxu0 %v3429
      %v3605 = vpop.f32.mrb[0].mxu0
      %v3606 = vadd.f32 0.0, %v3605
      %v3607 = vpop.f32.mrb[0].mxu0
      %3608 = vmatprep.mubr.f32.mxu0 0.0
      %3609 = vmatmul.mubr.f32.gmra.mrb[0].mxu0 %v3432
      %v3610 = vpop.f32.mrb[0].mxu0
      %v3611 = vadd.f32 0.0, %v3610
      %v3612 = vpop.f32.mrb[0].mxu0
      %3613 = vmatprep.mubr.f32.mxu0 0.0
      %3614 = vmatmul.mubr.f32.gmra.mrb[0].mxu0 %v3435
      %v3615 = vpop.f32.mrb[0].mxu0
      %v3616 = vadd.f32 0.0, %v3615
      %v3617 = vpop.f32.mrb[0].mxu0
      %3618 = vmatprep.mubr.f32.mxu0 0.0
      %3619 = vmatmul.mubr.f32.gmra.mrb[0].mxu0 %v3438
      %v3620 = vpop.f32.mrb[0].mxu0
      %v3621 = vadd.f32 0.0, %v3620
      %v3622 = vpop.f32.mrb[0].mxu0
      %3623 = vmatprep.mubr.f32.mxu0 0.0
      %3624 = vmatmul.mubr.f32.gmra.mrb[0].mxu0 %v3441
      %v3625 = vpop.f32.mrb[0].mxu0
      %v3626 = vadd.f32 0.0, %v3625
      %v3627 = vpop.f32.mrb[0].mxu0
      %3628 = vmatprep.mubr.f32.mxu0 0.0
      %3629 = vmatmul.mubr.f32.gmra.mrb[0].mxu0 %v3444
      %v3630 = vpop.f32.mrb[0].mxu0
      %v3631 = vadd.f32 0.0, %v3630
      %v3632 = vpop.f32.mrb[0].mxu0
      %3633 = vmatprep.mubr.f32.mxu0 0.0
      %3634 = vmatmul.mubr.f32.gmra.mrb[0].mxu0 %v3447
      %v3635 = vpop.f32.mrb[0].mxu0
      %v3636 = vadd.f32 0.0, %v3635
      %v3637 = vpop.f32.mrb[0].mxu0
      %3638 = vmatprep.mubr.f32.mxu0 0.0
      %3639 = vmatmul.mubr.f32.gmra.mrb[0].mxu0 %v3450
      %v3640 = vpop.f32.mrb[0].mxu0
      %v3641 = vadd.f32 0.0, %v3640
      %v3642 = vpop.f32.mrb[0].mxu0
      %3643 = vmatprep.mubr.f32.mxu0 0.0
      %3644 = vmatmul.mubr.f32.gmra.mrb[0].mxu0 %v3453
      %v3645 = vpop.f32.mrb[0].mxu0
      %v3646 = vadd.f32 0.0, %v3645
      %v3647 = vpop.f32.mrb[0].mxu0
      %3648 = vmatprep.mubr.f32.mxu0 0.0
      %3649 = vmatmul.mubr.f32.gmra.mrb[0].mxu0 %v3456
      %v3650 = vpop.f32.mrb[0].mxu0
      %v3651 = vadd.f32 0.0, %v3650
      %v3652 = vpop.f32.mrb[0].mxu0
      %3653 = vmatprep.mubr.f32.mxu0 0.0
      %3654 = vmatmul.mubr.f32.gmra.mrb[0].mxu0 %v3459
      %v3655 = vpop.f32.mrb[0].mxu0
      %v3656 = vadd.f32 0.0, %v3655
      %v3657 = vpop.f32.mrb[0].mxu0
      %3658 = vmatprep.mubr.f32.mxu0 0.0
      %3659 = vmatmul.mubr.f32.gmra.mrb[0].mxu0 %v3462
      %v3660 = vpop.f32.mrb[0].mxu0
      %v3661 = vadd.f32 0.0, %v3660
      %v3662 = vpop.f32.mrb[0].mxu0
      %3663 = vmatprep.mubr.f32.mxu0 0.0
      %3664 = vmatmul.mubr.f32.gmra.mrb[0].mxu0 %v3465
      %v3665 = vpop.f32.mrb[0].mxu0
      %v3666 = vadd.f32 0.0, %v3665
      %v3667 = vpop.f32.mrb[0].mxu0
      %3668 = vmatprep.mubr.f32.mxu0 0.0
      %3669 = vmatmul.mubr.f32.gmra.mrb[0].mxu0 %v3468
      %v3670 = vpop.f32.mrb[0].mxu0
      %v3671 = vadd.f32 0.0, %v3670
      %v3672 = vpop.f32.mrb[0].mxu0
      %3673 = vmatprep.mubr.f32.mxu0 0.0
      %3674 = vmatmul.mubr.f32.gmra.mrb[0].mxu0 %v3471
      %v3675 = vpop.f32.mrb[0].mxu0
      %v3676 = vadd.f32 0.0, %v3675
      %v3677 = vpop.f32.mrb[0].mxu0
      %3678 = vmatprep.mubr.f32.mxu0 0.0
      %3679 = vmatmul.mubr.f32.gmra.mrb[0].mxu0 %v3474
      %v3680 = vpop.f32.mrb[0].mxu0
      %v3681 = vadd.f32 0.0, %v3680
      %v3682 = vpop.f32.mrb[0].mxu0
      %3683 = vmatprep.mubr.f32.mxu0 0.0
      %3684 = vmatmul.mubr.f32.gmra.mrb[0].mxu0 %v3477
      %v3685 = vpop.f32.mrb[0].mxu0
      %v3686 = vadd.f32 0.0, %v3685
      %v3687 = vpop.f32.mrb[0].mxu0
      %3688 = vmatprep.mubr.f32.mxu0 0.0
      %3689 = vmatmul.mubr.f32.gmra.mrb[0].mxu0 %v3480
      %v3690 = vpop.f32.mrb[0].mxu0
      %v3691 = vadd.f32 0.0, %v3690
      %v3692 = vpop.f32.mrb[0].mxu0
      %3693 = vmatprep.mubr.f32.mxu0 0.0
      %3694 = vmatmul.mubr.f32.gmra.mrb[0].mxu0 %v3483
      %v3695 = vpop.f32.mrb[0].mxu0
      %v3696 = vadd.f32 0.0, %v3695
      %v3697 = vpop.f32.mrb[0].mxu0
      %3698 = vmatprep.mubr.f32.mxu0 0.0
      %3699 = vmatmul.mubr.f32.gmra.mrb[0].mxu0 %v3486
      %v3700 = vpop.f32.mrb[0].mxu0
      %v3701 = vadd.f32 0.0, %v3700
      %v3702 = vpop.f32.mrb[0].mxu0
      %3703 = vmatprep.mubr.f32.mxu0 0.0
      %3704 = vmatmul.mubr.f32.gmra.mrb[0].mxu0 %v3489
      %v3705 = vpop.f32.mrb[0].mxu0
      %v3706 = vadd.f32 0.0, %v3705
      %v3707 = vpop.f32.mrb[0].mxu0
      %3708 = vmatprep.mubr.f32.mxu0 0.0
      %3709 = vmatmul.mubr.f32.gmra.mrb[0].mxu0 %v3492
      %v3710 = vpop.f32.mrb[0].mxu0
      %v3711 = vadd.f32 0.0, %v3710
      %v3712 = vpop.f32.mrb[0].mxu0
      %3713 = vmatprep.mubr.f32.mxu0 0.0
      %3714 = vmatmul.mubr.f32.gmra.mrb[0].mxu0 %v3495
      %v3715 = vpop.f32.mrb[0].mxu0
      %v3716 = vadd.f32 0.0, %v3715
      %v3717 = vpop.f32.mrb[0].mxu0
      %3718 = vmatprep.mubr.f32.mxu0 0.0
      %3719 = vmatmul.mubr.f32.gmra.mrb[0].mxu0 %v3498
      %v3720 = vpop.f32.mrb[0].mxu0
      %v3721 = vadd.f32 0.0, %v3720
      %v3722 = vpop.f32.mrb[0].mxu0
      %3723 = vmatprep.mubr.f32.mxu0 0.0
      %3724 = vmatmul.mubr.f32.gmra.mrb[0].mxu0 %v3501
      %v3725 = vpop.f32.mrb[0].mxu0
      %v3726 = vadd.f32 0.0, %v3725
      %v3727 = vpop.f32.mrb[0].mxu0
      %3728 = vmatprep.mubr.f32.mxu0 0.0
      %3729 = vmatmul.mubr.f32.gmra.mrb[0].mxu0 %v3504
      %v3730 = vpop.f32.mrb[0].mxu0
      %v3731 = vadd.f32 0.0, %v3730
      %v3732 = vpop.f32.mrb[0].mxu0
      %3733 = vdwg.mxu0
      %v3734 = vadd.f32 %v3342, %v3576
      %v3735 = vadd.f32 %v3343, %v3581
      %v3736 = vadd.f32 %v3344, %v3586
      %v3737 = vadd.f32 %v3345, %v3591
      %v3738 = vadd.f32 %v3346, %v3596
      %v3739 = vadd.f32 %v3347, %v3601
      %v3740 = vadd.f32 %v3348, %v3606
      %v3741 = vadd.f32 %v3349, %v3611
      %v3742 = vadd.f32 %v3350, %v3616
      %v3743 = vadd.f32 %v3351, %v3621
      %v3744 = vadd.f32 %v3352, %v3626
      %v3745 = vadd.f32 %v3353, %v3631
      %v3746 = vadd.f32 %v3354, %v3636
      %v3747 = vadd.f32 %v3355, %v3641
      %v3748 = vadd.f32 %v3356, %v3646
      %v3749 = vadd.f32 %v3357, %v3651
      %v3750 = vadd.f32 %v3358, %v3656
      %v3751 = vadd.f32 %v3359, %v3661
      %v3752 = vadd.f32 %v3360, %v3666
      %v3753 = vadd.f32 %v3361, %v3671
      %v3754 = vadd.f32 %v3362, %v3676
      %v3755 = vadd.f32 %v3363, %v3681
      %v3756 = vadd.f32 %v3364, %v3686
      %v3757 = vadd.f32 %v3365, %v3691
      %v3758 = vadd.f32 %v3366, %v3696
      %v3759 = vadd.f32 %v3367, %v3701
      %v3760 = vadd.f32 %v3368, %v3706
      %v3761 = vadd.f32 %v3369, %v3711
      %v3762 = vadd.f32 %v3370, %v3716
      %v3763 = vadd.f32 %v3371, %v3721
      %v3764 = vadd.f32 %v3372, %v3726
      %v3765 = vadd.f32 %v3373, %v3731
      %v3766 = vld [vmem:[%s2] sm:$0x1]
      %v3768 = vlaneseq
      %v3769 = vshrl.u32 %v3768, 7
      %v3770 = vsub.s32 0, %v3769
      %v3771 = vrot.slane %v3766, %v3770
      %v3773 = vadd.f32 %v3734, %v3771
      %v3774 = vadd.f32 %v3735, %v3771
      %v3775 = vadd.f32 %v3736, %v3771
      %v3776 = vadd.f32 %v3737, %v3771
      %v3777 = vadd.f32 %v3738, %v3771
      %v3778 = vadd.f32 %v3739, %v3771
      %v3779 = vadd.f32 %v3740, %v3771
      %v3780 = vadd.f32 %v3741, %v3771
      %v3781 = vadd.f32 %v3742, %v3771
      %v3782 = vadd.f32 %v3743, %v3771
      %v3783 = vadd.f32 %v3744, %v3771
      %v3784 = vadd.f32 %v3745, %v3771
      %v3785 = vadd.f32 %v3746, %v3771
      %v3786 = vadd.f32 %v3747, %v3771
      %v3787 = vadd.f32 %v3748, %v3771
      %v3788 = vadd.f32 %v3749, %v3771
      %v3789 = vadd.f32 %v3750, %v3771
      %v3790 = vadd.f32 %v3751, %v3771
      %v3791 = vadd.f32 %v3752, %v3771
      %v3792 = vadd.f32 %v3753, %v3771
      %v3793 = vadd.f32 %v3754, %v3771
      %v3794 = vadd.f32 %v3755, %v3771
      %v3795 = vadd.f32 %v3756, %v3771
      %v3796 = vadd.f32 %v3757, %v3771
      %v3797 = vadd.f32 %v3758, %v3771
      %v3798 = vadd.f32 %v3759, %v3771
      %v3799 = vadd.f32 %v3760, %v3771
      %v3800 = vadd.f32 %v3761, %v3771
      %v3801 = vadd.f32 %v3762, %v3771
      %v3802 = vadd.f32 %v3763, %v3771
      %v3803 = vadd.f32 %v3764, %v3771
      %v3804 = vadd.f32 %v3765, %v3771
      %v3805 = vld [vmem:[%s293] sm:$0xff]
      %v3806 = vld [vmem:[%s293 + $0x8] sm:$0xff]
      %v3807 = vld [vmem:[%s293 + $0x10] sm:$0xff]
      %v3808 = vld [vmem:[%s293 + $0x18] sm:$0xff]
      %v3809 = vld [vmem:[%s293 + $0x20] sm:$0xff]
      %v3810 = vld [vmem:[%s293 + $0x28] sm:$0xff]
      %v3811 = vld [vmem:[%s293 + $0x30] sm:$0xff]
      %v3812 = vld [vmem:[%s293 + $0x38] sm:$0xff]
      %v3813 = vld [vmem:[%s293 + $0x40] sm:$0xff]
      %v3814 = vld [vmem:[%s293 + $0x48] sm:$0xff]
      %v3815 = vld [vmem:[%s293 + $0x50] sm:$0xff]
      %v3816 = vld [vmem:[%s293 + $0x58] sm:$0xff]
      %v3817 = vld [vmem:[%s293 + $0x60] sm:$0xff]
      %v3818 = vld [vmem:[%s293 + $0x68] sm:$0xff]
      %v3819 = vld [vmem:[%s293 + $0x70] sm:$0xff]
      %v3820 = vld [vmem:[%s293 + $0x78] sm:$0xff]
      %v3821 = vld [vmem:[%s293 + $0x80] sm:$0xff]
      %v3822 = vld [vmem:[%s293 + $0x88] sm:$0xff]
      %v3823 = vld [vmem:[%s293 + $0x90] sm:$0xff]
      %v3824 = vld [vmem:[%s293 + $0x98] sm:$0xff]
      %v3825 = vld [vmem:[%s293 + $0xa0] sm:$0xff]
      %v3826 = vld [vmem:[%s293 + $0xa8] sm:$0xff]
      %v3827 = vld [vmem:[%s293 + $0xb0] sm:$0xff]
      %v3828 = vld [vmem:[%s293 + $0xb8] sm:$0xff]
      %v3829 = vld [vmem:[%s293 + $0xc0] sm:$0xff]
      %v3830 = vld [vmem:[%s293 + $0xc8] sm:$0xff]
      %v3831 = vld [vmem:[%s293 + $0xd0] sm:$0xff]
      %v3832 = vld [vmem:[%s293 + $0xd8] sm:$0xff]
      %v3833 = vld [vmem:[%s293 + $0xe0] sm:$0xff]
      %v3834 = vld [vmem:[%s293 + $0xe8] sm:$0xff]
      %v3835 = vld [vmem:[%s293 + $0xf0] sm:$0xff]
      %v3836 = vld [vmem:[%s293 + $0xf8] sm:$0xff]
      %v3837 = vld [vmem:[%s4] sm:$0xff]
      %v3838 = vld [vmem:[%s4 + $0x8] sm:$0xff]
      %vm3839 = vcmask 130048
      %v3841 = vsel %vm3839, %v3805, 0
      %v3844 = vsel %vm3839, %v3806, 0
      %v3847 = vsel %vm3839, %v3807, 0
      %v3850 = vsel %vm3839, %v3808, 0
      %v3853 = vsel %vm3839, %v3809, 0
      %v3856 = vsel %vm3839, %v3810, 0
      %v3859 = vsel %vm3839, %v3811, 0
      %v3862 = vsel %vm3839, %v3812, 0
      %v3865 = vsel %vm3839, %v3813, 0
      %v3868 = vsel %vm3839, %v3814, 0
      %v3871 = vsel %vm3839, %v3815, 0
      %v3874 = vsel %vm3839, %v3816, 0
      %v3877 = vsel %vm3839, %v3817, 0
      %v3880 = vsel %vm3839, %v3818, 0
      %v3883 = vsel %vm3839, %v3819, 0
      %v3886 = vsel %vm3839, %v3820, 0
      %v3889 = vsel %vm3839, %v3821, 0
      %v3892 = vsel %vm3839, %v3822, 0
      %v3895 = vsel %vm3839, %v3823, 0
      %v3898 = vsel %vm3839, %v3824, 0
      %v3901 = vsel %vm3839, %v3825, 0
      %v3904 = vsel %vm3839, %v3826, 0
      %v3907 = vsel %vm3839, %v3827, 0
      %v3910 = vsel %vm3839, %v3828, 0
      %v3913 = vsel %vm3839, %v3829, 0
      %v3916 = vsel %vm3839, %v3830, 0
      %v3919 = vsel %vm3839, %v3831, 0
      %v3922 = vsel %vm3839, %v3832, 0
      %v3925 = vsel %vm3839, %v3833, 0
      %v3928 = vsel %vm3839, %v3834, 0
      %v3931 = vsel %vm3839, %v3835, 0
      %v3934 = vsel %vm3839, %v3836, 0
      %3936 = vmatprep.subr.mxu0 0.0
      %3937 = vmatpush1.msra.mxu0 %v3837
      %3938 = vmatprep.subr.mxu0 0.0
      %3939 = vmatpush1.msra.mxu0 %v3838
      %3940 = vmatprep.subr.mxu0 0.0
      %3941 = vmatpush1.msra.mxu0 0.0
      %3942 = vmatprep.subr.mxu0 0.0
      %3943 = vmatpush1.msra.mxu0 0.0
      %3944 = vmatprep.subr.mxu0 0.0
      %3945 = vmatpush1.msra.mxu0 0.0
      %3946 = vmatprep.subr.mxu0 0.0
      %3947 = vmatpush1.msra.mxu0 0.0
      %3948 = vmatprep.subr.mxu0 0.0
      %3949 = vmatpush1.msra.mxu0 0.0
      %3950 = vmatprep.subr.mxu0 0.0
      %3951 = vmatpush1.msra.mxu0 0.0
      %3952 = vmatprep.subr.mxu0 0.0
      %3953 = vmatpush1.msra.mxu0 0.0
      %3954 = vmatprep.subr.mxu0 0.0
      %3955 = vmatpush1.msra.mxu0 0.0
      %3956 = vmatprep.subr.mxu0 0.0
      %3957 = vmatpush1.msra.mxu0 0.0
      %3958 = vmatprep.subr.mxu0 0.0
      %3959 = vmatpush1.msra.mxu0 0.0
      %3960 = vmatprep.subr.mxu0 0.0
      %3961 = vmatpush1.msra.mxu0 0.0
      %3962 = vmatprep.subr.mxu0 0.0
      %3963 = vmatpush1.msra.mxu0 0.0
      %3964 = vmatprep.subr.mxu0 0.0
      %3965 = vmatpush1.msra.mxu0 0.0
      %3966 = vmatprep.subr.mxu0 0.0
      %3967 = vmatpush1.msra.mxu0 0.0
      %3968 = vmatprep.subr.mxu0 0.0
      %3969 = vmatpush1.msra.mxu0 0.0
      %3970 = vmatprep.subr.mxu0 0.0
      %3971 = vmatpush1.msra.mxu0 0.0
      %3972 = vmatprep.subr.mxu0 0.0
      %3973 = vmatpush1.msra.mxu0 0.0
      %3974 = vmatprep.subr.mxu0 0.0
      %3975 = vmatpush1.msra.mxu0 0.0
      %3976 = vmatprep.subr.mxu0 0.0
      %3977 = vmatpush1.msra.mxu0 0.0
      %3978 = vmatprep.subr.mxu0 0.0
      %3979 = vmatpush1.msra.mxu0 0.0
      %3980 = vmatprep.subr.mxu0 0.0
      %3981 = vmatpush1.msra.mxu0 0.0
      %3982 = vmatprep.subr.mxu0 0.0
      %3983 = vmatpush1.msra.mxu0 0.0
      %3984 = vmatprep.subr.mxu0 0.0
      %3985 = vmatpush1.msra.mxu0 0.0
      %3986 = vmatprep.subr.mxu0 0.0
      %3987 = vmatpush1.msra.mxu0 0.0
      %3988 = vmatprep.subr.mxu0 0.0
      %3989 = vmatpush1.msra.mxu0 0.0
      %3990 = vmatprep.subr.mxu0 0.0
      %3991 = vmatpush1.msra.mxu0 0.0
      %3992 = vmatprep.subr.mxu0 0.0
      %3993 = vmatpush1.msra.mxu0 0.0
      %3994 = vmatprep.subr.mxu0 0.0
      %3995 = vmatpush1.msra.mxu0 0.0
      %3996 = vmatprep.subr.mxu0 0.0
      %3997 = vmatpush1.msra.mxu0 0.0
      %3998 = vmatprep.subr.mxu0 0.0
      %3999 = vmatpush1.msra.mxu0 0.0
      %4000 = vmatprep.mubr.f32.mxu0 0.0
      %4001 = vmatmul.mubr.f32.gmra.mrb[0].mxu0 %v3841
      %v4002 = vpop.f32.mrb[0].mxu0
      %v4003 = vadd.f32 0.0, %v4002
      %v4004 = vpop.f32.mrb[0].mxu0
      %4005 = vmatprep.mubr.f32.mxu0 0.0
      %4006 = vmatmul.mubr.f32.gmra.mrb[0].mxu0 %v3844
      %v4007 = vpop.f32.mrb[0].mxu0
      %v4008 = vadd.f32 0.0, %v4007
      %v4009 = vpop.f32.mrb[0].mxu0
      %4010 = vmatprep.mubr.f32.mxu0 0.0
      %4011 = vmatmul.mubr.f32.gmra.mrb[0].mxu0 %v3847
      %v4012 = vpop.f32.mrb[0].mxu0
      %v4013 = vadd.f32 0.0, %v4012
      %v4014 = vpop.f32.mrb[0].mxu0
      %4015 = vmatprep.mubr.f32.mxu0 0.0
      %4016 = vmatmul.mubr.f32.gmra.mrb[0].mxu0 %v3850
      %v4017 = vpop.f32.mrb[0].mxu0
      %v4018 = vadd.f32 0.0, %v4017
      %v4019 = vpop.f32.mrb[0].mxu0
      %4020 = vmatprep.mubr.f32.mxu0 0.0
      %4021 = vmatmul.mubr.f32.gmra.mrb[0].mxu0 %v3853
      %v4022 = vpop.f32.mrb[0].mxu0
      %v4023 = vadd.f32 0.0, %v4022
      %v4024 = vpop.f32.mrb[0].mxu0
      %4025 = vmatprep.mubr.f32.mxu0 0.0
      %4026 = vmatmul.mubr.f32.gmra.mrb[0].mxu0 %v3856
      %v4027 = vpop.f32.mrb[0].mxu0
      %v4028 = vadd.f32 0.0, %v4027
      %v4029 = vpop.f32.mrb[0].mxu0
      %4030 = vmatprep.mubr.f32.mxu0 0.0
      %4031 = vmatmul.mubr.f32.gmra.mrb[0].mxu0 %v3859
      %v4032 = vpop.f32.mrb[0].mxu0
      %v4033 = vadd.f32 0.0, %v4032
      %v4034 = vpop.f32.mrb[0].mxu0
      %4035 = vmatprep.mubr.f32.mxu0 0.0
      %4036 = vmatmul.mubr.f32.gmra.mrb[0].mxu0 %v3862
      %v4037 = vpop.f32.mrb[0].mxu0
      %v4038 = vadd.f32 0.0, %v4037
      %v4039 = vpop.f32.mrb[0].mxu0
      %4040 = vmatprep.mubr.f32.mxu0 0.0
      %4041 = vmatmul.mubr.f32.gmra.mrb[0].mxu0 %v3865
      %v4042 = vpop.f32.mrb[0].mxu0
      %v4043 = vadd.f32 0.0, %v4042
      %v4044 = vpop.f32.mrb[0].mxu0
      %4045 = vmatprep.mubr.f32.mxu0 0.0
      %4046 = vmatmul.mubr.f32.gmra.mrb[0].mxu0 %v3868
      %v4047 = vpop.f32.mrb[0].mxu0
      %v4048 = vadd.f32 0.0, %v4047
      %v4049 = vpop.f32.mrb[0].mxu0
      %4050 = vmatprep.mubr.f32.mxu0 0.0
      %4051 = vmatmul.mubr.f32.gmra.mrb[0].mxu0 %v3871
      %v4052 = vpop.f32.mrb[0].mxu0
      %v4053 = vadd.f32 0.0, %v4052
      %v4054 = vpop.f32.mrb[0].mxu0
      %4055 = vmatprep.mubr.f32.mxu0 0.0
      %4056 = vmatmul.mubr.f32.gmra.mrb[0].mxu0 %v3874
      %v4057 = vpop.f32.mrb[0].mxu0
      %v4058 = vadd.f32 0.0, %v4057
      %v4059 = vpop.f32.mrb[0].mxu0
      %4060 = vmatprep.mubr.f32.mxu0 0.0
      %4061 = vmatmul.mubr.f32.gmra.mrb[0].mxu0 %v3877
      %v4062 = vpop.f32.mrb[0].mxu0
      %v4063 = vadd.f32 0.0, %v4062
      %v4064 = vpop.f32.mrb[0].mxu0
      %4065 = vmatprep.mubr.f32.mxu0 0.0
      %4066 = vmatmul.mubr.f32.gmra.mrb[0].mxu0 %v3880
      %v4067 = vpop.f32.mrb[0].mxu0
      %v4068 = vadd.f32 0.0, %v4067
      %v4069 = vpop.f32.mrb[0].mxu0
      %4070 = vmatprep.mubr.f32.mxu0 0.0
      %4071 = vmatmul.mubr.f32.gmra.mrb[0].mxu0 %v3883
      %v4072 = vpop.f32.mrb[0].mxu0
      %v4073 = vadd.f32 0.0, %v4072
      %v4074 = vpop.f32.mrb[0].mxu0
      %4075 = vmatprep.mubr.f32.mxu0 0.0
      %4076 = vmatmul.mubr.f32.gmra.mrb[0].mxu0 %v3886
      %v4077 = vpop.f32.mrb[0].mxu0
      %v4078 = vadd.f32 0.0, %v4077
      %v4079 = vpop.f32.mrb[0].mxu0
      %4080 = vmatprep.mubr.f32.mxu0 0.0
      %4081 = vmatmul.mubr.f32.gmra.mrb[0].mxu0 %v3889
      %v4082 = vpop.f32.mrb[0].mxu0
      %v4083 = vadd.f32 0.0, %v4082
      %v4084 = vpop.f32.mrb[0].mxu0
      %4085 = vmatprep.mubr.f32.mxu0 0.0
      %4086 = vmatmul.mubr.f32.gmra.mrb[0].mxu0 %v3892
      %v4087 = vpop.f32.mrb[0].mxu0
      %v4088 = vadd.f32 0.0, %v4087
      %v4089 = vpop.f32.mrb[0].mxu0
      %4090 = vmatprep.mubr.f32.mxu0 0.0
      %4091 = vmatmul.mubr.f32.gmra.mrb[0].mxu0 %v3895
      %v4092 = vpop.f32.mrb[0].mxu0
      %v4093 = vadd.f32 0.0, %v4092
      %v4094 = vpop.f32.mrb[0].mxu0
      %4095 = vmatprep.mubr.f32.mxu0 0.0
      %4096 = vmatmul.mubr.f32.gmra.mrb[0].mxu0 %v3898
      %v4097 = vpop.f32.mrb[0].mxu0
      %v4098 = vadd.f32 0.0, %v4097
      %v4099 = vpop.f32.mrb[0].mxu0
      %4100 = vmatprep.mubr.f32.mxu0 0.0
      %4101 = vmatmul.mubr.f32.gmra.mrb[0].mxu0 %v3901
      %v4102 = vpop.f32.mrb[0].mxu0
      %v4103 = vadd.f32 0.0, %v4102
      %v4104 = vpop.f32.mrb[0].mxu0
      %4105 = vmatprep.mubr.f32.mxu0 0.0
      %4106 = vmatmul.mubr.f32.gmra.mrb[0].mxu0 %v3904
      %v4107 = vpop.f32.mrb[0].mxu0
      %v4108 = vadd.f32 0.0, %v4107
      %v4109 = vpop.f32.mrb[0].mxu0
      %4110 = vmatprep.mubr.f32.mxu0 0.0
      %4111 = vmatmul.mubr.f32.gmra.mrb[0].mxu0 %v3907
      %v4112 = vpop.f32.mrb[0].mxu0
      %v4113 = vadd.f32 0.0, %v4112
      %v4114 = vpop.f32.mrb[0].mxu0
      %4115 = vmatprep.mubr.f32.mxu0 0.0
      %4116 = vmatmul.mubr.f32.gmra.mrb[0].mxu0 %v3910
      %v4117 = vpop.f32.mrb[0].mxu0
      %v4118 = vadd.f32 0.0, %v4117
      %v4119 = vpop.f32.mrb[0].mxu0
      %4120 = vmatprep.mubr.f32.mxu0 0.0
      %4121 = vmatmul.mubr.f32.gmra.mrb[0].mxu0 %v3913
      %v4122 = vpop.f32.mrb[0].mxu0
      %v4123 = vadd.f32 0.0, %v4122
      %v4124 = vpop.f32.mrb[0].mxu0
      %4125 = vmatprep.mubr.f32.mxu0 0.0
      %4126 = vmatmul.mubr.f32.gmra.mrb[0].mxu0 %v3916
      %v4127 = vpop.f32.mrb[0].mxu0
      %v4128 = vadd.f32 0.0, %v4127
      %v4129 = vpop.f32.mrb[0].mxu0
      %4130 = vmatprep.mubr.f32.mxu0 0.0
      %4131 = vmatmul.mubr.f32.gmra.mrb[0].mxu0 %v3919
      %v4132 = vpop.f32.mrb[0].mxu0
      %v4133 = vadd.f32 0.0, %v4132
      %v4134 = vpop.f32.mrb[0].mxu0
      %4135 = vmatprep.mubr.f32.mxu0 0.0
      %4136 = vmatmul.mubr.f32.gmra.mrb[0].mxu0 %v3922
      %v4137 = vpop.f32.mrb[0].mxu0
      %v4138 = vadd.f32 0.0, %v4137
      %v4139 = vpop.f32.mrb[0].mxu0
      %4140 = vmatprep.mubr.f32.mxu0 0.0
      %4141 = vmatmul.mubr.f32.gmra.mrb[0].mxu0 %v3925
      %v4142 = vpop.f32.mrb[0].mxu0
      %v4143 = vadd.f32 0.0, %v4142
      %v4144 = vpop.f32.mrb[0].mxu0
      %4145 = vmatprep.mubr.f32.mxu0 0.0
      %4146 = vmatmul.mubr.f32.gmra.mrb[0].mxu0 %v3928
      %v4147 = vpop.f32.mrb[0].mxu0
      %v4148 = vadd.f32 0.0, %v4147
      %v4149 = vpop.f32.mrb[0].mxu0
      %4150 = vmatprep.mubr.f32.mxu0 0.0
      %4151 = vmatmul.mubr.f32.gmra.mrb[0].mxu0 %v3931
      %v4152 = vpop.f32.mrb[0].mxu0
      %v4153 = vadd.f32 0.0, %v4152
      %v4154 = vpop.f32.mrb[0].mxu0
      %4155 = vmatprep.mubr.f32.mxu0 0.0
      %4156 = vmatmul.mubr.f32.gmra.mrb[0].mxu0 %v3934
      %v4157 = vpop.f32.mrb[0].mxu0
      %v4158 = vadd.f32 0.0, %v4157
      %v4159 = vpop.f32.mrb[0].mxu0
      %4160 = vdwg.mxu0
      %v4161 = vxor.u32 %v4003, 2147483648
      %v4162 = vxor.u32 %v4008, 2147483648
      %v4163 = vxor.u32 %v4013, 2147483648
      %v4164 = vxor.u32 %v4018, 2147483648
      %v4165 = vxor.u32 %v4023, 2147483648
      %v4166 = vxor.u32 %v4028, 2147483648
      %v4167 = vxor.u32 %v4033, 2147483648
      %v4168 = vxor.u32 %v4038, 2147483648
      %v4169 = vxor.u32 %v4043, 2147483648
      %v4170 = vxor.u32 %v4048, 2147483648
      %v4171 = vxor.u32 %v4053, 2147483648
      %v4172 = vxor.u32 %v4058, 2147483648
      %v4173 = vxor.u32 %v4063, 2147483648
      %v4174 = vxor.u32 %v4068, 2147483648
      %v4175 = vxor.u32 %v4073, 2147483648
      %v4176 = vxor.u32 %v4078, 2147483648
      %v4177 = vxor.u32 %v4083, 2147483648
      %v4178 = vxor.u32 %v4088, 2147483648
      %v4179 = vxor.u32 %v4093, 2147483648
      %v4180 = vxor.u32 %v4098, 2147483648
      %v4181 = vxor.u32 %v4103, 2147483648
      %v4182 = vxor.u32 %v4108, 2147483648
      %v4183 = vxor.u32 %v4113, 2147483648
      %v4184 = vxor.u32 %v4118, 2147483648
      %v4185 = vxor.u32 %v4123, 2147483648
      %v4186 = vxor.u32 %v4128, 2147483648
      %v4187 = vxor.u32 %v4133, 2147483648
      %v4188 = vxor.u32 %v4138, 2147483648
      %v4189 = vxor.u32 %v4143, 2147483648
      %v4190 = vxor.u32 %v4148, 2147483648
      %v4191 = vxor.u32 %v4153, 2147483648
      %v4192 = vxor.u32 %v4158, 2147483648
      %v4193 = vmul.f32 %v4161, 1.442695
      %v4194 = vpow.pop %v4193
      %v4195 = vmul.f32 %v4162, 1.442695
      %v4196 = vpow.pop %v4195
      %v4197 = vmul.f32 %v4163, 1.442695
      %v4198 = vpow.pop %v4197
      %v4199 = vmul.f32 %v4164, 1.442695
      %v4200 = vpow.pop %v4199
      %v4201 = vmul.f32 %v4165, 1.442695
      %v4202 = vpow.pop %v4201
      %v4203 = vmul.f32 %v4166, 1.442695
      %v4204 = vpow.pop %v4203
      %v4205 = vmul.f32 %v4167, 1.442695
      %v4206 = vpow.pop %v4205
      %v4207 = vmul.f32 %v4168, 1.442695
      %v4208 = vpow.pop %v4207
      %v4209 = vmul.f32 %v4169, 1.442695
      %v4210 = vpow.pop %v4209
      %v4211 = vmul.f32 %v4170, 1.442695
      %v4212 = vpow.pop %v4211
      %v4213 = vmul.f32 %v4171, 1.442695
      %v4214 = vpow.pop %v4213
      %v4215 = vmul.f32 %v4172, 1.442695
      %v4216 = vpow.pop %v4215
      %v4217 = vmul.f32 %v4173, 1.442695
      %v4218 = vpow.pop %v4217
      %v4219 = vmul.f32 %v4174, 1.442695
      %v4220 = vpow.pop %v4219
      %v4221 = vmul.f32 %v4175, 1.442695
      %v4222 = vpow.pop %v4221
      %v4223 = vmul.f32 %v4176, 1.442695
      %v4224 = vpow.pop %v4223
      %v4225 = vmul.f32 %v4177, 1.442695
      %v4226 = vpow.pop %v4225
      %v4227 = vmul.f32 %v4178, 1.442695
      %v4228 = vpow.pop %v4227
      %v4229 = vmul.f32 %v4179, 1.442695
      %v4230 = vpow.pop %v4229
      %v4231 = vmul.f32 %v4180, 1.442695
      %v4232 = vpow.pop %v4231
      %v4233 = vmul.f32 %v4181, 1.442695
      %v4234 = vpow.pop %v4233
      %v4235 = vmul.f32 %v4182, 1.442695
      %v4236 = vpow.pop %v4235
      %v4237 = vmul.f32 %v4183, 1.442695
      %v4238 = vpow.pop %v4237
      %v4239 = vmul.f32 %v4184, 1.442695
      %v4240 = vpow.pop %v4239
      %v4241 = vmul.f32 %v4185, 1.442695
      %v4242 = vpow.pop %v4241
      %v4243 = vmul.f32 %v4186, 1.442695
      %v4244 = vpow.pop %v4243
      %v4245 = vmul.f32 %v4187, 1.442695
      %v4246 = vpow.pop %v4245
      %v4247 = vmul.f32 %v4188, 1.442695
      %v4248 = vpow.pop %v4247
      %v4249 = vmul.f32 %v4189, 1.442695
      %v4250 = vpow.pop %v4249
      %v4251 = vmul.f32 %v4190, 1.442695
      %v4252 = vpow.pop %v4251
      %v4253 = vmul.f32 %v4191, 1.442695
      %v4254 = vpow.pop %v4253
      %v4255 = vmul.f32 %v4192, 1.442695
      %v4256 = vpow.pop %v4255
      %v4257 = vadd.f32 %v4194, 1.0
      %v4258 = vadd.f32 %v4196, 1.0
      %v4259 = vadd.f32 %v4198, 1.0
      %v4260 = vadd.f32 %v4200, 1.0
      %v4261 = vadd.f32 %v4202, 1.0
      %v4262 = vadd.f32 %v4204, 1.0
      %v4263 = vadd.f32 %v4206, 1.0
      %v4264 = vadd.f32 %v4208, 1.0
      %v4265 = vadd.f32 %v4210, 1.0
      %v4266 = vadd.f32 %v4212, 1.0
      %v4267 = vadd.f32 %v4214, 1.0
      %v4268 = vadd.f32 %v4216, 1.0
      %v4269 = vadd.f32 %v4218, 1.0
      %v4270 = vadd.f32 %v4220, 1.0
      %v4271 = vadd.f32 %v4222, 1.0
      %v4272 = vadd.f32 %v4224, 1.0
      %v4273 = vadd.f32 %v4226, 1.0
      %v4274 = vadd.f32 %v4228, 1.0
      %v4275 = vadd.f32 %v4230, 1.0
      %v4276 = vadd.f32 %v4232, 1.0
      %v4277 = vadd.f32 %v4234, 1.0
      %v4278 = vadd.f32 %v4236, 1.0
      %v4279 = vadd.f32 %v4238, 1.0
      %v4280 = vadd.f32 %v4240, 1.0
      %v4281 = vadd.f32 %v4242, 1.0
      %v4282 = vadd.f32 %v4244, 1.0
      %v4283 = vadd.f32 %v4246, 1.0
      %v4284 = vadd.f32 %v4248, 1.0
      %v4285 = vadd.f32 %v4250, 1.0
      %v4286 = vadd.f32 %v4252, 1.0
      %v4287 = vadd.f32 %v4254, 1.0
      %v4288 = vadd.f32 %v4256, 1.0
      %v4289 = vrcp.pop %v4257
      %v4290 = vmul.f32 1.0, %v4289
      %v4291 = vrcp.pop %v4258
      %v4292 = vmul.f32 1.0, %v4291
      %v4293 = vrcp.pop %v4259
      %v4294 = vmul.f32 1.0, %v4293
      %v4295 = vrcp.pop %v4260
      %v4296 = vmul.f32 1.0, %v4295
      %v4297 = vrcp.pop %v4261
      %v4298 = vmul.f32 1.0, %v4297
      %v4299 = vrcp.pop %v4262
      %v4300 = vmul.f32 1.0, %v4299
      %v4301 = vrcp.pop %v4263
      %v4302 = vmul.f32 1.0, %v4301
      %v4303 = vrcp.pop %v4264
      %v4304 = vmul.f32 1.0, %v4303
      %v4305 = vrcp.pop %v4265
      %v4306 = vmul.f32 1.0, %v4305
      %v4307 = vrcp.pop %v4266
      %v4308 = vmul.f32 1.0, %v4307
      %v4309 = vrcp.pop %v4267
      %v4310 = vmul.f32 1.0, %v4309
      %v4311 = vrcp.pop %v4268
      %v4312 = vmul.f32 1.0, %v4311
      %v4313 = vrcp.pop %v4269
      %v4314 = vmul.f32 1.0, %v4313
      %v4315 = vrcp.pop %v4270
      %v4316 = vmul.f32 1.0, %v4315
      %v4317 = vrcp.pop %v4271
      %v4318 = vmul.f32 1.0, %v4317
      %v4319 = vrcp.pop %v4272
      %v4320 = vmul.f32 1.0, %v4319
      %v4321 = vrcp.pop %v4273
      %v4322 = vmul.f32 1.0, %v4321
      %v4323 = vrcp.pop %v4274
      %v4324 = vmul.f32 1.0, %v4323
      %v4325 = vrcp.pop %v4275
      %v4326 = vmul.f32 1.0, %v4325
      %v4327 = vrcp.pop %v4276
      %v4328 = vmul.f32 1.0, %v4327
      %v4329 = vrcp.pop %v4277
      %v4330 = vmul.f32 1.0, %v4329
      %v4331 = vrcp.pop %v4278
      %v4332 = vmul.f32 1.0, %v4331
      %v4333 = vrcp.pop %v4279
      %v4334 = vmul.f32 1.0, %v4333
      %v4335 = vrcp.pop %v4280
      %v4336 = vmul.f32 1.0, %v4335
      %v4337 = vrcp.pop %v4281
      %v4338 = vmul.f32 1.0, %v4337
      %v4339 = vrcp.pop %v4282
      %v4340 = vmul.f32 1.0, %v4339
      %v4341 = vrcp.pop %v4283
      %v4342 = vmul.f32 1.0, %v4341
      %v4343 = vrcp.pop %v4284
      %v4344 = vmul.f32 1.0, %v4343
      %v4345 = vrcp.pop %v4285
      %v4346 = vmul.f32 1.0, %v4345
      %v4347 = vrcp.pop %v4286
      %v4348 = vmul.f32 1.0, %v4347
      %v4349 = vrcp.pop %v4287
      %v4350 = vmul.f32 1.0, %v4349
      %v4351 = vrcp.pop %v4288
      %v4352 = vmul.f32 1.0, %v4351
      %v4353 = vmul.f32 %v3773, %v4290
      %v4354 = vmul.f32 %v3774, %v4292
      %v4355 = vmul.f32 %v3775, %v4294
      %v4356 = vmul.f32 %v3776, %v4296
      %v4357 = vmul.f32 %v3777, %v4298
      %v4358 = vmul.f32 %v3778, %v4300
      %v4359 = vmul.f32 %v3779, %v4302
      %v4360 = vmul.f32 %v3780, %v4304
      %v4361 = vmul.f32 %v3781, %v4306
      %v4362 = vmul.f32 %v3782, %v4308
      %v4363 = vmul.f32 %v3783, %v4310
      %v4364 = vmul.f32 %v3784, %v4312
      %v4365 = vmul.f32 %v3785, %v4314
      %v4366 = vmul.f32 %v3786, %v4316
      %v4367 = vmul.f32 %v3787, %v4318
      %v4368 = vmul.f32 %v3788, %v4320
      %v4369 = vmul.f32 %v3789, %v4322
      %v4370 = vmul.f32 %v3790, %v4324
      %v4371 = vmul.f32 %v3791, %v4326
      %v4372 = vmul.f32 %v3792, %v4328
      %v4373 = vmul.f32 %v3793, %v4330
      %v4374 = vmul.f32 %v3794, %v4332
      %v4375 = vmul.f32 %v3795, %v4334
      %v4376 = vmul.f32 %v3796, %v4336
      %v4377 = vmul.f32 %v3797, %v4338
      %v4378 = vmul.f32 %v3798, %v4340
      %v4379 = vmul.f32 %v3799, %v4342
      %v4380 = vmul.f32 %v3800, %v4344
      %v4381 = vmul.f32 %v3801, %v4346
      %v4382 = vmul.f32 %v3802, %v4348
      %v4383 = vmul.f32 %v3803, %v4350
      %v4384 = vmul.f32 %v3804, %v4352
      %v4385 = vmax.f32 %v4353, 0.0
      %v4386 = vmax.f32 %v4354, 0.0
      %v4387 = vmax.f32 %v4355, 0.0
      %v4388 = vmax.f32 %v4356, 0.0
      %v4389 = vmax.f32 %v4357, 0.0
      %v4390 = vmax.f32 %v4358, 0.0
      %v4391 = vmax.f32 %v4359, 0.0
      %v4392 = vmax.f32 %v4360, 0.0
      %v4393 = vmax.f32 %v4361, 0.0
      %v4394 = vmax.f32 %v4362, 0.0
      %v4395 = vmax.f32 %v4363, 0.0
      %v4396 = vmax.f32 %v4364, 0.0
      %v4397 = vmax.f32 %v4365, 0.0
      %v4398 = vmax.f32 %v4366, 0.0
      %v4399 = vmax.f32 %v4367, 0.0
      %v4400 = vmax.f32 %v4368, 0.0
      %v4401 = vmax.f32 %v4369, 0.0
      %v4402 = vmax.f32 %v4370, 0.0
      %v4403 = vmax.f32 %v4371, 0.0
      %v4404 = vmax.f32 %v4372, 0.0
      %v4405 = vmax.f32 %v4373, 0.0
      %v4406 = vmax.f32 %v4374, 0.0
      %v4407 = vmax.f32 %v4375, 0.0
      %v4408 = vmax.f32 %v4376, 0.0
      %v4409 = vmax.f32 %v4377, 0.0
      %v4410 = vmax.f32 %v4378, 0.0
      %v4411 = vmax.f32 %v4379, 0.0
      %v4412 = vmax.f32 %v4380, 0.0
      %v4413 = vmax.f32 %v4381, 0.0
      %v4414 = vmax.f32 %v4382, 0.0
      %v4415 = vmax.f32 %v4383, 0.0
      %v4416 = vmax.f32 %v4384, 0.0
      %v4417 = vld [vmem:[%s5] sm:$0xff]
      %v4418 = vld [vmem:[%s5 + $0x8] sm:$0xff]
      %v4419 = vld [vmem:[%s5 + $0x10] sm:$0xff]
      %v4420 = vld [vmem:[%s5 + $0x18] sm:$0xff]
      %v4421 = vld [vmem:[%s5 + $0x20] sm:$0xff]
      %v4422 = vld [vmem:[%s5 + $0x28] sm:$0xff]
      %v4423 = vld [vmem:[%s5 + $0x30] sm:$0xff]
      %v4424 = vld [vmem:[%s5 + $0x38] sm:$0xff]
      %v4425 = vld [vmem:[%s5 + $0x40] sm:$0xff]
      %v4426 = vld [vmem:[%s5 + $0x48] sm:$0xff]
      %v4427 = vld [vmem:[%s5 + $0x50] sm:$0xff]
      %v4428 = vld [vmem:[%s5 + $0x58] sm:$0xff]
      %v4429 = vld [vmem:[%s5 + $0x60] sm:$0xff]
      %v4430 = vld [vmem:[%s5 + $0x68] sm:$0xff]
      %v4431 = vld [vmem:[%s5 + $0x70] sm:$0xff]
      %v4432 = vld [vmem:[%s5 + $0x78] sm:$0xff]
      %4433 = vmatprep.subr.mxu0 0.0
      %4434 = vmatpush1.msra.mxu0 %v4385
      %4435 = vmatprep.subr.mxu0 0.0
      %4436 = vmatpush1.msra.mxu0 %v4386
      %4437 = vmatprep.subr.mxu0 0.0
      %4438 = vmatpush1.msra.mxu0 %v4387
      %4439 = vmatprep.subr.mxu0 0.0
      %4440 = vmatpush1.msra.mxu0 %v4388
      %4441 = vmatprep.subr.mxu0 0.0
      %4442 = vmatpush1.msra.mxu0 %v4389
      %4443 = vmatprep.subr.mxu0 0.0
      %4444 = vmatpush1.msra.mxu0 %v4390
      %4445 = vmatprep.subr.mxu0 0.0
      %4446 = vmatpush1.msra.mxu0 %v4391
      %4447 = vmatprep.subr.mxu0 0.0
      %4448 = vmatpush1.msra.mxu0 %v4392
      %4449 = vmatprep.subr.mxu0 0.0
      %4450 = vmatpush1.msra.mxu0 %v4393
      %4451 = vmatprep.subr.mxu0 0.0
      %4452 = vmatpush1.msra.mxu0 %v4394
      %4453 = vmatprep.subr.mxu0 0.0
      %4454 = vmatpush1.msra.mxu0 %v4395
      %4455 = vmatprep.subr.mxu0 0.0
      %4456 = vmatpush1.msra.mxu0 %v4396
      %4457 = vmatprep.subr.mxu0 0.0
      %4458 = vmatpush1.msra.mxu0 %v4397
      %4459 = vmatprep.subr.mxu0 0.0
      %4460 = vmatpush1.msra.mxu0 %v4398
      %4461 = vmatprep.subr.mxu0 0.0
      %4462 = vmatpush1.msra.mxu0 %v4399
      %4463 = vmatprep.subr.mxu0 0.0
      %4464 = vmatpush1.msra.mxu0 %v4400
      %4465 = vmatprep.subr.mxu0 0.0
      %4466 = vmatpush1.msra.mxu0 %v4401
      %4467 = vmatprep.subr.mxu0 0.0
      %4468 = vmatpush1.msra.mxu0 %v4402
      %4469 = vmatprep.subr.mxu0 0.0
      %4470 = vmatpush1.msra.mxu0 %v4403
      %4471 = vmatprep.subr.mxu0 0.0
      %4472 = vmatpush1.msra.mxu0 %v4404
      %4473 = vmatprep.subr.mxu0 0.0
      %4474 = vmatpush1.msra.mxu0 %v4405
      %4475 = vmatprep.subr.mxu0 0.0
      %4476 = vmatpush1.msra.mxu0 %v4406
      %4477 = vmatprep.subr.mxu0 0.0
      %4478 = vmatpush1.msra.mxu0 %v4407
      %4479 = vmatprep.subr.mxu0 0.0
      %4480 = vmatpush1.msra.mxu0 %v4408
      %4481 = vmatprep.subr.mxu0 0.0
      %4482 = vmatpush1.msra.mxu0 %v4409
      %4483 = vmatprep.subr.mxu0 0.0
      %4484 = vmatpush1.msra.mxu0 %v4410
      %4485 = vmatprep.subr.mxu0 0.0
      %4486 = vmatpush1.msra.mxu0 %v4411
      %4487 = vmatprep.subr.mxu0 0.0
      %4488 = vmatpush1.msra.mxu0 %v4412
      %4489 = vmatprep.subr.mxu0 0.0
      %4490 = vmatpush1.msra.mxu0 %v4413
      %4491 = vmatprep.subr.mxu0 0.0
      %4492 = vmatpush1.msra.mxu0 %v4414
      %4493 = vmatprep.subr.mxu0 0.0
      %4494 = vmatpush1.msra.mxu0 %v4415
      %4495 = vmatprep.subr.mxu0 0.0
      %4496 = vmatpush1.msra.mxu0 %v4416
      %4497 = vmatprep.mubr.f32.mxu0 %v4418
      %4498 = vmatmul.mubr.f32.gmra.mrb[0].mxu0 %v4417
      %v4499 = vpop.f32.mrb[0].mxu0
      %v4500 = vadd.f32 0.0, %v4499
      %v4501 = vpop.f32.mrb[0].mxu0
      %4502 = vmatprep.mubr.f32.mxu0 %v4420
      %4503 = vmatmul.mubr.f32.gmra.mrb[0].mxu0 %v4419
      %v4504 = vpop.f32.mrb[0].mxu0
      %v4505 = vadd.f32 0.0, %v4504
      %v4506 = vpop.f32.mrb[0].mxu0
      %4507 = vmatprep.mubr.f32.mxu0 %v4422
      %4508 = vmatmul.mubr.f32.gmra.mrb[0].mxu0 %v4421
      %v4509 = vpop.f32.mrb[0].mxu0
      %v4510 = vadd.f32 0.0, %v4509
      %v4511 = vpop.f32.mrb[0].mxu0
      %4512 = vmatprep.mubr.f32.mxu0 %v4424
      %4513 = vmatmul.mubr.f32.gmra.mrb[0].mxu0 %v4423
      %v4514 = vpop.f32.mrb[0].mxu0
      %v4515 = vadd.f32 0.0, %v4514
      %v4516 = vpop.f32.mrb[0].mxu0
      %4517 = vmatprep.mubr.f32.mxu0 %v4426
      %4518 = vmatmul.mubr.f32.gmra.mrb[0].mxu0 %v4425
      %v4519 = vpop.f32.mrb[0].mxu0
      %v4520 = vadd.f32 0.0, %v4519
      %v4521 = vpop.f32.mrb[0].mxu0
      %4522 = vmatprep.mubr.f32.mxu0 %v4428
      %4523 = vmatmul.mubr.f32.gmra.mrb[0].mxu0 %v4427
      %v4524 = vpop.f32.mrb[0].mxu0
      %v4525 = vadd.f32 0.0, %v4524
      %v4526 = vpop.f32.mrb[0].mxu0
      %4527 = vmatprep.mubr.f32.mxu0 %v4430
      %4528 = vmatmul.mubr.f32.gmra.mrb[0].mxu0 %v4429
      %v4529 = vpop.f32.mrb[0].mxu0
      %v4530 = vadd.f32 0.0, %v4529
      %v4531 = vpop.f32.mrb[0].mxu0
      %4532 = vmatprep.mubr.f32.mxu0 %v4432
      %4533 = vmatmul.mubr.f32.gmra.mrb[0].mxu0 %v4431
      %v4534 = vpop.f32.mrb[0].mxu0
      %v4535 = vadd.f32 0.0, %v4534
      %v4536 = vpop.f32.mrb[0].mxu0
      %4537 = vdwg.mxu0
      %s4538 = scalar_lea.vmem %s5, 128
      %v4539 = vld [vmem:[%s4538] sm:$0xff]
      %v4540 = vld [vmem:[%s4538 + $0x8] sm:$0xff]
      %v4541 = vld [vmem:[%s4538 + $0x10] sm:$0xff]
      %v4542 = vld [vmem:[%s4538 + $0x18] sm:$0xff]
      %v4543 = vld [vmem:[%s4538 + $0x20] sm:$0xff]
      %v4544 = vld [vmem:[%s4538 + $0x28] sm:$0xff]
      %v4545 = vld [vmem:[%s4538 + $0x30] sm:$0xff]
      %v4546 = vld [vmem:[%s4538 + $0x38] sm:$0xff]
      %v4547 = vld [vmem:[%s4538 + $0x40] sm:$0xff]
      %v4548 = vld [vmem:[%s4538 + $0x48] sm:$0xff]
      %v4549 = vld [vmem:[%s4538 + $0x50] sm:$0xff]
      %v4550 = vld [vmem:[%s4538 + $0x58] sm:$0xff]
      %v4551 = vld [vmem:[%s4538 + $0x60] sm:$0xff]
      %v4552 = vld [vmem:[%s4538 + $0x68] sm:$0xff]
      %v4553 = vld [vmem:[%s4538 + $0x70] sm:$0xff]
      %v4554 = vld [vmem:[%s4538 + $0x78] sm:$0xff]
      %4555 = vmatprep.subr.mxu0 0.0
      %4556 = vmatpush1.msra.mxu0 %v4385
      %4557 = vmatprep.subr.mxu0 0.0
      %4558 = vmatpush1.msra.mxu0 %v4386
      %4559 = vmatprep.subr.mxu0 0.0
      %4560 = vmatpush1.msra.mxu0 %v4387
      %4561 = vmatprep.subr.mxu0 0.0
      %4562 = vmatpush1.msra.mxu0 %v4388
      %4563 = vmatprep.subr.mxu0 0.0
      %4564 = vmatpush1.msra.mxu0 %v4389
      %4565 = vmatprep.subr.mxu0 0.0
      %4566 = vmatpush1.msra.mxu0 %v4390
      %4567 = vmatprep.subr.mxu0 0.0
      %4568 = vmatpush1.msra.mxu0 %v4391
      %4569 = vmatprep.subr.mxu0 0.0
      %4570 = vmatpush1.msra.mxu0 %v4392
      %4571 = vmatprep.subr.mxu0 0.0
      %4572 = vmatpush1.msra.mxu0 %v4393
      %4573 = vmatprep.subr.mxu0 0.0
      %4574 = vmatpush1.msra.mxu0 %v4394
      %4575 = vmatprep.subr.mxu0 0.0
      %4576 = vmatpush1.msra.mxu0 %v4395
      %4577 = vmatprep.subr.mxu0 0.0
      %4578 = vmatpush1.msra.mxu0 %v4396
      %4579 = vmatprep.subr.mxu0 0.0
      %4580 = vmatpush1.msra.mxu0 %v4397
      %4581 = vmatprep.subr.mxu0 0.0
      %4582 = vmatpush1.msra.mxu0 %v4398
      %4583 = vmatprep.subr.mxu0 0.0
      %4584 = vmatpush1.msra.mxu0 %v4399
      %4585 = vmatprep.subr.mxu0 0.0
      %4586 = vmatpush1.msra.mxu0 %v4400
      %4587 = vmatprep.subr.mxu0 0.0
      %4588 = vmatpush1.msra.mxu0 %v4401
      %4589 = vmatprep.subr.mxu0 0.0
      %4590 = vmatpush1.msra.mxu0 %v4402
      %4591 = vmatprep.subr.mxu0 0.0
      %4592 = vmatpush1.msra.mxu0 %v4403
      %4593 = vmatprep.subr.mxu0 0.0
      %4594 = vmatpush1.msra.mxu0 %v4404
      %4595 = vmatprep.subr.mxu0 0.0
      %4596 = vmatpush1.msra.mxu0 %v4405
      %4597 = vmatprep.subr.mxu0 0.0
      %4598 = vmatpush1.msra.mxu0 %v4406
      %4599 = vmatprep.subr.mxu0 0.0
      %4600 = vmatpush1.msra.mxu0 %v4407
      %4601 = vmatprep.subr.mxu0 0.0
      %4602 = vmatpush1.msra.mxu0 %v4408
      %4603 = vmatprep.subr.mxu0 0.0
      %4604 = vmatpush1.msra.mxu0 %v4409
      %4605 = vmatprep.subr.mxu0 0.0
      %4606 = vmatpush1.msra.mxu0 %v4410
      %4607 = vmatprep.subr.mxu0 0.0
      %4608 = vmatpush1.msra.mxu0 %v4411
      %4609 = vmatprep.subr.mxu0 0.0
      %4610 = vmatpush1.msra.mxu0 %v4412
      %4611 = vmatprep.subr.mxu0 0.0
      %4612 = vmatpush1.msra.mxu0 %v4413
      %4613 = vmatprep.subr.mxu0 0.0
      %4614 = vmatpush1.msra.mxu0 %v4414
      %4615 = vmatprep.subr.mxu0 0.0
      %4616 = vmatpush1.msra.mxu0 %v4415
      %4617 = vmatprep.subr.mxu0 0.0
      %4618 = vmatpush1.msra.mxu0 %v4416
      %4619 = vmatprep.mubr.f32.mxu0 %v4540
      %4620 = vmatmul.mubr.f32.gmra.mrb[0].mxu0 %v4539
      %v4621 = vpop.f32.mrb[0].mxu0
      %v4622 = vadd.f32 0.0, %v4621
      %v4623 = vpop.f32.mrb[0].mxu0
      %4624 = vmatprep.mubr.f32.mxu0 %v4542
      %4625 = vmatmul.mubr.f32.gmra.mrb[0].mxu0 %v4541
      %v4626 = vpop.f32.mrb[0].mxu0
      %v4627 = vadd.f32 0.0, %v4626
      %v4628 = vpop.f32.mrb[0].mxu0
      %4629 = vmatprep.mubr.f32.mxu0 %v4544
      %4630 = vmatmul.mubr.f32.gmra.mrb[0].mxu0 %v4543
      %v4631 = vpop.f32.mrb[0].mxu0
      %v4632 = vadd.f32 0.0, %v4631
      %v4633 = vpop.f32.mrb[0].mxu0
      %4634 = vmatprep.mubr.f32.mxu0 %v4546
      %4635 = vmatmul.mubr.f32.gmra.mrb[0].mxu0 %v4545
      %v4636 = vpop.f32.mrb[0].mxu0
      %v4637 = vadd.f32 0.0, %v4636
      %v4638 = vpop.f32.mrb[0].mxu0
      %4639 = vmatprep.mubr.f32.mxu0 %v4548
      %4640 = vmatmul.mubr.f32.gmra.mrb[0].mxu0 %v4547
      %v4641 = vpop.f32.mrb[0].mxu0
      %v4642 = vadd.f32 0.0, %v4641
      %v4643 = vpop.f32.mrb[0].mxu0
      %4644 = vmatprep.mubr.f32.mxu0 %v4550
      %4645 = vmatmul.mubr.f32.gmra.mrb[0].mxu0 %v4549
      %v4646 = vpop.f32.mrb[0].mxu0
      %v4647 = vadd.f32 0.0, %v4646
      %v4648 = vpop.f32.mrb[0].mxu0
      %4649 = vmatprep.mubr.f32.mxu0 %v4552
      %4650 = vmatmul.mubr.f32.gmra.mrb[0].mxu0 %v4551
      %v4651 = vpop.f32.mrb[0].mxu0
      %v4652 = vadd.f32 0.0, %v4651
      %v4653 = vpop.f32.mrb[0].mxu0
      %4654 = vmatprep.mubr.f32.mxu0 %v4554
      %4655 = vmatmul.mubr.f32.gmra.mrb[0].mxu0 %v4553
      %v4656 = vpop.f32.mrb[0].mxu0
      %v4657 = vadd.f32 0.0, %v4656
      %v4658 = vpop.f32.mrb[0].mxu0
      %4659 = vdwg.mxu0
      %v4660 = vmax.f32 %v4500, %v4622
      %v4661 = vmax.f32 %v4505, %v4627
      %v4662 = vmax.f32 %v4510, %v4632
      %v4663 = vmax.f32 %v4515, %v4637
      %v4664 = vmax.f32 %v4520, %v4642
      %v4665 = vmax.f32 %v4525, %v4647
      %v4666 = vmax.f32 %v4530, %v4652
      %v4667 = vmax.f32 %v4535, %v4657
      %s4668 = scalar_lea.vmem %s5, 256
      %v4669 = vld [vmem:[%s4668] sm:$0xff]
      %v4670 = vld [vmem:[%s4668 + $0x8] sm:$0xff]
      %v4671 = vld [vmem:[%s4668 + $0x10] sm:$0xff]
      %v4672 = vld [vmem:[%s4668 + $0x18] sm:$0xff]
      %v4673 = vld [vmem:[%s4668 + $0x20] sm:$0xff]
      %v4674 = vld [vmem:[%s4668 + $0x28] sm:$0xff]
      %v4675 = vld [vmem:[%s4668 + $0x30] sm:$0xff]
      %v4676 = vld [vmem:[%s4668 + $0x38] sm:$0xff]
      %v4677 = vld [vmem:[%s4668 + $0x40] sm:$0xff]
      %v4678 = vld [vmem:[%s4668 + $0x48] sm:$0xff]
      %v4679 = vld [vmem:[%s4668 + $0x50] sm:$0xff]
      %v4680 = vld [vmem:[%s4668 + $0x58] sm:$0xff]
      %v4681 = vld [vmem:[%s4668 + $0x60] sm:$0xff]
      %v4682 = vld [vmem:[%s4668 + $0x68] sm:$0xff]
      %v4683 = vld [vmem:[%s4668 + $0x70] sm:$0xff]
      %v4684 = vld [vmem:[%s4668 + $0x78] sm:$0xff]
      %4685 = vmatprep.subr.mxu0 0.0
      %4686 = vmatpush1.msra.mxu0 %v4385
      %4687 = vmatprep.subr.mxu0 0.0
      %4688 = vmatpush1.msra.mxu0 %v4386
      %4689 = vmatprep.subr.mxu0 0.0
      %4690 = vmatpush1.msra.mxu0 %v4387
      %4691 = vmatprep.subr.mxu0 0.0
      %4692 = vmatpush1.msra.mxu0 %v4388
      %4693 = vmatprep.subr.mxu0 0.0
      %4694 = vmatpush1.msra.mxu0 %v4389
      %4695 = vmatprep.subr.mxu0 0.0
      %4696 = vmatpush1.msra.mxu0 %v4390
      %4697 = vmatprep.subr.mxu0 0.0
      %4698 = vmatpush1.msra.mxu0 %v4391
      %4699 = vmatprep.subr.mxu0 0.0
      %4700 = vmatpush1.msra.mxu0 %v4392
      %4701 = vmatprep.subr.mxu0 0.0
      %4702 = vmatpush1.msra.mxu0 %v4393
      %4703 = vmatprep.subr.mxu0 0.0
      %4704 = vmatpush1.msra.mxu0 %v4394
      %4705 = vmatprep.subr.mxu0 0.0
      %4706 = vmatpush1.msra.mxu0 %v4395
      %4707 = vmatprep.subr.mxu0 0.0
      %4708 = vmatpush1.msra.mxu0 %v4396
      %4709 = vmatprep.subr.mxu0 0.0
      %4710 = vmatpush1.msra.mxu0 %v4397
      %4711 = vmatprep.subr.mxu0 0.0
      %4712 = vmatpush1.msra.mxu0 %v4398
      %4713 = vmatprep.subr.mxu0 0.0
      %4714 = vmatpush1.msra.mxu0 %v4399
      %4715 = vmatprep.subr.mxu0 0.0
      %4716 = vmatpush1.msra.mxu0 %v4400
      %4717 = vmatprep.subr.mxu0 0.0
      %4718 = vmatpush1.msra.mxu0 %v4401
      %4719 = vmatprep.subr.mxu0 0.0
      %4720 = vmatpush1.msra.mxu0 %v4402
      %4721 = vmatprep.subr.mxu0 0.0
      %4722 = vmatpush1.msra.mxu0 %v4403
      %4723 = vmatprep.subr.mxu0 0.0
      %4724 = vmatpush1.msra.mxu0 %v4404
      %4725 = vmatprep.subr.mxu0 0.0
      %4726 = vmatpush1.msra.mxu0 %v4405
      %4727 = vmatprep.subr.mxu0 0.0
      %4728 = vmatpush1.msra.mxu0 %v4406
      %4729 = vmatprep.subr.mxu0 0.0
      %4730 = vmatpush1.msra.mxu0 %v4407
      %4731 = vmatprep.subr.mxu0 0.0
      %4732 = vmatpush1.msra.mxu0 %v4408
      %4733 = vmatprep.subr.mxu0 0.0
      %4734 = vmatpush1.msra.mxu0 %v4409
      %4735 = vmatprep.subr.mxu0 0.0
      %4736 = vmatpush1.msra.mxu0 %v4410
      %4737 = vmatprep.subr.mxu0 0.0
      %4738 = vmatpush1.msra.mxu0 %v4411
      %4739 = vmatprep.subr.mxu0 0.0
      %4740 = vmatpush1.msra.mxu0 %v4412
      %4741 = vmatprep.subr.mxu0 0.0
      %4742 = vmatpush1.msra.mxu0 %v4413
      %4743 = vmatprep.subr.mxu0 0.0
      %4744 = vmatpush1.msra.mxu0 %v4414
      %4745 = vmatprep.subr.mxu0 0.0
      %4746 = vmatpush1.msra.mxu0 %v4415
      %4747 = vmatprep.subr.mxu0 0.0
      %4748 = vmatpush1.msra.mxu0 %v4416
      %4749 = vmatprep.mubr.f32.mxu0 %v4670
      %4750 = vmatmul.mubr.f32.gmra.mrb[0].mxu0 %v4669
      %v4751 = vpop.f32.mrb[0].mxu0
      %v4752 = vadd.f32 0.0, %v4751
      %v4753 = vpop.f32.mrb[0].mxu0
      %4754 = vmatprep.mubr.f32.mxu0 %v4672
      %4755 = vmatmul.mubr.f32.gmra.mrb[0].mxu0 %v4671
      %v4756 = vpop.f32.mrb[0].mxu0
      %v4757 = vadd.f32 0.0, %v4756
      %v4758 = vpop.f32.mrb[0].mxu0
      %4759 = vmatprep.mubr.f32.mxu0 %v4674
      %4760 = vmatmul.mubr.f32.gmra.mrb[0].mxu0 %v4673
      %v4761 = vpop.f32.mrb[0].mxu0
      %v4762 = vadd.f32 0.0, %v4761
      %v4763 = vpop.f32.mrb[0].mxu0
      %4764 = vmatprep.mubr.f32.mxu0 %v4676
      %4765 = vmatmul.mubr.f32.gmra.mrb[0].mxu0 %v4675
      %v4766 = vpop.f32.mrb[0].mxu0
      %v4767 = vadd.f32 0.0, %v4766
      %v4768 = vpop.f32.mrb[0].mxu0
      %4769 = vmatprep.mubr.f32.mxu0 %v4678
      %4770 = vmatmul.mubr.f32.gmra.mrb[0].mxu0 %v4677
      %v4771 = vpop.f32.mrb[0].mxu0
      %v4772 = vadd.f32 0.0, %v4771
      %v4773 = vpop.f32.mrb[0].mxu0
      %4774 = vmatprep.mubr.f32.mxu0 %v4680
      %4775 = vmatmul.mubr.f32.gmra.mrb[0].mxu0 %v4679
      %v4776 = vpop.f32.mrb[0].mxu0
      %v4777 = vadd.f32 0.0, %v4776
      %v4778 = vpop.f32.mrb[0].mxu0
      %4779 = vmatprep.mubr.f32.mxu0 %v4682
      %4780 = vmatmul.mubr.f32.gmra.mrb[0].mxu0 %v4681
      %v4781 = vpop.f32.mrb[0].mxu0
      %v4782 = vadd.f32 0.0, %v4781
      %v4783 = vpop.f32.mrb[0].mxu0
      %4784 = vmatprep.mubr.f32.mxu0 %v4684
      %4785 = vmatmul.mubr.f32.gmra.mrb[0].mxu0 %v4683
      %v4786 = vpop.f32.mrb[0].mxu0
      %v4787 = vadd.f32 0.0, %v4786
      %v4788 = vpop.f32.mrb[0].mxu0
      %4789 = vdwg.mxu0
      %v4790 = vmax.f32 %v4660, %v4752
      %v4791 = vmax.f32 %v4661, %v4757
      %v4792 = vmax.f32 %v4662, %v4762
      %v4793 = vmax.f32 %v4663, %v4767
      %v4794 = vmax.f32 %v4664, %v4772
      %v4795 = vmax.f32 %v4665, %v4777
      %v4796 = vmax.f32 %v4666, %v4782
      %v4797 = vmax.f32 %v4667, %v4787
      %s4798 = scalar_lea.vmem %s5, 384
      %v4799 = vld [vmem:[%s4798] sm:$0xff]
      %v4800 = vld [vmem:[%s4798 + $0x8] sm:$0xff]
      %v4801 = vld [vmem:[%s4798 + $0x10] sm:$0xff]
      %v4802 = vld [vmem:[%s4798 + $0x18] sm:$0xff]
      %v4803 = vld [vmem:[%s4798 + $0x20] sm:$0xff]
      %v4804 = vld [vmem:[%s4798 + $0x28] sm:$0xff]
      %v4805 = vld [vmem:[%s4798 + $0x30] sm:$0xff]
      %v4806 = vld [vmem:[%s4798 + $0x38] sm:$0xff]
      %v4807 = vld [vmem:[%s4798 + $0x40] sm:$0xff]
      %v4808 = vld [vmem:[%s4798 + $0x48] sm:$0xff]
      %v4809 = vld [vmem:[%s4798 + $0x50] sm:$0xff]
      %v4810 = vld [vmem:[%s4798 + $0x58] sm:$0xff]
      %v4811 = vld [vmem:[%s4798 + $0x60] sm:$0xff]
      %v4812 = vld [vmem:[%s4798 + $0x68] sm:$0xff]
      %v4813 = vld [vmem:[%s4798 + $0x70] sm:$0xff]
      %v4814 = vld [vmem:[%s4798 + $0x78] sm:$0xff]
      %4815 = vmatprep.subr.mxu0 0.0
      %4816 = vmatpush1.msra.mxu0 %v4385
      %4817 = vmatprep.subr.mxu0 0.0
      %4818 = vmatpush1.msra.mxu0 %v4386
      %4819 = vmatprep.subr.mxu0 0.0
      %4820 = vmatpush1.msra.mxu0 %v4387
      %4821 = vmatprep.subr.mxu0 0.0
      %4822 = vmatpush1.msra.mxu0 %v4388
      %4823 = vmatprep.subr.mxu0 0.0
      %4824 = vmatpush1.msra.mxu0 %v4389
      %4825 = vmatprep.subr.mxu0 0.0
      %4826 = vmatpush1.msra.mxu0 %v4390
      %4827 = vmatprep.subr.mxu0 0.0
      %4828 = vmatpush1.msra.mxu0 %v4391
      %4829 = vmatprep.subr.mxu0 0.0
      %4830 = vmatpush1.msra.mxu0 %v4392
      %4831 = vmatprep.subr.mxu0 0.0
      %4832 = vmatpush1.msra.mxu0 %v4393
      %4833 = vmatprep.subr.mxu0 0.0
      %4834 = vmatpush1.msra.mxu0 %v4394
      %4835 = vmatprep.subr.mxu0 0.0
      %4836 = vmatpush1.msra.mxu0 %v4395
      %4837 = vmatprep.subr.mxu0 0.0
      %4838 = vmatpush1.msra.mxu0 %v4396
      %4839 = vmatprep.subr.mxu0 0.0
      %4840 = vmatpush1.msra.mxu0 %v4397
      %4841 = vmatprep.subr.mxu0 0.0
      %4842 = vmatpush1.msra.mxu0 %v4398
      %4843 = vmatprep.subr.mxu0 0.0
      %4844 = vmatpush1.msra.mxu0 %v4399
      %4845 = vmatprep.subr.mxu0 0.0
      %4846 = vmatpush1.msra.mxu0 %v4400
      %4847 = vmatprep.subr.mxu0 0.0
      %4848 = vmatpush1.msra.mxu0 %v4401
      %4849 = vmatprep.subr.mxu0 0.0
      %4850 = vmatpush1.msra.mxu0 %v4402
      %4851 = vmatprep.subr.mxu0 0.0
      %4852 = vmatpush1.msra.mxu0 %v4403
      %4853 = vmatprep.subr.mxu0 0.0
      %4854 = vmatpush1.msra.mxu0 %v4404
      %4855 = vmatprep.subr.mxu0 0.0
      %4856 = vmatpush1.msra.mxu0 %v4405
      %4857 = vmatprep.subr.mxu0 0.0
      %4858 = vmatpush1.msra.mxu0 %v4406
      %4859 = vmatprep.subr.mxu0 0.0
      %4860 = vmatpush1.msra.mxu0 %v4407
      %4861 = vmatprep.subr.mxu0 0.0
      %4862 = vmatpush1.msra.mxu0 %v4408
      %4863 = vmatprep.subr.mxu0 0.0
      %4864 = vmatpush1.msra.mxu0 %v4409
      %4865 = vmatprep.subr.mxu0 0.0
      %4866 = vmatpush1.msra.mxu0 %v4410
      %4867 = vmatprep.subr.mxu0 0.0
      %4868 = vmatpush1.msra.mxu0 %v4411
      %4869 = vmatprep.subr.mxu0 0.0
      %4870 = vmatpush1.msra.mxu0 %v4412
      %4871 = vmatprep.subr.mxu0 0.0
      %4872 = vmatpush1.msra.mxu0 %v4413
      %4873 = vmatprep.subr.mxu0 0.0
      %4874 = vmatpush1.msra.mxu0 %v4414
      %4875 = vmatprep.subr.mxu0 0.0
      %4876 = vmatpush1.msra.mxu0 %v4415
      %4877 = vmatprep.subr.mxu0 0.0
      %4878 = vmatpush1.msra.mxu0 %v4416
      %4879 = vmatprep.mubr.f32.mxu0 %v4800
      %4880 = vmatmul.mubr.f32.gmra.mrb[0].mxu0 %v4799
      %v4881 = vpop.f32.mrb[0].mxu0
      %v4882 = vadd.f32 0.0, %v4881
      %v4883 = vpop.f32.mrb[0].mxu0
      %4884 = vmatprep.mubr.f32.mxu0 %v4802
      %4885 = vmatmul.mubr.f32.gmra.mrb[0].mxu0 %v4801
      %v4886 = vpop.f32.mrb[0].mxu0
      %v4887 = vadd.f32 0.0, %v4886
      %v4888 = vpop.f32.mrb[0].mxu0
      %4889 = vmatprep.mubr.f32.mxu0 %v4804
      %4890 = vmatmul.mubr.f32.gmra.mrb[0].mxu0 %v4803
      %v4891 = vpop.f32.mrb[0].mxu0
      %v4892 = vadd.f32 0.0, %v4891
      %v4893 = vpop.f32.mrb[0].mxu0
      %4894 = vmatprep.mubr.f32.mxu0 %v4806
      %4895 = vmatmul.mubr.f32.gmra.mrb[0].mxu0 %v4805
      %v4896 = vpop.f32.mrb[0].mxu0
      %v4897 = vadd.f32 0.0, %v4896
      %v4898 = vpop.f32.mrb[0].mxu0
      %4899 = vmatprep.mubr.f32.mxu0 %v4808
      %4900 = vmatmul.mubr.f32.gmra.mrb[0].mxu0 %v4807
      %v4901 = vpop.f32.mrb[0].mxu0
      %v4902 = vadd.f32 0.0, %v4901
      %v4903 = vpop.f32.mrb[0].mxu0
      %4904 = vmatprep.mubr.f32.mxu0 %v4810
      %4905 = vmatmul.mubr.f32.gmra.mrb[0].mxu0 %v4809
      %v4906 = vpop.f32.mrb[0].mxu0
      %v4907 = vadd.f32 0.0, %v4906
      %v4908 = vpop.f32.mrb[0].mxu0
      %4909 = vmatprep.mubr.f32.mxu0 %v4812
      %4910 = vmatmul.mubr.f32.gmra.mrb[0].mxu0 %v4811
      %v4911 = vpop.f32.mrb[0].mxu0
      %v4912 = vadd.f32 0.0, %v4911
      %v4913 = vpop.f32.mrb[0].mxu0
      %4914 = vmatprep.mubr.f32.mxu0 %v4814
      %4915 = vmatmul.mubr.f32.gmra.mrb[0].mxu0 %v4813
      %v4916 = vpop.f32.mrb[0].mxu0
      %v4917 = vadd.f32 0.0, %v4916
      %v4918 = vpop.f32.mrb[0].mxu0
      %4919 = vdwg.mxu0
      %v4920 = vmax.f32 %v4790, %v4882
      %v4921 = vmax.f32 %v4791, %v4887
      %v4922 = vmax.f32 %v4792, %v4892
      %v4923 = vmax.f32 %v4793, %v4897
      %v4924 = vmax.f32 %v4794, %v4902
      %v4925 = vmax.f32 %v4795, %v4907
      %v4926 = vmax.f32 %v4796, %v4912
      %v4927 = vmax.f32 %v4797, %v4917
      %v4928 = vld [vmem:[%s6] sm:$0xff]
      %v4929 = vld [vmem:[%s6 + $0x8] sm:$0xff]
      %v4930 = vld [vmem:[%s6 + $0x10] sm:$0xff]
      %v4931 = vld [vmem:[%s6 + $0x18] sm:$0xff]
      %v4932 = vld [vmem:[%s6 + $0x20] sm:$0xff]
      %v4933 = vld [vmem:[%s6 + $0x28] sm:$0xff]
      %v4934 = vld [vmem:[%s6 + $0x30] sm:$0xff]
      %v4935 = vld [vmem:[%s6 + $0x38] sm:$0xff]
      %v4936 = vld [vmem:[%s6 + $0x40] sm:$0xff]
      %v4937 = vld [vmem:[%s6 + $0x48] sm:$0xff]
      %v4938 = vld [vmem:[%s6 + $0x50] sm:$0xff]
      %v4939 = vld [vmem:[%s6 + $0x58] sm:$0xff]
      %v4940 = vld [vmem:[%s6 + $0x60] sm:$0xff]
      %v4941 = vld [vmem:[%s6 + $0x68] sm:$0xff]
      %v4942 = vld [vmem:[%s6 + $0x70] sm:$0xff]
      %v4943 = vld [vmem:[%s6 + $0x78] sm:$0xff]
      %4944 = vmatprep.subr.mxu0 0.0
      %4945 = vmatpush1.msra.mxu0 %v4928
      %4946 = vmatprep.subr.mxu0 0.0
      %4947 = vmatpush1.msra.mxu0 %v4929
      %4948 = vmatprep.subr.mxu0 0.0
      %4949 = vmatpush1.msra.mxu0 %v4930
      %4950 = vmatprep.subr.mxu0 0.0
      %4951 = vmatpush1.msra.mxu0 %v4931
      %4952 = vmatprep.subr.mxu0 0.0
      %4953 = vmatpush1.msra.mxu0 %v4932
      %4954 = vmatprep.subr.mxu0 0.0
      %4955 = vmatpush1.msra.mxu0 %v4933
      %4956 = vmatprep.subr.mxu0 0.0
      %4957 = vmatpush1.msra.mxu0 %v4934
      %4958 = vmatprep.subr.mxu0 0.0
      %4959 = vmatpush1.msra.mxu0 %v4935
      %4960 = vmatprep.subr.mxu0 0.0
      %4961 = vmatpush1.msra.mxu0 %v4936
      %4962 = vmatprep.subr.mxu0 0.0
      %4963 = vmatpush1.msra.mxu0 %v4937
      %4964 = vmatprep.subr.mxu0 0.0
      %4965 = vmatpush1.msra.mxu0 %v4938
      %4966 = vmatprep.subr.mxu0 0.0
      %4967 = vmatpush1.msra.mxu0 %v4939
      %4968 = vmatprep.subr.mxu0 0.0
      %4969 = vmatpush1.msra.mxu0 %v4940
      %4970 = vmatprep.subr.mxu0 0.0
      %4971 = vmatpush1.msra.mxu0 %v4941
      %4972 = vmatprep.subr.mxu0 0.0
      %4973 = vmatpush1.msra.mxu0 %v4942
      %4974 = vmatprep.subr.mxu0 0.0
      %4975 = vmatpush1.msra.mxu0 %v4943
      %4976 = vmatprep.subr.mxu0 0.0
      %4977 = vmatpush1.msra.mxu0 0.0
      %4978 = vmatprep.subr.mxu0 0.0
      %4979 = vmatpush1.msra.mxu0 0.0
      %4980 = vmatprep.subr.mxu0 0.0
      %4981 = vmatpush1.msra.mxu0 0.0
      %4982 = vmatprep.subr.mxu0 0.0
      %4983 = vmatpush1.msra.mxu0 0.0
      %4984 = vmatprep.subr.mxu0 0.0
      %4985 = vmatpush1.msra.mxu0 0.0
      %4986 = vmatprep.subr.mxu0 0.0
      %4987 = vmatpush1.msra.mxu0 0.0
      %4988 = vmatprep.subr.mxu0 0.0
      %4989 = vmatpush1.msra.mxu0 0.0
      %4990 = vmatprep.subr.mxu0 0.0
      %4991 = vmatpush1.msra.mxu0 0.0
      %4992 = vmatprep.subr.mxu0 0.0
      %4993 = vmatpush1.msra.mxu0 0.0
      %4994 = vmatprep.subr.mxu0 0.0
      %4995 = vmatpush1.msra.mxu0 0.0
      %4996 = vmatprep.subr.mxu0 0.0
      %4997 = vmatpush1.msra.mxu0 0.0
      %4998 = vmatprep.subr.mxu0 0.0
      %4999 = vmatpush1.msra.mxu0 0.0
      %5000 = vmatprep.subr.mxu0 0.0
      %5001 = vmatpush1.msra.mxu0 0.0
      %5002 = vmatprep.subr.mxu0 0.0
      %5003 = vmatpush1.msra.mxu0 0.0
      %5004 = vmatprep.subr.mxu0 0.0
      %5005 = vmatpush1.msra.mxu0 0.0
      %5006 = vmatprep.subr.mxu0 0.0
      %5007 = vmatpush1.msra.mxu0 0.0
      %5008 = vmatprep.mubr.f32.mxu0 0.0
      %5009 = vmatmul.mubr.f32.gmra.mrb[0].mxu0 %v4920
      %v5010 = vpop.f32.mrb[0].mxu0
      %v5011 = vadd.f32 0.0, %v5010
      %v5012 = vpop.f32.mrb[0].mxu0
      %5013 = vmatprep.mubr.f32.mxu0 0.0
      %5014 = vmatmul.mubr.f32.gmra.mrb[0].mxu0 %v4921
      %v5015 = vpop.f32.mrb[0].mxu0
      %v5016 = vadd.f32 0.0, %v5015
      %v5017 = vpop.f32.mrb[0].mxu0
      %5018 = vmatprep.mubr.f32.mxu0 0.0
      %5019 = vmatmul.mubr.f32.gmra.mrb[0].mxu0 %v4922
      %v5020 = vpop.f32.mrb[0].mxu0
      %v5021 = vadd.f32 0.0, %v5020
      %v5022 = vpop.f32.mrb[0].mxu0
      %5023 = vmatprep.mubr.f32.mxu0 0.0
      %5024 = vmatmul.mubr.f32.gmra.mrb[0].mxu0 %v4923
      %v5025 = vpop.f32.mrb[0].mxu0
      %v5026 = vadd.f32 0.0, %v5025
      %v5027 = vpop.f32.mrb[0].mxu0
      %5028 = vmatprep.mubr.f32.mxu0 0.0
      %5029 = vmatmul.mubr.f32.gmra.mrb[0].mxu0 %v4924
      %v5030 = vpop.f32.mrb[0].mxu0
      %v5031 = vadd.f32 0.0, %v5030
      %v5032 = vpop.f32.mrb[0].mxu0
      %5033 = vmatprep.mubr.f32.mxu0 0.0
      %5034 = vmatmul.mubr.f32.gmra.mrb[0].mxu0 %v4925
      %v5035 = vpop.f32.mrb[0].mxu0
      %v5036 = vadd.f32 0.0, %v5035
      %v5037 = vpop.f32.mrb[0].mxu0
      %5038 = vmatprep.mubr.f32.mxu0 0.0
      %5039 = vmatmul.mubr.f32.gmra.mrb[0].mxu0 %v4926
      %v5040 = vpop.f32.mrb[0].mxu0
      %v5041 = vadd.f32 0.0, %v5040
      %v5042 = vpop.f32.mrb[0].mxu0
      %5043 = vmatprep.mubr.f32.mxu0 0.0
      %5044 = vmatmul.mubr.f32.gmra.mrb[0].mxu0 %v4927
      %v5045 = vpop.f32.mrb[0].mxu0
      %v5046 = vadd.f32 0.0, %v5045
      %v5047 = vpop.f32.mrb[0].mxu0
      %5048 = vdwg.mxu0
      %s5049 = scalar_lea.vmem %s6, 128
      %v5050 = vld [vmem:[%s5049] sm:$0xff]
      %v5051 = vld [vmem:[%s5049 + $0x8] sm:$0xff]
      %v5052 = vld [vmem:[%s5049 + $0x10] sm:$0xff]
      %v5053 = vld [vmem:[%s5049 + $0x18] sm:$0xff]
      %v5054 = vld [vmem:[%s5049 + $0x20] sm:$0xff]
      %v5055 = vld [vmem:[%s5049 + $0x28] sm:$0xff]
      %v5056 = vld [vmem:[%s5049 + $0x30] sm:$0xff]
      %v5057 = vld [vmem:[%s5049 + $0x38] sm:$0xff]
      %v5058 = vld [vmem:[%s5049 + $0x40] sm:$0xff]
      %v5059 = vld [vmem:[%s5049 + $0x48] sm:$0xff]
      %v5060 = vld [vmem:[%s5049 + $0x50] sm:$0xff]
      %v5061 = vld [vmem:[%s5049 + $0x58] sm:$0xff]
      %v5062 = vld [vmem:[%s5049 + $0x60] sm:$0xff]
      %v5063 = vld [vmem:[%s5049 + $0x68] sm:$0xff]
      %v5064 = vld [vmem:[%s5049 + $0x70] sm:$0xff]
      %v5065 = vld [vmem:[%s5049 + $0x78] sm:$0xff]
      %5066 = vmatprep.subr.mxu0 0.0
      %5067 = vmatpush1.msra.mxu0 %v5050
      %5068 = vmatprep.subr.mxu0 0.0
      %5069 = vmatpush1.msra.mxu0 %v5051
      %5070 = vmatprep.subr.mxu0 0.0
      %5071 = vmatpush1.msra.mxu0 %v5052
      %5072 = vmatprep.subr.mxu0 0.0
      %5073 = vmatpush1.msra.mxu0 %v5053
      %5074 = vmatprep.subr.mxu0 0.0
      %5075 = vmatpush1.msra.mxu0 %v5054
      %5076 = vmatprep.subr.mxu0 0.0
      %5077 = vmatpush1.msra.mxu0 %v5055
      %5078 = vmatprep.subr.mxu0 0.0
      %5079 = vmatpush1.msra.mxu0 %v5056
      %5080 = vmatprep.subr.mxu0 0.0
      %5081 = vmatpush1.msra.mxu0 %v5057
      %5082 = vmatprep.subr.mxu0 0.0
      %5083 = vmatpush1.msra.mxu0 %v5058
      %5084 = vmatprep.subr.mxu0 0.0
      %5085 = vmatpush1.msra.mxu0 %v5059
      %5086 = vmatprep.subr.mxu0 0.0
      %5087 = vmatpush1.msra.mxu0 %v5060
      %5088 = vmatprep.subr.mxu0 0.0
      %5089 = vmatpush1.msra.mxu0 %v5061
      %5090 = vmatprep.subr.mxu0 0.0
      %5091 = vmatpush1.msra.mxu0 %v5062
      %5092 = vmatprep.subr.mxu0 0.0
      %5093 = vmatpush1.msra.mxu0 %v5063
      %5094 = vmatprep.subr.mxu0 0.0
      %5095 = vmatpush1.msra.mxu0 %v5064
      %5096 = vmatprep.subr.mxu0 0.0
      %5097 = vmatpush1.msra.mxu0 %v5065
      %5098 = vmatprep.subr.mxu0 0.0
      %5099 = vmatpush1.msra.mxu0 0.0
      %5100 = vmatprep.subr.mxu0 0.0
      %5101 = vmatpush1.msra.mxu0 0.0
      %5102 = vmatprep.subr.mxu0 0.0
      %5103 = vmatpush1.msra.mxu0 0.0
      %5104 = vmatprep.subr.mxu0 0.0
      %5105 = vmatpush1.msra.mxu0 0.0
      %5106 = vmatprep.subr.mxu0 0.0
      %5107 = vmatpush1.msra.mxu0 0.0
      %5108 = vmatprep.subr.mxu0 0.0
      %5109 = vmatpush1.msra.mxu0 0.0
      %5110 = vmatprep.subr.mxu0 0.0
      %5111 = vmatpush1.msra.mxu0 0.0
      %5112 = vmatprep.subr.mxu0 0.0
      %5113 = vmatpush1.msra.mxu0 0.0
      %5114 = vmatprep.subr.mxu0 0.0
      %5115 = vmatpush1.msra.mxu0 0.0
      %5116 = vmatprep.subr.mxu0 0.0
      %5117 = vmatpush1.msra.mxu0 0.0
      %5118 = vmatprep.subr.mxu0 0.0
      %5119 = vmatpush1.msra.mxu0 0.0
      %5120 = vmatprep.subr.mxu0 0.0
      %5121 = vmatpush1.msra.mxu0 0.0
      %5122 = vmatprep.subr.mxu0 0.0
      %5123 = vmatpush1.msra.mxu0 0.0
      %5124 = vmatprep.subr.mxu0 0.0
      %5125 = vmatpush1.msra.mxu0 0.0
      %5126 = vmatprep.subr.mxu0 0.0
      %5127 = vmatpush1.msra.mxu0 0.0
      %5128 = vmatprep.subr.mxu0 0.0
      %5129 = vmatpush1.msra.mxu0 0.0
      %5130 = vmatprep.mubr.f32.mxu0 0.0
      %5131 = vmatmul.mubr.f32.gmra.mrb[0].mxu0 %v4920
      %v5132 = vpop.f32.mrb[0].mxu0
      %v5133 = vadd.f32 0.0, %v5132
      %v5134 = vpop.f32.mrb[0].mxu0
      %5135 = vmatprep.mubr.f32.mxu0 0.0
      %5136 = vmatmul.mubr.f32.gmra.mrb[0].mxu0 %v4921
      %v5137 = vpop.f32.mrb[0].mxu0
      %v5138 = vadd.f32 0.0, %v5137
      %v5139 = vpop.f32.mrb[0].mxu0
      %5140 = vmatprep.mubr.f32.mxu0 0.0
      %5141 = vmatmul.mubr.f32.gmra.mrb[0].mxu0 %v4922
      %v5142 = vpop.f32.mrb[0].mxu0
      %v5143 = vadd.f32 0.0, %v5142
      %v5144 = vpop.f32.mrb[0].mxu0
      %5145 = vmatprep.mubr.f32.mxu0 0.0
      %5146 = vmatmul.mubr.f32.gmra.mrb[0].mxu0 %v4923
      %v5147 = vpop.f32.mrb[0].mxu0
      %v5148 = vadd.f32 0.0, %v5147
      %v5149 = vpop.f32.mrb[0].mxu0
      %5150 = vmatprep.mubr.f32.mxu0 0.0
      %5151 = vmatmul.mubr.f32.gmra.mrb[0].mxu0 %v4924
      %v5152 = vpop.f32.mrb[0].mxu0
      %v5153 = vadd.f32 0.0, %v5152
      %v5154 = vpop.f32.mrb[0].mxu0
      %5155 = vmatprep.mubr.f32.mxu0 0.0
      %5156 = vmatmul.mubr.f32.gmra.mrb[0].mxu0 %v4925
      %v5157 = vpop.f32.mrb[0].mxu0
      %v5158 = vadd.f32 0.0, %v5157
      %v5159 = vpop.f32.mrb[0].mxu0
      %5160 = vmatprep.mubr.f32.mxu0 0.0
      %5161 = vmatmul.mubr.f32.gmra.mrb[0].mxu0 %v4926
      %v5162 = vpop.f32.mrb[0].mxu0
      %v5163 = vadd.f32 0.0, %v5162
      %v5164 = vpop.f32.mrb[0].mxu0
      %5165 = vmatprep.mubr.f32.mxu0 0.0
      %5166 = vmatmul.mubr.f32.gmra.mrb[0].mxu0 %v4927
      %v5167 = vpop.f32.mrb[0].mxu0
      %v5168 = vadd.f32 0.0, %v5167
      %v5169 = vpop.f32.mrb[0].mxu0
      %5170 = vdwg.mxu0
      %v5171 = vmax.f32 %v5011, %v5133
      %v5172 = vmax.f32 %v5016, %v5138
      %v5173 = vmax.f32 %v5021, %v5143
      %v5174 = vmax.f32 %v5026, %v5148
      %v5175 = vmax.f32 %v5031, %v5153
      %v5176 = vmax.f32 %v5036, %v5158
      %v5177 = vmax.f32 %v5041, %v5163
      %v5178 = vmax.f32 %v5046, %v5168
      %vm5179 = vcmask 523264
      %5180 = vst.msk [vmem:[%s298] sm:$0xff] %vm5179, %v5171
      %5181 = vst.msk [vmem:[%s298 + $0x8] sm:$0xff] %vm5179, %v5172
      %5182 = vst.msk [vmem:[%s298 + $0x10] sm:$0xff] %vm5179, %v5173
      %5183 = vst.msk [vmem:[%s298 + $0x18] sm:$0xff] %vm5179, %v5174
      %5184 = vst.msk [vmem:[%s298 + $0x20] sm:$0xff] %vm5179, %v5175
      %5185 = vst.msk [vmem:[%s298 + $0x28] sm:$0xff] %vm5179, %v5176
      %5186 = vst.msk [vmem:[%s298 + $0x30] sm:$0xff] %vm5179, %v5177
      %5187 = vst.msk [vmem:[%s298 + $0x38] sm:$0xff] %vm5179, %v5178
      %p5188 = scmp.lt.s32.totalorder %s18, 1
      %s5189 = scalar_select %p5188, %s18, 1
      %s5190 = smul.addr %s5189, 8
      %s5191 = smul.addr %s5190, 8
      %s5192 = scalar_lea.vmem %s7, %s5191
      // Predicated region
      $region49: #{masked_vgg3d_forward.3} parent=47 // pred_check
        %p5193 = pneg %p193
      $region50: #{masked_vgg3d_forward.3} parent=47 // pred_check_branch
        %5195 = sbr.rel (%p5193) target = $region52
      $region51: #{masked_vgg3d_forward.3} parent=47 // pred_region
        _
      $region52: #{masked_vgg3d_forward.3} parent=47 // pred_fallthru
        _
    $region48: #{masked_vgg3d_forward.3} parent=5 // pred_fallthru
      _
    %p5196 = scmp.le.s32.totalorder 2, %s13
    // Predicated region
    $region53: #{masked_vgg3d_forward.3} parent=5 // pred_check
      %p5197 = pneg %p5196
    $region54: #{masked_vgg3d_forward.3} parent=5 // pred_check_branch
      %5199 = sbr.rel (%p5197) target = $region56
    $region55: #{masked_vgg3d_forward.3} parent=5 // pred_region
      %s5200 = ssub.s32 %s13, 2
      // Predicated region
      $region57: #{masked_vgg3d_forward.3} parent=55 // pred_check
        %p5201 = pneg %p199
      $region58: #{masked_vgg3d_forward.3} parent=55 // pred_check_branch
        %5203 = sbr.rel (%p5201) target = $region60
      $region59: #{masked_vgg3d_forward.3} parent=55 // pred_region
        %p5204 = scmp.lt.s32.totalorder %s19, 1
        %s5205 = scalar_select %p5204, %s19, 1
        %s5206 = smul.addr %s5205, 8
        %s5207 = smul.addr %s5206, 8
        %s5208 = scalar_lea.vmem %s7, %s5207
      $region60: #{masked_vgg3d_forward.3} parent=55 // pred_fallthru
        _
    $region56: #{masked_vgg3d_forward.3} parent=5 // pred_fallthru
      _
  $region6: #{masked_vgg3d_forward.3} parent=0 // loop_footer
    %s17 = sadd.s32 1, %s13
  $region7: #{masked_vgg3d_forward.3} parent=0 // loop_footer_branch
    %12 = sbr.rel target = $region3
  $region8: #{masked_vgg3d_forward.3} parent=0 // loop_exit
    _

// kernel: masked_vgg3d_forward.4
$region0: #{masked_vgg3d_forward.4}
  #allocation0 [shape = 'u32[]', space=smem, size = 0x4, offset = 0x4, fixed_abs, tag = 'smem constant byte address 0x4 - core index']
  #allocation1 [shape = 'u32[144,128]{1,0:T(1,128)}', space=vmem, size = 0x12000, scoped, tag = 'internal scratch']
  %s0 = inlined_call_operand.vmem [shape: f32[2,10,10,80], index: 0, kind: input, shape index: {}]
  %s1 = inlined_call_operand.vmem [shape: f32[9,80,128], index: 1, kind: input, shape index: {}]
  %s2 = inlined_call_operand.vmem [shape: f32[1,128], index: 2, kind: input, shape index: {}]
  %s3 = inlined_call_operand.vmem [shape: f32[2,64,8], index: 3, kind: input, shape index: {}]
  %s4 = inlined_call_operand.vmem [shape: f32[8,128], index: 4, kind: input, shape index: {}]
  %s5 = inlined_call_operand.vmem [shape: f32[4,16,64], index: 5, kind: input, shape index: {}]
  %s6 = inlined_call_operand.vmem [shape: f32[2,128,64], index: 6, kind: input, shape index: {}]
  %s7 = inlined_call_operand.vmem [shape: f32[2,16,64], index: 7, kind: output, shape index: {}]
  %s8 = sld [smem:[#allocation0]]
  $region61: #{masked_vgg3d_forward.4} parent=0
    _
  %s10 = ssub.s32 1, %s8
  %s11 = scalar_select 0, %s10, %s8
  loop: start=0, step=1, limit=4
  $region2: #{masked_vgg3d_forward.4} parent=0 // loop_pre_header
    _
  $region3: #{masked_vgg3d_forward.4} parent=0 // loop_header
    %s13 = sphi 0, %s17
    %p14 = scmp.ge.s32.totalorder %s13, 4
    %s23 = sphi 0, %s25
    %s26 = sphi 0, %s23
    %s27 = sphi 0, %s26
    %s43 = sphi 0, %s27
    %s47 = sphi 0, %s47
    %s49 = sphi 0, %s47
    %s50 = sphi 0, %s49
    %s64 = sphi 0, %s50
    %s68 = sphi 0, %s68
    %s70 = sphi 0, %s68
    %s71 = sphi 0, %s70
    %s85 = sphi 0, %s71
    %s91 = sphi 0, %s93
    %s94 = sphi 0, %s91
    %s95 = sphi 0, %s94
    %s111 = sphi 0, %s95
    %s115 = sphi 0, %s115
    %s117 = sphi 0, %s115
    %s118 = sphi 0, %s117
    %s132 = sphi 0, %s118
    %s136 = sphi 0, %s136
    %s138 = sphi 0, %s136
    %s139 = sphi 0, %s138
    %s153 = sphi 0, %s139
    %s157 = sphi 0, %s157
    %s159 = sphi 0, %s157
    %s160 = sphi 0, %s159
    %s174 = sphi 0, %s160
    %s180 = sphi 0, %s182
    %s183 = sphi 0, %s180
    %s184 = sphi 0, %s183
    %s200 = sphi 0, %s184
  $region4: #{masked_vgg3d_forward.4} parent=0 // loop_header_branch
    %16 = sbr.rel (%p14) target = $region8
  $region5: #{masked_vgg3d_forward.4} parent=0 // loop_body
    %s18 = ssub.s32 %s13, 1
    %s19 = ssub.s32 %s13, 2
    %s20 = sadd.s32 %s13, 1
    %s21 = ssub.s32 %s13, %s20
    %p22 = scmp.eq.s32.totalorder %s21, 0
    %s24 = sadd.s32 %s23, 1
    %s25 = scalar_select %p22, %s23, %s24
    %p28 = pneg %p22
    %p29 = scmp.eq.s32.totalorder %s13, 1
    %p30 = por %p28, %p29
    %p31 = scmp.ne.s32.totalorder %s23, %s26
    %p32 = scmp.eq.s32.totalorder %s13, 0
    %p33 = por %p31, %p32
    %p34 = scmp.ne.s32.totalorder %s23, %s26
    %p35 = scmp.eq.s32.totalorder %s18, 1
    %p36 = por %p34, %p35
    %p37 = scmp.ne.s32.totalorder %s26, %s27
    %p38 = scmp.eq.s32.totalorder %s18, 0
    %p39 = por %p37, %p38
    %p40 = scmp.ne.s32.totalorder %s26, %s27
    %p41 = scmp.eq.s32.totalorder %s19, 1
    %p42 = por %p40, %p41
    %p44 = scmp.ne.s32.totalorder %s27, %s43
    %p45 = scmp.eq.s32.totalorder %s19, 0
    %p46 = por %p44, %p45
    %s48 = sadd.s32 %s47, 1
    %p51 = scmp.eq.s32.totalorder %s13, 1
    %p52 = scmp.ne.s32.totalorder %s47, %s49
    %p53 = scmp.eq.s32.totalorder %s13, 0
    %p54 = por %p52, %p53
    %p55 = scmp.ne.s32.totalorder %s47, %s49
    %p56 = scmp.eq.s32.totalorder %s18, 1
    %p57 = por %p55, %p56
    %p58 = scmp.ne.s32.totalorder %s49, %s50
    %p59 = scmp.eq.s32.totalorder %s18, 0
    %p60 = por %p58, %p59
    %p61 = scmp.ne.s32.totalorder %s49, %s50
    %p62 = scmp.eq.s32.totalorder %s19, 1
    %p63 = por %p61, %p62
    %p65 = scmp.ne.s32.totalorder %s50, %s64
    %p66 = scmp.eq.s32.totalorder %s19, 0
    %p67 = por %p65, %p66
    %s69 = sadd.s32 %s68, 1
    %p72 = scmp.eq.s32.totalorder %s13, 1
    %p73 = scmp.ne.s32.totalorder %s68, %s70
    %p74 = scmp.eq.s32.totalorder %s13, 0
    %p75 = por %p73, %p74
    %p76 = scmp.ne.s32.totalorder %s68, %s70
    %p77 = scmp.eq.s32.totalorder %s18, 1
    %p78 = por %p76, %p77
    %p79 = scmp.ne.s32.totalorder %s70, %s71
    %p80 = scmp.eq.s32.totalorder %s18, 0
    %p81 = por %p79, %p80
    %p82 = scmp.ne.s32.totalorder %s70, %s71
    %p83 = scmp.eq.s32.totalorder %s19, 1
    %p84 = por %p82, %p83
    %p86 = scmp.ne.s32.totalorder %s71, %s85
    %p87 = scmp.eq.s32.totalorder %s19, 0
    %p88 = por %p86, %p87
    %s89 = ssub.s32 %s13, %s20
    %p90 = scmp.eq.s32.totalorder %s89, 0
    %s92 = sadd.s32 %s91, 1
    %s93 = scalar_select %p90, %s91, %s92
    %p96 = pneg %p90
    %p97 = scmp.eq.s32.totalorder %s13, 1
    %p98 = por %p96, %p97
    %p99 = scmp.ne.s32.totalorder %s91, %s94
    %p100 = scmp.eq.s32.totalorder %s13, 0
    %p101 = por %p99, %p100
    %p102 = scmp.ne.s32.totalorder %s91, %s94
    %p103 = scmp.eq.s32.totalorder %s18, 1
    %p104 = por %p102, %p103
    %p105 = scmp.ne.s32.totalorder %s94, %s95
    %p106 = scmp.eq.s32.totalorder %s18, 0
    %p107 = por %p105, %p106
    %p108 = scmp.ne.s32.totalorder %s94, %s95
    %p109 = scmp.eq.s32.totalorder %s19, 1
    %p110 = por %p108, %p109
    %p112 = scmp.ne.s32.totalorder %s95, %s111
    %p113 = scmp.eq.s32.totalorder %s19, 0
    %p114 = por %p112, %p113
    %s116 = sadd.s32 %s115, 1
    %p119 = scmp.eq.s32.totalorder %s13, 1
    %p120 = scmp.ne.s32.totalorder %s115, %s117
    %p121 = scmp.eq.s32.totalorder %s13, 0
    %p122 = por %p120, %p121
    %p123 = scmp.ne.s32.totalorder %s115, %s117
    %p124 = scmp.eq.s32.totalorder %s18, 1
    %p125 = por %p123, %p124
    %p126 = scmp.ne.s32.totalorder %s117, %s118
    %p127 = scmp.eq.s32.totalorder %s18, 0
    %p128 = por %p126, %p127
    %p129 = scmp.ne.s32.totalorder %s117, %s118
    %p130 = scmp.eq.s32.totalorder %s19, 1
    %p131 = por %p129, %p130
    %p133 = scmp.ne.s32.totalorder %s118, %s132
    %p134 = scmp.eq.s32.totalorder %s19, 0
    %p135 = por %p133, %p134
    %s137 = sadd.s32 %s136, 1
    %p140 = scmp.eq.s32.totalorder %s13, 1
    %p141 = scmp.ne.s32.totalorder %s136, %s138
    %p142 = scmp.eq.s32.totalorder %s13, 0
    %p143 = por %p141, %p142
    %p144 = scmp.ne.s32.totalorder %s136, %s138
    %p145 = scmp.eq.s32.totalorder %s18, 1
    %p146 = por %p144, %p145
    %p147 = scmp.ne.s32.totalorder %s138, %s139
    %p148 = scmp.eq.s32.totalorder %s18, 0
    %p149 = por %p147, %p148
    %p150 = scmp.ne.s32.totalorder %s138, %s139
    %p151 = scmp.eq.s32.totalorder %s19, 1
    %p152 = por %p150, %p151
    %p154 = scmp.ne.s32.totalorder %s139, %s153
    %p155 = scmp.eq.s32.totalorder %s19, 0
    %p156 = por %p154, %p155
    %s158 = sadd.s32 %s157, 1
    %p161 = scmp.eq.s32.totalorder %s13, 1
    %p162 = scmp.ne.s32.totalorder %s157, %s159
    %p163 = scmp.eq.s32.totalorder %s13, 0
    %p164 = por %p162, %p163
    %p165 = scmp.ne.s32.totalorder %s157, %s159
    %p166 = scmp.eq.s32.totalorder %s18, 1
    %p167 = por %p165, %p166
    %p168 = scmp.ne.s32.totalorder %s159, %s160
    %p169 = scmp.eq.s32.totalorder %s18, 0
    %p170 = por %p168, %p169
    %p171 = scmp.ne.s32.totalorder %s159, %s160
    %p172 = scmp.eq.s32.totalorder %s19, 1
    %p173 = por %p171, %p172
    %p175 = scmp.ne.s32.totalorder %s160, %s174
    %p176 = scmp.eq.s32.totalorder %s19, 0
    %p177 = por %p175, %p176
    %s178 = ssub.s32 %s13, %s20
    %p179 = scmp.eq.s32.totalorder %s178, 0
    %s181 = sadd.s32 %s180, 1
    %s182 = scalar_select %p179, %s180, %s181
    %p185 = pneg %p179
    %p186 = scmp.eq.s32.totalorder %s13, 1
    %p187 = por %p185, %p186
    %p188 = scmp.ne.s32.totalorder %s180, %s183
    %p189 = scmp.eq.s32.totalorder %s13, 0
    %p190 = por %p188, %p189
    %p191 = scmp.ne.s32.totalorder %s180, %s183
    %p192 = scmp.eq.s32.totalorder %s18, 1
    %p193 = por %p191, %p192
    %p194 = scmp.ne.s32.totalorder %s183, %s184
    %p195 = scmp.eq.s32.totalorder %s18, 0
    %p196 = por %p194, %p195
    %p197 = scmp.ne.s32.totalorder %s183, %s184
    %p198 = scmp.eq.s32.totalorder %s19, 1
    %p199 = por %p197, %p198
    %p201 = scmp.ne.s32.totalorder %s184, %s200
    %p202 = scmp.eq.s32.totalorder %s19, 0
    %p203 = por %p201, %p202
    %p204 = scmp.le.s32.totalorder 1, %s13
    %p205 = scmp.lt.s32.totalorder %s13, 3
    %p206 = pnand %p204, %p205
    %p207 = pneg %p206
    // Predicated region
    $region9: #{masked_vgg3d_forward.4} parent=5 // pred_check
      _
    $region10: #{masked_vgg3d_forward.4} parent=5 // pred_check_branch
      %209 = sbr.rel (%p206) target = $region12
    $region11: #{masked_vgg3d_forward.4} parent=5 // pred_region
      %s210 = ssub.s32 %s13, 1
      // Predicated region
      $region13: #{masked_vgg3d_forward.4} parent=11 // pred_check
        %p211 = pneg %p60
      $region14: #{masked_vgg3d_forward.4} parent=11 // pred_check_branch
        %213 = sbr.rel (%p211) target = $region16
      $region15: #{masked_vgg3d_forward.4} parent=11 // pred_region
        _
      $region16: #{masked_vgg3d_forward.4} parent=11 // pred_fallthru
        _
      // Predicated region
      $region17: #{masked_vgg3d_forward.4} parent=11 // pred_check
        %p214 = pneg %p81
      $region18: #{masked_vgg3d_forward.4} parent=11 // pred_check_branch
        %216 = sbr.rel (%p214) target = $region20
      $region19: #{masked_vgg3d_forward.4} parent=11 // pred_region
        _
      $region20: #{masked_vgg3d_forward.4} parent=11 // pred_fallthru
        _
      // Predicated region
      $region21: #{masked_vgg3d_forward.4} parent=11 // pred_check
        %p217 = pneg %p128
      $region22: #{masked_vgg3d_forward.4} parent=11 // pred_check_branch
        %219 = sbr.rel (%p217) target = $region24
      $region23: #{masked_vgg3d_forward.4} parent=11 // pred_region
        _
      $region24: #{masked_vgg3d_forward.4} parent=11 // pred_fallthru
        _
      // Predicated region
      $region25: #{masked_vgg3d_forward.4} parent=11 // pred_check
        %p220 = pneg %p149
      $region26: #{masked_vgg3d_forward.4} parent=11 // pred_check_branch
        %222 = sbr.rel (%p220) target = $region28
      $region27: #{masked_vgg3d_forward.4} parent=11 // pred_region
        _
      $region28: #{masked_vgg3d_forward.4} parent=11 // pred_fallthru
        _
      // Predicated region
      $region29: #{masked_vgg3d_forward.4} parent=11 // pred_check
        %p223 = pneg %p170
      $region30: #{masked_vgg3d_forward.4} parent=11 // pred_check_branch
        %225 = sbr.rel (%p223) target = $region32
      $region31: #{masked_vgg3d_forward.4} parent=11 // pred_region
        _
      $region32: #{masked_vgg3d_forward.4} parent=11 // pred_fallthru
        _
    $region12: #{masked_vgg3d_forward.4} parent=5 // pred_fallthru
      _
    %p226 = scmp.lt.s32.totalorder %s13, 2
    // Predicated region
    $region33: #{masked_vgg3d_forward.4} parent=5 // pred_check
      %p227 = pneg %p226
    $region34: #{masked_vgg3d_forward.4} parent=5 // pred_check_branch
      %229 = sbr.rel (%p227) target = $region36
    $region35: #{masked_vgg3d_forward.4} parent=5 // pred_region
      // Predicated region
      $region37: #{masked_vgg3d_forward.4} parent=35 // pred_check
        %p230 = pneg %p33
      $region38: #{masked_vgg3d_forward.4} parent=35 // pred_check_branch
        %232 = sbr.rel (%p230) target = $region40
      $region39: #{masked_vgg3d_forward.4} parent=35 // pred_region
        %p233 = scmp.lt.s32.totalorder %s13, 1
        %s234 = scalar_select %p233, %s13, 1
        %s235 = smul.addr %s234, 20
        %s236 = smul.addr %s235, 8
        %s237 = scalar_lea.vmem %s0, %s236
      $region40: #{masked_vgg3d_forward.4} parent=35 // pred_fallthru
        _
      // Predicated region
      $region41: #{masked_vgg3d_forward.4} parent=35 // pred_check
        %p238 = pneg %p101
      $region42: #{masked_vgg3d_forward.4} parent=35 // pred_check_branch
        %240 = sbr.rel (%p238) target = $region44
      $region43: #{masked_vgg3d_forward.4} parent=35 // pred_region
        %p241 = scmp.lt.s32.totalorder %s13, 1
        %s242 = scalar_select %p241, %s13, 1
        %s243 = smul.addr %s242, 8
        %s244 = smul.addr %s243, 8
        %s245 = scalar_lea.vmem %s3, %s244
      $region44: #{masked_vgg3d_forward.4} parent=35 // pred_fallthru
        _
    $region36: #{masked_vgg3d_forward.4} parent=5 // pred_fallthru
      _
    %p246 = scmp.le.s32.totalorder 1, %s13
    %p247 = scmp.lt.s32.totalorder %s13, 3
    %p248 = pnand %p246, %p247
    %p249 = pneg %p248
    // Predicated region
    $region45: #{masked_vgg3d_forward.4} parent=5 // pred_check
      _
    $region46: #{masked_vgg3d_forward.4} parent=5 // pred_check_branch
      %251 = sbr.rel (%p248) target = $region48
    $region47: #{masked_vgg3d_forward.4} parent=5 // pred_region
      %s252 = ssub.s32 %s13, 1
      %p253 = scmp.lt.s32.totalorder %s18, 1
      %s254 = scalar_select %p253, %s18, 1
      %s255 = smul.addr %s254, 20
      %s256 = smul.addr %s255, 8
      %s257 = scalar_lea.vmem %s0, %s256
      %p258 = pneg %p39
      %p259 = pneg %p36
      %p260 = pneg %p60
      %p261 = pneg %p57
      %p262 = pneg %p81
      %p263 = pneg %p78
      %p264 = scmp.lt.s32.totalorder %s18, 1
      %s265 = scalar_select %p264, %s18, 1
      %s266 = smul.addr %s265, 8
      %s267 = smul.addr %s266, 8
      %s268 = scalar_lea.vmem %s3, %s267
      %p269 = pneg %p107
      %p270 = pneg %p104
      %p271 = pneg %p128
      %p272 = pneg %p125
      %p273 = pneg %p149
      %p274 = pneg %p146
      %p275 = pneg %p170
      %p276 = pneg %p167
      %p277 = pneg %p196
      %p278 = pneg %p193
      %p279 = scmp.lt.s32.totalorder %s18, 1
      %s280 = scalar_select %p279, %s18, 1
      %s281 = smul.addr %s280, 2
      %s282 = smul.addr %s281, 8
      %s283 = scalar_lea.vmem %s7, %s282
      %p284 = scmp.lt.s32.totalorder %s18, 1
      %s285 = scalar_select %p284, %s18, 1
      %s286 = smul.addr %s285, 20
      %s287 = smul.addr %s286, 8
      %s288 = scalar_lea.vmem %s0, %s287
      %p289 = scmp.lt.s32.totalorder %s18, 1
      %s290 = scalar_select %p289, %s18, 1
      %s291 = smul.addr %s290, 8
      %s292 = smul.addr %s291, 8
      %s293 = scalar_lea.vmem %s3, %s292
      %p294 = scmp.lt.s32.totalorder %s18, 1
      %s295 = scalar_select %p294, %s18, 1
      %s296 = smul.addr %s295, 2
      %s297 = smul.addr %s296, 8
      %s298 = scalar_lea.vmem %s7, %s297
      %v299 = vld [vmem:[%s288] sm:$0xff]
      %v300 = vld [vmem:[%s288 + $0x10] sm:$0xff]
      %v301 = vld [vmem:[%s288 + $0x20] sm:$0xff]
      %v302 = vld [vmem:[%s288 + $0x30] sm:$0xff]
      %v303 = vld [vmem:[%s288 + $0x40] sm:$0xff]
      %v304 = vld [vmem:[%s288 + $0x50] sm:$0xff]
      %v305 = vld [vmem:[%s288 + $0x60] sm:$0xff]
      %v306 = vld [vmem:[%s288 + $0x70] sm:$0xff]
      %v307 = vld [vmem:[%s1] sm:$0xff]
      %v308 = vld [vmem:[%s1 + $0x8] sm:$0xff]
      %v309 = vld [vmem:[%s1 + $0x10] sm:$0xff]
      %v310 = vld [vmem:[%s1 + $0x18] sm:$0xff]
      %v311 = vld [vmem:[%s1 + $0x20] sm:$0xff]
      %v312 = vld [vmem:[%s1 + $0x28] sm:$0xff]
      %v313 = vld [vmem:[%s1 + $0x30] sm:$0xff]
      %v314 = vld [vmem:[%s1 + $0x38] sm:$0xff]
      %v315 = vld [vmem:[%s1 + $0x40] sm:$0xff]
      %v316 = vld [vmem:[%s1 + $0x48] sm:$0xff]
      %v317 = vld [vmem:[%s288 + $0x1] sm:$0xff]
      %v318 = vld [vmem:[%s288 + $0x11] sm:$0xff]
      %v319 = vld [vmem:[%s288 + $0x21] sm:$0xff]
      %v320 = vld [vmem:[%s288 + $0x31] sm:$0xff]
      %v321 = vld [vmem:[%s288 + $0x41] sm:$0xff]
      %v322 = vld [vmem:[%s288 + $0x51] sm:$0xff]
      %v323 = vld [vmem:[%s288 + $0x61] sm:$0xff]
      %v324 = vld [vmem:[%s288 + $0x71] sm:$0xff]
      %s325 = scalar_lea.vmem %s1, 80
      %v326 = vld [vmem:[%s325] sm:$0xff]
      %v327 = vld [vmem:[%s325 + $0x8] sm:$0xff]
      %v328 = vld [vmem:[%s325 + $0x10] sm:$0xff]
      %v329 = vld [vmem:[%s325 + $0x18] sm:$0xff]
      %v330 = vld [vmem:[%s325 + $0x20] sm:$0xff]
      %v331 = vld [vmem:[%s325 + $0x28] sm:$0xff]
      %v332 = vld [vmem:[%s325 + $0x30] sm:$0xff]
      %v333 = vld [vmem:[%s325 + $0x38] sm:$0xff]
      %v334 = vld [vmem:[%s325 + $0x40] sm:$0xff]
      %v335 = vld [vmem:[%s325 + $0x48] sm:$0xff]
      %vm336 = vcmask 654336
      %v338 = vsel %vm336, %v317, 0
      %v341 = vsel %vm336, %v318, 0
      %v344 = vsel %vm336, %v319, 0
      %v347 = vsel %vm336, %v320, 0
      %v350 = vsel %vm336, %v321, 0
      %v353 = vsel %vm336, %v322, 0
      %v356 = vsel %vm336, %v323, 0
      %v359 = vsel %vm336, %v324, 0
      %361 = vmatprep.subr.mxu0 0.0
      %362 = vmatpush1.msra.mxu0 %v326
      %363 = vmatprep.subr.mxu0 0.0
      %364 = vmatpush1.msra.mxu0 %v327
      %365 = vmatprep.subr.mxu0 0.0
      %366 = vmatpush1.msra.mxu0 %v328
      %367 = vmatprep.subr.mxu0 0.0
      %368 = vmatpush1.msra.mxu0 %v329
      %369 = vmatprep.subr.mxu0 0.0
      %370 = vmatpush1.msra.mxu0 %v330
      %371 = vmatprep.subr.mxu0 0.0
      %372 = vmatpush1.msra.mxu0 %v331
      %373 = vmatprep.subr.mxu0 0.0
      %374 = vmatpush1.msra.mxu0 %v332
      %375 = vmatprep.subr.mxu0 0.0
      %376 = vmatpush1.msra.mxu0 %v333
      %377 = vmatprep.subr.mxu0 0.0
      %378 = vmatpush1.msra.mxu0 %v334
      %379 = vmatprep.subr.mxu0 0.0
      %380 = vmatpush1.msra.mxu0 %v335
      %381 = vmatprep.subr.mxu0 0.0
      %382 = vmatpush1.msra.mxu0 0.0
      %383 = vmatprep.subr.mxu0 0.0
      %384 = vmatpush1.msra.mxu0 0.0
      %385 = vmatprep.subr.mxu0 0.0
      %386 = vmatpush1.msra.mxu0 0.0
      %387 = vmatprep.subr.mxu0 0.0
      %388 = vmatpush1.msra.mxu0 0.0
      %389 = vmatprep.subr.mxu0 0.0
      %390 = vmatpush1.msra.mxu0 0.0
      %391 = vmatprep.subr.mxu0 0.0
      %392 = vmatpush1.msra.mxu0 0.0
      %393 = vmatprep.subr.mxu0 0.0
      %394 = vmatpush1.msra.mxu0 0.0
      %395 = vmatprep.subr.mxu0 0.0
      %396 = vmatpush1.msra.mxu0 0.0
      %397 = vmatprep.subr.mxu0 0.0
      %398 = vmatpush1.msra.mxu0 0.0
      %399 = vmatprep.subr.mxu0 0.0
      %400 = vmatpush1.msra.mxu0 0.0
      %401 = vmatprep.subr.mxu0 0.0
      %402 = vmatpush1.msra.mxu0 0.0
      %403 = vmatprep.subr.mxu0 0.0
      %404 = vmatpush1.msra.mxu0 0.0
      %405 = vmatprep.subr.mxu0 0.0
      %406 = vmatpush1.msra.mxu0 0.0
      %407 = vmatprep.subr.mxu0 0.0
      %408 = vmatpush1.msra.mxu0 0.0
      %409 = vmatprep.subr.mxu0 0.0
      %410 = vmatpush1.msra.mxu0 0.0
      %411 = vmatprep.subr.mxu0 0.0
      %412 = vmatpush1.msra.mxu0 0.0
      %413 = vmatprep.subr.mxu0 0.0
      %414 = vmatpush1.msra.mxu0 0.0
      %415 = vmatprep.subr.mxu0 0.0
      %416 = vmatpush1.msra.mxu0 0.0
      %417 = vmatprep.subr.mxu0 0.0
      %418 = vmatpush1.msra.mxu0 0.0
      %419 = vmatprep.subr.mxu0 0.0
      %420 = vmatpush1.msra.mxu0 0.0
      %421 = vmatprep.subr.mxu0 0.0
      %422 = vmatpush1.msra.mxu0 0.0
      %423 = vmatprep.subr.mxu0 0.0
      %424 = vmatpush1.msra.mxu0 0.0
      %425 = vmatprep.mubr.f32.mxu0 0.0
      %426 = vmatmul.mubr.f32.gmra.mrb[0].mxu0 %v338
      %v427 = vpop.f32.mrb[0].mxu0
      %v428 = vadd.f32 0.0, %v427
      %v429 = vpop.f32.mrb[0].mxu0
      %430 = vmatprep.mubr.f32.mxu0 0.0
      %431 = vmatmul.mubr.f32.gmra.mrb[0].mxu0 %v341
      %v432 = vpop.f32.mrb[0].mxu0
      %v433 = vadd.f32 0.0, %v432
      %v434 = vpop.f32.mrb[0].mxu0
      %435 = vmatprep.mubr.f32.mxu0 0.0
      %436 = vmatmul.mubr.f32.gmra.mrb[0].mxu0 %v344
      %v437 = vpop.f32.mrb[0].mxu0
      %v438 = vadd.f32 0.0, %v437
      %v439 = vpop.f32.mrb[0].mxu0
      %440 = vmatprep.mubr.f32.mxu0 0.0
      %441 = vmatmul.mubr.f32.gmra.mrb[0].mxu0 %v347
      %v442 = vpop.f32.mrb[0].mxu0
      %v443 = vadd.f32 0.0, %v442
      %v444 = vpop.f32.mrb[0].mxu0
      %445 = vmatprep.mubr.f32.mxu0 0.0
      %446 = vmatmul.mubr.f32.gmra.mrb[0].mxu0 %v350
      %v447 = vpop.f32.mrb[0].mxu0
      %v448 = vadd.f32 0.0, %v447
      %v449 = vpop.f32.mrb[0].mxu0
      %450 = vmatprep.mubr.f32.mxu0 0.0
      %451 = vmatmul.mubr.f32.gmra.mrb[0].mxu0 %v353
      %v452 = vpop.f32.mrb[0].mxu0
      %v453 = vadd.f32 0.0, %v452
      %v454 = vpop.f32.mrb[0].mxu0
      %455 = vmatprep.mubr.f32.mxu0 0.0
      %456 = vmatmul.mubr.f32.gmra.mrb[0].mxu0 %v356
      %v457 = vpop.f32.mrb[0].mxu0
      %v458 = vadd.f32 0.0, %v457
      %v459 = vpop.f32.mrb[0].mxu0
      %460 = vmatprep.mubr.f32.mxu0 0.0
      %461 = vmatmul.mubr.f32.gmra.mrb[0].mxu0 %v359
      %v462 = vpop.f32.mrb[0].mxu0
      %v463 = vadd.f32 0.0, %v462
      %v464 = vpop.f32.mrb[0].mxu0
      %465 = vdwg.mxu0
      %v467 = vsel %vm336, %v299, 0
      %v470 = vsel %vm336, %v300, 0
      %v473 = vsel %vm336, %v301, 0
      %v476 = vsel %vm336, %v302, 0
      %v479 = vsel %vm336, %v303, 0
      %v482 = vsel %vm336, %v304, 0
      %v485 = vsel %vm336, %v305, 0
      %v488 = vsel %vm336, %v306, 0
      %490 = vmatprep.subr.mxu0 0.0
      %491 = vmatpush1.msra.mxu0 %v307
      %492 = vmatprep.subr.mxu0 0.0
      %493 = vmatpush1.msra.mxu0 %v308
      %494 = vmatprep.subr.mxu0 0.0
      %495 = vmatpush1.msra.mxu0 %v309
      %496 = vmatprep.subr.mxu0 0.0
      %497 = vmatpush1.msra.mxu0 %v310
      %498 = vmatprep.subr.mxu0 0.0
      %499 = vmatpush1.msra.mxu0 %v311
      %500 = vmatprep.subr.mxu0 0.0
      %501 = vmatpush1.msra.mxu0 %v312
      %502 = vmatprep.subr.mxu0 0.0
      %503 = vmatpush1.msra.mxu0 %v313
      %504 = vmatprep.subr.mxu0 0.0
      %505 = vmatpush1.msra.mxu0 %v314
      %506 = vmatprep.subr.mxu0 0.0
      %507 = vmatpush1.msra.mxu0 %v315
      %508 = vmatprep.subr.mxu0 0.0
      %509 = vmatpush1.msra.mxu0 %v316
      %510 = vmatprep.subr.mxu0 0.0
      %511 = vmatpush1.msra.mxu0 0.0
      %512 = vmatprep.subr.mxu0 0.0
      %513 = vmatpush1.msra.mxu0 0.0
      %514 = vmatprep.subr.mxu0 0.0
      %515 = vmatpush1.msra.mxu0 0.0
      %516 = vmatprep.subr.mxu0 0.0
      %517 = vmatpush1.msra.mxu0 0.0
      %518 = vmatprep.subr.mxu0 0.0
      %519 = vmatpush1.msra.mxu0 0.0
      %520 = vmatprep.subr.mxu0 0.0
      %521 = vmatpush1.msra.mxu0 0.0
      %522 = vmatprep.subr.mxu0 0.0
      %523 = vmatpush1.msra.mxu0 0.0
      %524 = vmatprep.subr.mxu0 0.0
      %525 = vmatpush1.msra.mxu0 0.0
      %526 = vmatprep.subr.mxu0 0.0
      %527 = vmatpush1.msra.mxu0 0.0
      %528 = vmatprep.subr.mxu0 0.0
      %529 = vmatpush1.msra.mxu0 0.0
      %530 = vmatprep.subr.mxu0 0.0
      %531 = vmatpush1.msra.mxu0 0.0
      %532 = vmatprep.subr.mxu0 0.0
      %533 = vmatpush1.msra.mxu0 0.0
      %534 = vmatprep.subr.mxu0 0.0
      %535 = vmatpush1.msra.mxu0 0.0
      %536 = vmatprep.subr.mxu0 0.0
      %537 = vmatpush1.msra.mxu0 0.0
      %538 = vmatprep.subr.mxu0 0.0
      %539 = vmatpush1.msra.mxu0 0.0
      %540 = vmatprep.subr.mxu0 0.0
      %541 = vmatpush1.msra.mxu0 0.0
      %542 = vmatprep.subr.mxu0 0.0
      %543 = vmatpush1.msra.mxu0 0.0
      %544 = vmatprep.subr.mxu0 0.0
      %545 = vmatpush1.msra.mxu0 0.0
      %546 = vmatprep.subr.mxu0 0.0
      %547 = vmatpush1.msra.mxu0 0.0
      %548 = vmatprep.subr.mxu0 0.0
      %549 = vmatpush1.msra.mxu0 0.0
      %550 = vmatprep.subr.mxu0 0.0
      %551 = vmatpush1.msra.mxu0 0.0
      %552 = vmatprep.subr.mxu0 0.0
      %553 = vmatpush1.msra.mxu0 0.0
      %554 = vmatprep.mubr.f32.mxu0 0.0
      %555 = vmatmul.mubr.f32.gmra.mrb[0].mxu0 %v467
      %v556 = vpop.f32.mrb[0].mxu0
      %v557 = vadd.f32 %v428, %v556
      %v558 = vpop.f32.mrb[0].mxu0
      %559 = vmatprep.mubr.f32.mxu0 0.0
      %560 = vmatmul.mubr.f32.gmra.mrb[0].mxu0 %v470
      %v561 = vpop.f32.mrb[0].mxu0
      %v562 = vadd.f32 %v433, %v561
      %v563 = vpop.f32.mrb[0].mxu0
      %564 = vmatprep.mubr.f32.mxu0 0.0
      %565 = vmatmul.mubr.f32.gmra.mrb[0].mxu0 %v473
      %v566 = vpop.f32.mrb[0].mxu0
      %v567 = vadd.f32 %v438, %v566
      %v568 = vpop.f32.mrb[0].mxu0
      %569 = vmatprep.mubr.f32.mxu0 0.0
      %570 = vmatmul.mubr.f32.gmra.mrb[0].mxu0 %v476
      %v571 = vpop.f32.mrb[0].mxu0
      %v572 = vadd.f32 %v443, %v571
      %v573 = vpop.f32.mrb[0].mxu0
      %574 = vmatprep.mubr.f32.mxu0 0.0
      %575 = vmatmul.mubr.f32.gmra.mrb[0].mxu0 %v479
      %v576 = vpop.f32.mrb[0].mxu0
      %v577 = vadd.f32 %v448, %v576
      %v578 = vpop.f32.mrb[0].mxu0
      %579 = vmatprep.mubr.f32.mxu0 0.0
      %580 = vmatmul.mubr.f32.gmra.mrb[0].mxu0 %v482
      %v581 = vpop.f32.mrb[0].mxu0
      %v582 = vadd.f32 %v453, %v581
      %v583 = vpop.f32.mrb[0].mxu0
      %584 = vmatprep.mubr.f32.mxu0 0.0
      %585 = vmatmul.mubr.f32.gmra.mrb[0].mxu0 %v485
      %v586 = vpop.f32.mrb[0].mxu0
      %v587 = vadd.f32 %v458, %v586
      %v588 = vpop.f32.mrb[0].mxu0
      %589 = vmatprep.mubr.f32.mxu0 0.0
      %590 = vmatmul.mubr.f32.gmra.mrb[0].mxu0 %v488
      %v591 = vpop.f32.mrb[0].mxu0
      %v592 = vadd.f32 %v463, %v591
      %v593 = vpop.f32.mrb[0].mxu0
      %594 = vdwg.mxu0
      %v595 = vld [vmem:[%s288 + $0x2] sm:$0xff]
      %v596 = vld [vmem:[%s288 + $0x12] sm:$0xff]
      %v597 = vld [vmem:[%s288 + $0x22] sm:$0xff]
      %v598 = vld [vmem:[%s288 + $0x32] sm:$0xff]
      %v599 = vld [vmem:[%s288 + $0x42] sm:$0xff]
      %v600 = vld [vmem:[%s288 + $0x52] sm:$0xff]
      %v601 = vld [vmem:[%s288 + $0x62] sm:$0xff]
      %v602 = vld [vmem:[%s288 + $0x72] sm:$0xff]
      %s603 = scalar_lea.vmem %s1, 160
      %v604 = vld [vmem:[%s603] sm:$0xff]
      %v605 = vld [vmem:[%s603 + $0x8] sm:$0xff]
      %v606 = vld [vmem:[%s603 + $0x10] sm:$0xff]
      %v607 = vld [vmem:[%s603 + $0x18] sm:$0xff]
      %v608 = vld [vmem:[%s603 + $0x20] sm:$0xff]
      %v609 = vld [vmem:[%s603 + $0x28] sm:$0xff]
      %v610 = vld [vmem:[%s603 + $0x30] sm:$0xff]
      %v611 = vld [vmem:[%s603 + $0x38] sm:$0xff]
      %v612 = vld [vmem:[%s603 + $0x40] sm:$0xff]
      %v613 = vld [vmem:[%s603 + $0x48] sm:$0xff]
      %v615 = vsel %vm336, %v595, 0
      %v618 = vsel %vm336, %v596, 0
      %v621 = vsel %vm336, %v597, 0
      %v624 = vsel %vm336, %v598, 0
      %v627 = vsel %vm336, %v599, 0
      %v630 = vsel %vm336, %v600, 0
      %v633 = vsel %vm336, %v601, 0
      %v636 = vsel %vm336, %v602, 0
      %638 = vmatprep.subr.mxu0 0.0
      %639 = vmatpush1.msra.mxu0 %v604
      %640 = vmatprep.subr.mxu0 0.0
      %641 = vmatpush1.msra.mxu0 %v605
      %642 = vmatprep.subr.mxu0 0.0
      %643 = vmatpush1.msra.mxu0 %v606
      %644 = vmatprep.subr.mxu0 0.0
      %645 = vmatpush1.msra.mxu0 %v607
      %646 = vmatprep.subr.mxu0 0.0
      %647 = vmatpush1.msra.mxu0 %v608
      %648 = vmatprep.subr.mxu0 0.0
      %649 = vmatpush1.msra.mxu0 %v609
      %650 = vmatprep.subr.mxu0 0.0
      %651 = vmatpush1.msra.mxu0 %v610
      %652 = vmatprep.subr.mxu0 0.0
      %653 = vmatpush1.msra.mxu0 %v611
      %654 = vmatprep.subr.mxu0 0.0
      %655 = vmatpush1.msra.mxu0 %v612
      %656 = vmatprep.subr.mxu0 0.0
      %657 = vmatpush1.msra.mxu0 %v613
      %658 = vmatprep.subr.mxu0 0.0
      %659 = vmatpush1.msra.mxu0 0.0
      %660 = vmatprep.subr.mxu0 0.0
      %661 = vmatpush1.msra.mxu0 0.0
      %662 = vmatprep.subr.mxu0 0.0
      %663 = vmatpush1.msra.mxu0 0.0
      %664 = vmatprep.subr.mxu0 0.0
      %665 = vmatpush1.msra.mxu0 0.0
      %666 = vmatprep.subr.mxu0 0.0
      %667 = vmatpush1.msra.mxu0 0.0
      %668 = vmatprep.subr.mxu0 0.0
      %669 = vmatpush1.msra.mxu0 0.0
      %670 = vmatprep.subr.mxu0 0.0
      %671 = vmatpush1.msra.mxu0 0.0
      %672 = vmatprep.subr.mxu0 0.0
      %673 = vmatpush1.msra.mxu0 0.0
      %674 = vmatprep.subr.mxu0 0.0
      %675 = vmatpush1.msra.mxu0 0.0
      %676 = vmatprep.subr.mxu0 0.0
      %677 = vmatpush1.msra.mxu0 0.0
      %678 = vmatprep.subr.mxu0 0.0
      %679 = vmatpush1.msra.mxu0 0.0
      %680 = vmatprep.subr.mxu0 0.0
      %681 = vmatpush1.msra.mxu0 0.0
      %682 = vmatprep.subr.mxu0 0.0
      %683 = vmatpush1.msra.mxu0 0.0
      %684 = vmatprep.subr.mxu0 0.0
      %685 = vmatpush1.msra.mxu0 0.0
      %686 = vmatprep.subr.mxu0 0.0
      %687 = vmatpush1.msra.mxu0 0.0
      %688 = vmatprep.subr.mxu0 0.0
      %689 = vmatpush1.msra.mxu0 0.0
      %690 = vmatprep.subr.mxu0 0.0
      %691 = vmatpush1.msra.mxu0 0.0
      %692 = vmatprep.subr.mxu0 0.0
      %693 = vmatpush1.msra.mxu0 0.0
      %694 = vmatprep.subr.mxu0 0.0
      %695 = vmatpush1.msra.mxu0 0.0
      %696 = vmatprep.subr.mxu0 0.0
      %697 = vmatpush1.msra.mxu0 0.0
      %698 = vmatprep.subr.mxu0 0.0
      %699 = vmatpush1.msra.mxu0 0.0
      %700 = vmatprep.subr.mxu0 0.0
      %701 = vmatpush1.msra.mxu0 0.0
      %702 = vmatprep.mubr.f32.mxu0 0.0
      %703 = vmatmul.mubr.f32.gmra.mrb[0].mxu0 %v615
      %v704 = vpop.f32.mrb[0].mxu0
      %v705 = vadd.f32 0.0, %v704
      %v706 = vpop.f32.mrb[0].mxu0
      %707 = vmatprep.mubr.f32.mxu0 0.0
      %708 = vmatmul.mubr.f32.gmra.mrb[0].mxu0 %v618
      %v709 = vpop.f32.mrb[0].mxu0
      %v710 = vadd.f32 0.0, %v709
      %v711 = vpop.f32.mrb[0].mxu0
      %712 = vmatprep.mubr.f32.mxu0 0.0
      %713 = vmatmul.mubr.f32.gmra.mrb[0].mxu0 %v621
      %v714 = vpop.f32.mrb[0].mxu0
      %v715 = vadd.f32 0.0, %v714
      %v716 = vpop.f32.mrb[0].mxu0
      %717 = vmatprep.mubr.f32.mxu0 0.0
      %718 = vmatmul.mubr.f32.gmra.mrb[0].mxu0 %v624
      %v719 = vpop.f32.mrb[0].mxu0
      %v720 = vadd.f32 0.0, %v719
      %v721 = vpop.f32.mrb[0].mxu0
      %722 = vmatprep.mubr.f32.mxu0 0.0
      %723 = vmatmul.mubr.f32.gmra.mrb[0].mxu0 %v627
      %v724 = vpop.f32.mrb[0].mxu0
      %v725 = vadd.f32 0.0, %v724
      %v726 = vpop.f32.mrb[0].mxu0
      %727 = vmatprep.mubr.f32.mxu0 0.0
      %728 = vmatmul.mubr.f32.gmra.mrb[0].mxu0 %v630
      %v729 = vpop.f32.mrb[0].mxu0
      %v730 = vadd.f32 0.0, %v729
      %v731 = vpop.f32.mrb[0].mxu0
      %732 = vmatprep.mubr.f32.mxu0 0.0
      %733 = vmatmul.mubr.f32.gmra.mrb[0].mxu0 %v633
      %v734 = vpop.f32.mrb[0].mxu0
      %v735 = vadd.f32 0.0, %v734
      %v736 = vpop.f32.mrb[0].mxu0
      %737 = vmatprep.mubr.f32.mxu0 0.0
      %738 = vmatmul.mubr.f32.gmra.mrb[0].mxu0 %v636
      %v739 = vpop.f32.mrb[0].mxu0
      %v740 = vadd.f32 0.0, %v739
      %v741 = vpop.f32.mrb[0].mxu0
      %742 = vdwg.mxu0
      %v743 = vadd.f32 %v557, %v705
      %v744 = vadd.f32 %v562, %v710
      %v745 = vadd.f32 %v567, %v715
      %v746 = vadd.f32 %v572, %v720
      %v747 = vadd.f32 %v577, %v725
      %v748 = vadd.f32 %v582, %v730
      %v749 = vadd.f32 %v587, %v735
      %v750 = vadd.f32 %v592, %v740
      %s751 = scalar_lea.vmem %s288, 16
      %v752 = vld [vmem:[%s751] sm:$0xff]
      %v753 = vld [vmem:[%s751 + $0x10] sm:$0xff]
      %v754 = vld [vmem:[%s751 + $0x20] sm:$0xff]
      %v755 = vld [vmem:[%s751 + $0x30] sm:$0xff]
      %v756 = vld [vmem:[%s751 + $0x40] sm:$0xff]
      %v757 = vld [vmem:[%s751 + $0x50] sm:$0xff]
      %v758 = vld [vmem:[%s751 + $0x60] sm:$0xff]
      %v759 = vld [vmem:[%s751 + $0x70] sm:$0xff]
      %s760 = scalar_lea.vmem %s1, 240
      %v761 = vld [vmem:[%s760] sm:$0xff]
      %v762 = vld [vmem:[%s760 + $0x8] sm:$0xff]
      %v763 = vld [vmem:[%s760 + $0x10] sm:$0xff]
      %v764 = vld [vmem:[%s760 + $0x18] sm:$0xff]
      %v765 = vld [vmem:[%s760 + $0x20] sm:$0xff]
      %v766 = vld [vmem:[%s760 + $0x28] sm:$0xff]
      %v767 = vld [vmem:[%s760 + $0x30] sm:$0xff]
      %v768 = vld [vmem:[%s760 + $0x38] sm:$0xff]
      %v769 = vld [vmem:[%s760 + $0x40] sm:$0xff]
      %v770 = vld [vmem:[%s760 + $0x48] sm:$0xff]
      %v772 = vsel %vm336, %v752, 0
      %v775 = vsel %vm336, %v753, 0
      %v778 = vsel %vm336, %v754, 0
      %v781 = vsel %vm336, %v755, 0
      %v784 = vsel %vm336, %v756, 0
      %v787 = vsel %vm336, %v757, 0
      %v790 = vsel %vm336, %v758, 0
      %v793 = vsel %vm336, %v759, 0
      %795 = vmatprep.subr.mxu0 0.0
      %796 = vmatpush1.msra.mxu0 %v761
      %797 = vmatprep.subr.mxu0 0.0
      %798 = vmatpush1.msra.mxu0 %v762
      %799 = vmatprep.subr.mxu0 0.0
      %800 = vmatpush1.msra.mxu0 %v763
      %801 = vmatprep.subr.mxu0 0.0
      %802 = vmatpush1.msra.mxu0 %v764
      %803 = vmatprep.subr.mxu0 0.0
      %804 = vmatpush1.msra.mxu0 %v765
      %805 = vmatprep.subr.mxu0 0.0
      %806 = vmatpush1.msra.mxu0 %v766
      %807 = vmatprep.subr.mxu0 0.0
      %808 = vmatpush1.msra.mxu0 %v767
      %809 = vmatprep.subr.mxu0 0.0
      %810 = vmatpush1.msra.mxu0 %v768
      %811 = vmatprep.subr.mxu0 0.0
      %812 = vmatpush1.msra.mxu0 %v769
      %813 = vmatprep.subr.mxu0 0.0
      %814 = vmatpush1.msra.mxu0 %v770
      %815 = vmatprep.subr.mxu0 0.0
      %816 = vmatpush1.msra.mxu0 0.0
      %817 = vmatprep.subr.mxu0 0.0
      %818 = vmatpush1.msra.mxu0 0.0
      %819 = vmatprep.subr.mxu0 0.0
      %820 = vmatpush1.msra.mxu0 0.0
      %821 = vmatprep.subr.mxu0 0.0
      %822 = vmatpush1.msra.mxu0 0.0
      %823 = vmatprep.subr.mxu0 0.0
      %824 = vmatpush1.msra.mxu0 0.0
      %825 = vmatprep.subr.mxu0 0.0
      %826 = vmatpush1.msra.mxu0 0.0
      %827 = vmatprep.subr.mxu0 0.0
      %828 = vmatpush1.msra.mxu0 0.0
      %829 = vmatprep.subr.mxu0 0.0
      %830 = vmatpush1.msra.mxu0 0.0
      %831 = vmatprep.subr.mxu0 0.0
      %832 = vmatpush1.msra.mxu0 0.0
      %833 = vmatprep.subr.mxu0 0.0
      %834 = vmatpush1.msra.mxu0 0.0
      %835 = vmatprep.subr.mxu0 0.0
      %836 = vmatpush1.msra.mxu0 0.0
      %837 = vmatprep.subr.mxu0 0.0
      %838 = vmatpush1.msra.mxu0 0.0
      %839 = vmatprep.subr.mxu0 0.0
      %840 = vmatpush1.msra.mxu0 0.0
      %841 = vmatprep.subr.mxu0 0.0
      %842 = vmatpush1.msra.mxu0 0.0
      %843 = vmatprep.subr.mxu0 0.0
      %844 = vmatpush1.msra.mxu0 0.0
      %845 = vmatprep.subr.mxu0 0.0
      %846 = vmatpush1.msra.mxu0 0.0
      %847 = vmatprep.subr.mxu0 0.0
      %848 = vmatpush1.msra.mxu0 0.0
      %849 = vmatprep.subr.mxu0 0.0
      %850 = vmatpush1.msra.mxu0 0.0
      %851 = vmatprep.subr.mxu0 0.0
      %852 = vmatpush1.msra.mxu0 0.0
      %853 = vmatprep.subr.mxu0 0.0
      %854 = vmatpush1.msra.mxu0 0.0
      %855 = vmatprep.subr.mxu0 0.0
      %856 = vmatpush1.msra.mxu0 0.0
      %857 = vmatprep.subr.mxu0 0.0
      %858 = vmatpush1.msra.mxu0 0.0
      %859 = vmatprep.mubr.f32.mxu0 0.0
      %860 = vmatmul.mubr.f32.gmra.mrb[0].mxu0 %v772
      %v861 = vpop.f32.mrb[0].mxu0
      %v862 = vadd.f32 0.0, %v861
      %v863 = vpop.f32.mrb[0].mxu0
      %864 = vmatprep.mubr.f32.mxu0 0.0
      %865 = vmatmul.mubr.f32.gmra.mrb[0].mxu0 %v775
      %v866 = vpop.f32.mrb[0].mxu0
      %v867 = vadd.f32 0.0, %v866
      %v868 = vpop.f32.mrb[0].mxu0
      %869 = vmatprep.mubr.f32.mxu0 0.0
      %870 = vmatmul.mubr.f32.gmra.mrb[0].mxu0 %v778
      %v871 = vpop.f32.mrb[0].mxu0
      %v872 = vadd.f32 0.0, %v871
      %v873 = vpop.f32.mrb[0].mxu0
      %874 = vmatprep.mubr.f32.mxu0 0.0
      %875 = vmatmul.mubr.f32.gmra.mrb[0].mxu0 %v781
      %v876 = vpop.f32.mrb[0].mxu0
      %v877 = vadd.f32 0.0, %v876
      %v878 = vpop.f32.mrb[0].mxu0
      %879 = vmatprep.mubr.f32.mxu0 0.0
      %880 = vmatmul.mubr.f32.gmra.mrb[0].mxu0 %v784
      %v881 = vpop.f32.mrb[0].mxu0
      %v882 = vadd.f32 0.0, %v881
      %v883 = vpop.f32.mrb[0].mxu0
      %884 = vmatprep.mubr.f32.mxu0 0.0
      %885 = vmatmul.mubr.f32.gmra.mrb[0].mxu0 %v787
      %v886 = vpop.f32.mrb[0].mxu0
      %v887 = vadd.f32 0.0, %v886
      %v888 = vpop.f32.mrb[0].mxu0
      %889 = vmatprep.mubr.f32.mxu0 0.0
      %890 = vmatmul.mubr.f32.gmra.mrb[0].mxu0 %v790
      %v891 = vpop.f32.mrb[0].mxu0
      %v892 = vadd.f32 0.0, %v891
      %v893 = vpop.f32.mrb[0].mxu0
      %894 = vmatprep.mubr.f32.mxu0 0.0
      %895 = vmatmul.mubr.f32.gmra.mrb[0].mxu0 %v793
      %v896 = vpop.f32.mrb[0].mxu0
      %v897 = vadd.f32 0.0, %v896
      %v898 = vpop.f32.mrb[0].mxu0
      %899 = vdwg.mxu0
      %v900 = vadd.f32 %v743, %v862
      %v901 = vadd.f32 %v744, %v867
      %v902 = vadd.f32 %v745, %v872
      %v903 = vadd.f32 %v746, %v877
      %v904 = vadd.f32 %v747, %v882
      %v905 = vadd.f32 %v748, %v887
      %v906 = vadd.f32 %v749, %v892
      %v907 = vadd.f32 %v750, %v897
      %v908 = vld [vmem:[%s751 + $0x1] sm:$0xff]
      %v909 = vld [vmem:[%s751 + $0x11] sm:$0xff]
      %v910 = vld [vmem:[%s751 + $0x21] sm:$0xff]
      %v911 = vld [vmem:[%s751 + $0x31] sm:$0xff]
      %v912 = vld [vmem:[%s751 + $0x41] sm:$0xff]
      %v913 = vld [vmem:[%s751 + $0x51] sm:$0xff]
      %v914 = vld [vmem:[%s751 + $0x61] sm:$0xff]
      %v915 = vld [vmem:[%s751 + $0x71] sm:$0xff]
      %s916 = scalar_lea.vmem %s1, 320
      %v917 = vld [vmem:[%s916] sm:$0xff]
      %v918 = vld [vmem:[%s916 + $0x8] sm:$0xff]
      %v919 = vld [vmem:[%s916 + $0x10] sm:$0xff]
      %v920 = vld [vmem:[%s916 + $0x18] sm:$0xff]
      %v921 = vld [vmem:[%s916 + $0x20] sm:$0xff]
      %v922 = vld [vmem:[%s916 + $0x28] sm:$0xff]
      %v923 = vld [vmem:[%s916 + $0x30] sm:$0xff]
      %v924 = vld [vmem:[%s916 + $0x38] sm:$0xff]
      %v925 = vld [vmem:[%s916 + $0x40] sm:$0xff]
      %v926 = vld [vmem:[%s916 + $0x48] sm:$0xff]
      %v928 = vsel %vm336, %v908, 0
      %v931 = vsel %vm336, %v909, 0
      %v934 = vsel %vm336, %v910, 0
      %v937 = vsel %vm336, %v911, 0
      %v940 = vsel %vm336, %v912, 0
      %v943 = vsel %vm336, %v913, 0
      %v946 = vsel %vm336, %v914, 0
      %v949 = vsel %vm336, %v915, 0
      %951 = vmatprep.subr.mxu0 0.0
      %952 = vmatpush1.msra.mxu0 %v917
      %953 = vmatprep.subr.mxu0 0.0
      %954 = vmatpush1.msra.mxu0 %v918
      %955 = vmatprep.subr.mxu0 0.0
      %956 = vmatpush1.msra.mxu0 %v919
      %957 = vmatprep.subr.mxu0 0.0
      %958 = vmatpush1.msra.mxu0 %v920
      %959 = vmatprep.subr.mxu0 0.0
      %960 = vmatpush1.msra.mxu0 %v921
      %961 = vmatprep.subr.mxu0 0.0
      %962 = vmatpush1.msra.mxu0 %v922
      %963 = vmatprep.subr.mxu0 0.0
      %964 = vmatpush1.msra.mxu0 %v923
      %965 = vmatprep.subr.mxu0 0.0
      %966 = vmatpush1.msra.mxu0 %v924
      %967 = vmatprep.subr.mxu0 0.0
      %968 = vmatpush1.msra.mxu0 %v925
      %969 = vmatprep.subr.mxu0 0.0
      %970 = vmatpush1.msra.mxu0 %v926
      %971 = vmatprep.subr.mxu0 0.0
      %972 = vmatpush1.msra.mxu0 0.0
      %973 = vmatprep.subr.mxu0 0.0
      %974 = vmatpush1.msra.mxu0 0.0
      %975 = vmatprep.subr.mxu0 0.0
      %976 = vmatpush1.msra.mxu0 0.0
      %977 = vmatprep.subr.mxu0 0.0
      %978 = vmatpush1.msra.mxu0 0.0
      %979 = vmatprep.subr.mxu0 0.0
      %980 = vmatpush1.msra.mxu0 0.0
      %981 = vmatprep.subr.mxu0 0.0
      %982 = vmatpush1.msra.mxu0 0.0
      %983 = vmatprep.subr.mxu0 0.0
      %984 = vmatpush1.msra.mxu0 0.0
      %985 = vmatprep.subr.mxu0 0.0
      %986 = vmatpush1.msra.mxu0 0.0
      %987 = vmatprep.subr.mxu0 0.0
      %988 = vmatpush1.msra.mxu0 0.0
      %989 = vmatprep.subr.mxu0 0.0
      %990 = vmatpush1.msra.mxu0 0.0
      %991 = vmatprep.subr.mxu0 0.0
      %992 = vmatpush1.msra.mxu0 0.0
      %993 = vmatprep.subr.mxu0 0.0
      %994 = vmatpush1.msra.mxu0 0.0
      %995 = vmatprep.subr.mxu0 0.0
      %996 = vmatpush1.msra.mxu0 0.0
      %997 = vmatprep.subr.mxu0 0.0
      %998 = vmatpush1.msra.mxu0 0.0
      %999 = vmatprep.subr.mxu0 0.0
      %1000 = vmatpush1.msra.mxu0 0.0
      %1001 = vmatprep.subr.mxu0 0.0
      %1002 = vmatpush1.msra.mxu0 0.0
      %1003 = vmatprep.subr.mxu0 0.0
      %1004 = vmatpush1.msra.mxu0 0.0
      %1005 = vmatprep.subr.mxu0 0.0
      %1006 = vmatpush1.msra.mxu0 0.0
      %1007 = vmatprep.subr.mxu0 0.0
      %1008 = vmatpush1.msra.mxu0 0.0
      %1009 = vmatprep.subr.mxu0 0.0
      %1010 = vmatpush1.msra.mxu0 0.0
      %1011 = vmatprep.subr.mxu0 0.0
      %1012 = vmatpush1.msra.mxu0 0.0
      %1013 = vmatprep.subr.mxu0 0.0
      %1014 = vmatpush1.msra.mxu0 0.0
      %1015 = vmatprep.mubr.f32.mxu0 0.0
      %1016 = vmatmul.mubr.f32.gmra.mrb[0].mxu0 %v928
      %v1017 = vpop.f32.mrb[0].mxu0
      %v1018 = vadd.f32 0.0, %v1017
      %v1019 = vpop.f32.mrb[0].mxu0
      %1020 = vmatprep.mubr.f32.mxu0 0.0
      %1021 = vmatmul.mubr.f32.gmra.mrb[0].mxu0 %v931
      %v1022 = vpop.f32.mrb[0].mxu0
      %v1023 = vadd.f32 0.0, %v1022
      %v1024 = vpop.f32.mrb[0].mxu0
      %1025 = vmatprep.mubr.f32.mxu0 0.0
      %1026 = vmatmul.mubr.f32.gmra.mrb[0].mxu0 %v934
      %v1027 = vpop.f32.mrb[0].mxu0
      %v1028 = vadd.f32 0.0, %v1027
      %v1029 = vpop.f32.mrb[0].mxu0
      %1030 = vmatprep.mubr.f32.mxu0 0.0
      %1031 = vmatmul.mubr.f32.gmra.mrb[0].mxu0 %v937
      %v1032 = vpop.f32.mrb[0].mxu0
      %v1033 = vadd.f32 0.0, %v1032
      %v1034 = vpop.f32.mrb[0].mxu0
      %1035 = vmatprep.mubr.f32.mxu0 0.0
      %1036 = vmatmul.mubr.f32.gmra.mrb[0].mxu0 %v940
      %v1037 = vpop.f32.mrb[0].mxu0
      %v1038 = vadd.f32 0.0, %v1037
      %v1039 = vpop.f32.mrb[0].mxu0
      %1040 = vmatprep.mubr.f32.mxu0 0.0
      %1041 = vmatmul.mubr.f32.gmra.mrb[0].mxu0 %v943
      %v1042 = vpop.f32.mrb[0].mxu0
      %v1043 = vadd.f32 0.0, %v1042
      %v1044 = vpop.f32.mrb[0].mxu0
      %1045 = vmatprep.mubr.f32.mxu0 0.0
      %1046 = vmatmul.mubr.f32.gmra.mrb[0].mxu0 %v946
      %v1047 = vpop.f32.mrb[0].mxu0
      %v1048 = vadd.f32 0.0, %v1047
      %v1049 = vpop.f32.mrb[0].mxu0
      %1050 = vmatprep.mubr.f32.mxu0 0.0
      %1051 = vmatmul.mubr.f32.gmra.mrb[0].mxu0 %v949
      %v1052 = vpop.f32.mrb[0].mxu0
      %v1053 = vadd.f32 0.0, %v1052
      %v1054 = vpop.f32.mrb[0].mxu0
      %1055 = vdwg.mxu0
      %v1056 = vadd.f32 %v900, %v1018
      %v1057 = vadd.f32 %v901, %v1023
      %v1058 = vadd.f32 %v902, %v1028
      %v1059 = vadd.f32 %v903, %v1033
      %v1060 = vadd.f32 %v904, %v1038
      %v1061 = vadd.f32 %v905, %v1043
      %v1062 = vadd.f32 %v906, %v1048
      %v1063 = vadd.f32 %v907, %v1053
      %v1064 = vld [vmem:[%s751 + $0x2] sm:$0xff]
      %v1065 = vld [vmem:[%s751 + $0x12] sm:$0xff]
      %v1066 = vld [vmem:[%s751 + $0x22] sm:$0xff]
      %v1067 = vld [vmem:[%s751 + $0x32] sm:$0xff]
      %v1068 = vld [vmem:[%s751 + $0x42] sm:$0xff]
      %v1069 = vld [vmem:[%s751 + $0x52] sm:$0xff]
      %v1070 = vld [vmem:[%s751 + $0x62] sm:$0xff]
      %v1071 = vld [vmem:[%s751 + $0x72] sm:$0xff]
      %s1072 = scalar_lea.vmem %s1, 400
      %v1073 = vld [vmem:[%s1072] sm:$0xff]
      %v1074 = vld [vmem:[%s1072 + $0x8] sm:$0xff]
      %v1075 = vld [vmem:[%s1072 + $0x10] sm:$0xff]
      %v1076 = vld [vmem:[%s1072 + $0x18] sm:$0xff]
      %v1077 = vld [vmem:[%s1072 + $0x20] sm:$0xff]
      %v1078 = vld [vmem:[%s1072 + $0x28] sm:$0xff]
      %v1079 = vld [vmem:[%s1072 + $0x30] sm:$0xff]
      %v1080 = vld [vmem:[%s1072 + $0x38] sm:$0xff]
      %v1081 = vld [vmem:[%s1072 + $0x40] sm:$0xff]
      %v1082 = vld [vmem:[%s1072 + $0x48] sm:$0xff]
      %v1084 = vsel %vm336, %v1064, 0
      %v1087 = vsel %vm336, %v1065, 0
      %v1090 = vsel %vm336, %v1066, 0
      %v1093 = vsel %vm336, %v1067, 0
      %v1096 = vsel %vm336, %v1068, 0
      %v1099 = vsel %vm336, %v1069, 0
      %v1102 = vsel %vm336, %v1070, 0
      %v1105 = vsel %vm336, %v1071, 0
      %1107 = vmatprep.subr.mxu0 0.0
      %1108 = vmatpush1.msra.mxu0 %v1073
      %1109 = vmatprep.subr.mxu0 0.0
      %1110 = vmatpush1.msra.mxu0 %v1074
      %1111 = vmatprep.subr.mxu0 0.0
      %1112 = vmatpush1.msra.mxu0 %v1075
      %1113 = vmatprep.subr.mxu0 0.0
      %1114 = vmatpush1.msra.mxu0 %v1076
      %1115 = vmatprep.subr.mxu0 0.0
      %1116 = vmatpush1.msra.mxu0 %v1077
      %1117 = vmatprep.subr.mxu0 0.0
      %1118 = vmatpush1.msra.mxu0 %v1078
      %1119 = vmatprep.subr.mxu0 0.0
      %1120 = vmatpush1.msra.mxu0 %v1079
      %1121 = vmatprep.subr.mxu0 0.0
      %1122 = vmatpush1.msra.mxu0 %v1080
      %1123 = vmatprep.subr.mxu0 0.0
      %1124 = vmatpush1.msra.mxu0 %v1081
      %1125 = vmatprep.subr.mxu0 0.0
      %1126 = vmatpush1.msra.mxu0 %v1082
      %1127 = vmatprep.subr.mxu0 0.0
      %1128 = vmatpush1.msra.mxu0 0.0
      %1129 = vmatprep.subr.mxu0 0.0
      %1130 = vmatpush1.msra.mxu0 0.0
      %1131 = vmatprep.subr.mxu0 0.0
      %1132 = vmatpush1.msra.mxu0 0.0
      %1133 = vmatprep.subr.mxu0 0.0
      %1134 = vmatpush1.msra.mxu0 0.0
      %1135 = vmatprep.subr.mxu0 0.0
      %1136 = vmatpush1.msra.mxu0 0.0
      %1137 = vmatprep.subr.mxu0 0.0
      %1138 = vmatpush1.msra.mxu0 0.0
      %1139 = vmatprep.subr.mxu0 0.0
      %1140 = vmatpush1.msra.mxu0 0.0
      %1141 = vmatprep.subr.mxu0 0.0
      %1142 = vmatpush1.msra.mxu0 0.0
      %1143 = vmatprep.subr.mxu0 0.0
      %1144 = vmatpush1.msra.mxu0 0.0
      %1145 = vmatprep.subr.mxu0 0.0
      %1146 = vmatpush1.msra.mxu0 0.0
      %1147 = vmatprep.subr.mxu0 0.0
      %1148 = vmatpush1.msra.mxu0 0.0
      %1149 = vmatprep.subr.mxu0 0.0
      %1150 = vmatpush1.msra.mxu0 0.0
      %1151 = vmatprep.subr.mxu0 0.0
      %1152 = vmatpush1.msra.mxu0 0.0
      %1153 = vmatprep.subr.mxu0 0.0
      %1154 = vmatpush1.msra.mxu0 0.0
      %1155 = vmatprep.subr.mxu0 0.0
      %1156 = vmatpush1.msra.mxu0 0.0
      %1157 = vmatprep.subr.mxu0 0.0
      %1158 = vmatpush1.msra.mxu0 0.0
      %1159 = vmatprep.subr.mxu0 0.0
      %1160 = vmatpush1.msra.mxu0 0.0
      %1161 = vmatprep.subr.mxu0 0.0
      %1162 = vmatpush1.msra.mxu0 0.0
      %1163 = vmatprep.subr.mxu0 0.0
      %1164 = vmatpush1.msra.mxu0 0.0
      %1165 = vmatprep.subr.mxu0 0.0
      %1166 = vmatpush1.msra.mxu0 0.0
      %1167 = vmatprep.subr.mxu0 0.0
      %1168 = vmatpush1.msra.mxu0 0.0
      %1169 = vmatprep.subr.mxu0 0.0
      %1170 = vmatpush1.msra.mxu0 0.0
      %1171 = vmatprep.mubr.f32.mxu0 0.0
      %1172 = vmatmul.mubr.f32.gmra.mrb[0].mxu0 %v1084
      %v1173 = vpop.f32.mrb[0].mxu0
      %v1174 = vadd.f32 0.0, %v1173
      %v1175 = vpop.f32.mrb[0].mxu0
      %1176 = vmatprep.mubr.f32.mxu0 0.0
      %1177 = vmatmul.mubr.f32.gmra.mrb[0].mxu0 %v1087
      %v1178 = vpop.f32.mrb[0].mxu0
      %v1179 = vadd.f32 0.0, %v1178
      %v1180 = vpop.f32.mrb[0].mxu0
      %1181 = vmatprep.mubr.f32.mxu0 0.0
      %1182 = vmatmul.mubr.f32.gmra.mrb[0].mxu0 %v1090
      %v1183 = vpop.f32.mrb[0].mxu0
      %v1184 = vadd.f32 0.0, %v1183
      %v1185 = vpop.f32.mrb[0].mxu0
      %1186 = vmatprep.mubr.f32.mxu0 0.0
      %1187 = vmatmul.mubr.f32.gmra.mrb[0].mxu0 %v1093
      %v1188 = vpop.f32.mrb[0].mxu0
      %v1189 = vadd.f32 0.0, %v1188
      %v1190 = vpop.f32.mrb[0].mxu0
      %1191 = vmatprep.mubr.f32.mxu0 0.0
      %1192 = vmatmul.mubr.f32.gmra.mrb[0].mxu0 %v1096
      %v1193 = vpop.f32.mrb[0].mxu0
      %v1194 = vadd.f32 0.0, %v1193
      %v1195 = vpop.f32.mrb[0].mxu0
      %1196 = vmatprep.mubr.f32.mxu0 0.0
      %1197 = vmatmul.mubr.f32.gmra.mrb[0].mxu0 %v1099
      %v1198 = vpop.f32.mrb[0].mxu0
      %v1199 = vadd.f32 0.0, %v1198
      %v1200 = vpop.f32.mrb[0].mxu0
      %1201 = vmatprep.mubr.f32.mxu0 0.0
      %1202 = vmatmul.mubr.f32.gmra.mrb[0].mxu0 %v1102
      %v1203 = vpop.f32.mrb[0].mxu0
      %v1204 = vadd.f32 0.0, %v1203
      %v1205 = vpop.f32.mrb[0].mxu0
      %1206 = vmatprep.mubr.f32.mxu0 0.0
      %1207 = vmatmul.mubr.f32.gmra.mrb[0].mxu0 %v1105
      %v1208 = vpop.f32.mrb[0].mxu0
      %v1209 = vadd.f32 0.0, %v1208
      %v1210 = vpop.f32.mrb[0].mxu0
      %1211 = vdwg.mxu0
      %v1212 = vadd.f32 %v1056, %v1174
      %v1213 = vadd.f32 %v1057, %v1179
      %v1214 = vadd.f32 %v1058, %v1184
      %v1215 = vadd.f32 %v1059, %v1189
      %v1216 = vadd.f32 %v1060, %v1194
      %v1217 = vadd.f32 %v1061, %v1199
      %v1218 = vadd.f32 %v1062, %v1204
      %v1219 = vadd.f32 %v1063, %v1209
      %s1220 = scalar_lea.vmem %s288, 32
      %v1221 = vld [vmem:[%s1220] sm:$0xff]
      %v1222 = vld [vmem:[%s1220 + $0x10] sm:$0xff]
      %v1223 = vld [vmem:[%s1220 + $0x20] sm:$0xff]
      %v1224 = vld [vmem:[%s1220 + $0x30] sm:$0xff]
      %v1225 = vld [vmem:[%s1220 + $0x40] sm:$0xff]
      %v1226 = vld [vmem:[%s1220 + $0x50] sm:$0xff]
      %v1227 = vld [vmem:[%s1220 + $0x60] sm:$0xff]
      %v1228 = vld [vmem:[%s1220 + $0x70] sm:$0xff]
      %s1229 = scalar_lea.vmem %s1, 480
      %v1230 = vld [vmem:[%s1229] sm:$0xff]
      %v1231 = vld [vmem:[%s1229 + $0x8] sm:$0xff]
      %v1232 = vld [vmem:[%s1229 + $0x10] sm:$0xff]
      %v1233 = vld [vmem:[%s1229 + $0x18] sm:$0xff]
      %v1234 = vld [vmem:[%s1229 + $0x20] sm:$0xff]
      %v1235 = vld [vmem:[%s1229 + $0x28] sm:$0xff]
      %v1236 = vld [vmem:[%s1229 + $0x30] sm:$0xff]
      %v1237 = vld [vmem:[%s1229 + $0x38] sm:$0xff]
      %v1238 = vld [vmem:[%s1229 + $0x40] sm:$0xff]
      %v1239 = vld [vmem:[%s1229 + $0x48] sm:$0xff]
      %v1241 = vsel %vm336, %v1221, 0
      %v1244 = vsel %vm336, %v1222, 0
      %v1247 = vsel %vm336, %v1223, 0
      %v1250 = vsel %vm336, %v1224, 0
      %v1253 = vsel %vm336, %v1225, 0
      %v1256 = vsel %vm336, %v1226, 0
      %v1259 = vsel %vm336, %v1227, 0
      %v1262 = vsel %vm336, %v1228, 0
      %1264 = vmatprep.subr.mxu0 0.0
      %1265 = vmatpush1.msra.mxu0 %v1230
      %1266 = vmatprep.subr.mxu0 0.0
      %1267 = vmatpush1.msra.mxu0 %v1231
      %1268 = vmatprep.subr.mxu0 0.0
      %1269 = vmatpush1.msra.mxu0 %v1232
      %1270 = vmatprep.subr.mxu0 0.0
      %1271 = vmatpush1.msra.mxu0 %v1233
      %1272 = vmatprep.subr.mxu0 0.0
      %1273 = vmatpush1.msra.mxu0 %v1234
      %1274 = vmatprep.subr.mxu0 0.0
      %1275 = vmatpush1.msra.mxu0 %v1235
      %1276 = vmatprep.subr.mxu0 0.0
      %1277 = vmatpush1.msra.mxu0 %v1236
      %1278 = vmatprep.subr.mxu0 0.0
      %1279 = vmatpush1.msra.mxu0 %v1237
      %1280 = vmatprep.subr.mxu0 0.0
      %1281 = vmatpush1.msra.mxu0 %v1238
      %1282 = vmatprep.subr.mxu0 0.0
      %1283 = vmatpush1.msra.mxu0 %v1239
      %1284 = vmatprep.subr.mxu0 0.0
      %1285 = vmatpush1.msra.mxu0 0.0
      %1286 = vmatprep.subr.mxu0 0.0
      %1287 = vmatpush1.msra.mxu0 0.0
      %1288 = vmatprep.subr.mxu0 0.0
      %1289 = vmatpush1.msra.mxu0 0.0
      %1290 = vmatprep.subr.mxu0 0.0
      %1291 = vmatpush1.msra.mxu0 0.0
      %1292 = vmatprep.subr.mxu0 0.0
      %1293 = vmatpush1.msra.mxu0 0.0
      %1294 = vmatprep.subr.mxu0 0.0
      %1295 = vmatpush1.msra.mxu0 0.0
      %1296 = vmatprep.subr.mxu0 0.0
      %1297 = vmatpush1.msra.mxu0 0.0
      %1298 = vmatprep.subr.mxu0 0.0
      %1299 = vmatpush1.msra.mxu0 0.0
      %1300 = vmatprep.subr.mxu0 0.0
      %1301 = vmatpush1.msra.mxu0 0.0
      %1302 = vmatprep.subr.mxu0 0.0
      %1303 = vmatpush1.msra.mxu0 0.0
      %1304 = vmatprep.subr.mxu0 0.0
      %1305 = vmatpush1.msra.mxu0 0.0
      %1306 = vmatprep.subr.mxu0 0.0
      %1307 = vmatpush1.msra.mxu0 0.0
      %1308 = vmatprep.subr.mxu0 0.0
      %1309 = vmatpush1.msra.mxu0 0.0
      %1310 = vmatprep.subr.mxu0 0.0
      %1311 = vmatpush1.msra.mxu0 0.0
      %1312 = vmatprep.subr.mxu0 0.0
      %1313 = vmatpush1.msra.mxu0 0.0
      %1314 = vmatprep.subr.mxu0 0.0
      %1315 = vmatpush1.msra.mxu0 0.0
      %1316 = vmatprep.subr.mxu0 0.0
      %1317 = vmatpush1.msra.mxu0 0.0
      %1318 = vmatprep.subr.mxu0 0.0
      %1319 = vmatpush1.msra.mxu0 0.0
      %1320 = vmatprep.subr.mxu0 0.0
      %1321 = vmatpush1.msra.mxu0 0.0
      %1322 = vmatprep.subr.mxu0 0.0
      %1323 = vmatpush1.msra.mxu0 0.0
      %1324 = vmatprep.subr.mxu0 0.0
      %1325 = vmatpush1.msra.mxu0 0.0
      %1326 = vmatprep.subr.mxu0 0.0
      %1327 = vmatpush1.msra.mxu0 0.0
      %1328 = vmatprep.mubr.f32.mxu0 0.0
      %1329 = vmatmul.mubr.f32.gmra.mrb[0].mxu0 %v1241
      %v1330 = vpop.f32.mrb[0].mxu0
      %v1331 = vadd.f32 0.0, %v1330
      %v1332 = vpop.f32.mrb[0].mxu0
      %1333 = vmatprep.mubr.f32.mxu0 0.0
      %1334 = vmatmul.mubr.f32.gmra.mrb[0].mxu0 %v1244
      %v1335 = vpop.f32.mrb[0].mxu0
      %v1336 = vadd.f32 0.0, %v1335
      %v1337 = vpop.f32.mrb[0].mxu0
      %1338 = vmatprep.mubr.f32.mxu0 0.0
      %1339 = vmatmul.mubr.f32.gmra.mrb[0].mxu0 %v1247
      %v1340 = vpop.f32.mrb[0].mxu0
      %v1341 = vadd.f32 0.0, %v1340
      %v1342 = vpop.f32.mrb[0].mxu0
      %1343 = vmatprep.mubr.f32.mxu0 0.0
      %1344 = vmatmul.mubr.f32.gmra.mrb[0].mxu0 %v1250
      %v1345 = vpop.f32.mrb[0].mxu0
      %v1346 = vadd.f32 0.0, %v1345
      %v1347 = vpop.f32.mrb[0].mxu0
      %1348 = vmatprep.mubr.f32.mxu0 0.0
      %1349 = vmatmul.mubr.f32.gmra.mrb[0].mxu0 %v1253
      %v1350 = vpop.f32.mrb[0].mxu0
      %v1351 = vadd.f32 0.0, %v1350
      %v1352 = vpop.f32.mrb[0].mxu0
      %1353 = vmatprep.mubr.f32.mxu0 0.0
      %1354 = vmatmul.mubr.f32.gmra.mrb[0].mxu0 %v1256
      %v1355 = vpop.f32.mrb[0].mxu0
      %v1356 = vadd.f32 0.0, %v1355
      %v1357 = vpop.f32.mrb[0].mxu0
      %1358 = vmatprep.mubr.f32.mxu0 0.0
      %1359 = vmatmul.mubr.f32.gmra.mrb[0].mxu0 %v1259
      %v1360 = vpop.f32.mrb[0].mxu0
      %v1361 = vadd.f32 0.0, %v1360
      %v1362 = vpop.f32.mrb[0].mxu0
      %1363 = vmatprep.mubr.f32.mxu0 0.0
      %1364 = vmatmul.mubr.f32.gmra.mrb[0].mxu0 %v1262
      %v1365 = vpop.f32.mrb[0].mxu0
      %v1366 = vadd.f32 0.0, %v1365
      %v1367 = vpop.f32.mrb[0].mxu0
      %1368 = vdwg.mxu0
      %v1369 = vadd.f32 %v1212, %v1331
      %v1370 = vadd.f32 %v1213, %v1336
      %v1371 = vadd.f32 %v1214, %v1341
      %v1372 = vadd.f32 %v1215, %v1346
      %v1373 = vadd.f32 %v1216, %v1351
      %v1374 = vadd.f32 %v1217, %v1356
      %v1375 = vadd.f32 %v1218, %v1361
      %v1376 = vadd.f32 %v1219, %v1366
      %v1377 = vld [vmem:[%s1220 + $0x1] sm:$0xff]
      %v1378 = vld [vmem:[%s1220 + $0x11] sm:$0xff]
      %v1379 = vld [vmem:[%s1220 + $0x21] sm:$0xff]
      %v1380 = vld [vmem:[%s1220 + $0x31] sm:$0xff]
      %v1381 = vld [vmem:[%s1220 + $0x41] sm:$0xff]
      %v1382 = vld [vmem:[%s1220 + $0x51] sm:$0xff]
      %v1383 = vld [vmem:[%s1220 + $0x61] sm:$0xff]
      %v1384 = vld [vmem:[%s1220 + $0x71] sm:$0xff]
      %s1385 = scalar_lea.vmem %s1, 560
      %v1386 = vld [vmem:[%s1385] sm:$0xff]
      %v1387 = vld [vmem:[%s1385 + $0x8] sm:$0xff]
      %v1388 = vld [vmem:[%s1385 + $0x10] sm:$0xff]
      %v1389 = vld [vmem:[%s1385 + $0x18] sm:$0xff]
      %v1390 = vld [vmem:[%s1385 + $0x20] sm:$0xff]
      %v1391 = vld [vmem:[%s1385 + $0x28] sm:$0xff]
      %v1392 = vld [vmem:[%s1385 + $0x30] sm:$0xff]
      %v1393 = vld [vmem:[%s1385 + $0x38] sm:$0xff]
      %v1394 = vld [vmem:[%s1385 + $0x40] sm:$0xff]
      %v1395 = vld [vmem:[%s1385 + $0x48] sm:$0xff]
      %v1397 = vsel %vm336, %v1377, 0
      %v1400 = vsel %vm336, %v1378, 0
      %v1403 = vsel %vm336, %v1379, 0
      %v1406 = vsel %vm336, %v1380, 0
      %v1409 = vsel %vm336, %v1381, 0
      %v1412 = vsel %vm336, %v1382, 0
      %v1415 = vsel %vm336, %v1383, 0
      %v1418 = vsel %vm336, %v1384, 0
      %1420 = vmatprep.subr.mxu0 0.0
      %1421 = vmatpush1.msra.mxu0 %v1386
      %1422 = vmatprep.subr.mxu0 0.0
      %1423 = vmatpush1.msra.mxu0 %v1387
      %1424 = vmatprep.subr.mxu0 0.0
      %1425 = vmatpush1.msra.mxu0 %v1388
      %1426 = vmatprep.subr.mxu0 0.0
      %1427 = vmatpush1.msra.mxu0 %v1389
      %1428 = vmatprep.subr.mxu0 0.0
      %1429 = vmatpush1.msra.mxu0 %v1390
      %1430 = vmatprep.subr.mxu0 0.0
      %1431 = vmatpush1.msra.mxu0 %v1391
      %1432 = vmatprep.subr.mxu0 0.0
      %1433 = vmatpush1.msra.mxu0 %v1392
      %1434 = vmatprep.subr.mxu0 0.0
      %1435 = vmatpush1.msra.mxu0 %v1393
      %1436 = vmatprep.subr.mxu0 0.0
      %1437 = vmatpush1.msra.mxu0 %v1394
      %1438 = vmatprep.subr.mxu0 0.0
      %1439 = vmatpush1.msra.mxu0 %v1395
      %1440 = vmatprep.subr.mxu0 0.0
      %1441 = vmatpush1.msra.mxu0 0.0
      %1442 = vmatprep.subr.mxu0 0.0
      %1443 = vmatpush1.msra.mxu0 0.0
      %1444 = vmatprep.subr.mxu0 0.0
      %1445 = vmatpush1.msra.mxu0 0.0
      %1446 = vmatprep.subr.mxu0 0.0
      %1447 = vmatpush1.msra.mxu0 0.0
      %1448 = vmatprep.subr.mxu0 0.0
      %1449 = vmatpush1.msra.mxu0 0.0
      %1450 = vmatprep.subr.mxu0 0.0
      %1451 = vmatpush1.msra.mxu0 0.0
      %1452 = vmatprep.subr.mxu0 0.0
      %1453 = vmatpush1.msra.mxu0 0.0
      %1454 = vmatprep.subr.mxu0 0.0
      %1455 = vmatpush1.msra.mxu0 0.0
      %1456 = vmatprep.subr.mxu0 0.0
      %1457 = vmatpush1.msra.mxu0 0.0
      %1458 = vmatprep.subr.mxu0 0.0
      %1459 = vmatpush1.msra.mxu0 0.0
      %1460 = vmatprep.subr.mxu0 0.0
      %1461 = vmatpush1.msra.mxu0 0.0
      %1462 = vmatprep.subr.mxu0 0.0
      %1463 = vmatpush1.msra.mxu0 0.0
      %1464 = vmatprep.subr.mxu0 0.0
      %1465 = vmatpush1.msra.mxu0 0.0
      %1466 = vmatprep.subr.mxu0 0.0
      %1467 = vmatpush1.msra.mxu0 0.0
      %1468 = vmatprep.subr.mxu0 0.0
      %1469 = vmatpush1.msra.mxu0 0.0
      %1470 = vmatprep.subr.mxu0 0.0
      %1471 = vmatpush1.msra.mxu0 0.0
      %1472 = vmatprep.subr.mxu0 0.0
      %1473 = vmatpush1.msra.mxu0 0.0
      %1474 = vmatprep.subr.mxu0 0.0
      %1475 = vmatpush1.msra.mxu0 0.0
      %1476 = vmatprep.subr.mxu0 0.0
      %1477 = vmatpush1.msra.mxu0 0.0
      %1478 = vmatprep.subr.mxu0 0.0
      %1479 = vmatpush1.msra.mxu0 0.0
      %1480 = vmatprep.subr.mxu0 0.0
      %1481 = vmatpush1.msra.mxu0 0.0
      %1482 = vmatprep.subr.mxu0 0.0
      %1483 = vmatpush1.msra.mxu0 0.0
      %1484 = vmatprep.mubr.f32.mxu0 0.0
      %1485 = vmatmul.mubr.f32.gmra.mrb[0].mxu0 %v1397
      %v1486 = vpop.f32.mrb[0].mxu0
      %v1487 = vadd.f32 0.0, %v1486
      %v1488 = vpop.f32.mrb[0].mxu0
      %1489 = vmatprep.mubr.f32.mxu0 0.0
      %1490 = vmatmul.mubr.f32.gmra.mrb[0].mxu0 %v1400
      %v1491 = vpop.f32.mrb[0].mxu0
      %v1492 = vadd.f32 0.0, %v1491
      %v1493 = vpop.f32.mrb[0].mxu0
      %1494 = vmatprep.mubr.f32.mxu0 0.0
      %1495 = vmatmul.mubr.f32.gmra.mrb[0].mxu0 %v1403
      %v1496 = vpop.f32.mrb[0].mxu0
      %v1497 = vadd.f32 0.0, %v1496
      %v1498 = vpop.f32.mrb[0].mxu0
      %1499 = vmatprep.mubr.f32.mxu0 0.0
      %1500 = vmatmul.mubr.f32.gmra.mrb[0].mxu0 %v1406
      %v1501 = vpop.f32.mrb[0].mxu0
      %v1502 = vadd.f32 0.0, %v1501
      %v1503 = vpop.f32.mrb[0].mxu0
      %1504 = vmatprep.mubr.f32.mxu0 0.0
      %1505 = vmatmul.mubr.f32.gmra.mrb[0].mxu0 %v1409
      %v1506 = vpop.f32.mrb[0].mxu0
      %v1507 = vadd.f32 0.0, %v1506
      %v1508 = vpop.f32.mrb[0].mxu0
      %1509 = vmatprep.mubr.f32.mxu0 0.0
      %1510 = vmatmul.mubr.f32.gmra.mrb[0].mxu0 %v1412
      %v1511 = vpop.f32.mrb[0].mxu0
      %v1512 = vadd.f32 0.0, %v1511
      %v1513 = vpop.f32.mrb[0].mxu0
      %1514 = vmatprep.mubr.f32.mxu0 0.0
      %1515 = vmatmul.mubr.f32.gmra.mrb[0].mxu0 %v1415
      %v1516 = vpop.f32.mrb[0].mxu0
      %v1517 = vadd.f32 0.0, %v1516
      %v1518 = vpop.f32.mrb[0].mxu0
      %1519 = vmatprep.mubr.f32.mxu0 0.0
      %1520 = vmatmul.mubr.f32.gmra.mrb[0].mxu0 %v1418
      %v1521 = vpop.f32.mrb[0].mxu0
      %v1522 = vadd.f32 0.0, %v1521
      %v1523 = vpop.f32.mrb[0].mxu0
      %1524 = vdwg.mxu0
      %v1525 = vadd.f32 %v1369, %v1487
      %v1526 = vadd.f32 %v1370, %v1492
      %v1527 = vadd.f32 %v1371, %v1497
      %v1528 = vadd.f32 %v1372, %v1502
      %v1529 = vadd.f32 %v1373, %v1507
      %v1530 = vadd.f32 %v1374, %v1512
      %v1531 = vadd.f32 %v1375, %v1517
      %v1532 = vadd.f32 %v1376, %v1522
      %v1533 = vld [vmem:[%s1220 + $0x2] sm:$0xff]
      %v1534 = vld [vmem:[%s1220 + $0x12] sm:$0xff]
      %v1535 = vld [vmem:[%s1220 + $0x22] sm:$0xff]
      %v1536 = vld [vmem:[%s1220 + $0x32] sm:$0xff]
      %v1537 = vld [vmem:[%s1220 + $0x42] sm:$0xff]
      %v1538 = vld [vmem:[%s1220 + $0x52] sm:$0xff]
      %v1539 = vld [vmem:[%s1220 + $0x62] sm:$0xff]
      %v1540 = vld [vmem:[%s1220 + $0x72] sm:$0xff]
      %s1541 = scalar_lea.vmem %s1, 640
      %v1542 = vld [vmem:[%s1541] sm:$0xff]
      %v1543 = vld [vmem:[%s1541 + $0x8] sm:$0xff]
      %v1544 = vld [vmem:[%s1541 + $0x10] sm:$0xff]
      %v1545 = vld [vmem:[%s1541 + $0x18] sm:$0xff]
      %v1546 = vld [vmem:[%s1541 + $0x20] sm:$0xff]
      %v1547 = vld [vmem:[%s1541 + $0x28] sm:$0xff]
      %v1548 = vld [vmem:[%s1541 + $0x30] sm:$0xff]
      %v1549 = vld [vmem:[%s1541 + $0x38] sm:$0xff]
      %v1550 = vld [vmem:[%s1541 + $0x40] sm:$0xff]
      %v1551 = vld [vmem:[%s1541 + $0x48] sm:$0xff]
      %v1553 = vsel %vm336, %v1533, 0
      %v1556 = vsel %vm336, %v1534, 0
      %v1559 = vsel %vm336, %v1535, 0
      %v1562 = vsel %vm336, %v1536, 0
      %v1565 = vsel %vm336, %v1537, 0
      %v1568 = vsel %vm336, %v1538, 0
      %v1571 = vsel %vm336, %v1539, 0
      %v1574 = vsel %vm336, %v1540, 0
      %1576 = vmatprep.subr.mxu0 0.0
      %1577 = vmatpush1.msra.mxu0 %v1542
      %1578 = vmatprep.subr.mxu0 0.0
      %1579 = vmatpush1.msra.mxu0 %v1543
      %1580 = vmatprep.subr.mxu0 0.0
      %1581 = vmatpush1.msra.mxu0 %v1544
      %1582 = vmatprep.subr.mxu0 0.0
      %1583 = vmatpush1.msra.mxu0 %v1545
      %1584 = vmatprep.subr.mxu0 0.0
      %1585 = vmatpush1.msra.mxu0 %v1546
      %1586 = vmatprep.subr.mxu0 0.0
      %1587 = vmatpush1.msra.mxu0 %v1547
      %1588 = vmatprep.subr.mxu0 0.0
      %1589 = vmatpush1.msra.mxu0 %v1548
      %1590 = vmatprep.subr.mxu0 0.0
      %1591 = vmatpush1.msra.mxu0 %v1549
      %1592 = vmatprep.subr.mxu0 0.0
      %1593 = vmatpush1.msra.mxu0 %v1550
      %1594 = vmatprep.subr.mxu0 0.0
      %1595 = vmatpush1.msra.mxu0 %v1551
      %1596 = vmatprep.subr.mxu0 0.0
      %1597 = vmatpush1.msra.mxu0 0.0
      %1598 = vmatprep.subr.mxu0 0.0
      %1599 = vmatpush1.msra.mxu0 0.0
      %1600 = vmatprep.subr.mxu0 0.0
      %1601 = vmatpush1.msra.mxu0 0.0
      %1602 = vmatprep.subr.mxu0 0.0
      %1603 = vmatpush1.msra.mxu0 0.0
      %1604 = vmatprep.subr.mxu0 0.0
      %1605 = vmatpush1.msra.mxu0 0.0
      %1606 = vmatprep.subr.mxu0 0.0
      %1607 = vmatpush1.msra.mxu0 0.0
      %1608 = vmatprep.subr.mxu0 0.0
      %1609 = vmatpush1.msra.mxu0 0.0
      %1610 = vmatprep.subr.mxu0 0.0
      %1611 = vmatpush1.msra.mxu0 0.0
      %1612 = vmatprep.subr.mxu0 0.0
      %1613 = vmatpush1.msra.mxu0 0.0
      %1614 = vmatprep.subr.mxu0 0.0
      %1615 = vmatpush1.msra.mxu0 0.0
      %1616 = vmatprep.subr.mxu0 0.0
      %1617 = vmatpush1.msra.mxu0 0.0
      %1618 = vmatprep.subr.mxu0 0.0
      %1619 = vmatpush1.msra.mxu0 0.0
      %1620 = vmatprep.subr.mxu0 0.0
      %1621 = vmatpush1.msra.mxu0 0.0
      %1622 = vmatprep.subr.mxu0 0.0
      %1623 = vmatpush1.msra.mxu0 0.0
      %1624 = vmatprep.subr.mxu0 0.0
      %1625 = vmatpush1.msra.mxu0 0.0
      %1626 = vmatprep.subr.mxu0 0.0
      %1627 = vmatpush1.msra.mxu0 0.0
      %1628 = vmatprep.subr.mxu0 0.0
      %1629 = vmatpush1.msra.mxu0 0.0
      %1630 = vmatprep.subr.mxu0 0.0
      %1631 = vmatpush1.msra.mxu0 0.0
      %1632 = vmatprep.subr.mxu0 0.0
      %1633 = vmatpush1.msra.mxu0 0.0
      %1634 = vmatprep.subr.mxu0 0.0
      %1635 = vmatpush1.msra.mxu0 0.0
      %1636 = vmatprep.subr.mxu0 0.0
      %1637 = vmatpush1.msra.mxu0 0.0
      %1638 = vmatprep.subr.mxu0 0.0
      %1639 = vmatpush1.msra.mxu0 0.0
      %1640 = vmatprep.mubr.f32.mxu0 0.0
      %1641 = vmatmul.mubr.f32.gmra.mrb[0].mxu0 %v1553
      %v1642 = vpop.f32.mrb[0].mxu0
      %v1643 = vadd.f32 0.0, %v1642
      %v1644 = vpop.f32.mrb[0].mxu0
      %1645 = vmatprep.mubr.f32.mxu0 0.0
      %1646 = vmatmul.mubr.f32.gmra.mrb[0].mxu0 %v1556
      %v1647 = vpop.f32.mrb[0].mxu0
      %v1648 = vadd.f32 0.0, %v1647
      %v1649 = vpop.f32.mrb[0].mxu0
      %1650 = vmatprep.mubr.f32.mxu0 0.0
      %1651 = vmatmul.mubr.f32.gmra.mrb[0].mxu0 %v1559
      %v1652 = vpop.f32.mrb[0].mxu0
      %v1653 = vadd.f32 0.0, %v1652
      %v1654 = vpop.f32.mrb[0].mxu0
      %1655 = vmatprep.mubr.f32.mxu0 0.0
      %1656 = vmatmul.mubr.f32.gmra.mrb[0].mxu0 %v1562
      %v1657 = vpop.f32.mrb[0].mxu0
      %v1658 = vadd.f32 0.0, %v1657
      %v1659 = vpop.f32.mrb[0].mxu0
      %1660 = vmatprep.mubr.f32.mxu0 0.0
      %1661 = vmatmul.mubr.f32.gmra.mrb[0].mxu0 %v1565
      %v1662 = vpop.f32.mrb[0].mxu0
      %v1663 = vadd.f32 0.0, %v1662
      %v1664 = vpop.f32.mrb[0].mxu0
      %1665 = vmatprep.mubr.f32.mxu0 0.0
      %1666 = vmatmul.mubr.f32.gmra.mrb[0].mxu0 %v1568
      %v1667 = vpop.f32.mrb[0].mxu0
      %v1668 = vadd.f32 0.0, %v1667
      %v1669 = vpop.f32.mrb[0].mxu0
      %1670 = vmatprep.mubr.f32.mxu0 0.0
      %1671 = vmatmul.mubr.f32.gmra.mrb[0].mxu0 %v1571
      %v1672 = vpop.f32.mrb[0].mxu0
      %v1673 = vadd.f32 0.0, %v1672
      %v1674 = vpop.f32.mrb[0].mxu0
      %1675 = vmatprep.mubr.f32.mxu0 0.0
      %1676 = vmatmul.mubr.f32.gmra.mrb[0].mxu0 %v1574
      %v1677 = vpop.f32.mrb[0].mxu0
      %v1678 = vadd.f32 0.0, %v1677
      %v1679 = vpop.f32.mrb[0].mxu0
      %1680 = vdwg.mxu0
      %v1681 = vadd.f32 %v1525, %v1643
      %v1682 = vadd.f32 %v1526, %v1648
      %v1683 = vadd.f32 %v1527, %v1653
      %v1684 = vadd.f32 %v1528, %v1658
      %v1685 = vadd.f32 %v1529, %v1663
      %v1686 = vadd.f32 %v1530, %v1668
      %v1687 = vadd.f32 %v1531, %v1673
      %v1688 = vadd.f32 %v1532, %v1678
      %v1689 = vld [vmem:[%s2] sm:$0x1]
      %v1691 = vlaneseq
      %v1692 = vshrl.u32 %v1691, 7
      %v1693 = vsub.s32 0, %v1692
      %v1694 = vrot.slane %v1689, %v1693
      %v1696 = vadd.f32 %v1681, %v1694
      %v1697 = vadd.f32 %v1682, %v1694
      %v1698 = vadd.f32 %v1683, %v1694
      %v1699 = vadd.f32 %v1684, %v1694
      %v1700 = vadd.f32 %v1685, %v1694
      %v1701 = vadd.f32 %v1686, %v1694
      %v1702 = vadd.f32 %v1687, %v1694
      %v1703 = vadd.f32 %v1688, %v1694
      %v1704 = vld [vmem:[%s293] sm:$0xff]
      %v1705 = vld [vmem:[%s293 + $0x8] sm:$0xff]
      %v1706 = vld [vmem:[%s293 + $0x10] sm:$0xff]
      %v1707 = vld [vmem:[%s293 + $0x18] sm:$0xff]
      %v1708 = vld [vmem:[%s293 + $0x20] sm:$0xff]
      %v1709 = vld [vmem:[%s293 + $0x28] sm:$0xff]
      %v1710 = vld [vmem:[%s293 + $0x30] sm:$0xff]
      %v1711 = vld [vmem:[%s293 + $0x38] sm:$0xff]
      %v1712 = vld [vmem:[%s4] sm:$0xff]
      %vm1713 = vcmask 64512
      %v1715 = vsel %vm1713, %v1704, 0
      %v1718 = vsel %vm1713, %v1705, 0
      %v1721 = vsel %vm1713, %v1706, 0
      %v1724 = vsel %vm1713, %v1707, 0
      %v1727 = vsel %vm1713, %v1708, 0
      %v1730 = vsel %vm1713, %v1709, 0
      %v1733 = vsel %vm1713, %v1710, 0
      %v1736 = vsel %vm1713, %v1711, 0
      %1738 = vmatprep.subr.mxu0 0.0
      %1739 = vmatpush1.msra.mxu0 %v1712
      %1740 = vmatprep.subr.mxu0 0.0
      %1741 = vmatpush1.msra.mxu0 0.0
      %1742 = vmatprep.subr.mxu0 0.0
      %1743 = vmatpush1.msra.mxu0 0.0
      %1744 = vmatprep.subr.mxu0 0.0
      %1745 = vmatpush1.msra.mxu0 0.0
      %1746 = vmatprep.subr.mxu0 0.0
      %1747 = vmatpush1.msra.mxu0 0.0
      %1748 = vmatprep.subr.mxu0 0.0
      %1749 = vmatpush1.msra.mxu0 0.0
      %1750 = vmatprep.subr.mxu0 0.0
      %1751 = vmatpush1.msra.mxu0 0.0
      %1752 = vmatprep.subr.mxu0 0.0
      %1753 = vmatpush1.msra.mxu0 0.0
      %1754 = vmatprep.subr.mxu0 0.0
      %1755 = vmatpush1.msra.mxu0 0.0
      %1756 = vmatprep.subr.mxu0 0.0
      %1757 = vmatpush1.msra.mxu0 0.0
      %1758 = vmatprep.subr.mxu0 0.0
      %1759 = vmatpush1.msra.mxu0 0.0
      %1760 = vmatprep.subr.mxu0 0.0
      %1761 = vmatpush1.msra.mxu0 0.0
      %1762 = vmatprep.subr.mxu0 0.0
      %1763 = vmatpush1.msra.mxu0 0.0
      %1764 = vmatprep.subr.mxu0 0.0
      %1765 = vmatpush1.msra.mxu0 0.0
      %1766 = vmatprep.subr.mxu0 0.0
      %1767 = vmatpush1.msra.mxu0 0.0
      %1768 = vmatprep.subr.mxu0 0.0
      %1769 = vmatpush1.msra.mxu0 0.0
      %1770 = vmatprep.subr.mxu0 0.0
      %1771 = vmatpush1.msra.mxu0 0.0
      %1772 = vmatprep.subr.mxu0 0.0
      %1773 = vmatpush1.msra.mxu0 0.0
      %1774 = vmatprep.subr.mxu0 0.0
      %1775 = vmatpush1.msra.mxu0 0.0
      %1776 = vmatprep.subr.mxu0 0.0
      %1777 = vmatpush1.msra.mxu0 0.0
      %1778 = vmatprep.subr.mxu0 0.0
      %1779 = vmatpush1.msra.mxu0 0.0
      %1780 = vmatprep.subr.mxu0 0.0
      %1781 = vmatpush1.msra.mxu0 0.0
      %1782 = vmatprep.subr.mxu0 0.0
      %1783 = vmatpush1.msra.mxu0 0.0
      %1784 = vmatprep.subr.mxu0 0.0
      %1785 = vmatpush1.msra.mxu0 0.0
      %1786 = vmatprep.subr.mxu0 0.0
      %1787 = vmatpush1.msra.mxu0 0.0
      %1788 = vmatprep.subr.mxu0 0.0
      %1789 = vmatpush1.msra.mxu0 0.0
      %1790 = vmatprep.subr.mxu0 0.0
      %1791 = vmatpush1.msra.mxu0 0.0
      %1792 = vmatprep.subr.mxu0 0.0
      %1793 = vmatpush1.msra.mxu0 0.0
      %1794 = vmatprep.subr.mxu0 0.0
      %1795 = vmatpush1.msra.mxu0 0.0
      %1796 = vmatprep.subr.mxu0 0.0
      %1797 = vmatpush1.msra.mxu0 0.0
      %1798 = vmatprep.subr.mxu0 0.0
      %1799 = vmatpush1.msra.mxu0 0.0
      %1800 = vmatprep.subr.mxu0 0.0
      %1801 = vmatpush1.msra.mxu0 0.0
      %1802 = vmatprep.mubr.f32.mxu0 0.0
      %1803 = vmatmul.mubr.f32.gmra.mrb[0].mxu0 %v1715
      %v1804 = vpop.f32.mrb[0].mxu0
      %v1805 = vadd.f32 0.0, %v1804
      %v1806 = vpop.f32.mrb[0].mxu0
      %1807 = vmatprep.mubr.f32.mxu0 0.0
      %1808 = vmatmul.mubr.f32.gmra.mrb[0].mxu0 %v1718
      %v1809 = vpop.f32.mrb[0].mxu0
      %v1810 = vadd.f32 0.0, %v1809
      %v1811 = vpop.f32.mrb[0].mxu0
      %1812 = vmatprep.mubr.f32.mxu0 0.0
      %1813 = vmatmul.mubr.f32.gmra.mrb[0].mxu0 %v1721
      %v1814 = vpop.f32.mrb[0].mxu0
      %v1815 = vadd.f32 0.0, %v1814
      %v1816 = vpop.f32.mrb[0].mxu0
      %1817 = vmatprep.mubr.f32.mxu0 0.0
      %1818 = vmatmul.mubr.f32.gmra.mrb[0].mxu0 %v1724
      %v1819 = vpop.f32.mrb[0].mxu0
      %v1820 = vadd.f32 0.0, %v1819
      %v1821 = vpop.f32.mrb[0].mxu0
      %1822 = vmatprep.mubr.f32.mxu0 0.0
      %1823 = vmatmul.mubr.f32.gmra.mrb[0].mxu0 %v1727
      %v1824 = vpop.f32.mrb[0].mxu0
      %v1825 = vadd.f32 0.0, %v1824
      %v1826 = vpop.f32.mrb[0].mxu0
      %1827 = vmatprep.mubr.f32.mxu0 0.0
      %1828 = vmatmul.mubr.f32.gmra.mrb[0].mxu0 %v1730
      %v1829 = vpop.f32.mrb[0].mxu0
      %v1830 = vadd.f32 0.0, %v1829
      %v1831 = vpop.f32.mrb[0].mxu0
      %1832 = vmatprep.mubr.f32.mxu0 0.0
      %1833 = vmatmul.mubr.f32.gmra.mrb[0].mxu0 %v1733
      %v1834 = vpop.f32.mrb[0].mxu0
      %v1835 = vadd.f32 0.0, %v1834
      %v1836 = vpop.f32.mrb[0].mxu0
      %1837 = vmatprep.mubr.f32.mxu0 0.0
      %1838 = vmatmul.mubr.f32.gmra.mrb[0].mxu0 %v1736
      %v1839 = vpop.f32.mrb[0].mxu0
      %v1840 = vadd.f32 0.0, %v1839
      %v1841 = vpop.f32.mrb[0].mxu0
      %1842 = vdwg.mxu0
      %v1843 = vxor.u32 %v1805, 2147483648
      %v1844 = vxor.u32 %v1810, 2147483648
      %v1845 = vxor.u32 %v1815, 2147483648
      %v1846 = vxor.u32 %v1820, 2147483648
      %v1847 = vxor.u32 %v1825, 2147483648
      %v1848 = vxor.u32 %v1830, 2147483648
      %v1849 = vxor.u32 %v1835, 2147483648
      %v1850 = vxor.u32 %v1840, 2147483648
      %v1851 = vmul.f32 %v1843, 1.442695
      %v1852 = vpow.pop %v1851
      %v1853 = vmul.f32 %v1844, 1.442695
      %v1854 = vpow.pop %v1853
      %v1855 = vmul.f32 %v1845, 1.442695
      %v1856 = vpow.pop %v1855
      %v1857 = vmul.f32 %v1846, 1.442695
      %v1858 = vpow.pop %v1857
      %v1859 = vmul.f32 %v1847, 1.442695
      %v1860 = vpow.pop %v1859
      %v1861 = vmul.f32 %v1848, 1.442695
      %v1862 = vpow.pop %v1861
      %v1863 = vmul.f32 %v1849, 1.442695
      %v1864 = vpow.pop %v1863
      %v1865 = vmul.f32 %v1850, 1.442695
      %v1866 = vpow.pop %v1865
      %v1867 = vadd.f32 %v1852, 1.0
      %v1868 = vadd.f32 %v1854, 1.0
      %v1869 = vadd.f32 %v1856, 1.0
      %v1870 = vadd.f32 %v1858, 1.0
      %v1871 = vadd.f32 %v1860, 1.0
      %v1872 = vadd.f32 %v1862, 1.0
      %v1873 = vadd.f32 %v1864, 1.0
      %v1874 = vadd.f32 %v1866, 1.0
      %v1875 = vrcp.pop %v1867
      %v1876 = vmul.f32 1.0, %v1875
      %v1877 = vrcp.pop %v1868
      %v1878 = vmul.f32 1.0, %v1877
      %v1879 = vrcp.pop %v1869
      %v1880 = vmul.f32 1.0, %v1879
      %v1881 = vrcp.pop %v1870
      %v1882 = vmul.f32 1.0, %v1881
      %v1883 = vrcp.pop %v1871
      %v1884 = vmul.f32 1.0, %v1883
      %v1885 = vrcp.pop %v1872
      %v1886 = vmul.f32 1.0, %v1885
      %v1887 = vrcp.pop %v1873
      %v1888 = vmul.f32 1.0, %v1887
      %v1889 = vrcp.pop %v1874
      %v1890 = vmul.f32 1.0, %v1889
      %v1891 = vmul.f32 %v1696, %v1876
      %v1892 = vmul.f32 %v1697, %v1878
      %v1893 = vmul.f32 %v1698, %v1880
      %v1894 = vmul.f32 %v1699, %v1882
      %v1895 = vmul.f32 %v1700, %v1884
      %v1896 = vmul.f32 %v1701, %v1886
      %v1897 = vmul.f32 %v1702, %v1888
      %v1898 = vmul.f32 %v1703, %v1890
      %v1899 = vmax.f32 %v1891, 0.0
      %v1900 = vmax.f32 %v1892, 0.0
      %v1901 = vmax.f32 %v1893, 0.0
      %v1902 = vmax.f32 %v1894, 0.0
      %v1903 = vmax.f32 %v1895, 0.0
      %v1904 = vmax.f32 %v1896, 0.0
      %v1905 = vmax.f32 %v1897, 0.0
      %v1906 = vmax.f32 %v1898, 0.0
      %v1907 = vld [vmem:[%s5] sm:$0xff]
      %v1908 = vld [vmem:[%s5 + $0x8] sm:$0xff]
      %vm1909 = vcmask 523264
      %v1911 = vsel %vm1909, %v1907, 0
      %v1914 = vsel %vm1909, %v1908, 0
      %1916 = vmatprep.subr.mxu0 0.0
      %1917 = vmatpush1.msra.mxu0 %v1899
      %1918 = vmatprep.subr.mxu0 0.0
      %1919 = vmatpush1.msra.mxu0 %v1900
      %1920 = vmatprep.subr.mxu0 0.0
      %1921 = vmatpush1.msra.mxu0 %v1901
      %1922 = vmatprep.subr.mxu0 0.0
      %1923 = vmatpush1.msra.mxu0 %v1902
      %1924 = vmatprep.subr.mxu0 0.0
      %1925 = vmatpush1.msra.mxu0 %v1903
      %1926 = vmatprep.subr.mxu0 0.0
      %1927 = vmatpush1.msra.mxu0 %v1904
      %1928 = vmatprep.subr.mxu0 0.0
      %1929 = vmatpush1.msra.mxu0 %v1905
      %1930 = vmatprep.subr.mxu0 0.0
      %1931 = vmatpush1.msra.mxu0 %v1906
      %1932 = vmatprep.subr.mxu0 0.0
      %1933 = vmatpush1.msra.mxu0 0.0
      %1934 = vmatprep.subr.mxu0 0.0
      %1935 = vmatpush1.msra.mxu0 0.0
      %1936 = vmatprep.subr.mxu0 0.0
      %1937 = vmatpush1.msra.mxu0 0.0
      %1938 = vmatprep.subr.mxu0 0.0
      %1939 = vmatpush1.msra.mxu0 0.0
      %1940 = vmatprep.subr.mxu0 0.0
      %1941 = vmatpush1.msra.mxu0 0.0
      %1942 = vmatprep.subr.mxu0 0.0
      %1943 = vmatpush1.msra.mxu0 0.0
      %1944 = vmatprep.subr.mxu0 0.0
      %1945 = vmatpush1.msra.mxu0 0.0
      %1946 = vmatprep.subr.mxu0 0.0
      %1947 = vmatpush1.msra.mxu0 0.0
      %1948 = vmatprep.subr.mxu0 0.0
      %1949 = vmatpush1.msra.mxu0 0.0
      %1950 = vmatprep.subr.mxu0 0.0
      %1951 = vmatpush1.msra.mxu0 0.0
      %1952 = vmatprep.subr.mxu0 0.0
      %1953 = vmatpush1.msra.mxu0 0.0
      %1954 = vmatprep.subr.mxu0 0.0
      %1955 = vmatpush1.msra.mxu0 0.0
      %1956 = vmatprep.subr.mxu0 0.0
      %1957 = vmatpush1.msra.mxu0 0.0
      %1958 = vmatprep.subr.mxu0 0.0
      %1959 = vmatpush1.msra.mxu0 0.0
      %1960 = vmatprep.subr.mxu0 0.0
      %1961 = vmatpush1.msra.mxu0 0.0
      %1962 = vmatprep.subr.mxu0 0.0
      %1963 = vmatpush1.msra.mxu0 0.0
      %1964 = vmatprep.subr.mxu0 0.0
      %1965 = vmatpush1.msra.mxu0 0.0
      %1966 = vmatprep.subr.mxu0 0.0
      %1967 = vmatpush1.msra.mxu0 0.0
      %1968 = vmatprep.subr.mxu0 0.0
      %1969 = vmatpush1.msra.mxu0 0.0
      %1970 = vmatprep.subr.mxu0 0.0
      %1971 = vmatpush1.msra.mxu0 0.0
      %1972 = vmatprep.subr.mxu0 0.0
      %1973 = vmatpush1.msra.mxu0 0.0
      %1974 = vmatprep.subr.mxu0 0.0
      %1975 = vmatpush1.msra.mxu0 0.0
      %1976 = vmatprep.subr.mxu0 0.0
      %1977 = vmatpush1.msra.mxu0 0.0
      %1978 = vmatprep.subr.mxu0 0.0
      %1979 = vmatpush1.msra.mxu0 0.0
      %1980 = vmatprep.mubr.f32.mxu0 0.0
      %1981 = vmatmul.mubr.f32.gmra.mrb[0].mxu0 %v1911
      %v1982 = vpop.f32.mrb[0].mxu0
      %v1983 = vadd.f32 0.0, %v1982
      %v1984 = vpop.f32.mrb[0].mxu0
      %1985 = vmatprep.mubr.f32.mxu0 0.0
      %1986 = vmatmul.mubr.f32.gmra.mrb[0].mxu0 %v1914
      %v1987 = vpop.f32.mrb[0].mxu0
      %v1988 = vadd.f32 0.0, %v1987
      %v1989 = vpop.f32.mrb[0].mxu0
      %1990 = vdwg.mxu0
      %s1991 = scalar_lea.vmem %s5, 16
      %v1992 = vld [vmem:[%s1991] sm:$0xff]
      %v1993 = vld [vmem:[%s1991 + $0x8] sm:$0xff]
      %v1995 = vsel %vm1909, %v1992, 0
      %v1998 = vsel %vm1909, %v1993, 0
      %2000 = vmatprep.subr.mxu0 0.0
      %2001 = vmatpush1.msra.mxu0 %v1899
      %2002 = vmatprep.subr.mxu0 0.0
      %2003 = vmatpush1.msra.mxu0 %v1900
      %2004 = vmatprep.subr.mxu0 0.0
      %2005 = vmatpush1.msra.mxu0 %v1901
      %2006 = vmatprep.subr.mxu0 0.0
      %2007 = vmatpush1.msra.mxu0 %v1902
      %2008 = vmatprep.subr.mxu0 0.0
      %2009 = vmatpush1.msra.mxu0 %v1903
      %2010 = vmatprep.subr.mxu0 0.0
      %2011 = vmatpush1.msra.mxu0 %v1904
      %2012 = vmatprep.subr.mxu0 0.0
      %2013 = vmatpush1.msra.mxu0 %v1905
      %2014 = vmatprep.subr.mxu0 0.0
      %2015 = vmatpush1.msra.mxu0 %v1906
      %2016 = vmatprep.subr.mxu0 0.0
      %2017 = vmatpush1.msra.mxu0 0.0
      %2018 = vmatprep.subr.mxu0 0.0
      %2019 = vmatpush1.msra.mxu0 0.0
      %2020 = vmatprep.subr.mxu0 0.0
      %2021 = vmatpush1.msra.mxu0 0.0
      %2022 = vmatprep.subr.mxu0 0.0
      %2023 = vmatpush1.msra.mxu0 0.0
      %2024 = vmatprep.subr.mxu0 0.0
      %2025 = vmatpush1.msra.mxu0 0.0
      %2026 = vmatprep.subr.mxu0 0.0
      %2027 = vmatpush1.msra.mxu0 0.0
      %2028 = vmatprep.subr.mxu0 0.0
      %2029 = vmatpush1.msra.mxu0 0.0
      %2030 = vmatprep.subr.mxu0 0.0
      %2031 = vmatpush1.msra.mxu0 0.0
      %2032 = vmatprep.subr.mxu0 0.0
      %2033 = vmatpush1.msra.mxu0 0.0
      %2034 = vmatprep.subr.mxu0 0.0
      %2035 = vmatpush1.msra.mxu0 0.0
      %2036 = vmatprep.subr.mxu0 0.0
      %2037 = vmatpush1.msra.mxu0 0.0
      %2038 = vmatprep.subr.mxu0 0.0
      %2039 = vmatpush1.msra.mxu0 0.0
      %2040 = vmatprep.subr.mxu0 0.0
      %2041 = vmatpush1.msra.mxu0 0.0
      %2042 = vmatprep.subr.mxu0 0.0
      %2043 = vmatpush1.msra.mxu0 0.0
      %2044 = vmatprep.subr.mxu0 0.0
      %2045 = vmatpush1.msra.mxu0 0.0
      %2046 = vmatprep.subr.mxu0 0.0
      %2047 = vmatpush1.msra.mxu0 0.0
      %2048 = vmatprep.subr.mxu0 0.0
      %2049 = vmatpush1.msra.mxu0 0.0
      %2050 = vmatprep.subr.mxu0 0.0
      %2051 = vmatpush1.msra.mxu0 0.0
      %2052 = vmatprep.subr.mxu0 0.0
      %2053 = vmatpush1.msra.mxu0 0.0
      %2054 = vmatprep.subr.mxu0 0.0
      %2055 = vmatpush1.msra.mxu0 0.0
      %2056 = vmatprep.subr.mxu0 0.0
      %2057 = vmatpush1.msra.mxu0 0.0
      %2058 = vmatprep.subr.mxu0 0.0
      %2059 = vmatpush1.msra.mxu0 0.0
      %2060 = vmatprep.subr.mxu0 0.0
      %2061 = vmatpush1.msra.mxu0 0.0
      %2062 = vmatprep.subr.mxu0 0.0
      %2063 = vmatpush1.msra.mxu0 0.0
      %2064 = vmatprep.mubr.f32.mxu0 0.0
      %2065 = vmatmul.mubr.f32.gmra.mrb[0].mxu0 %v1995
      %v2066 = vpop.f32.mrb[0].mxu0
      %v2067 = vadd.f32 0.0, %v2066
      %v2068 = vpop.f32.mrb[0].mxu0
      %2069 = vmatprep.mubr.f32.mxu0 0.0
      %2070 = vmatmul.mubr.f32.gmra.mrb[0].mxu0 %v1998
      %v2071 = vpop.f32.mrb[0].mxu0
      %v2072 = vadd.f32 0.0, %v2071
      %v2073 = vpop.f32.mrb[0].mxu0
      %2074 = vdwg.mxu0
      %v2075 = vmax.f32 %v1983, %v2067
      %v2076 = vmax.f32 %v1988, %v2072
      %s2077 = scalar_lea.vmem %s5, 32
      %v2078 = vld [vmem:[%s2077] sm:$0xff]
      %v2079 = vld [vmem:[%s2077 + $0x8] sm:$0xff]
      %v2081 = vsel %vm1909, %v2078, 0
      %v2084 = vsel %vm1909, %v2079, 0
      %2086 = vmatprep.subr.mxu0 0.0
      %2087 = vmatpush1.msra.mxu0 %v1899
      %2088 = vmatprep.subr.mxu0 0.0
      %2089 = vmatpush1.msra.mxu0 %v1900
      %2090 = vmatprep.subr.mxu0 0.0
      %2091 = vmatpush1.msra.mxu0 %v1901
      %2092 = vmatprep.subr.mxu0 0.0
      %2093 = vmatpush1.msra.mxu0 %v1902
      %2094 = vmatprep.subr.mxu0 0.0
      %2095 = vmatpush1.msra.mxu0 %v1903
      %2096 = vmatprep.subr.mxu0 0.0
      %2097 = vmatpush1.msra.mxu0 %v1904
      %2098 = vmatprep.subr.mxu0 0.0
      %2099 = vmatpush1.msra.mxu0 %v1905
      %2100 = vmatprep.subr.mxu0 0.0
      %2101 = vmatpush1.msra.mxu0 %v1906
      %2102 = vmatprep.subr.mxu0 0.0
      %2103 = vmatpush1.msra.mxu0 0.0
      %2104 = vmatprep.subr.mxu0 0.0
      %2105 = vmatpush1.msra.mxu0 0.0
      %2106 = vmatprep.subr.mxu0 0.0
      %2107 = vmatpush1.msra.mxu0 0.0
      %2108 = vmatprep.subr.mxu0 0.0
      %2109 = vmatpush1.msra.mxu0 0.0
      %2110 = vmatprep.subr.mxu0 0.0
      %2111 = vmatpush1.msra.mxu0 0.0
      %2112 = vmatprep.subr.mxu0 0.0
      %2113 = vmatpush1.msra.mxu0 0.0
      %2114 = vmatprep.subr.mxu0 0.0
      %2115 = vmatpush1.msra.mxu0 0.0
      %2116 = vmatprep.subr.mxu0 0.0
      %2117 = vmatpush1.msra.mxu0 0.0
      %2118 = vmatprep.subr.mxu0 0.0
      %2119 = vmatpush1.msra.mxu0 0.0
      %2120 = vmatprep.subr.mxu0 0.0
      %2121 = vmatpush1.msra.mxu0 0.0
      %2122 = vmatprep.subr.mxu0 0.0
      %2123 = vmatpush1.msra.mxu0 0.0
      %2124 = vmatprep.subr.mxu0 0.0
      %2125 = vmatpush1.msra.mxu0 0.0
      %2126 = vmatprep.subr.mxu0 0.0
      %2127 = vmatpush1.msra.mxu0 0.0
      %2128 = vmatprep.subr.mxu0 0.0
      %2129 = vmatpush1.msra.mxu0 0.0
      %2130 = vmatprep.subr.mxu0 0.0
      %2131 = vmatpush1.msra.mxu0 0.0
      %2132 = vmatprep.subr.mxu0 0.0
      %2133 = vmatpush1.msra.mxu0 0.0
      %2134 = vmatprep.subr.mxu0 0.0
      %2135 = vmatpush1.msra.mxu0 0.0
      %2136 = vmatprep.subr.mxu0 0.0
      %2137 = vmatpush1.msra.mxu0 0.0
      %2138 = vmatprep.subr.mxu0 0.0
      %2139 = vmatpush1.msra.mxu0 0.0
      %2140 = vmatprep.subr.mxu0 0.0
      %2141 = vmatpush1.msra.mxu0 0.0
      %2142 = vmatprep.subr.mxu0 0.0
      %2143 = vmatpush1.msra.mxu0 0.0
      %2144 = vmatprep.subr.mxu0 0.0
      %2145 = vmatpush1.msra.mxu0 0.0
      %2146 = vmatprep.subr.mxu0 0.0
      %2147 = vmatpush1.msra.mxu0 0.0
      %2148 = vmatprep.subr.mxu0 0.0
      %2149 = vmatpush1.msra.mxu0 0.0
      %2150 = vmatprep.mubr.f32.mxu0 0.0
      %2151 = vmatmul.mubr.f32.gmra.mrb[0].mxu0 %v2081
      %v2152 = vpop.f32.mrb[0].mxu0
      %v2153 = vadd.f32 0.0, %v2152
      %v2154 = vpop.f32.mrb[0].mxu0
      %2155 = vmatprep.mubr.f32.mxu0 0.0
      %2156 = vmatmul.mubr.f32.gmra.mrb[0].mxu0 %v2084
      %v2157 = vpop.f32.mrb[0].mxu0
      %v2158 = vadd.f32 0.0, %v2157
      %v2159 = vpop.f32.mrb[0].mxu0
      %2160 = vdwg.mxu0
      %v2161 = vmax.f32 %v2075, %v2153
      %v2162 = vmax.f32 %v2076, %v2158
      %s2163 = scalar_lea.vmem %s5, 48
      %v2164 = vld [vmem:[%s2163] sm:$0xff]
      %v2165 = vld [vmem:[%s2163 + $0x8] sm:$0xff]
      %v2167 = vsel %vm1909, %v2164, 0
      %v2170 = vsel %vm1909, %v2165, 0
      %2172 = vmatprep.subr.mxu0 0.0
      %2173 = vmatpush1.msra.mxu0 %v1899
      %2174 = vmatprep.subr.mxu0 0.0
      %2175 = vmatpush1.msra.mxu0 %v1900
      %2176 = vmatprep.subr.mxu0 0.0
      %2177 = vmatpush1.msra.mxu0 %v1901
      %2178 = vmatprep.subr.mxu0 0.0
      %2179 = vmatpush1.msra.mxu0 %v1902
      %2180 = vmatprep.subr.mxu0 0.0
      %2181 = vmatpush1.msra.mxu0 %v1903
      %2182 = vmatprep.subr.mxu0 0.0
      %2183 = vmatpush1.msra.mxu0 %v1904
      %2184 = vmatprep.subr.mxu0 0.0
      %2185 = vmatpush1.msra.mxu0 %v1905
      %2186 = vmatprep.subr.mxu0 0.0
      %2187 = vmatpush1.msra.mxu0 %v1906
      %2188 = vmatprep.subr.mxu0 0.0
      %2189 = vmatpush1.msra.mxu0 0.0
      %2190 = vmatprep.subr.mxu0 0.0
      %2191 = vmatpush1.msra.mxu0 0.0
      %2192 = vmatprep.subr.mxu0 0.0
      %2193 = vmatpush1.msra.mxu0 0.0
      %2194 = vmatprep.subr.mxu0 0.0
      %2195 = vmatpush1.msra.mxu0 0.0
      %2196 = vmatprep.subr.mxu0 0.0
      %2197 = vmatpush1.msra.mxu0 0.0
      %2198 = vmatprep.subr.mxu0 0.0
      %2199 = vmatpush1.msra.mxu0 0.0
      %2200 = vmatprep.subr.mxu0 0.0
      %2201 = vmatpush1.msra.mxu0 0.0
      %2202 = vmatprep.subr.mxu0 0.0
      %2203 = vmatpush1.msra.mxu0 0.0
      %2204 = vmatprep.subr.mxu0 0.0
      %2205 = vmatpush1.msra.mxu0 0.0
      %2206 = vmatprep.subr.mxu0 0.0
      %2207 = vmatpush1.msra.mxu0 0.0
      %2208 = vmatprep.subr.mxu0 0.0
      %2209 = vmatpush1.msra.mxu0 0.0
      %2210 = vmatprep.subr.mxu0 0.0
      %2211 = vmatpush1.msra.mxu0 0.0
      %2212 = vmatprep.subr.mxu0 0.0
      %2213 = vmatpush1.msra.mxu0 0.0
      %2214 = vmatprep.subr.mxu0 0.0
      %2215 = vmatpush1.msra.mxu0 0.0
      %2216 = vmatprep.subr.mxu0 0.0
      %2217 = vmatpush1.msra.mxu0 0.0
      %2218 = vmatprep.subr.mxu0 0.0
      %2219 = vmatpush1.msra.mxu0 0.0
      %2220 = vmatprep.subr.mxu0 0.0
      %2221 = vmatpush1.msra.mxu0 0.0
      %2222 = vmatprep.subr.mxu0 0.0
      %2223 = vmatpush1.msra.mxu0 0.0
      %2224 = vmatprep.subr.mxu0 0.0
      %2225 = vmatpush1.msra.mxu0 0.0
      %2226 = vmatprep.subr.mxu0 0.0
      %2227 = vmatpush1.msra.mxu0 0.0
      %2228 = vmatprep.subr.mxu0 0.0
      %2229 = vmatpush1.msra.mxu0 0.0
      %2230 = vmatprep.subr.mxu0 0.0
      %2231 = vmatpush1.msra.mxu0 0.0
      %2232 = vmatprep.subr.mxu0 0.0
      %2233 = vmatpush1.msra.mxu0 0.0
      %2234 = vmatprep.subr.mxu0 0.0
      %2235 = vmatpush1.msra.mxu0 0.0
      %2236 = vmatprep.mubr.f32.mxu0 0.0
      %2237 = vmatmul.mubr.f32.gmra.mrb[0].mxu0 %v2167
      %v2238 = vpop.f32.mrb[0].mxu0
      %v2239 = vadd.f32 0.0, %v2238
      %v2240 = vpop.f32.mrb[0].mxu0
      %2241 = vmatprep.mubr.f32.mxu0 0.0
      %2242 = vmatmul.mubr.f32.gmra.mrb[0].mxu0 %v2170
      %v2243 = vpop.f32.mrb[0].mxu0
      %v2244 = vadd.f32 0.0, %v2243
      %v2245 = vpop.f32.mrb[0].mxu0
      %2246 = vdwg.mxu0
      %v2247 = vmax.f32 %v2161, %v2239
      %v2248 = vmax.f32 %v2162, %v2244
      %v2249 = vld [vmem:[%s6] sm:$0xff]
      %v2250 = vld [vmem:[%s6 + $0x8] sm:$0xff]
      %v2251 = vld [vmem:[%s6 + $0x10] sm:$0xff]
      %v2252 = vld [vmem:[%s6 + $0x18] sm:$0xff]
      %v2253 = vld [vmem:[%s6 + $0x20] sm:$0xff]
      %v2254 = vld [vmem:[%s6 + $0x28] sm:$0xff]
      %v2255 = vld [vmem:[%s6 + $0x30] sm:$0xff]
      %v2256 = vld [vmem:[%s6 + $0x38] sm:$0xff]
      %v2257 = vld [vmem:[%s6 + $0x40] sm:$0xff]
      %v2258 = vld [vmem:[%s6 + $0x48] sm:$0xff]
      %v2259 = vld [vmem:[%s6 + $0x50] sm:$0xff]
      %v2260 = vld [vmem:[%s6 + $0x58] sm:$0xff]
      %v2261 = vld [vmem:[%s6 + $0x60] sm:$0xff]
      %v2262 = vld [vmem:[%s6 + $0x68] sm:$0xff]
      %v2263 = vld [vmem:[%s6 + $0x70] sm:$0xff]
      %v2264 = vld [vmem:[%s6 + $0x78] sm:$0xff]
      %2265 = vmatprep.subr.mxu0 0.0
      %2266 = vmatpush1.msra.mxu0 %v2249
      %2267 = vmatprep.subr.mxu0 0.0
      %2268 = vmatpush1.msra.mxu0 %v2250
      %2269 = vmatprep.subr.mxu0 0.0
      %2270 = vmatpush1.msra.mxu0 %v2251
      %2271 = vmatprep.subr.mxu0 0.0
      %2272 = vmatpush1.msra.mxu0 %v2252
      %2273 = vmatprep.subr.mxu0 0.0
      %2274 = vmatpush1.msra.mxu0 %v2253
      %2275 = vmatprep.subr.mxu0 0.0
      %2276 = vmatpush1.msra.mxu0 %v2254
      %2277 = vmatprep.subr.mxu0 0.0
      %2278 = vmatpush1.msra.mxu0 %v2255
      %2279 = vmatprep.subr.mxu0 0.0
      %2280 = vmatpush1.msra.mxu0 %v2256
      %2281 = vmatprep.subr.mxu0 0.0
      %2282 = vmatpush1.msra.mxu0 %v2257
      %2283 = vmatprep.subr.mxu0 0.0
      %2284 = vmatpush1.msra.mxu0 %v2258
      %2285 = vmatprep.subr.mxu0 0.0
      %2286 = vmatpush1.msra.mxu0 %v2259
      %2287 = vmatprep.subr.mxu0 0.0
      %2288 = vmatpush1.msra.mxu0 %v2260
      %2289 = vmatprep.subr.mxu0 0.0
      %2290 = vmatpush1.msra.mxu0 %v2261
      %2291 = vmatprep.subr.mxu0 0.0
      %2292 = vmatpush1.msra.mxu0 %v2262
      %2293 = vmatprep.subr.mxu0 0.0
      %2294 = vmatpush1.msra.mxu0 %v2263
      %2295 = vmatprep.subr.mxu0 0.0
      %2296 = vmatpush1.msra.mxu0 %v2264
      %2297 = vmatprep.subr.mxu0 0.0
      %2298 = vmatpush1.msra.mxu0 0.0
      %2299 = vmatprep.subr.mxu0 0.0
      %2300 = vmatpush1.msra.mxu0 0.0
      %2301 = vmatprep.subr.mxu0 0.0
      %2302 = vmatpush1.msra.mxu0 0.0
      %2303 = vmatprep.subr.mxu0 0.0
      %2304 = vmatpush1.msra.mxu0 0.0
      %2305 = vmatprep.subr.mxu0 0.0
      %2306 = vmatpush1.msra.mxu0 0.0
      %2307 = vmatprep.subr.mxu0 0.0
      %2308 = vmatpush1.msra.mxu0 0.0
      %2309 = vmatprep.subr.mxu0 0.0
      %2310 = vmatpush1.msra.mxu0 0.0
      %2311 = vmatprep.subr.mxu0 0.0
      %2312 = vmatpush1.msra.mxu0 0.0
      %2313 = vmatprep.subr.mxu0 0.0
      %2314 = vmatpush1.msra.mxu0 0.0
      %2315 = vmatprep.subr.mxu0 0.0
      %2316 = vmatpush1.msra.mxu0 0.0
      %2317 = vmatprep.subr.mxu0 0.0
      %2318 = vmatpush1.msra.mxu0 0.0
      %2319 = vmatprep.subr.mxu0 0.0
      %2320 = vmatpush1.msra.mxu0 0.0
      %2321 = vmatprep.subr.mxu0 0.0
      %2322 = vmatpush1.msra.mxu0 0.0
      %2323 = vmatprep.subr.mxu0 0.0
      %2324 = vmatpush1.msra.mxu0 0.0
      %2325 = vmatprep.subr.mxu0 0.0
      %2326 = vmatpush1.msra.mxu0 0.0
      %2327 = vmatprep.subr.mxu0 0.0
      %2328 = vmatpush1.msra.mxu0 0.0
      %2329 = vmatprep.mubr.f32.mxu0 0.0
      %2330 = vmatmul.mubr.f32.gmra.mrb[0].mxu0 %v2247
      %v2331 = vpop.f32.mrb[0].mxu0
      %v2332 = vadd.f32 0.0, %v2331
      %v2333 = vpop.f32.mrb[0].mxu0
      %2334 = vmatprep.mubr.f32.mxu0 0.0
      %2335 = vmatmul.mubr.f32.gmra.mrb[0].mxu0 %v2248
      %v2336 = vpop.f32.mrb[0].mxu0
      %v2337 = vadd.f32 0.0, %v2336
      %v2338 = vpop.f32.mrb[0].mxu0
      %2339 = vdwg.mxu0
      %s2340 = scalar_lea.vmem %s6, 128
      %v2341 = vld [vmem:[%s2340] sm:$0xff]
      %v2342 = vld [vmem:[%s2340 + $0x8] sm:$0xff]
      %v2343 = vld [vmem:[%s2340 + $0x10] sm:$0xff]
      %v2344 = vld [vmem:[%s2340 + $0x18] sm:$0xff]
      %v2345 = vld [vmem:[%s2340 + $0x20] sm:$0xff]
      %v2346 = vld [vmem:[%s2340 + $0x28] sm:$0xff]
      %v2347 = vld [vmem:[%s2340 + $0x30] sm:$0xff]
      %v2348 = vld [vmem:[%s2340 + $0x38] sm:$0xff]
      %v2349 = vld [vmem:[%s2340 + $0x40] sm:$0xff]
      %v2350 = vld [vmem:[%s2340 + $0x48] sm:$0xff]
      %v2351 = vld [vmem:[%s2340 + $0x50] sm:$0xff]
      %v2352 = vld [vmem:[%s2340 + $0x58] sm:$0xff]
      %v2353 = vld [vmem:[%s2340 + $0x60] sm:$0xff]
      %v2354 = vld [vmem:[%s2340 + $0x68] sm:$0xff]
      %v2355 = vld [vmem:[%s2340 + $0x70] sm:$0xff]
      %v2356 = vld [vmem:[%s2340 + $0x78] sm:$0xff]
      %2357 = vmatprep.subr.mxu0 0.0
      %2358 = vmatpush1.msra.mxu0 %v2341
      %2359 = vmatprep.subr.mxu0 0.0
      %2360 = vmatpush1.msra.mxu0 %v2342
      %2361 = vmatprep.subr.mxu0 0.0
      %2362 = vmatpush1.msra.mxu0 %v2343
      %2363 = vmatprep.subr.mxu0 0.0
      %2364 = vmatpush1.msra.mxu0 %v2344
      %2365 = vmatprep.subr.mxu0 0.0
      %2366 = vmatpush1.msra.mxu0 %v2345
      %2367 = vmatprep.subr.mxu0 0.0
      %2368 = vmatpush1.msra.mxu0 %v2346
      %2369 = vmatprep.subr.mxu0 0.0
      %2370 = vmatpush1.msra.mxu0 %v2347
      %2371 = vmatprep.subr.mxu0 0.0
      %2372 = vmatpush1.msra.mxu0 %v2348
      %2373 = vmatprep.subr.mxu0 0.0
      %2374 = vmatpush1.msra.mxu0 %v2349
      %2375 = vmatprep.subr.mxu0 0.0
      %2376 = vmatpush1.msra.mxu0 %v2350
      %2377 = vmatprep.subr.mxu0 0.0
      %2378 = vmatpush1.msra.mxu0 %v2351
      %2379 = vmatprep.subr.mxu0 0.0
      %2380 = vmatpush1.msra.mxu0 %v2352
      %2381 = vmatprep.subr.mxu0 0.0
      %2382 = vmatpush1.msra.mxu0 %v2353
      %2383 = vmatprep.subr.mxu0 0.0
      %2384 = vmatpush1.msra.mxu0 %v2354
      %2385 = vmatprep.subr.mxu0 0.0
      %2386 = vmatpush1.msra.mxu0 %v2355
      %2387 = vmatprep.subr.mxu0 0.0
      %2388 = vmatpush1.msra.mxu0 %v2356
      %2389 = vmatprep.subr.mxu0 0.0
      %2390 = vmatpush1.msra.mxu0 0.0
      %2391 = vmatprep.subr.mxu0 0.0
      %2392 = vmatpush1.msra.mxu0 0.0
      %2393 = vmatprep.subr.mxu0 0.0
      %2394 = vmatpush1.msra.mxu0 0.0
      %2395 = vmatprep.subr.mxu0 0.0
      %2396 = vmatpush1.msra.mxu0 0.0
      %2397 = vmatprep.subr.mxu0 0.0
      %2398 = vmatpush1.msra.mxu0 0.0
      %2399 = vmatprep.subr.mxu0 0.0
      %2400 = vmatpush1.msra.mxu0 0.0
      %2401 = vmatprep.subr.mxu0 0.0
      %2402 = vmatpush1.msra.mxu0 0.0
      %2403 = vmatprep.subr.mxu0 0.0
      %2404 = vmatpush1.msra.mxu0 0.0
      %2405 = vmatprep.subr.mxu0 0.0
      %2406 = vmatpush1.msra.mxu0 0.0
      %2407 = vmatprep.subr.mxu0 0.0
      %2408 = vmatpush1.msra.mxu0 0.0
      %2409 = vmatprep.subr.mxu0 0.0
      %2410 = vmatpush1.msra.mxu0 0.0
      %2411 = vmatprep.subr.mxu0 0.0
      %2412 = vmatpush1.msra.mxu0 0.0
      %2413 = vmatprep.subr.mxu0 0.0
      %2414 = vmatpush1.msra.mxu0 0.0
      %2415 = vmatprep.subr.mxu0 0.0
      %2416 = vmatpush1.msra.mxu0 0.0
      %2417 = vmatprep.subr.mxu0 0.0
      %2418 = vmatpush1.msra.mxu0 0.0
      %2419 = vmatprep.subr.mxu0 0.0
      %2420 = vmatpush1.msra.mxu0 0.0
      %2421 = vmatprep.mubr.f32.mxu0 0.0
      %2422 = vmatmul.mubr.f32.gmra.mrb[0].mxu0 %v2247
      %v2423 = vpop.f32.mrb[0].mxu0
      %v2424 = vadd.f32 0.0, %v2423
      %v2425 = vpop.f32.mrb[0].mxu0
      %2426 = vmatprep.mubr.f32.mxu0 0.0
      %2427 = vmatmul.mubr.f32.gmra.mrb[0].mxu0 %v2248
      %v2428 = vpop.f32.mrb[0].mxu0
      %v2429 = vadd.f32 0.0, %v2428
      %v2430 = vpop.f32.mrb[0].mxu0
      %2431 = vdwg.mxu0
      %v2432 = vmax.f32 %v2332, %v2424
      %v2433 = vmax.f32 %v2337, %v2429
      %2434 = vst.msk [vmem:[%s298] sm:$0xff] %vm1909, %v2432
      %2435 = vst.msk [vmem:[%s298 + $0x8] sm:$0xff] %vm1909, %v2433
      %p2436 = scmp.lt.s32.totalorder %s18, 1
      %s2437 = scalar_select %p2436, %s18, 1
      %s2438 = smul.addr %s2437, 2
      %s2439 = smul.addr %s2438, 8
      %s2440 = scalar_lea.vmem %s7, %s2439
      // Predicated region
      $region49: #{masked_vgg3d_forward.4} parent=47 // pred_check
        %p2441 = pneg %p193
      $region50: #{masked_vgg3d_forward.4} parent=47 // pred_check_branch
        %2443 = sbr.rel (%p2441) target = $region52
      $region51: #{masked_vgg3d_forward.4} parent=47 // pred_region
        _
      $region52: #{masked_vgg3d_forward.4} parent=47 // pred_fallthru
        _
    $region48: #{masked_vgg3d_forward.4} parent=5 // pred_fallthru
      _
    %p2444 = scmp.le.s32.totalorder 2, %s13
    // Predicated region
    $region53: #{masked_vgg3d_forward.4} parent=5 // pred_check
      %p2445 = pneg %p2444
    $region54: #{masked_vgg3d_forward.4} parent=5 // pred_check_branch
      %2447 = sbr.rel (%p2445) target = $region56
    $region55: #{masked_vgg3d_forward.4} parent=5 // pred_region
      %s2448 = ssub.s32 %s13, 2
      // Predicated region
      $region57: #{masked_vgg3d_forward.4} parent=55 // pred_check
        %p2449 = pneg %p199
      $region58: #{masked_vgg3d_forward.4} parent=55 // pred_check_branch
        %2451 = sbr.rel (%p2449) target = $region60
      $region59: #{masked_vgg3d_forward.4} parent=55 // pred_region
        %p2452 = scmp.lt.s32.totalorder %s19, 1
        %s2453 = scalar_select %p2452, %s19, 1
        %s2454 = smul.addr %s2453, 2
        %s2455 = smul.addr %s2454, 8
        %s2456 = scalar_lea.vmem %s7, %s2455
      $region60: #{masked_vgg3d_forward.4} parent=55 // pred_fallthru
        _
    $region56: #{masked_vgg3d_forward.4} parent=5 // pred_fallthru
      _
  $region6: #{masked_vgg3d_forward.4} parent=0 // loop_footer
    %s17 = sadd.s32 1, %s13
  $region7: #{masked_vgg3d_forward.4} parent=0 // loop_footer_branch
    %12 = sbr.rel target = $region3
  $region8: #{masked_vgg3d_forward.4} parent=0 // loop_exit
    _

// kernel: masked_vgg3d_forward.5
$region0: #{masked_vgg3d_forward.5}
  #allocation0 [shape = 'u32[]', space=smem, size = 0x4, offset = 0x4, fixed_abs, tag = 'smem constant byte address 0x4 - core index']
  #allocation1 [shape = 'u32[144,128]{1,0:T(1,128)}', space=vmem, size = 0x12000, scoped, tag = 'internal scratch']
  %s0 = inlined_call_operand.vmem [shape: f32[2,1,1024], index: 0, kind: input, shape index: {}]
  %s1 = inlined_call_operand.vmem [shape: f32[1024,64], index: 1, kind: input, shape index: {}]
  %s2 = inlined_call_operand.vmem [shape: f32[1,64], index: 2, kind: input, shape index: {}]
  %s3 = inlined_call_operand.vmem [shape: f32[64,64], index: 3, kind: input, shape index: {}]
  %s4 = inlined_call_operand.vmem [shape: f32[1,64], index: 4, kind: input, shape index: {}]
  %s5 = inlined_call_operand.vmem [shape: f32[64,3], index: 5, kind: input, shape index: {}]
  %s6 = inlined_call_operand.vmem [shape: f32[1,3], index: 6, kind: input, shape index: {}]
  %s7 = inlined_call_operand.hbm [shape: f32[2,1,3], index: 7, kind: output, shape index: {}]
  %s8 = sld [smem:[#allocation0]]
  $region61: #{masked_vgg3d_forward.5} parent=0
    _
  %s10 = ssub.s32 1, %s8
  %s11 = scalar_select 0, %s10, %s8
  $region1: #{masked_vgg3d_forward.5} parent=0
    #allocation2 [shape = 'u8[1024]{0}', space=vmem, size = 0x400, scoped, tag = 'output window, operand 0']
    #allocation3 [shape = 's32[2]{0}', space=sflag, size = 0x8, scoped, tag = 'scoped memory for masked_vgg3d_forward.5']
    %12 = vsyncpa [#allocation3], 0
    %s13 = scalar_lea.sflag [#allocation3], 1
    %14 = vsyncpa %s13, 0
    loop: start=0, step=1, limit=4
    $region2: #{masked_vgg3d_forward.5} parent=1 // loop_pre_header
      _
    $region3: #{masked_vgg3d_forward.5} parent=1 // loop_header
      %s16 = sphi 0, %s20
      %p17 = scmp.ge.s32.totalorder %s16, 4
      %s26 = sphi 0, %s28
      %s29 = sphi 0, %s26
      %s30 = sphi 0, %s29
      %s46 = sphi 0, %s30
      %s50 = sphi 0, %s50
      %s52 = sphi 0, %s50
      %s53 = sphi 0, %s52
      %s67 = sphi 0, %s53
      %s71 = sphi 0, %s71
      %s73 = sphi 0, %s71
      %s74 = sphi 0, %s73
      %s88 = sphi 0, %s74
      %s92 = sphi 0, %s92
      %s94 = sphi 0, %s92
      %s95 = sphi 0, %s94
      %s109 = sphi 0, %s95
      %s113 = sphi 0, %s113
      %s115 = sphi 0, %s113
      %s116 = sphi 0, %s115
      %s130 = sphi 0, %s116
      %s134 = sphi 0, %s134
      %s136 = sphi 0, %s134
      %s137 = sphi 0, %s136
      %s151 = sphi 0, %s137
      %s155 = sphi 0, %s155
      %s157 = sphi 0, %s155
      %s158 = sphi 0, %s157
      %s172 = sphi 0, %s158
      %s178 = sphi 0, %s180
      %s181 = sphi 0, %s178
      %s182 = sphi 0, %s181
      %s198 = sphi 0, %s182
    $region4: #{masked_vgg3d_forward.5} parent=1 // loop_header_branch
      %19 = sbr.rel (%p17) target = $region8
    $region5: #{masked_vgg3d_forward.5} parent=1 // loop_body
      %s21 = ssub.s32 %s16, 1
      %s22 = ssub.s32 %s16, 2
      %s23 = sadd.s32 %s16, 1
      %s24 = ssub.s32 %s16, %s23
      %p25 = scmp.eq.s32.totalorder %s24, 0
      %s27 = sadd.s32 %s26, 1
      %s28 = scalar_select %p25, %s26, %s27
      %p31 = pneg %p25
      %p32 = scmp.eq.s32.totalorder %s16, 1
      %p33 = por %p31, %p32
      %p34 = scmp.ne.s32.totalorder %s26, %s29
      %p35 = scmp.eq.s32.totalorder %s16, 0
      %p36 = por %p34, %p35
      %p37 = scmp.ne.s32.totalorder %s26, %s29
      %p38 = scmp.eq.s32.totalorder %s21, 1
      %p39 = por %p37, %p38
      %p40 = scmp.ne.s32.totalorder %s29, %s30
      %p41 = scmp.eq.s32.totalorder %s21, 0
      %p42 = por %p40, %p41
      %p43 = scmp.ne.s32.totalorder %s29, %s30
      %p44 = scmp.eq.s32.totalorder %s22, 1
      %p45 = por %p43, %p44
      %p47 = scmp.ne.s32.totalorder %s30, %s46
      %p48 = scmp.eq.s32.totalorder %s22, 0
      %p49 = por %p47, %p48
      %s51 = sadd.s32 %s50, 1
      %p54 = scmp.eq.s32.totalorder %s16, 1
      %p55 = scmp.ne.s32.totalorder %s50, %s52
      %p56 = scmp.eq.s32.totalorder %s16, 0
      %p57 = por %p55, %p56
      %p58 = scmp.ne.s32.totalorder %s50, %s52
      %p59 = scmp.eq.s32.totalorder %s21, 1
      %p60 = por %p58, %p59
      %p61 = scmp.ne.s32.totalorder %s52, %s53
      %p62 = scmp.eq.s32.totalorder %s21, 0
      %p63 = por %p61, %p62
      %p64 = scmp.ne.s32.totalorder %s52, %s53
      %p65 = scmp.eq.s32.totalorder %s22, 1
      %p66 = por %p64, %p65
      %p68 = scmp.ne.s32.totalorder %s53, %s67
      %p69 = scmp.eq.s32.totalorder %s22, 0
      %p70 = por %p68, %p69
      %s72 = sadd.s32 %s71, 1
      %p75 = scmp.eq.s32.totalorder %s16, 1
      %p76 = scmp.ne.s32.totalorder %s71, %s73
      %p77 = scmp.eq.s32.totalorder %s16, 0
      %p78 = por %p76, %p77
      %p79 = scmp.ne.s32.totalorder %s71, %s73
      %p80 = scmp.eq.s32.totalorder %s21, 1
      %p81 = por %p79, %p80
      %p82 = scmp.ne.s32.totalorder %s73, %s74
      %p83 = scmp.eq.s32.totalorder %s21, 0
      %p84 = por %p82, %p83
      %p85 = scmp.ne.s32.totalorder %s73, %s74
      %p86 = scmp.eq.s32.totalorder %s22, 1
      %p87 = por %p85, %p86
      %p89 = scmp.ne.s32.totalorder %s74, %s88
      %p90 = scmp.eq.s32.totalorder %s22, 0
      %p91 = por %p89, %p90
      %s93 = sadd.s32 %s92, 1
      %p96 = scmp.eq.s32.totalorder %s16, 1
      %p97 = scmp.ne.s32.totalorder %s92, %s94
      %p98 = scmp.eq.s32.totalorder %s16, 0
      %p99 = por %p97, %p98
      %p100 = scmp.ne.s32.totalorder %s92, %s94
      %p101 = scmp.eq.s32.totalorder %s21, 1
      %p102 = por %p100, %p101
      %p103 = scmp.ne.s32.totalorder %s94, %s95
      %p104 = scmp.eq.s32.totalorder %s21, 0
      %p105 = por %p103, %p104
      %p106 = scmp.ne.s32.totalorder %s94, %s95
      %p107 = scmp.eq.s32.totalorder %s22, 1
      %p108 = por %p106, %p107
      %p110 = scmp.ne.s32.totalorder %s95, %s109
      %p111 = scmp.eq.s32.totalorder %s22, 0
      %p112 = por %p110, %p111
      %s114 = sadd.s32 %s113, 1
      %p117 = scmp.eq.s32.totalorder %s16, 1
      %p118 = scmp.ne.s32.totalorder %s113, %s115
      %p119 = scmp.eq.s32.totalorder %s16, 0
      %p120 = por %p118, %p119
      %p121 = scmp.ne.s32.totalorder %s113, %s115
      %p122 = scmp.eq.s32.totalorder %s21, 1
      %p123 = por %p121, %p122
      %p124 = scmp.ne.s32.totalorder %s115, %s116
      %p125 = scmp.eq.s32.totalorder %s21, 0
      %p126 = por %p124, %p125
      %p127 = scmp.ne.s32.totalorder %s115, %s116
      %p128 = scmp.eq.s32.totalorder %s22, 1
      %p129 = por %p127, %p128
      %p131 = scmp.ne.s32.totalorder %s116, %s130
      %p132 = scmp.eq.s32.totalorder %s22, 0
      %p133 = por %p131, %p132
      %s135 = sadd.s32 %s134, 1
      %p138 = scmp.eq.s32.totalorder %s16, 1
      %p139 = scmp.ne.s32.totalorder %s134, %s136
      %p140 = scmp.eq.s32.totalorder %s16, 0
      %p141 = por %p139, %p140
      %p142 = scmp.ne.s32.totalorder %s134, %s136
      %p143 = scmp.eq.s32.totalorder %s21, 1
      %p144 = por %p142, %p143
      %p145 = scmp.ne.s32.totalorder %s136, %s137
      %p146 = scmp.eq.s32.totalorder %s21, 0
      %p147 = por %p145, %p146
      %p148 = scmp.ne.s32.totalorder %s136, %s137
      %p149 = scmp.eq.s32.totalorder %s22, 1
      %p150 = por %p148, %p149
      %p152 = scmp.ne.s32.totalorder %s137, %s151
      %p153 = scmp.eq.s32.totalorder %s22, 0
      %p154 = por %p152, %p153
      %s156 = sadd.s32 %s155, 1
      %p159 = scmp.eq.s32.totalorder %s16, 1
      %p160 = scmp.ne.s32.totalorder %s155, %s157
      %p161 = scmp.eq.s32.totalorder %s16, 0
      %p162 = por %p160, %p161
      %p163 = scmp.ne.s32.totalorder %s155, %s157
      %p164 = scmp.eq.s32.totalorder %s21, 1
      %p165 = por %p163, %p164
      %p166 = scmp.ne.s32.totalorder %s157, %s158
      %p167 = scmp.eq.s32.totalorder %s21, 0
      %p168 = por %p166, %p167
      %p169 = scmp.ne.s32.totalorder %s157, %s158
      %p170 = scmp.eq.s32.totalorder %s22, 1
      %p171 = por %p169, %p170
      %p173 = scmp.ne.s32.totalorder %s158, %s172
      %p174 = scmp.eq.s32.totalorder %s22, 0
      %p175 = por %p173, %p174
      %s176 = ssub.s32 %s16, %s23
      %p177 = scmp.eq.s32.totalorder %s176, 0
      %s179 = sadd.s32 %s178, 1
      %s180 = scalar_select %p177, %s178, %s179
      %p183 = pneg %p177
      %p184 = scmp.eq.s32.totalorder %s16, 1
      %p185 = por %p183, %p184
      %p186 = scmp.ne.s32.totalorder %s178, %s181
      %p187 = scmp.eq.s32.totalorder %s16, 0
      %p188 = por %p186, %p187
      %p189 = scmp.ne.s32.totalorder %s178, %s181
      %p190 = scmp.eq.s32.totalorder %s21, 1
      %p191 = por %p189, %p190
      %p192 = scmp.ne.s32.totalorder %s181, %s182
      %p193 = scmp.eq.s32.totalorder %s21, 0
      %p194 = por %p192, %p193
      %p195 = scmp.ne.s32.totalorder %s181, %s182
      %p196 = scmp.eq.s32.totalorder %s22, 1
      %p197 = por %p195, %p196
      %p199 = scmp.ne.s32.totalorder %s182, %s198
      %p200 = scmp.eq.s32.totalorder %s22, 0
      %p201 = por %p199, %p200
      %p202 = scmp.le.s32.totalorder 1, %s16
      %p203 = scmp.lt.s32.totalorder %s16, 3
      %p204 = pnand %p202, %p203
      %p205 = pneg %p204
      // Predicated region
      $region9: #{masked_vgg3d_forward.5} parent=5 // pred_check
        _
      $region10: #{masked_vgg3d_forward.5} parent=5 // pred_check_branch
        %207 = sbr.rel (%p204) target = $region12
      $region11: #{masked_vgg3d_forward.5} parent=5 // pred_region
        %s208 = ssub.s32 %s16, 1
        // Predicated region
        $region13: #{masked_vgg3d_forward.5} parent=11 // pred_check
          %p209 = pneg %p63
        $region14: #{masked_vgg3d_forward.5} parent=11 // pred_check_branch
          %211 = sbr.rel (%p209) target = $region16
        $region15: #{masked_vgg3d_forward.5} parent=11 // pred_region
          _
        $region16: #{masked_vgg3d_forward.5} parent=11 // pred_fallthru
          _
        // Predicated region
        $region17: #{masked_vgg3d_forward.5} parent=11 // pred_check
          %p212 = pneg %p84
        $region18: #{masked_vgg3d_forward.5} parent=11 // pred_check_branch
          %214 = sbr.rel (%p212) target = $region20
        $region19: #{masked_vgg3d_forward.5} parent=11 // pred_region
          _
        $region20: #{masked_vgg3d_forward.5} parent=11 // pred_fallthru
          _
        // Predicated region
        $region21: #{masked_vgg3d_forward.5} parent=11 // pred_check
          %p215 = pneg %p105
        $region22: #{masked_vgg3d_forward.5} parent=11 // pred_check_branch
          %217 = sbr.rel (%p215) target = $region24
        $region23: #{masked_vgg3d_forward.5} parent=11 // pred_region
          _
        $region24: #{masked_vgg3d_forward.5} parent=11 // pred_fallthru
          _
        // Predicated region
        $region25: #{masked_vgg3d_forward.5} parent=11 // pred_check
          %p218 = pneg %p126
        $region26: #{masked_vgg3d_forward.5} parent=11 // pred_check_branch
          %220 = sbr.rel (%p218) target = $region28
        $region27: #{masked_vgg3d_forward.5} parent=11 // pred_region
          _
        $region28: #{masked_vgg3d_forward.5} parent=11 // pred_fallthru
          _
        // Predicated region
        $region29: #{masked_vgg3d_forward.5} parent=11 // pred_check
          %p221 = pneg %p147
        $region30: #{masked_vgg3d_forward.5} parent=11 // pred_check_branch
          %223 = sbr.rel (%p221) target = $region32
        $region31: #{masked_vgg3d_forward.5} parent=11 // pred_region
          _
        $region32: #{masked_vgg3d_forward.5} parent=11 // pred_fallthru
          _
        // Predicated region
        $region33: #{masked_vgg3d_forward.5} parent=11 // pred_check
          %p224 = pneg %p168
        $region34: #{masked_vgg3d_forward.5} parent=11 // pred_check_branch
          %226 = sbr.rel (%p224) target = $region36
        $region35: #{masked_vgg3d_forward.5} parent=11 // pred_region
          _
        $region36: #{masked_vgg3d_forward.5} parent=11 // pred_fallthru
          _
      $region12: #{masked_vgg3d_forward.5} parent=5 // pred_fallthru
        _
      %p227 = scmp.lt.s32.totalorder %s16, 2
      // Predicated region
      $region37: #{masked_vgg3d_forward.5} parent=5 // pred_check
        %p228 = pneg %p227
      $region38: #{masked_vgg3d_forward.5} parent=5 // pred_check_branch
        %230 = sbr.rel (%p228) target = $region40
      $region39: #{masked_vgg3d_forward.5} parent=5 // pred_region
        // Predicated region
        $region41: #{masked_vgg3d_forward.5} parent=39 // pred_check
          %p231 = pneg %p36
        $region42: #{masked_vgg3d_forward.5} parent=39 // pred_check_branch
          %233 = sbr.rel (%p231) target = $region44
        $region43: #{masked_vgg3d_forward.5} parent=39 // pred_region
          %p234 = scmp.lt.s32.totalorder %s16, 1
          %s235 = scalar_select %p234, %s16, 1
          %s236 = smul.addr %s235, 8
          %s237 = scalar_lea.vmem %s0, %s236
        $region44: #{masked_vgg3d_forward.5} parent=39 // pred_fallthru
          _
      $region40: #{masked_vgg3d_forward.5} parent=5 // pred_fallthru
        _
      %p238 = scmp.le.s32.totalorder 1, %s16
      %p239 = scmp.lt.s32.totalorder %s16, 3
      %p240 = pnand %p238, %p239
      %p241 = pneg %p240
      // Predicated region
      $region45: #{masked_vgg3d_forward.5} parent=5 // pred_check
        _
      $region46: #{masked_vgg3d_forward.5} parent=5 // pred_check_branch
        %243 = sbr.rel (%p240) target = $region48
      $region47: #{masked_vgg3d_forward.5} parent=5 // pred_region
        %s244 = ssub.s32 %s16, 1
        %p245 = scmp.lt.s32.totalorder %s21, 1
        %s246 = scalar_select %p245, %s21, 1
        %s247 = smul.addr %s246, 8
        %s248 = scalar_lea.vmem %s0, %s247
        %p249 = pneg %p42
        %p250 = pneg %p39
        %p251 = pneg %p63
        %p252 = pneg %p60
        %p253 = pneg %p84
        %p254 = pneg %p81
        %p255 = pneg %p105
        %p256 = pneg %p102
        %p257 = pneg %p126
        %p258 = pneg %p123
        %p259 = pneg %p147
        %p260 = pneg %p144
        %p261 = pneg %p168
        %p262 = pneg %p165
        %p263 = pneg %p194
        %p264 = pneg %p191
        %s265 = sand.u32 %s181, 1
        %s266 = scalar_lea.sflag [#allocation3], %s265
        %s267 = sand.u32 %s181, 1
        %s268 = scalar_lea.vmem [#allocation2], %s267
        %p269 = scmp.lt.s32.totalorder %s21, 1
        %s270 = scalar_select %p269, %s21, 1
        %s271 = smul.addr %s270, 8
        %s272 = scalar_lea.vmem %s0, %s271
        %v273 = vld [vmem:[%s272] sm:$0xff]
        %v274 = vld [vmem:[%s1] sm:$0xff]
        %v275 = vld [vmem:[%s1 + $0x8] sm:$0xff]
        %v276 = vld [vmem:[%s1 + $0x10] sm:$0xff]
        %v277 = vld [vmem:[%s1 + $0x18] sm:$0xff]
        %v278 = vld [vmem:[%s1 + $0x20] sm:$0xff]
        %v279 = vld [vmem:[%s1 + $0x28] sm:$0xff]
        %v280 = vld [vmem:[%s1 + $0x30] sm:$0xff]
        %v281 = vld [vmem:[%s1 + $0x38] sm:$0xff]
        %v282 = vld [vmem:[%s1 + $0x40] sm:$0xff]
        %v283 = vld [vmem:[%s1 + $0x48] sm:$0xff]
        %v284 = vld [vmem:[%s1 + $0x50] sm:$0xff]
        %v285 = vld [vmem:[%s1 + $0x58] sm:$0xff]
        %v286 = vld [vmem:[%s1 + $0x60] sm:$0xff]
        %v287 = vld [vmem:[%s1 + $0x68] sm:$0xff]
        %v288 = vld [vmem:[%s1 + $0x70] sm:$0xff]
        %v289 = vld [vmem:[%s1 + $0x78] sm:$0xff]
        %v290 = vld [vmem:[%s1 + $0x80] sm:$0xff]
        %v291 = vld [vmem:[%s1 + $0x88] sm:$0xff]
        %v292 = vld [vmem:[%s1 + $0x90] sm:$0xff]
        %v293 = vld [vmem:[%s1 + $0x98] sm:$0xff]
        %v294 = vld [vmem:[%s1 + $0xa0] sm:$0xff]
        %v295 = vld [vmem:[%s1 + $0xa8] sm:$0xff]
        %v296 = vld [vmem:[%s1 + $0xb0] sm:$0xff]
        %v297 = vld [vmem:[%s1 + $0xb8] sm:$0xff]
        %v298 = vld [vmem:[%s1 + $0xc0] sm:$0xff]
        %v299 = vld [vmem:[%s1 + $0xc8] sm:$0xff]
        %v300 = vld [vmem:[%s1 + $0xd0] sm:$0xff]
        %v301 = vld [vmem:[%s1 + $0xd8] sm:$0xff]
        %v302 = vld [vmem:[%s1 + $0xe0] sm:$0xff]
        %v303 = vld [vmem:[%s1 + $0xe8] sm:$0xff]
        %v304 = vld [vmem:[%s1 + $0xf0] sm:$0xff]
        %v305 = vld [vmem:[%s1 + $0xf8] sm:$0xff]
        %v306 = vld [vmem:[%s1 + $0x100] sm:$0xff]
        %v307 = vld [vmem:[%s1 + $0x108] sm:$0xff]
        %v308 = vld [vmem:[%s1 + $0x110] sm:$0xff]
        %v309 = vld [vmem:[%s1 + $0x118] sm:$0xff]
        %v310 = vld [vmem:[%s1 + $0x120] sm:$0xff]
        %v311 = vld [vmem:[%s1 + $0x128] sm:$0xff]
        %v312 = vld [vmem:[%s1 + $0x130] sm:$0xff]
        %v313 = vld [vmem:[%s1 + $0x138] sm:$0xff]
        %v314 = vld [vmem:[%s1 + $0x140] sm:$0xff]
        %v315 = vld [vmem:[%s1 + $0x148] sm:$0xff]
        %v316 = vld [vmem:[%s1 + $0x150] sm:$0xff]
        %v317 = vld [vmem:[%s1 + $0x158] sm:$0xff]
        %v318 = vld [vmem:[%s1 + $0x160] sm:$0xff]
        %v319 = vld [vmem:[%s1 + $0x168] sm:$0xff]
        %v320 = vld [vmem:[%s1 + $0x170] sm:$0xff]
        %v321 = vld [vmem:[%s1 + $0x178] sm:$0xff]
        %v322 = vld [vmem:[%s1 + $0x180] sm:$0xff]
        %v323 = vld [vmem:[%s1 + $0x188] sm:$0xff]
        %v324 = vld [vmem:[%s1 + $0x190] sm:$0xff]
        %v325 = vld [vmem:[%s1 + $0x198] sm:$0xff]
        %v326 = vld [vmem:[%s1 + $0x1a0] sm:$0xff]
        %v327 = vld [vmem:[%s1 + $0x1a8] sm:$0xff]
        %v328 = vld [vmem:[%s1 + $0x1b0] sm:$0xff]
        %v329 = vld [vmem:[%s1 + $0x1b8] sm:$0xff]
        %v330 = vld [vmem:[%s1 + $0x1c0] sm:$0xff]
        %v331 = vld [vmem:[%s1 + $0x1c8] sm:$0xff]
        %v332 = vld [vmem:[%s1 + $0x1d0] sm:$0xff]
        %v333 = vld [vmem:[%s1 + $0x1d8] sm:$0xff]
        %v334 = vld [vmem:[%s1 + $0x1e0] sm:$0xff]
        %v335 = vld [vmem:[%s1 + $0x1e8] sm:$0xff]
        %v336 = vld [vmem:[%s1 + $0x1f0] sm:$0xff]
        %v337 = vld [vmem:[%s1 + $0x1f8] sm:$0xff]
        %v338 = vld [vmem:[%s1 + $0x200] sm:$0xff]
        %v339 = vld [vmem:[%s1 + $0x208] sm:$0xff]
        %v340 = vld [vmem:[%s1 + $0x210] sm:$0xff]
        %v341 = vld [vmem:[%s1 + $0x218] sm:$0xff]
        %v342 = vld [vmem:[%s1 + $0x220] sm:$0xff]
        %v343 = vld [vmem:[%s1 + $0x228] sm:$0xff]
        %v344 = vld [vmem:[%s1 + $0x230] sm:$0xff]
        %v345 = vld [vmem:[%s1 + $0x238] sm:$0xff]
        %v346 = vld [vmem:[%s1 + $0x240] sm:$0xff]
        %v347 = vld [vmem:[%s1 + $0x248] sm:$0xff]
        %v348 = vld [vmem:[%s1 + $0x250] sm:$0xff]
        %v349 = vld [vmem:[%s1 + $0x258] sm:$0xff]
        %v350 = vld [vmem:[%s1 + $0x260] sm:$0xff]
        %v351 = vld [vmem:[%s1 + $0x268] sm:$0xff]
        %v352 = vld [vmem:[%s1 + $0x270] sm:$0xff]
        %v353 = vld [vmem:[%s1 + $0x278] sm:$0xff]
        %v354 = vld [vmem:[%s1 + $0x280] sm:$0xff]
        %v355 = vld [vmem:[%s1 + $0x288] sm:$0xff]
        %v356 = vld [vmem:[%s1 + $0x290] sm:$0xff]
        %v357 = vld [vmem:[%s1 + $0x298] sm:$0xff]
        %v358 = vld [vmem:[%s1 + $0x2a0] sm:$0xff]
        %v359 = vld [vmem:[%s1 + $0x2a8] sm:$0xff]
        %v360 = vld [vmem:[%s1 + $0x2b0] sm:$0xff]
        %v361 = vld [vmem:[%s1 + $0x2b8] sm:$0xff]
        %v362 = vld [vmem:[%s1 + $0x2c0] sm:$0xff]
        %v363 = vld [vmem:[%s1 + $0x2c8] sm:$0xff]
        %v364 = vld [vmem:[%s1 + $0x2d0] sm:$0xff]
        %v365 = vld [vmem:[%s1 + $0x2d8] sm:$0xff]
        %v366 = vld [vmem:[%s1 + $0x2e0] sm:$0xff]
        %v367 = vld [vmem:[%s1 + $0x2e8] sm:$0xff]
        %v368 = vld [vmem:[%s1 + $0x2f0] sm:$0xff]
        %v369 = vld [vmem:[%s1 + $0x2f8] sm:$0xff]
        %v370 = vld [vmem:[%s1 + $0x300] sm:$0xff]
        %v371 = vld [vmem:[%s1 + $0x308] sm:$0xff]
        %v372 = vld [vmem:[%s1 + $0x310] sm:$0xff]
        %v373 = vld [vmem:[%s1 + $0x318] sm:$0xff]
        %v374 = vld [vmem:[%s1 + $0x320] sm:$0xff]
        %v375 = vld [vmem:[%s1 + $0x328] sm:$0xff]
        %v376 = vld [vmem:[%s1 + $0x330] sm:$0xff]
        %v377 = vld [vmem:[%s1 + $0x338] sm:$0xff]
        %v378 = vld [vmem:[%s1 + $0x340] sm:$0xff]
        %v379 = vld [vmem:[%s1 + $0x348] sm:$0xff]
        %v380 = vld [vmem:[%s1 + $0x350] sm:$0xff]
        %v381 = vld [vmem:[%s1 + $0x358] sm:$0xff]
        %v382 = vld [vmem:[%s1 + $0x360] sm:$0xff]
        %v383 = vld [vmem:[%s1 + $0x368] sm:$0xff]
        %v384 = vld [vmem:[%s1 + $0x370] sm:$0xff]
        %v385 = vld [vmem:[%s1 + $0x378] sm:$0xff]
        %v386 = vld [vmem:[%s1 + $0x380] sm:$0xff]
        %v387 = vld [vmem:[%s1 + $0x388] sm:$0xff]
        %v388 = vld [vmem:[%s1 + $0x390] sm:$0xff]
        %v389 = vld [vmem:[%s1 + $0x398] sm:$0xff]
        %v390 = vld [vmem:[%s1 + $0x3a0] sm:$0xff]
        %v391 = vld [vmem:[%s1 + $0x3a8] sm:$0xff]
        %v392 = vld [vmem:[%s1 + $0x3b0] sm:$0xff]
        %v393 = vld [vmem:[%s1 + $0x3b8] sm:$0xff]
        %v394 = vld [vmem:[%s1 + $0x3c0] sm:$0xff]
        %v395 = vld [vmem:[%s1 + $0x3c8] sm:$0xff]
        %v396 = vld [vmem:[%s1 + $0x3d0] sm:$0xff]
        %v397 = vld [vmem:[%s1 + $0x3d8] sm:$0xff]
        %v398 = vld [vmem:[%s1 + $0x3e0] sm:$0xff]
        %v399 = vld [vmem:[%s1 + $0x3e8] sm:$0xff]
        %v400 = vld [vmem:[%s1 + $0x3f0] sm:$0xff]
        %v401 = vld [vmem:[%s1 + $0x3f8] sm:$0xff]
        %v402 = vld [vmem:[%s2] sm:$0x1]
        %v404 = vlaneseq
        %v405 = vshrl.u32 %v404, 7
        %v406 = vsub.s32 0, %v405
        %v407 = vrot.slane %v273, %v406
        %v408 = vlaneseq
        %v409 = vshrl.u32 %v408, 7
        %v410 = vsub.s32 1, %v409
        %v411 = vrot.slane %v273, %v410
        %v412 = vlaneseq
        %v413 = vshrl.u32 %v412, 7
        %v414 = vsub.s32 2, %v413
        %v415 = vrot.slane %v273, %v414
        %v416 = vlaneseq
        %v417 = vshrl.u32 %v416, 7
        %v418 = vsub.s32 3, %v417
        %v419 = vrot.slane %v273, %v418
        %v420 = vlaneseq
        %v421 = vshrl.u32 %v420, 7
        %v422 = vsub.s32 4, %v421
        %v423 = vrot.slane %v273, %v422
        %v424 = vlaneseq
        %v425 = vshrl.u32 %v424, 7
        %v426 = vsub.s32 5, %v425
        %v427 = vrot.slane %v273, %v426
        %v428 = vlaneseq
        %v429 = vshrl.u32 %v428, 7
        %v430 = vsub.s32 6, %v429
        %v431 = vrot.slane %v273, %v430
        %v432 = vlaneseq
        %v433 = vshrl.u32 %v432, 7
        %v434 = vsub.s32 7, %v433
        %v435 = vrot.slane %v273, %v434
        %444 = vmatprep.subr.mxu0 0.0
        %445 = vmatpush1.msra.mxu0 %v274
        %446 = vmatprep.subr.mxu0 0.0
        %447 = vmatpush1.msra.mxu0 %v275
        %448 = vmatprep.subr.mxu0 0.0
        %449 = vmatpush1.msra.mxu0 %v276
        %450 = vmatprep.subr.mxu0 0.0
        %451 = vmatpush1.msra.mxu0 %v277
        %452 = vmatprep.subr.mxu0 0.0
        %453 = vmatpush1.msra.mxu0 %v278
        %454 = vmatprep.subr.mxu0 0.0
        %455 = vmatpush1.msra.mxu0 %v279
        %456 = vmatprep.subr.mxu0 0.0
        %457 = vmatpush1.msra.mxu0 %v280
        %458 = vmatprep.subr.mxu0 0.0
        %459 = vmatpush1.msra.mxu0 %v281
        %460 = vmatprep.subr.mxu0 0.0
        %461 = vmatpush1.msra.mxu0 %v282
        %462 = vmatprep.subr.mxu0 0.0
        %463 = vmatpush1.msra.mxu0 %v283
        %464 = vmatprep.subr.mxu0 0.0
        %465 = vmatpush1.msra.mxu0 %v284
        %466 = vmatprep.subr.mxu0 0.0
        %467 = vmatpush1.msra.mxu0 %v285
        %468 = vmatprep.subr.mxu0 0.0
        %469 = vmatpush1.msra.mxu0 %v286
        %470 = vmatprep.subr.mxu0 0.0
        %471 = vmatpush1.msra.mxu0 %v287
        %472 = vmatprep.subr.mxu0 0.0
        %473 = vmatpush1.msra.mxu0 %v288
        %474 = vmatprep.subr.mxu0 0.0
        %475 = vmatpush1.msra.mxu0 %v289
        %476 = vmatprep.subr.mxu0 0.0
        %477 = vmatpush1.msra.mxu0 %v290
        %478 = vmatprep.subr.mxu0 0.0
        %479 = vmatpush1.msra.mxu0 %v291
        %480 = vmatprep.subr.mxu0 0.0
        %481 = vmatpush1.msra.mxu0 %v292
        %482 = vmatprep.subr.mxu0 0.0
        %483 = vmatpush1.msra.mxu0 %v293
        %484 = vmatprep.subr.mxu0 0.0
        %485 = vmatpush1.msra.mxu0 %v294
        %486 = vmatprep.subr.mxu0 0.0
        %487 = vmatpush1.msra.mxu0 %v295
        %488 = vmatprep.subr.mxu0 0.0
        %489 = vmatpush1.msra.mxu0 %v296
        %490 = vmatprep.subr.mxu0 0.0
        %491 = vmatpush1.msra.mxu0 %v297
        %492 = vmatprep.subr.mxu0 0.0
        %493 = vmatpush1.msra.mxu0 %v298
        %494 = vmatprep.subr.mxu0 0.0
        %495 = vmatpush1.msra.mxu0 %v299
        %496 = vmatprep.subr.mxu0 0.0
        %497 = vmatpush1.msra.mxu0 %v300
        %498 = vmatprep.subr.mxu0 0.0
        %499 = vmatpush1.msra.mxu0 %v301
        %500 = vmatprep.subr.mxu0 0.0
        %501 = vmatpush1.msra.mxu0 %v302
        %502 = vmatprep.subr.mxu0 0.0
        %503 = vmatpush1.msra.mxu0 %v303
        %504 = vmatprep.subr.mxu0 0.0
        %505 = vmatpush1.msra.mxu0 %v304
        %506 = vmatprep.subr.mxu0 0.0
        %507 = vmatpush1.msra.mxu0 %v305
        %508 = vmatprep.mubr.f32.mxu0 %v411
        %509 = vmatmul.mubr.f32.gmra.mrb[0].mxu0 %v407
        %v510 = vpop.f32.mrb[0].mxu0
        %v511 = vadd.f32 %v402, %v510
        %v512 = vpop.f32.mrb[0].mxu0
        %513 = vdwg.mxu0
        %514 = vmatprep.subr.mxu0 0.0
        %515 = vmatpush1.msra.mxu0 %v306
        %516 = vmatprep.subr.mxu0 0.0
        %517 = vmatpush1.msra.mxu0 %v307
        %518 = vmatprep.subr.mxu0 0.0
        %519 = vmatpush1.msra.mxu0 %v308
        %520 = vmatprep.subr.mxu0 0.0
        %521 = vmatpush1.msra.mxu0 %v309
        %522 = vmatprep.subr.mxu0 0.0
        %523 = vmatpush1.msra.mxu0 %v310
        %524 = vmatprep.subr.mxu0 0.0
        %525 = vmatpush1.msra.mxu0 %v311
        %526 = vmatprep.subr.mxu0 0.0
        %527 = vmatpush1.msra.mxu0 %v312
        %528 = vmatprep.subr.mxu0 0.0
        %529 = vmatpush1.msra.mxu0 %v313
        %530 = vmatprep.subr.mxu0 0.0
        %531 = vmatpush1.msra.mxu0 %v314
        %532 = vmatprep.subr.mxu0 0.0
        %533 = vmatpush1.msra.mxu0 %v315
        %534 = vmatprep.subr.mxu0 0.0
        %535 = vmatpush1.msra.mxu0 %v316
        %536 = vmatprep.subr.mxu0 0.0
        %537 = vmatpush1.msra.mxu0 %v317
        %538 = vmatprep.subr.mxu0 0.0
        %539 = vmatpush1.msra.mxu0 %v318
        %540 = vmatprep.subr.mxu0 0.0
        %541 = vmatpush1.msra.mxu0 %v319
        %542 = vmatprep.subr.mxu0 0.0
        %543 = vmatpush1.msra.mxu0 %v320
        %544 = vmatprep.subr.mxu0 0.0
        %545 = vmatpush1.msra.mxu0 %v321
        %546 = vmatprep.subr.mxu0 0.0
        %547 = vmatpush1.msra.mxu0 %v322
        %548 = vmatprep.subr.mxu0 0.0
        %549 = vmatpush1.msra.mxu0 %v323
        %550 = vmatprep.subr.mxu0 0.0
        %551 = vmatpush1.msra.mxu0 %v324
        %552 = vmatprep.subr.mxu0 0.0
        %553 = vmatpush1.msra.mxu0 %v325
        %554 = vmatprep.subr.mxu0 0.0
        %555 = vmatpush1.msra.mxu0 %v326
        %556 = vmatprep.subr.mxu0 0.0
        %557 = vmatpush1.msra.mxu0 %v327
        %558 = vmatprep.subr.mxu0 0.0
        %559 = vmatpush1.msra.mxu0 %v328
        %560 = vmatprep.subr.mxu0 0.0
        %561 = vmatpush1.msra.mxu0 %v329
        %562 = vmatprep.subr.mxu0 0.0
        %563 = vmatpush1.msra.mxu0 %v330
        %564 = vmatprep.subr.mxu0 0.0
        %565 = vmatpush1.msra.mxu0 %v331
        %566 = vmatprep.subr.mxu0 0.0
        %567 = vmatpush1.msra.mxu0 %v332
        %568 = vmatprep.subr.mxu0 0.0
        %569 = vmatpush1.msra.mxu0 %v333
        %570 = vmatprep.subr.mxu0 0.0
        %571 = vmatpush1.msra.mxu0 %v334
        %572 = vmatprep.subr.mxu0 0.0
        %573 = vmatpush1.msra.mxu0 %v335
        %574 = vmatprep.subr.mxu0 0.0
        %575 = vmatpush1.msra.mxu0 %v336
        %576 = vmatprep.subr.mxu0 0.0
        %577 = vmatpush1.msra.mxu0 %v337
        %578 = vmatprep.mubr.f32.mxu0 %v419
        %579 = vmatmul.mubr.f32.gmra.mrb[0].mxu0 %v415
        %v580 = vpop.f32.mrb[0].mxu0
        %v581 = vadd.f32 %v511, %v580
        %v582 = vpop.f32.mrb[0].mxu0
        %583 = vdwg.mxu0
        %584 = vmatprep.subr.mxu0 0.0
        %585 = vmatpush1.msra.mxu0 %v338
        %586 = vmatprep.subr.mxu0 0.0
        %587 = vmatpush1.msra.mxu0 %v339
        %588 = vmatprep.subr.mxu0 0.0
        %589 = vmatpush1.msra.mxu0 %v340
        %590 = vmatprep.subr.mxu0 0.0
        %591 = vmatpush1.msra.mxu0 %v341
        %592 = vmatprep.subr.mxu0 0.0
        %593 = vmatpush1.msra.mxu0 %v342
        %594 = vmatprep.subr.mxu0 0.0
        %595 = vmatpush1.msra.mxu0 %v343
        %596 = vmatprep.subr.mxu0 0.0
        %597 = vmatpush1.msra.mxu0 %v344
        %598 = vmatprep.subr.mxu0 0.0
        %599 = vmatpush1.msra.mxu0 %v345
        %600 = vmatprep.subr.mxu0 0.0
        %601 = vmatpush1.msra.mxu0 %v346
        %602 = vmatprep.subr.mxu0 0.0
        %603 = vmatpush1.msra.mxu0 %v347
        %604 = vmatprep.subr.mxu0 0.0
        %605 = vmatpush1.msra.mxu0 %v348
        %606 = vmatprep.subr.mxu0 0.0
        %607 = vmatpush1.msra.mxu0 %v349
        %608 = vmatprep.subr.mxu0 0.0
        %609 = vmatpush1.msra.mxu0 %v350
        %610 = vmatprep.subr.mxu0 0.0
        %611 = vmatpush1.msra.mxu0 %v351
        %612 = vmatprep.subr.mxu0 0.0
        %613 = vmatpush1.msra.mxu0 %v352
        %614 = vmatprep.subr.mxu0 0.0
        %615 = vmatpush1.msra.mxu0 %v353
        %616 = vmatprep.subr.mxu0 0.0
        %617 = vmatpush1.msra.mxu0 %v354
        %618 = vmatprep.subr.mxu0 0.0
        %619 = vmatpush1.msra.mxu0 %v355
        %620 = vmatprep.subr.mxu0 0.0
        %621 = vmatpush1.msra.mxu0 %v356
        %622 = vmatprep.subr.mxu0 0.0
        %623 = vmatpush1.msra.mxu0 %v357
        %624 = vmatprep.subr.mxu0 0.0
        %625 = vmatpush1.msra.mxu0 %v358
        %626 = vmatprep.subr.mxu0 0.0
        %627 = vmatpush1.msra.mxu0 %v359
        %628 = vmatprep.subr.mxu0 0.0
        %629 = vmatpush1.msra.mxu0 %v360
        %630 = vmatprep.subr.mxu0 0.0
        %631 = vmatpush1.msra.mxu0 %v361
        %632 = vmatprep.subr.mxu0 0.0
        %633 = vmatpush1.msra.mxu0 %v362
        %634 = vmatprep.subr.mxu0 0.0
        %635 = vmatpush1.msra.mxu0 %v363
        %636 = vmatprep.subr.mxu0 0.0
        %637 = vmatpush1.msra.mxu0 %v364
        %638 = vmatprep.subr.mxu0 0.0
        %639 = vmatpush1.msra.mxu0 %v365
        %640 = vmatprep.subr.mxu0 0.0
        %641 = vmatpush1.msra.mxu0 %v366
        %642 = vmatprep.subr.mxu0 0.0
        %643 = vmatpush1.msra.mxu0 %v367
        %644 = vmatprep.subr.mxu0 0.0
        %645 = vmatpush1.msra.mxu0 %v368
        %646 = vmatprep.subr.mxu0 0.0
        %647 = vmatpush1.msra.mxu0 %v369
        %648 = vmatprep.mubr.f32.mxu0 %v427
        %649 = vmatmul.mubr.f32.gmra.mrb[0].mxu0 %v423
        %v650 = vpop.f32.mrb[0].mxu0
        %v651 = vadd.f32 %v581, %v650
        %v652 = vpop.f32.mrb[0].mxu0
        %653 = vdwg.mxu0
        %654 = vmatprep.subr.mxu0 0.0
        %655 = vmatpush1.msra.mxu0 %v370
        %656 = vmatprep.subr.mxu0 0.0
        %657 = vmatpush1.msra.mxu0 %v371
        %658 = vmatprep.subr.mxu0 0.0
        %659 = vmatpush1.msra.mxu0 %v372
        %660 = vmatprep.subr.mxu0 0.0
        %661 = vmatpush1.msra.mxu0 %v373
        %662 = vmatprep.subr.mxu0 0.0
        %663 = vmatpush1.msra.mxu0 %v374
        %664 = vmatprep.subr.mxu0 0.0
        %665 = vmatpush1.msra.mxu0 %v375
        %666 = vmatprep.subr.mxu0 0.0
        %667 = vmatpush1.msra.mxu0 %v376
        %668 = vmatprep.subr.mxu0 0.0
        %669 = vmatpush1.msra.mxu0 %v377
        %670 = vmatprep.subr.mxu0 0.0
        %671 = vmatpush1.msra.mxu0 %v378
        %672 = vmatprep.subr.mxu0 0.0
        %673 = vmatpush1.msra.mxu0 %v379
        %674 = vmatprep.subr.mxu0 0.0
        %675 = vmatpush1.msra.mxu0 %v380
        %676 = vmatprep.subr.mxu0 0.0
        %677 = vmatpush1.msra.mxu0 %v381
        %678 = vmatprep.subr.mxu0 0.0
        %679 = vmatpush1.msra.mxu0 %v382
        %680 = vmatprep.subr.mxu0 0.0
        %681 = vmatpush1.msra.mxu0 %v383
        %682 = vmatprep.subr.mxu0 0.0
        %683 = vmatpush1.msra.mxu0 %v384
        %684 = vmatprep.subr.mxu0 0.0
        %685 = vmatpush1.msra.mxu0 %v385
        %686 = vmatprep.subr.mxu0 0.0
        %687 = vmatpush1.msra.mxu0 %v386
        %688 = vmatprep.subr.mxu0 0.0
        %689 = vmatpush1.msra.mxu0 %v387
        %690 = vmatprep.subr.mxu0 0.0
        %691 = vmatpush1.msra.mxu0 %v388
        %692 = vmatprep.subr.mxu0 0.0
        %693 = vmatpush1.msra.mxu0 %v389
        %694 = vmatprep.subr.mxu0 0.0
        %695 = vmatpush1.msra.mxu0 %v390
        %696 = vmatprep.subr.mxu0 0.0
        %697 = vmatpush1.msra.mxu0 %v391
        %698 = vmatprep.subr.mxu0 0.0
        %699 = vmatpush1.msra.mxu0 %v392
        %700 = vmatprep.subr.mxu0 0.0
        %701 = vmatpush1.msra.mxu0 %v393
        %702 = vmatprep.subr.mxu0 0.0
        %703 = vmatpush1.msra.mxu0 %v394
        %704 = vmatprep.subr.mxu0 0.0
        %705 = vmatpush1.msra.mxu0 %v395
        %706 = vmatprep.subr.mxu0 0.0
        %707 = vmatpush1.msra.mxu0 %v396
        %708 = vmatprep.subr.mxu0 0.0
        %709 = vmatpush1.msra.mxu0 %v397
        %710 = vmatprep.subr.mxu0 0.0
        %711 = vmatpush1.msra.mxu0 %v398
        %712 = vmatprep.subr.mxu0 0.0
        %713 = vmatpush1.msra.mxu0 %v399
        %714 = vmatprep.subr.mxu0 0.0
        %715 = vmatpush1.msra.mxu0 %v400
        %716 = vmatprep.subr.mxu0 0.0
        %717 = vmatpush1.msra.mxu0 %v401
        %718 = vmatprep.mubr.f32.mxu0 %v435
        %719 = vmatmul.mubr.f32.gmra.mrb[0].mxu0 %v431
        %v720 = vpop.f32.mrb[0].mxu0
        %v721 = vadd.f32 %v651, %v720
        %v722 = vpop.f32.mrb[0].mxu0
        %723 = vdwg.mxu0
        %v724 = vmax.f32 %v721, 0.0
        %v725 = vld [vmem:[%s3] sm:$0xff]
        %v726 = vld [vmem:[%s3 + $0x8] sm:$0xff]
        %v727 = vld [vmem:[%s3 + $0x10] sm:$0xff]
        %v728 = vld [vmem:[%s3 + $0x18] sm:$0xff]
        %v729 = vld [vmem:[%s3 + $0x20] sm:$0xff]
        %v730 = vld [vmem:[%s3 + $0x28] sm:$0xff]
        %v731 = vld [vmem:[%s3 + $0x30] sm:$0xff]
        %v732 = vld [vmem:[%s3 + $0x38] sm:$0xff]
        %v733 = vld [vmem:[%s4] sm:$0x1]
        %vm734 = vcmask 523264
        %v736 = vsel %vm734, %v724, 0
        %738 = vmatprep.subr.mxu0 0.0
        %739 = vmatpush1.msra.mxu0 %v725
        %740 = vmatprep.subr.mxu0 0.0
        %741 = vmatpush1.msra.mxu0 %v726
        %742 = vmatprep.subr.mxu0 0.0
        %743 = vmatpush1.msra.mxu0 %v727
        %744 = vmatprep.subr.mxu0 0.0
        %745 = vmatpush1.msra.mxu0 %v728
        %746 = vmatprep.subr.mxu0 0.0
        %747 = vmatpush1.msra.mxu0 %v729
        %748 = vmatprep.subr.mxu0 0.0
        %749 = vmatpush1.msra.mxu0 %v730
        %750 = vmatprep.subr.mxu0 0.0
        %751 = vmatpush1.msra.mxu0 %v731
        %752 = vmatprep.subr.mxu0 0.0
        %753 = vmatpush1.msra.mxu0 %v732
        %754 = vmatprep.subr.mxu0 0.0
        %755 = vmatpush1.msra.mxu0 0.0
        %756 = vmatprep.subr.mxu0 0.0
        %757 = vmatpush1.msra.mxu0 0.0
        %758 = vmatprep.subr.mxu0 0.0
        %759 = vmatpush1.msra.mxu0 0.0
        %760 = vmatprep.subr.mxu0 0.0
        %761 = vmatpush1.msra.mxu0 0.0
        %762 = vmatprep.subr.mxu0 0.0
        %763 = vmatpush1.msra.mxu0 0.0
        %764 = vmatprep.subr.mxu0 0.0
        %765 = vmatpush1.msra.mxu0 0.0
        %766 = vmatprep.subr.mxu0 0.0
        %767 = vmatpush1.msra.mxu0 0.0
        %768 = vmatprep.subr.mxu0 0.0
        %769 = vmatpush1.msra.mxu0 0.0
        %770 = vmatprep.subr.mxu0 0.0
        %771 = vmatpush1.msra.mxu0 0.0
        %772 = vmatprep.subr.mxu0 0.0
        %773 = vmatpush1.msra.mxu0 0.0
        %774 = vmatprep.subr.mxu0 0.0
        %775 = vmatpush1.msra.mxu0 0.0
        %776 = vmatprep.subr.mxu0 0.0
        %777 = vmatpush1.msra.mxu0 0.0
        %778 = vmatprep.subr.mxu0 0.0
        %779 = vmatpush1.msra.mxu0 0.0
        %780 = vmatprep.subr.mxu0 0.0
        %781 = vmatpush1.msra.mxu0 0.0
        %782 = vmatprep.subr.mxu0 0.0
        %783 = vmatpush1.msra.mxu0 0.0
        %784 = vmatprep.subr.mxu0 0.0
        %785 = vmatpush1.msra.mxu0 0.0
        %786 = vmatprep.subr.mxu0 0.0
        %787 = vmatpush1.msra.mxu0 0.0
        %788 = vmatprep.subr.mxu0 0.0
        %789 = vmatpush1.msra.mxu0 0.0
        %790 = vmatprep.subr.mxu0 0.0
        %791 = vmatpush1.msra.mxu0 0.0
        %792 = vmatprep.subr.mxu0 0.0
        %793 = vmatpush1.msra.mxu0 0.0
        %794 = vmatprep.subr.mxu0 0.0
        %795 = vmatpush1.msra.mxu0 0.0
        %796 = vmatprep.subr.mxu0 0.0
        %797 = vmatpush1.msra.mxu0 0.0
        %798 = vmatprep.subr.mxu0 0.0
        %799 = vmatpush1.msra.mxu0 0.0
        %800 = vmatprep.subr.mxu0 0.0
        %801 = vmatpush1.msra.mxu0 0.0
        %802 = vmatprep.mubr.f32.mxu0 0.0
        %803 = vmatmul.mubr.f32.gmra.mrb[0].mxu0 %v736
        %v804 = vpop.f32.mrb[0].mxu0
        %v805 = vadd.f32 %v733, %v804
        %v806 = vpop.f32.mrb[0].mxu0
        %807 = vdwg.mxu0
        %v808 = vmax.f32 %v805, 0.0
        %v809 = vld [vmem:[%s5] sm:$0xff]
        %v810 = vld [vmem:[%s5 + $0x8] sm:$0xff]
        %v811 = vld [vmem:[%s5 + $0x10] sm:$0xff]
        %v812 = vld [vmem:[%s5 + $0x18] sm:$0xff]
        %v813 = vld [vmem:[%s5 + $0x20] sm:$0xff]
        %v814 = vld [vmem:[%s5 + $0x28] sm:$0xff]
        %v815 = vld [vmem:[%s5 + $0x30] sm:$0xff]
        %v816 = vld [vmem:[%s5 + $0x38] sm:$0xff]
        %v817 = vld [vmem:[%s6] sm:$0x1]
        %v819 = vsel %vm734, %v808, 0
        %821 = vmatprep.subr.mxu0 0.0
        %822 = vmatpush1.msra.mxu0 %v809
        %823 = vmatprep.subr.mxu0 0.0
        %824 = vmatpush1.msra.mxu0 %v810
        %825 = vmatprep.subr.mxu0 0.0
        %826 = vmatpush1.msra.mxu0 %v811
        %827 = vmatprep.subr.mxu0 0.0
        %828 = vmatpush1.msra.mxu0 %v812
        %829 = vmatprep.subr.mxu0 0.0
        %830 = vmatpush1.msra.mxu0 %v813
        %831 = vmatprep.subr.mxu0 0.0
        %832 = vmatpush1.msra.mxu0 %v814
        %833 = vmatprep.subr.mxu0 0.0
        %834 = vmatpush1.msra.mxu0 %v815
        %835 = vmatprep.subr.mxu0 0.0
        %836 = vmatpush1.msra.mxu0 %v816
        %837 = vmatprep.subr.mxu0 0.0
        %838 = vmatpush1.msra.mxu0 0.0
        %839 = vmatprep.subr.mxu0 0.0
        %840 = vmatpush1.msra.mxu0 0.0
        %841 = vmatprep.subr.mxu0 0.0
        %842 = vmatpush1.msra.mxu0 0.0
        %843 = vmatprep.subr.mxu0 0.0
        %844 = vmatpush1.msra.mxu0 0.0
        %845 = vmatprep.subr.mxu0 0.0
        %846 = vmatpush1.msra.mxu0 0.0
        %847 = vmatprep.subr.mxu0 0.0
        %848 = vmatpush1.msra.mxu0 0.0
        %849 = vmatprep.subr.mxu0 0.0
        %850 = vmatpush1.msra.mxu0 0.0
        %851 = vmatprep.subr.mxu0 0.0
        %852 = vmatpush1.msra.mxu0 0.0
        %853 = vmatprep.subr.mxu0 0.0
        %854 = vmatpush1.msra.mxu0 0.0
        %855 = vmatprep.subr.mxu0 0.0
        %856 = vmatpush1.msra.mxu0 0.0
        %857 = vmatprep.subr.mxu0 0.0
        %858 = vmatpush1.msra.mxu0 0.0
        %859 = vmatprep.subr.mxu0 0.0
        %860 = vmatpush1.msra.mxu0 0.0
        %861 = vmatprep.subr.mxu0 0.0
        %862 = vmatpush1.msra.mxu0 0.0
        %863 = vmatprep.subr.mxu0 0.0
        %864 = vmatpush1.msra.mxu0 0.0
        %865 = vmatprep.subr.mxu0 0.0
        %866 = vmatpush1.msra.mxu0 0.0
        %867 = vmatprep.subr.mxu0 0.0
        %868 = vmatpush1.msra.mxu0 0.0
        %869 = vmatprep.subr.mxu0 0.0
        %870 = vmatpush1.msra.mxu0 0.0
        %871 = vmatprep.subr.mxu0 0.0
        %872 = vmatpush1.msra.mxu0 0.0
        %873 = vmatprep.subr.mxu0 0.0
        %874 = vmatpush1.msra.mxu0 0.0
        %875 = vmatprep.subr.mxu0 0.0
        %876 = vmatpush1.msra.mxu0 0.0
        %877 = vmatprep.subr.mxu0 0.0
        %878 = vmatpush1.msra.mxu0 0.0
        %879 = vmatprep.subr.mxu0 0.0
        %880 = vmatpush1.msra.mxu0 0.0
        %881 = vmatprep.subr.mxu0 0.0
        %882 = vmatpush1.msra.mxu0 0.0
        %883 = vmatprep.subr.mxu0 0.0
        %884 = vmatpush1.msra.mxu0 0.0
        %885 = vmatprep.mubr.f32.mxu0 0.0
        %886 = vmatmul.mubr.f32.gmra.mrb[0].mxu0 %v819
        %v887 = vpop.f32.mrb[0].mxu0
        %v888 = vadd.f32 %v817, %v887
        %v889 = vpop.f32.mrb[0].mxu0
        %890 = vdwg.mxu0
        %vm891 = vcmask 16384
        %892 = vst.msk [vmem:[%s268] sm:$0x1] %vm891, %v888
        %s893 = sand.u32 %s181, 1
        %s894 = scalar_lea.sflag [#allocation3], %s893
        %s895 = sand.u32 %s181, 1
        %s896 = scalar_lea.vmem [#allocation2], %s895
        // Predicated region
        $region49: #{masked_vgg3d_forward.5} parent=47 // pred_check
          %p897 = pneg %p191
        $region50: #{masked_vgg3d_forward.5} parent=47 // pred_check_branch
          %899 = sbr.rel (%p897) target = $region52
        $region51: #{masked_vgg3d_forward.5} parent=47 // pred_region
          %s901 = ssub.s32 16, 16
          %902 = vsyncadd %s894, %s901
          %s903 = smul.addr %s21, 16
          %s904 = scalar_lea.hbm %s7, %s903
          %s906 = sshll.u32 %s896, 4
          %s907 = int_to_ptr.vmem [resolvable:$true] %s906
          %909 = dma.vmem_to_hbm [thread:$0]  %s907, 16, %s904, %s894
        $region52: #{masked_vgg3d_forward.5} parent=47 // pred_fallthru
          _
      $region48: #{masked_vgg3d_forward.5} parent=5 // pred_fallthru
        _
      %p910 = scmp.le.s32.totalorder 2, %s16
      // Predicated region
      $region53: #{masked_vgg3d_forward.5} parent=5 // pred_check
        %p911 = pneg %p910
      $region54: #{masked_vgg3d_forward.5} parent=5 // pred_check_branch
        %913 = sbr.rel (%p911) target = $region56
      $region55: #{masked_vgg3d_forward.5} parent=5 // pred_region
        %s914 = ssub.s32 %s16, 2
        // Predicated region
        $region57: #{masked_vgg3d_forward.5} parent=55 // pred_check
          %p915 = pneg %p197
        $region58: #{masked_vgg3d_forward.5} parent=55 // pred_check_branch
          %917 = sbr.rel (%p915) target = $region60
        $region59: #{masked_vgg3d_forward.5} parent=55 // pred_region
          %s918 = sand.u32 %s182, 1
          %s919 = scalar_lea.sflag [#allocation3], %s918
          %s920 = sand.u32 %s182, 1
          %s921 = scalar_lea.vmem [#allocation2], %s920
          %922 = dma.done %s919, 16
        $region60: #{masked_vgg3d_forward.5} parent=55 // pred_fallthru
          _
      $region56: #{masked_vgg3d_forward.5} parent=5 // pred_fallthru
        _
    $region6: #{masked_vgg3d_forward.5} parent=1 // loop_footer
      %s20 = sadd.s32 1, %s16
    $region7: #{masked_vgg3d_forward.5} parent=1 // loop_footer_branch
      %15 = sbr.rel target = $region3
    $region8: #{masked_vgg3d_forward.5} parent=1 // loop_exit
      _
    %923 = vsyncpa [#allocation3], 1
    %s924 = scalar_lea.sflag [#allocation3], 1
    %925 = vsyncpa %s924, 1

</llo_original>
